<compile_context>
chip_gen: v7x
topology: tpu7x:2x2x1
jax: 0.10.0
libtpu: 0.0.40
codegen_flags: <defaults>
</compile_context>

<pallas_src>
import functools

import jax
import jax.numpy as jnp
from jax import lax
from jax.experimental import pallas as pl
from jax.experimental.pallas import tpu as pltpu  # noqa: F401  (TPU backend)

EPS = 1e-5          # torch.nn.InstanceNorm1d default eps
NEG_SLOPE = 0.01    # torch.nn.LeakyReLU default negative_slope
F32 = jnp.float32


def _input_features(starting_channels, max_channels, size):
    feats = [starting_channels]
    s = float(size)
    while (s > 8) and (len(feats) <= 6):
        feats.append(min(2 * feats[-1], max_channels))
        s /= 2
    return feats


# ---------------------------------------------------------------------------
# The fused kernel
# ---------------------------------------------------------------------------
def _make_unet_kernel(n_enc, batch, length):
    """Build the fused U-Net kernel for a fixed (n_enc, batch, length)."""

    def kernel(*refs):
        x_ref, o_ref = refs[0], refs[-1]
        w_it = iter(refs[1:-1])
        nxt = lambda: next(w_it)[...]          # noqa: E731  (load next weight)

        cache = {}                             # memoize constant matrices

        def iota(shape, dim):
            return lax.broadcasted_iota(jnp.int32, shape, dim)

        def same_sample(i, j, L):
            m = None
            for s in range(batch):
                lo, hi = s * L, (s + 1) * L
                c = (i >= lo) & (i < hi) & (j >= lo) & (j < hi)
                m = c if m is None else (m | c)
            return m

        def shift_mat(L, delta):
            # (M, M): column j of (A @ T) = column j+delta of A if that column
            # is in the same sample, else 0  (== per-sample 'same' zero pad).
            key = ("shift", L, delta)
            if key not in cache:
                M = batch * L
                i, j = iota((M, M), 0), iota((M, M), 1)
                cond = (i == j + delta) & same_sample(i, j, L)
                cache[key] = jnp.where(cond, 1.0, 0.0).astype(F32)
            return cache[key]

        def mean_mat(L):
            # (M, M): h @ B = per-sample mean broadcast over that sample.
            key = ("mean", L)
            if key not in cache:
                M = batch * L
                i, j = iota((M, M), 0), iota((M, M), 1)
                cache[key] = jnp.where(same_sample(i, j, L), 1.0 / L, 0.0).astype(F32)
            return cache[key]

        def pool_mat(L, parity):
            # (M, M/2): output column j gathers input column 2j+parity.
            key = ("pool", L, parity)
            if key not in cache:
                M = batch * L
                i, j = iota((M, M // 2), 0), iota((M, M // 2), 1)
                cache[key] = jnp.where(i == 2 * j + parity, 1.0, 0.0).astype(F32)
            return cache[key]

        def up_mat(L, parity):
            # (M, 2M): scatters input column i to output column 2i+parity.
            key = ("up", L, parity)
            if key not in cache:
                M = batch * L
                i, j = iota((M, 2 * M), 0), iota((M, 2 * M), 1)
                cache[key] = jnp.where(j == 2 * i + parity, 1.0, 0.0).astype(F32)
            return cache[key]

        def dot(a, b):
            return jnp.dot(a, b, preferred_element_type=F32)

        def lrelu(a):
            return jnp.where(a >= 0, a, NEG_SLOPE * a)

        def conv3(parts, b, L, act=True):
            # 'same' K=3 conv on the folded (C, N*L) slab: one (Cout, Cin)
            # matmul per tap per input part; the two off-center taps are then
            # shifted with per-sample shift matrices.  `parts` lets the decoder
            # consume (skip, up) without materializing the channel concat.
            taps = []
            for k in range(3):
                a = None
                for h, wt in parts:
                    t = dot(wt[k], h)
                    a = t if a is None else a + t
                taps.append(a)
            out = (taps[1]
                   + dot(taps[0], shift_mat(L, -1))
                   + dot(taps[2], shift_mat(L, +1))
                   + b)
            return lrelu(out) if act else out

        def inst_norm(h, L):
            B = mean_mat(L)
            d = h - dot(h, B)
            var = dot(d * d, B)               # biased variance (torch default)
            return d * lax.rsqrt(var + EPS)

        def convdown(parts, b1, wt2, b2, L):
            h = conv3(parts, b1, L, act=True)
            h = conv3([(h, wt2)], b2, L, act=True)
            return inst_norm(h, L)

        def maxpool2(h, L):
            return jnp.maximum(dot(h, pool_mat(L, 0)), dot(h, pool_mat(L, 1)))

        def deconv2x(g, wd, bd, L):
            a0 = dot(wd[0], g) + bd
            a1 = dot(wd[1], g) + bd
            return dot(a0, up_mat(L, 0)) + dot(a1, up_mat(L, 1))

        # ------------------------ forward pass ------------------------
        h = x_ref[...].astype(F32)            # (C_in, N*L) folded activations
        L = length
        skips = []

        # Encoder stages: Convdown -> MaxPool1d(2)
        for _ in range(n_enc):
            wt1, b1, wt2, b2 = nxt(), nxt(), nxt(), nxt()
            skip = convdown([(h, wt1)], b1, wt2, b2, L)
            skips.append(skip)
            h = maxpool2(skip, L)
            L //= 2

        # Middle Convdown
        wt1, b1, wt2, b2 = nxt(), nxt(), nxt(), nxt()
        h = convdown([(h, wt1)], b1, wt2, b2, L)

        # Decoder stages: ConvTranspose(2,2) -> concat(skip, up) -> Convdown
        for d in range(n_enc):
            wd = nxt()
            bd = nxt()
            w1a = nxt()
            w1b = nxt()
            b1 = nxt()
            wt2 = nxt()
            b2 = nxt()
            up = deconv2x(h, wd, bd, L)
            L *= 2
            skip = skips[n_enc - 1 - d]
            # concat(skip, up) along channels is fused into the first conv by
            # splitting its weight along the input-channel axis.
            h = convdown([(skip, w1a), (up, w1b)], b1, wt2, b2, L)

        # Output 1x1 conv (no non-linearity, no norm)
        wo, bo = nxt(), nxt()
        o_ref[...] = dot(wo, h) + bo

    return kernel


# ---------------------------------------------------------------------------
# Wrapper (single pallas_call; only layout plumbing outside the kernel)
# ---------------------------------------------------------------------------
@functools.partial(jax.jit, static_argnames=("features",))
def _unet_forward(x, flat_params, features):
    N, C, L = x.shape
    n_enc = len(features) - 1
    assert L % (1 << n_enc) == 0, "spatial length must be divisible by 2**n_enc"
    # One-time layout plumbing: fold batch into the lane dimension -> (C, N*L).
    x_fold = jnp.transpose(x, (1, 0, 2)).reshape(C, N * L)
    out_fold = pl.pallas_call(
        _make_unet_kernel(n_enc, N, L),
        out_shape=jax.ShapeDtypeStruct((2, N * L), F32),
    )(x_fold, *flat_params)
    return jnp.transpose(out_fold.reshape(2, N, L), (1, 0, 2))


def unet_forward(x, params):
    return _unet_forward(x, params["flat"], params["features"])


# ---------------------------------------------------------------------------
# Parameter construction (deterministic, PyTorch-like uniform fan-in init).
# All layout transforms are done ONCE here, not per forward.
# ---------------------------------------------------------------------------
def _init_conv(key, cout, cin, k):
    kw, kb = jax.random.split(key)
    scale = 1.0 / float(cin * k) ** 0.5
    w = jax.random.uniform(kw, (cout, cin, k), F32, -scale, scale)   # torch layout
    b = jax.random.uniform(kb, (cout,), F32, -scale, scale)
    return w, b


def _init_deconv(key, cin, cout, k=2):
    kw, kb = jax.random.split(key)
    scale = 1.0 / float(cout * k) ** 0.5
    w = jax.random.uniform(kw, (cin, cout, k), F32, -scale, scale)   # torch layout
    b = jax.random.uniform(kb, (cout,), F32, -scale, scale)
    return w, b


def build_unet_params(key, num_modalities, starting_channels, max_channels, size):
    feats = _input_features(starting_channels, max_channels, size)
    keys = iter(jax.random.split(key, 64))
    flat = []

    def conv3_params(cout, cin):
        w, b = _init_conv(next(keys), cout, cin, 3)
        return jnp.transpose(w, (2, 0, 1)), b.reshape(cout, 1)      # (3, Cout, Cin)

    # Encoders
    in_ch = num_modalities
    for f in feats[:-1]:
        wt1, b1 = conv3_params(f, in_ch)
        wt2, b2 = conv3_params(f, f)
        flat += [wt1, b1, wt2, b2]
        in_ch = f

    # Middle Convdown
    wt1, b1 = conv3_params(feats[-1], feats[-2])
    wt2, b2 = conv3_params(feats[-1], feats[-1])
    flat += [wt1, b1, wt2, b2]

    # Decoders
    out_feats = feats[::-1]
    for i in range(len(feats) - 1):
        x_ch, g_ch, o_ch = out_feats[i + 1], out_feats[i], out_feats[i + 1]
        wd, bd = _init_deconv(next(keys), g_ch, x_ch, 2)
        w1, b1 = _init_conv(next(keys), o_ch, 2 * x_ch, 3)
        wt2, b2 = conv3_params(o_ch, o_ch)
        wdt = jnp.transpose(wd, (2, 1, 0))                          # (2, x_ch, g_ch)
        w1t = jnp.transpose(w1, (2, 0, 1))                          # (3, o_ch, 2*x_ch)
        flat += [wdt, bd.reshape(x_ch, 1),
                 w1t[:, :, :x_ch],            # applies to skip (concat order: skip, up)
                 w1t[:, :, x_ch:],            # applies to upsampled g
                 b1.reshape(o_ch, 1),
                 wt2, b2]

    # Output 1x1 conv
    wo, bo = _init_conv(next(keys), 2, starting_channels, 1)
    flat += [wo.reshape(2, starting_channels), bo.reshape(2, 1)]

    return {"features": tuple(feats), "flat": tuple(flat)}


# ---------------------------------------------------------------------------
if __name__ == "__main__":
    key = jax.random.PRNGKey(0)
    kp, kx = jax.random.split(key)

    # Unet(num_modalities=2, n_dim=1, starting_channels=4, max_channels=16, size=32)
    params = build_unet_params(
        kp, num_modalities=2, starting_channels=4, max_channels=16, size=32
    )

    # N x D x L input (case 1 in the module docstring): 2 examples, 2 electrodes, length 16
    x = jax.random.normal(kx, (2, 2, 16), F32)

    y = unet_forward(x, params)
    y = jax.block_until_ready(y)
    assert y.shape == (2, 2, 16), y.shape
    assert bool(jnp.all(jnp.isfinite(y)))
    print("KERNEL_OK")
</pallas_src>

<mosaic_0001>
module attributes {stable_mosaic.version = 11 : i64} {
  func.func @kernel(%arg0: memref<2x32xf32, #tpu.memory_space<vmem>>, %arg1: memref<3x4x2xf32, #tpu.memory_space<vmem>>, %arg2: memref<4x1xf32, #tpu.memory_space<vmem>>, %arg3: memref<3x4x4xf32, #tpu.memory_space<vmem>>, %arg4: memref<4x1xf32, #tpu.memory_space<vmem>>, %arg5: memref<3x8x4xf32, #tpu.memory_space<vmem>>, %arg6: memref<8x1xf32, #tpu.memory_space<vmem>>, %arg7: memref<3x8x8xf32, #tpu.memory_space<vmem>>, %arg8: memref<8x1xf32, #tpu.memory_space<vmem>>, %arg9: memref<3x16x8xf32, #tpu.memory_space<vmem>>, %arg10: memref<16x1xf32, #tpu.memory_space<vmem>>, %arg11: memref<3x16x16xf32, #tpu.memory_space<vmem>>, %arg12: memref<16x1xf32, #tpu.memory_space<vmem>>, %arg13: memref<2x8x16xf32, #tpu.memory_space<vmem>>, %arg14: memref<8x1xf32, #tpu.memory_space<vmem>>, %arg15: memref<3x8x8xf32, #tpu.memory_space<vmem>>, %arg16: memref<3x8x8xf32, #tpu.memory_space<vmem>>, %arg17: memref<8x1xf32, #tpu.memory_space<vmem>>, %arg18: memref<3x8x8xf32, #tpu.memory_space<vmem>>, %arg19: memref<8x1xf32, #tpu.memory_space<vmem>>, %arg20: memref<2x4x8xf32, #tpu.memory_space<vmem>>, %arg21: memref<4x1xf32, #tpu.memory_space<vmem>>, %arg22: memref<3x4x4xf32, #tpu.memory_space<vmem>>, %arg23: memref<3x4x4xf32, #tpu.memory_space<vmem>>, %arg24: memref<4x1xf32, #tpu.memory_space<vmem>>, %arg25: memref<3x4x4xf32, #tpu.memory_space<vmem>>, %arg26: memref<4x1xf32, #tpu.memory_space<vmem>>, %arg27: memref<2x4xf32, #tpu.memory_space<vmem>>, %arg28: memref<2x1xf32, #tpu.memory_space<vmem>>, %arg29: memref<2x32xf32, #tpu.memory_space<vmem>>) attributes {dimension_semantics = [], scalar_prefetch = 0 : i64, scratch_operands = 0 : i64, tpu.core_type = #tpu.core_type<tc>} {
    %c0 = arith.constant 0 : index
    %c0_0 = arith.constant 0 : index
    %0 = vector.load %arg0[%c0, %c0_0] : memref<2x32xf32, #tpu.memory_space<vmem>>, vector<2x32xf32>
    %c0_1 = arith.constant 0 : index
    %c0_2 = arith.constant 0 : index
    %c0_3 = arith.constant 0 : index
    %1 = vector.load %arg1[%c0_1, %c0_2, %c0_3] : memref<3x4x2xf32, #tpu.memory_space<vmem>>, vector<3x4x2xf32>
    %c0_4 = arith.constant 0 : index
    %c0_5 = arith.constant 0 : index
    %2 = vector.load %arg2[%c0_4, %c0_5] : memref<4x1xf32, #tpu.memory_space<vmem>>, vector<4x1xf32>
    %c0_6 = arith.constant 0 : index
    %c0_7 = arith.constant 0 : index
    %c0_8 = arith.constant 0 : index
    %3 = vector.load %arg3[%c0_6, %c0_7, %c0_8] : memref<3x4x4xf32, #tpu.memory_space<vmem>>, vector<3x4x4xf32>
    %c0_9 = arith.constant 0 : index
    %c0_10 = arith.constant 0 : index
    %4 = vector.load %arg4[%c0_9, %c0_10] : memref<4x1xf32, #tpu.memory_space<vmem>>, vector<4x1xf32>
    %5 = vector.extract_strided_slice %1 {offsets = [0, 0, 0], sizes = [1, 4, 2], strides = [1, 1, 1]} : vector<3x4x2xf32> to vector<1x4x2xf32>
    %6 = vector.shape_cast %5 : vector<1x4x2xf32> to vector<4x2xf32>
    %cst = arith.constant dense<0.000000e+00> : vector<4x32xf32>
    %7 = tpu.matmul %6, %0, %cst {dimension_numbers = #tpu.dot_dimension_numbers<[1], [0], [0], [1], [0, 0, 1, 1], [], []>} : vector<4x2xf32>, vector<2x32xf32>, vector<4x32xf32> -> vector<4x32xf32>
    %8 = vector.extract_strided_slice %1 {offsets = [1, 0, 0], sizes = [1, 4, 2], strides = [1, 1, 1]} : vector<3x4x2xf32> to vector<1x4x2xf32>
    %9 = vector.shape_cast %8 : vector<1x4x2xf32> to vector<4x2xf32>
    %cst_11 = arith.constant dense<0.000000e+00> : vector<4x32xf32>
    %10 = tpu.matmul %9, %0, %cst_11 {dimension_numbers = #tpu.dot_dimension_numbers<[1], [0], [0], [1], [0, 0, 1, 1], [], []>} : vector<4x2xf32>, vector<2x32xf32>, vector<4x32xf32> -> vector<4x32xf32>
    %11 = vector.extract_strided_slice %1 {offsets = [2, 0, 0], sizes = [1, 4, 2], strides = [1, 1, 1]} : vector<3x4x2xf32> to vector<1x4x2xf32>
    %12 = vector.shape_cast %11 : vector<1x4x2xf32> to vector<4x2xf32>
    %cst_12 = arith.constant dense<0.000000e+00> : vector<4x32xf32>
    %13 = tpu.matmul %12, %0, %cst_12 {dimension_numbers = #tpu.dot_dimension_numbers<[1], [0], [0], [1], [0, 0, 1, 1], [], []>} : vector<4x2xf32>, vector<2x32xf32>, vector<4x32xf32> -> vector<4x32xf32>
    %14 = tpu.iota {dimensions = array<i32: 0>} : vector<32x32xi32>
    %15 = tpu.iota {dimensions = array<i32: 1>} : vector<32x32xi32>
    %c-1_i32 = arith.constant -1 : i32
    %16 = vector.broadcast %c-1_i32 : i32 to vector<32x32xi32>
    %17 = arith.addi %15, %16 : vector<32x32xi32>
    %18 = arith.cmpi eq, %14, %17 : vector<32x32xi32>
    %c0_i32 = arith.constant 0 : i32
    %19 = vector.broadcast %c0_i32 : i32 to vector<32x32xi32>
    %20 = arith.cmpi sge, %14, %19 : vector<32x32xi32>
    %c16_i32 = arith.constant 16 : i32
    %21 = vector.broadcast %c16_i32 : i32 to vector<32x32xi32>
    %22 = arith.cmpi slt, %14, %21 : vector<32x32xi32>
    %23 = arith.andi %20, %22 : vector<32x32xi1>
    %c0_i32_13 = arith.constant 0 : i32
    %24 = vector.broadcast %c0_i32_13 : i32 to vector<32x32xi32>
    %25 = arith.cmpi sge, %15, %24 : vector<32x32xi32>
    %26 = arith.andi %23, %25 : vector<32x32xi1>
    %c16_i32_14 = arith.constant 16 : i32
    %27 = vector.broadcast %c16_i32_14 : i32 to vector<32x32xi32>
    %28 = arith.cmpi slt, %15, %27 : vector<32x32xi32>
    %29 = arith.andi %26, %28 : vector<32x32xi1>
    %c16_i32_15 = arith.constant 16 : i32
    %30 = vector.broadcast %c16_i32_15 : i32 to vector<32x32xi32>
    %31 = arith.cmpi sge, %14, %30 : vector<32x32xi32>
    %c32_i32 = arith.constant 32 : i32
    %32 = vector.broadcast %c32_i32 : i32 to vector<32x32xi32>
    %33 = arith.cmpi slt, %14, %32 : vector<32x32xi32>
    %34 = arith.andi %31, %33 : vector<32x32xi1>
    %c16_i32_16 = arith.constant 16 : i32
    %35 = vector.broadcast %c16_i32_16 : i32 to vector<32x32xi32>
    %36 = arith.cmpi sge, %15, %35 : vector<32x32xi32>
    %37 = arith.andi %34, %36 : vector<32x32xi1>
    %c32_i32_17 = arith.constant 32 : i32
    %38 = vector.broadcast %c32_i32_17 : i32 to vector<32x32xi32>
    %39 = arith.cmpi slt, %15, %38 : vector<32x32xi32>
    %40 = arith.andi %37, %39 : vector<32x32xi1>
    %41 = arith.ori %29, %40 : vector<32x32xi1>
    %42 = arith.andi %18, %41 : vector<32x32xi1>
    %cst_18 = arith.constant 1.000000e+00 : f32
    %cst_19 = arith.constant 0.000000e+00 : f32
    %43 = vector.broadcast %cst_18 : f32 to vector<32x32xf32>
    %44 = vector.broadcast %cst_19 : f32 to vector<32x32xf32>
    %45 = arith.select %42, %43, %44 : vector<32x32xi1>, vector<32x32xf32>
    %cst_20 = arith.constant dense<0.000000e+00> : vector<4x32xf32>
    %46 = tpu.matmul %7, %45, %cst_20 {dimension_numbers = #tpu.dot_dimension_numbers<[1], [0], [0], [1], [0, 0, 1, 1], [], []>} : vector<4x32xf32>, vector<32x32xf32>, vector<4x32xf32> -> vector<4x32xf32>
    %47 = arith.addf %10, %46 : vector<4x32xf32>
    %48 = tpu.iota {dimensions = array<i32: 0>} : vector<32x32xi32>
    %49 = tpu.iota {dimensions = array<i32: 1>} : vector<32x32xi32>
    %c1_i32 = arith.constant 1 : i32
    %50 = vector.broadcast %c1_i32 : i32 to vector<32x32xi32>
    %51 = arith.addi %49, %50 : vector<32x32xi32>
    %52 = arith.cmpi eq, %48, %51 : vector<32x32xi32>
    %c0_i32_21 = arith.constant 0 : i32
    %53 = vector.broadcast %c0_i32_21 : i32 to vector<32x32xi32>
    %54 = arith.cmpi sge, %48, %53 : vector<32x32xi32>
    %c16_i32_22 = arith.constant 16 : i32
    %55 = vector.broadcast %c16_i32_22 : i32 to vector<32x32xi32>
    %56 = arith.cmpi slt, %48, %55 : vector<32x32xi32>
    %57 = arith.andi %54, %56 : vector<32x32xi1>
    %c0_i32_23 = arith.constant 0 : i32
    %58 = vector.broadcast %c0_i32_23 : i32 to vector<32x32xi32>
    %59 = arith.cmpi sge, %49, %58 : vector<32x32xi32>
    %60 = arith.andi %57, %59 : vector<32x32xi1>
    %c16_i32_24 = arith.constant 16 : i32
    %61 = vector.broadcast %c16_i32_24 : i32 to vector<32x32xi32>
    %62 = arith.cmpi slt, %49, %61 : vector<32x32xi32>
    %63 = arith.andi %60, %62 : vector<32x32xi1>
    %c16_i32_25 = arith.constant 16 : i32
    %64 = vector.broadcast %c16_i32_25 : i32 to vector<32x32xi32>
    %65 = arith.cmpi sge, %48, %64 : vector<32x32xi32>
    %c32_i32_26 = arith.constant 32 : i32
    %66 = vector.broadcast %c32_i32_26 : i32 to vector<32x32xi32>
    %67 = arith.cmpi slt, %48, %66 : vector<32x32xi32>
    %68 = arith.andi %65, %67 : vector<32x32xi1>
    %c16_i32_27 = arith.constant 16 : i32
    %69 = vector.broadcast %c16_i32_27 : i32 to vector<32x32xi32>
    %70 = arith.cmpi sge, %49, %69 : vector<32x32xi32>
    %71 = arith.andi %68, %70 : vector<32x32xi1>
    %c32_i32_28 = arith.constant 32 : i32
    %72 = vector.broadcast %c32_i32_28 : i32 to vector<32x32xi32>
    %73 = arith.cmpi slt, %49, %72 : vector<32x32xi32>
    %74 = arith.andi %71, %73 : vector<32x32xi1>
    %75 = arith.ori %63, %74 : vector<32x32xi1>
    %76 = arith.andi %52, %75 : vector<32x32xi1>
    %cst_29 = arith.constant 1.000000e+00 : f32
    %cst_30 = arith.constant 0.000000e+00 : f32
    %77 = vector.broadcast %cst_29 : f32 to vector<32x32xf32>
    %78 = vector.broadcast %cst_30 : f32 to vector<32x32xf32>
    %79 = arith.select %76, %77, %78 : vector<32x32xi1>, vector<32x32xf32>
    %cst_31 = arith.constant dense<0.000000e+00> : vector<4x32xf32>
    %80 = tpu.matmul %13, %79, %cst_31 {dimension_numbers = #tpu.dot_dimension_numbers<[1], [0], [0], [1], [0, 0, 1, 1], [], []>} : vector<4x32xf32>, vector<32x32xf32>, vector<4x32xf32> -> vector<4x32xf32>
    %81 = arith.addf %47, %80 : vector<4x32xf32>
    %82 = vector.broadcast %2 : vector<4x1xf32> to vector<4x32xf32>
    %83 = arith.addf %81, %82 : vector<4x32xf32>
    %cst_32 = arith.constant 0.000000e+00 : f32
    %84 = vector.broadcast %cst_32 : f32 to vector<4x32xf32>
    %85 = arith.cmpf oge, %83, %84 : vector<4x32xf32>
    %cst_33 = arith.constant 0.00999999977 : f32
    %86 = vector.broadcast %cst_33 : f32 to vector<4x32xf32>
    %87 = arith.mulf %86, %83 : vector<4x32xf32>
    %88 = arith.select %85, %83, %87 : vector<4x32xi1>, vector<4x32xf32>
    %89 = vector.extract_strided_slice %3 {offsets = [0, 0, 0], sizes = [1, 4, 4], strides = [1, 1, 1]} : vector<3x4x4xf32> to vector<1x4x4xf32>
    %90 = vector.shape_cast %89 : vector<1x4x4xf32> to vector<4x4xf32>
    %cst_34 = arith.constant dense<0.000000e+00> : vector<4x32xf32>
    %91 = tpu.matmul %90, %88, %cst_34 {dimension_numbers = #tpu.dot_dimension_numbers<[1], [0], [0], [1], [0, 0, 1, 1], [], []>} : vector<4x4xf32>, vector<4x32xf32>, vector<4x32xf32> -> vector<4x32xf32>
    %92 = vector.extract_strided_slice %3 {offsets = [1, 0, 0], sizes = [1, 4, 4], strides = [1, 1, 1]} : vector<3x4x4xf32> to vector<1x4x4xf32>
    %93 = vector.shape_cast %92 : vector<1x4x4xf32> to vector<4x4xf32>
    %cst_35 = arith.constant dense<0.000000e+00> : vector<4x32xf32>
    %94 = tpu.matmul %93, %88, %cst_35 {dimension_numbers = #tpu.dot_dimension_numbers<[1], [0], [0], [1], [0, 0, 1, 1], [], []>} : vector<4x4xf32>, vector<4x32xf32>, vector<4x32xf32> -> vector<4x32xf32>
    %95 = vector.extract_strided_slice %3 {offsets = [2, 0, 0], sizes = [1, 4, 4], strides = [1, 1, 1]} : vector<3x4x4xf32> to vector<1x4x4xf32>
    %96 = vector.shape_cast %95 : vector<1x4x4xf32> to vector<4x4xf32>
    %cst_36 = arith.constant dense<0.000000e+00> : vector<4x32xf32>
    %97 = tpu.matmul %96, %88, %cst_36 {dimension_numbers = #tpu.dot_dimension_numbers<[1], [0], [0], [1], [0, 0, 1, 1], [], []>} : vector<4x4xf32>, vector<4x32xf32>, vector<4x32xf32> -> vector<4x32xf32>
    %cst_37 = arith.constant dense<0.000000e+00> : vector<4x32xf32>
    %98 = tpu.matmul %91, %45, %cst_37 {dimension_numbers = #tpu.dot_dimension_numbers<[1], [0], [0], [1], [0, 0, 1, 1], [], []>} : vector<4x32xf32>, vector<32x32xf32>, vector<4x32xf32> -> vector<4x32xf32>
    %99 = arith.addf %94, %98 : vector<4x32xf32>
    %cst_38 = arith.constant dense<0.000000e+00> : vector<4x32xf32>
    %100 = tpu.matmul %97, %79, %cst_38 {dimension_numbers = #tpu.dot_dimension_numbers<[1], [0], [0], [1], [0, 0, 1, 1], [], []>} : vector<4x32xf32>, vector<32x32xf32>, vector<4x32xf32> -> vector<4x32xf32>
    %101 = arith.addf %99, %100 : vector<4x32xf32>
    %102 = vector.broadcast %4 : vector<4x1xf32> to vector<4x32xf32>
    %103 = arith.addf %101, %102 : vector<4x32xf32>
    %cst_39 = arith.constant 0.000000e+00 : f32
    %104 = vector.broadcast %cst_39 : f32 to vector<4x32xf32>
    %105 = arith.cmpf oge, %103, %104 : vector<4x32xf32>
    %cst_40 = arith.constant 0.00999999977 : f32
    %106 = vector.broadcast %cst_40 : f32 to vector<4x32xf32>
    %107 = arith.mulf %106, %103 : vector<4x32xf32>
    %108 = arith.select %105, %103, %107 : vector<4x32xi1>, vector<4x32xf32>
    %109 = tpu.iota {dimensions = array<i32: 0>} : vector<32x32xi32>
    %110 = tpu.iota {dimensions = array<i32: 1>} : vector<32x32xi32>
    %c0_i32_41 = arith.constant 0 : i32
    %111 = vector.broadcast %c0_i32_41 : i32 to vector<32x32xi32>
    %112 = arith.cmpi sge, %109, %111 : vector<32x32xi32>
    %c16_i32_42 = arith.constant 16 : i32
    %113 = vector.broadcast %c16_i32_42 : i32 to vector<32x32xi32>
    %114 = arith.cmpi slt, %109, %113 : vector<32x32xi32>
    %115 = arith.andi %112, %114 : vector<32x32xi1>
    %c0_i32_43 = arith.constant 0 : i32
    %116 = vector.broadcast %c0_i32_43 : i32 to vector<32x32xi32>
    %117 = arith.cmpi sge, %110, %116 : vector<32x32xi32>
    %118 = arith.andi %115, %117 : vector<32x32xi1>
    %c16_i32_44 = arith.constant 16 : i32
    %119 = vector.broadcast %c16_i32_44 : i32 to vector<32x32xi32>
    %120 = arith.cmpi slt, %110, %119 : vector<32x32xi32>
    %121 = arith.andi %118, %120 : vector<32x32xi1>
    %c16_i32_45 = arith.constant 16 : i32
    %122 = vector.broadcast %c16_i32_45 : i32 to vector<32x32xi32>
    %123 = arith.cmpi sge, %109, %122 : vector<32x32xi32>
    %c32_i32_46 = arith.constant 32 : i32
    %124 = vector.broadcast %c32_i32_46 : i32 to vector<32x32xi32>
    %125 = arith.cmpi slt, %109, %124 : vector<32x32xi32>
    %126 = arith.andi %123, %125 : vector<32x32xi1>
    %c16_i32_47 = arith.constant 16 : i32
    %127 = vector.broadcast %c16_i32_47 : i32 to vector<32x32xi32>
    %128 = arith.cmpi sge, %110, %127 : vector<32x32xi32>
    %129 = arith.andi %126, %128 : vector<32x32xi1>
    %c32_i32_48 = arith.constant 32 : i32
    %130 = vector.broadcast %c32_i32_48 : i32 to vector<32x32xi32>
    %131 = arith.cmpi slt, %110, %130 : vector<32x32xi32>
    %132 = arith.andi %129, %131 : vector<32x32xi1>
    %133 = arith.ori %121, %132 : vector<32x32xi1>
    %cst_49 = arith.constant 6.250000e-02 : f32
    %cst_50 = arith.constant 0.000000e+00 : f32
    %134 = vector.broadcast %cst_49 : f32 to vector<32x32xf32>
    %135 = vector.broadcast %cst_50 : f32 to vector<32x32xf32>
    %136 = arith.select %133, %134, %135 : vector<32x32xi1>, vector<32x32xf32>
    %cst_51 = arith.constant dense<0.000000e+00> : vector<4x32xf32>
    %137 = tpu.matmul %108, %136, %cst_51 {dimension_numbers = #tpu.dot_dimension_numbers<[1], [0], [0], [1], [0, 0, 1, 1], [], []>} : vector<4x32xf32>, vector<32x32xf32>, vector<4x32xf32> -> vector<4x32xf32>
    %138 = arith.subf %108, %137 : vector<4x32xf32>
    %139 = arith.mulf %138, %138 : vector<4x32xf32>
    %cst_52 = arith.constant dense<0.000000e+00> : vector<4x32xf32>
    %140 = tpu.matmul %139, %136, %cst_52 {dimension_numbers = #tpu.dot_dimension_numbers<[1], [0], [0], [1], [0, 0, 1, 1], [], []>} : vector<4x32xf32>, vector<32x32xf32>, vector<4x32xf32> -> vector<4x32xf32>
    %cst_53 = arith.constant 9.99999974E-6 : f32
    %141 = vector.broadcast %cst_53 : f32 to vector<4x32xf32>
    %142 = arith.addf %140, %141 : vector<4x32xf32>
    %143 = math.rsqrt %142 : vector<4x32xf32>
    %144 = arith.mulf %138, %143 : vector<4x32xf32>
    %145 = tpu.iota {dimensions = array<i32: 0>} : vector<32x16xi32>
    %146 = tpu.iota {dimensions = array<i32: 1>} : vector<32x16xi32>
    %c2_i32 = arith.constant 2 : i32
    %147 = vector.broadcast %c2_i32 : i32 to vector<32x16xi32>
    %148 = arith.muli %147, %146 : vector<32x16xi32>
    %c0_i32_54 = arith.constant 0 : i32
    %149 = vector.broadcast %c0_i32_54 : i32 to vector<32x16xi32>
    %150 = arith.addi %148, %149 : vector<32x16xi32>
    %151 = arith.cmpi eq, %145, %150 : vector<32x16xi32>
    %cst_55 = arith.constant 1.000000e+00 : f32
    %cst_56 = arith.constant 0.000000e+00 : f32
    %152 = vector.broadcast %cst_55 : f32 to vector<32x16xf32>
    %153 = vector.broadcast %cst_56 : f32 to vector<32x16xf32>
    %154 = arith.select %151, %152, %153 : vector<32x16xi1>, vector<32x16xf32>
    %cst_57 = arith.constant dense<0.000000e+00> : vector<4x16xf32>
    %155 = tpu.matmul %144, %154, %cst_57 {dimension_numbers = #tpu.dot_dimension_numbers<[1], [0], [0], [1], [0, 0, 1, 1], [], []>} : vector<4x32xf32>, vector<32x16xf32>, vector<4x16xf32> -> vector<4x16xf32>
    %156 = tpu.iota {dimensions = array<i32: 0>} : vector<32x16xi32>
    %157 = tpu.iota {dimensions = array<i32: 1>} : vector<32x16xi32>
    %c2_i32_58 = arith.constant 2 : i32
    %158 = vector.broadcast %c2_i32_58 : i32 to vector<32x16xi32>
    %159 = arith.muli %158, %157 : vector<32x16xi32>
    %c1_i32_59 = arith.constant 1 : i32
    %160 = vector.broadcast %c1_i32_59 : i32 to vector<32x16xi32>
    %161 = arith.addi %159, %160 : vector<32x16xi32>
    %162 = arith.cmpi eq, %156, %161 : vector<32x16xi32>
    %cst_60 = arith.constant 1.000000e+00 : f32
    %cst_61 = arith.constant 0.000000e+00 : f32
    %163 = vector.broadcast %cst_60 : f32 to vector<32x16xf32>
    %164 = vector.broadcast %cst_61 : f32 to vector<32x16xf32>
    %165 = arith.select %162, %163, %164 : vector<32x16xi1>, vector<32x16xf32>
    %cst_62 = arith.constant dense<0.000000e+00> : vector<4x16xf32>
    %166 = tpu.matmul %144, %165, %cst_62 {dimension_numbers = #tpu.dot_dimension_numbers<[1], [0], [0], [1], [0, 0, 1, 1], [], []>} : vector<4x32xf32>, vector<32x16xf32>, vector<4x16xf32> -> vector<4x16xf32>
    %167 = arith.maximumf %155, %166 : vector<4x16xf32>
    %c0_63 = arith.constant 0 : index
    %c0_64 = arith.constant 0 : index
    %c0_65 = arith.constant 0 : index
    %168 = vector.load %arg5[%c0_63, %c0_64, %c0_65] : memref<3x8x4xf32, #tpu.memory_space<vmem>>, vector<3x8x4xf32>
    %c0_66 = arith.constant 0 : index
    %c0_67 = arith.constant 0 : index
    %169 = vector.load %arg6[%c0_66, %c0_67] : memref<8x1xf32, #tpu.memory_space<vmem>>, vector<8x1xf32>
    %c0_68 = arith.constant 0 : index
    %c0_69 = arith.constant 0 : index
    %c0_70 = arith.constant 0 : index
    %170 = vector.load %arg7[%c0_68, %c0_69, %c0_70] : memref<3x8x8xf32, #tpu.memory_space<vmem>>, vector<3x8x8xf32>
    %c0_71 = arith.constant 0 : index
    %c0_72 = arith.constant 0 : index
    %171 = vector.load %arg8[%c0_71, %c0_72] : memref<8x1xf32, #tpu.memory_space<vmem>>, vector<8x1xf32>
    %172 = vector.extract_strided_slice %168 {offsets = [0, 0, 0], sizes = [1, 8, 4], strides = [1, 1, 1]} : vector<3x8x4xf32> to vector<1x8x4xf32>
    %173 = vector.shape_cast %172 : vector<1x8x4xf32> to vector<8x4xf32>
    %cst_73 = arith.constant dense<0.000000e+00> : vector<8x16xf32>
    %174 = tpu.matmul %173, %167, %cst_73 {dimension_numbers = #tpu.dot_dimension_numbers<[1], [0], [0], [1], [0, 0, 1, 1], [], []>} : vector<8x4xf32>, vector<4x16xf32>, vector<8x16xf32> -> vector<8x16xf32>
    %175 = vector.extract_strided_slice %168 {offsets = [1, 0, 0], sizes = [1, 8, 4], strides = [1, 1, 1]} : vector<3x8x4xf32> to vector<1x8x4xf32>
    %176 = vector.shape_cast %175 : vector<1x8x4xf32> to vector<8x4xf32>
    %cst_74 = arith.constant dense<0.000000e+00> : vector<8x16xf32>
    %177 = tpu.matmul %176, %167, %cst_74 {dimension_numbers = #tpu.dot_dimension_numbers<[1], [0], [0], [1], [0, 0, 1, 1], [], []>} : vector<8x4xf32>, vector<4x16xf32>, vector<8x16xf32> -> vector<8x16xf32>
    %178 = vector.extract_strided_slice %168 {offsets = [2, 0, 0], sizes = [1, 8, 4], strides = [1, 1, 1]} : vector<3x8x4xf32> to vector<1x8x4xf32>
    %179 = vector.shape_cast %178 : vector<1x8x4xf32> to vector<8x4xf32>
    %cst_75 = arith.constant dense<0.000000e+00> : vector<8x16xf32>
    %180 = tpu.matmul %179, %167, %cst_75 {dimension_numbers = #tpu.dot_dimension_numbers<[1], [0], [0], [1], [0, 0, 1, 1], [], []>} : vector<8x4xf32>, vector<4x16xf32>, vector<8x16xf32> -> vector<8x16xf32>
    %181 = tpu.iota {dimensions = array<i32: 0>} : vector<16x16xi32>
    %182 = tpu.iota {dimensions = array<i32: 1>} : vector<16x16xi32>
    %c-1_i32_76 = arith.constant -1 : i32
    %183 = vector.broadcast %c-1_i32_76 : i32 to vector<16x16xi32>
    %184 = arith.addi %182, %183 : vector<16x16xi32>
    %185 = arith.cmpi eq, %181, %184 : vector<16x16xi32>
    %c0_i32_77 = arith.constant 0 : i32
    %186 = vector.broadcast %c0_i32_77 : i32 to vector<16x16xi32>
    %187 = arith.cmpi sge, %181, %186 : vector<16x16xi32>
    %c8_i32 = arith.constant 8 : i32
    %188 = vector.broadcast %c8_i32 : i32 to vector<16x16xi32>
    %189 = arith.cmpi slt, %181, %188 : vector<16x16xi32>
    %190 = arith.andi %187, %189 : vector<16x16xi1>
    %c0_i32_78 = arith.constant 0 : i32
    %191 = vector.broadcast %c0_i32_78 : i32 to vector<16x16xi32>
    %192 = arith.cmpi sge, %182, %191 : vector<16x16xi32>
    %193 = arith.andi %190, %192 : vector<16x16xi1>
    %c8_i32_79 = arith.constant 8 : i32
    %194 = vector.broadcast %c8_i32_79 : i32 to vector<16x16xi32>
    %195 = arith.cmpi slt, %182, %194 : vector<16x16xi32>
    %196 = arith.andi %193, %195 : vector<16x16xi1>
    %c8_i32_80 = arith.constant 8 : i32
    %197 = vector.broadcast %c8_i32_80 : i32 to vector<16x16xi32>
    %198 = arith.cmpi sge, %181, %197 : vector<16x16xi32>
    %c16_i32_81 = arith.constant 16 : i32
    %199 = vector.broadcast %c16_i32_81 : i32 to vector<16x16xi32>
    %200 = arith.cmpi slt, %181, %199 : vector<16x16xi32>
    %201 = arith.andi %198, %200 : vector<16x16xi1>
    %c8_i32_82 = arith.constant 8 : i32
    %202 = vector.broadcast %c8_i32_82 : i32 to vector<16x16xi32>
    %203 = arith.cmpi sge, %182, %202 : vector<16x16xi32>
    %204 = arith.andi %201, %203 : vector<16x16xi1>
    %c16_i32_83 = arith.constant 16 : i32
    %205 = vector.broadcast %c16_i32_83 : i32 to vector<16x16xi32>
    %206 = arith.cmpi slt, %182, %205 : vector<16x16xi32>
    %207 = arith.andi %204, %206 : vector<16x16xi1>
    %208 = arith.ori %196, %207 : vector<16x16xi1>
    %209 = arith.andi %185, %208 : vector<16x16xi1>
    %cst_84 = arith.constant 1.000000e+00 : f32
    %cst_85 = arith.constant 0.000000e+00 : f32
    %210 = vector.broadcast %cst_84 : f32 to vector<16x16xf32>
    %211 = vector.broadcast %cst_85 : f32 to vector<16x16xf32>
    %212 = arith.select %209, %210, %211 : vector<16x16xi1>, vector<16x16xf32>
    %cst_86 = arith.constant dense<0.000000e+00> : vector<8x16xf32>
    %213 = tpu.matmul %174, %212, %cst_86 {dimension_numbers = #tpu.dot_dimension_numbers<[1], [0], [0], [1], [0, 0, 1, 1], [], []>} : vector<8x16xf32>, vector<16x16xf32>, vector<8x16xf32> -> vector<8x16xf32>
    %214 = arith.addf %177, %213 : vector<8x16xf32>
    %215 = tpu.iota {dimensions = array<i32: 0>} : vector<16x16xi32>
    %216 = tpu.iota {dimensions = array<i32: 1>} : vector<16x16xi32>
    %c1_i32_87 = arith.constant 1 : i32
    %217 = vector.broadcast %c1_i32_87 : i32 to vector<16x16xi32>
    %218 = arith.addi %216, %217 : vector<16x16xi32>
    %219 = arith.cmpi eq, %215, %218 : vector<16x16xi32>
    %c0_i32_88 = arith.constant 0 : i32
    %220 = vector.broadcast %c0_i32_88 : i32 to vector<16x16xi32>
    %221 = arith.cmpi sge, %215, %220 : vector<16x16xi32>
    %c8_i32_89 = arith.constant 8 : i32
    %222 = vector.broadcast %c8_i32_89 : i32 to vector<16x16xi32>
    %223 = arith.cmpi slt, %215, %222 : vector<16x16xi32>
    %224 = arith.andi %221, %223 : vector<16x16xi1>
    %c0_i32_90 = arith.constant 0 : i32
    %225 = vector.broadcast %c0_i32_90 : i32 to vector<16x16xi32>
    %226 = arith.cmpi sge, %216, %225 : vector<16x16xi32>
    %227 = arith.andi %224, %226 : vector<16x16xi1>
    %c8_i32_91 = arith.constant 8 : i32
    %228 = vector.broadcast %c8_i32_91 : i32 to vector<16x16xi32>
    %229 = arith.cmpi slt, %216, %228 : vector<16x16xi32>
    %230 = arith.andi %227, %229 : vector<16x16xi1>
    %c8_i32_92 = arith.constant 8 : i32
    %231 = vector.broadcast %c8_i32_92 : i32 to vector<16x16xi32>
    %232 = arith.cmpi sge, %215, %231 : vector<16x16xi32>
    %c16_i32_93 = arith.constant 16 : i32
    %233 = vector.broadcast %c16_i32_93 : i32 to vector<16x16xi32>
    %234 = arith.cmpi slt, %215, %233 : vector<16x16xi32>
    %235 = arith.andi %232, %234 : vector<16x16xi1>
    %c8_i32_94 = arith.constant 8 : i32
    %236 = vector.broadcast %c8_i32_94 : i32 to vector<16x16xi32>
    %237 = arith.cmpi sge, %216, %236 : vector<16x16xi32>
    %238 = arith.andi %235, %237 : vector<16x16xi1>
    %c16_i32_95 = arith.constant 16 : i32
    %239 = vector.broadcast %c16_i32_95 : i32 to vector<16x16xi32>
    %240 = arith.cmpi slt, %216, %239 : vector<16x16xi32>
    %241 = arith.andi %238, %240 : vector<16x16xi1>
    %242 = arith.ori %230, %241 : vector<16x16xi1>
    %243 = arith.andi %219, %242 : vector<16x16xi1>
    %cst_96 = arith.constant 1.000000e+00 : f32
    %cst_97 = arith.constant 0.000000e+00 : f32
    %244 = vector.broadcast %cst_96 : f32 to vector<16x16xf32>
    %245 = vector.broadcast %cst_97 : f32 to vector<16x16xf32>
    %246 = arith.select %243, %244, %245 : vector<16x16xi1>, vector<16x16xf32>
    %cst_98 = arith.constant dense<0.000000e+00> : vector<8x16xf32>
    %247 = tpu.matmul %180, %246, %cst_98 {dimension_numbers = #tpu.dot_dimension_numbers<[1], [0], [0], [1], [0, 0, 1, 1], [], []>} : vector<8x16xf32>, vector<16x16xf32>, vector<8x16xf32> -> vector<8x16xf32>
    %248 = arith.addf %214, %247 : vector<8x16xf32>
    %249 = vector.broadcast %169 : vector<8x1xf32> to vector<8x16xf32>
    %250 = arith.addf %248, %249 : vector<8x16xf32>
    %cst_99 = arith.constant 0.000000e+00 : f32
    %251 = vector.broadcast %cst_99 : f32 to vector<8x16xf32>
    %252 = arith.cmpf oge, %250, %251 : vector<8x16xf32>
    %cst_100 = arith.constant 0.00999999977 : f32
    %253 = vector.broadcast %cst_100 : f32 to vector<8x16xf32>
    %254 = arith.mulf %253, %250 : vector<8x16xf32>
    %255 = arith.select %252, %250, %254 : vector<8x16xi1>, vector<8x16xf32>
    %256 = vector.extract_strided_slice %170 {offsets = [0, 0, 0], sizes = [1, 8, 8], strides = [1, 1, 1]} : vector<3x8x8xf32> to vector<1x8x8xf32>
    %257 = vector.shape_cast %256 : vector<1x8x8xf32> to vector<8x8xf32>
    %cst_101 = arith.constant dense<0.000000e+00> : vector<8x16xf32>
    %258 = tpu.matmul %257, %255, %cst_101 {dimension_numbers = #tpu.dot_dimension_numbers<[1], [0], [0], [1], [0, 0, 1, 1], [], []>} : vector<8x8xf32>, vector<8x16xf32>, vector<8x16xf32> -> vector<8x16xf32>
    %259 = vector.extract_strided_slice %170 {offsets = [1, 0, 0], sizes = [1, 8, 8], strides = [1, 1, 1]} : vector<3x8x8xf32> to vector<1x8x8xf32>
    %260 = vector.shape_cast %259 : vector<1x8x8xf32> to vector<8x8xf32>
    %cst_102 = arith.constant dense<0.000000e+00> : vector<8x16xf32>
    %261 = tpu.matmul %260, %255, %cst_102 {dimension_numbers = #tpu.dot_dimension_numbers<[1], [0], [0], [1], [0, 0, 1, 1], [], []>} : vector<8x8xf32>, vector<8x16xf32>, vector<8x16xf32> -> vector<8x16xf32>
    %262 = vector.extract_strided_slice %170 {offsets = [2, 0, 0], sizes = [1, 8, 8], strides = [1, 1, 1]} : vector<3x8x8xf32> to vector<1x8x8xf32>
    %263 = vector.shape_cast %262 : vector<1x8x8xf32> to vector<8x8xf32>
    %cst_103 = arith.constant dense<0.000000e+00> : vector<8x16xf32>
    %264 = tpu.matmul %263, %255, %cst_103 {dimension_numbers = #tpu.dot_dimension_numbers<[1], [0], [0], [1], [0, 0, 1, 1], [], []>} : vector<8x8xf32>, vector<8x16xf32>, vector<8x16xf32> -> vector<8x16xf32>
    %cst_104 = arith.constant dense<0.000000e+00> : vector<8x16xf32>
    %265 = tpu.matmul %258, %212, %cst_104 {dimension_numbers = #tpu.dot_dimension_numbers<[1], [0], [0], [1], [0, 0, 1, 1], [], []>} : vector<8x16xf32>, vector<16x16xf32>, vector<8x16xf32> -> vector<8x16xf32>
    %266 = arith.addf %261, %265 : vector<8x16xf32>
    %cst_105 = arith.constant dense<0.000000e+00> : vector<8x16xf32>
    %267 = tpu.matmul %264, %246, %cst_105 {dimension_numbers = #tpu.dot_dimension_numbers<[1], [0], [0], [1], [0, 0, 1, 1], [], []>} : vector<8x16xf32>, vector<16x16xf32>, vector<8x16xf32> -> vector<8x16xf32>
    %268 = arith.addf %266, %267 : vector<8x16xf32>
    %269 = vector.broadcast %171 : vector<8x1xf32> to vector<8x16xf32>
    %270 = arith.addf %268, %269 : vector<8x16xf32>
    %cst_106 = arith.constant 0.000000e+00 : f32
    %271 = vector.broadcast %cst_106 : f32 to vector<8x16xf32>
    %272 = arith.cmpf oge, %270, %271 : vector<8x16xf32>
    %cst_107 = arith.constant 0.00999999977 : f32
    %273 = vector.broadcast %cst_107 : f32 to vector<8x16xf32>
    %274 = arith.mulf %273, %270 : vector<8x16xf32>
    %275 = arith.select %272, %270, %274 : vector<8x16xi1>, vector<8x16xf32>
    %276 = tpu.iota {dimensions = array<i32: 0>} : vector<16x16xi32>
    %277 = tpu.iota {dimensions = array<i32: 1>} : vector<16x16xi32>
    %c0_i32_108 = arith.constant 0 : i32
    %278 = vector.broadcast %c0_i32_108 : i32 to vector<16x16xi32>
    %279 = arith.cmpi sge, %276, %278 : vector<16x16xi32>
    %c8_i32_109 = arith.constant 8 : i32
    %280 = vector.broadcast %c8_i32_109 : i32 to vector<16x16xi32>
    %281 = arith.cmpi slt, %276, %280 : vector<16x16xi32>
    %282 = arith.andi %279, %281 : vector<16x16xi1>
    %c0_i32_110 = arith.constant 0 : i32
    %283 = vector.broadcast %c0_i32_110 : i32 to vector<16x16xi32>
    %284 = arith.cmpi sge, %277, %283 : vector<16x16xi32>
    %285 = arith.andi %282, %284 : vector<16x16xi1>
    %c8_i32_111 = arith.constant 8 : i32
    %286 = vector.broadcast %c8_i32_111 : i32 to vector<16x16xi32>
    %287 = arith.cmpi slt, %277, %286 : vector<16x16xi32>
    %288 = arith.andi %285, %287 : vector<16x16xi1>
    %c8_i32_112 = arith.constant 8 : i32
    %289 = vector.broadcast %c8_i32_112 : i32 to vector<16x16xi32>
    %290 = arith.cmpi sge, %276, %289 : vector<16x16xi32>
    %c16_i32_113 = arith.constant 16 : i32
    %291 = vector.broadcast %c16_i32_113 : i32 to vector<16x16xi32>
    %292 = arith.cmpi slt, %276, %291 : vector<16x16xi32>
    %293 = arith.andi %290, %292 : vector<16x16xi1>
    %c8_i32_114 = arith.constant 8 : i32
    %294 = vector.broadcast %c8_i32_114 : i32 to vector<16x16xi32>
    %295 = arith.cmpi sge, %277, %294 : vector<16x16xi32>
    %296 = arith.andi %293, %295 : vector<16x16xi1>
    %c16_i32_115 = arith.constant 16 : i32
    %297 = vector.broadcast %c16_i32_115 : i32 to vector<16x16xi32>
    %298 = arith.cmpi slt, %277, %297 : vector<16x16xi32>
    %299 = arith.andi %296, %298 : vector<16x16xi1>
    %300 = arith.ori %288, %299 : vector<16x16xi1>
    %cst_116 = arith.constant 1.250000e-01 : f32
    %cst_117 = arith.constant 0.000000e+00 : f32
    %301 = vector.broadcast %cst_116 : f32 to vector<16x16xf32>
    %302 = vector.broadcast %cst_117 : f32 to vector<16x16xf32>
    %303 = arith.select %300, %301, %302 : vector<16x16xi1>, vector<16x16xf32>
    %cst_118 = arith.constant dense<0.000000e+00> : vector<8x16xf32>
    %304 = tpu.matmul %275, %303, %cst_118 {dimension_numbers = #tpu.dot_dimension_numbers<[1], [0], [0], [1], [0, 0, 1, 1], [], []>} : vector<8x16xf32>, vector<16x16xf32>, vector<8x16xf32> -> vector<8x16xf32>
    %305 = arith.subf %275, %304 : vector<8x16xf32>
    %306 = arith.mulf %305, %305 : vector<8x16xf32>
    %cst_119 = arith.constant dense<0.000000e+00> : vector<8x16xf32>
    %307 = tpu.matmul %306, %303, %cst_119 {dimension_numbers = #tpu.dot_dimension_numbers<[1], [0], [0], [1], [0, 0, 1, 1], [], []>} : vector<8x16xf32>, vector<16x16xf32>, vector<8x16xf32> -> vector<8x16xf32>
    %cst_120 = arith.constant 9.99999974E-6 : f32
    %308 = vector.broadcast %cst_120 : f32 to vector<8x16xf32>
    %309 = arith.addf %307, %308 : vector<8x16xf32>
    %310 = math.rsqrt %309 : vector<8x16xf32>
    %311 = arith.mulf %305, %310 : vector<8x16xf32>
    %312 = tpu.iota {dimensions = array<i32: 0>} : vector<16x8xi32>
    %313 = tpu.iota {dimensions = array<i32: 1>} : vector<16x8xi32>
    %c2_i32_121 = arith.constant 2 : i32
    %314 = vector.broadcast %c2_i32_121 : i32 to vector<16x8xi32>
    %315 = arith.muli %314, %313 : vector<16x8xi32>
    %c0_i32_122 = arith.constant 0 : i32
    %316 = vector.broadcast %c0_i32_122 : i32 to vector<16x8xi32>
    %317 = arith.addi %315, %316 : vector<16x8xi32>
    %318 = arith.cmpi eq, %312, %317 : vector<16x8xi32>
    %cst_123 = arith.constant 1.000000e+00 : f32
    %cst_124 = arith.constant 0.000000e+00 : f32
    %319 = vector.broadcast %cst_123 : f32 to vector<16x8xf32>
    %320 = vector.broadcast %cst_124 : f32 to vector<16x8xf32>
    %321 = arith.select %318, %319, %320 : vector<16x8xi1>, vector<16x8xf32>
    %cst_125 = arith.constant dense<0.000000e+00> : vector<8x8xf32>
    %322 = tpu.matmul %311, %321, %cst_125 {dimension_numbers = #tpu.dot_dimension_numbers<[1], [0], [0], [1], [0, 0, 1, 1], [], []>} : vector<8x16xf32>, vector<16x8xf32>, vector<8x8xf32> -> vector<8x8xf32>
    %323 = tpu.iota {dimensions = array<i32: 0>} : vector<16x8xi32>
    %324 = tpu.iota {dimensions = array<i32: 1>} : vector<16x8xi32>
    %c2_i32_126 = arith.constant 2 : i32
    %325 = vector.broadcast %c2_i32_126 : i32 to vector<16x8xi32>
    %326 = arith.muli %325, %324 : vector<16x8xi32>
    %c1_i32_127 = arith.constant 1 : i32
    %327 = vector.broadcast %c1_i32_127 : i32 to vector<16x8xi32>
    %328 = arith.addi %326, %327 : vector<16x8xi32>
    %329 = arith.cmpi eq, %323, %328 : vector<16x8xi32>
    %cst_128 = arith.constant 1.000000e+00 : f32
    %cst_129 = arith.constant 0.000000e+00 : f32
    %330 = vector.broadcast %cst_128 : f32 to vector<16x8xf32>
    %331 = vector.broadcast %cst_129 : f32 to vector<16x8xf32>
    %332 = arith.select %329, %330, %331 : vector<16x8xi1>, vector<16x8xf32>
    %cst_130 = arith.constant dense<0.000000e+00> : vector<8x8xf32>
    %333 = tpu.matmul %311, %332, %cst_130 {dimension_numbers = #tpu.dot_dimension_numbers<[1], [0], [0], [1], [0, 0, 1, 1], [], []>} : vector<8x16xf32>, vector<16x8xf32>, vector<8x8xf32> -> vector<8x8xf32>
    %334 = arith.maximumf %322, %333 : vector<8x8xf32>
    %c0_131 = arith.constant 0 : index
    %c0_132 = arith.constant 0 : index
    %c0_133 = arith.constant 0 : index
    %335 = vector.load %arg9[%c0_131, %c0_132, %c0_133] : memref<3x16x8xf32, #tpu.memory_space<vmem>>, vector<3x16x8xf32>
    %c0_134 = arith.constant 0 : index
    %c0_135 = arith.constant 0 : index
    %336 = vector.load %arg10[%c0_134, %c0_135] : memref<16x1xf32, #tpu.memory_space<vmem>>, vector<16x1xf32>
    %c0_136 = arith.constant 0 : index
    %c0_137 = arith.constant 0 : index
    %c0_138 = arith.constant 0 : index
    %337 = vector.load %arg11[%c0_136, %c0_137, %c0_138] : memref<3x16x16xf32, #tpu.memory_space<vmem>>, vector<3x16x16xf32>
    %c0_139 = arith.constant 0 : index
    %c0_140 = arith.constant 0 : index
    %338 = vector.load %arg12[%c0_139, %c0_140] : memref<16x1xf32, #tpu.memory_space<vmem>>, vector<16x1xf32>
    %339 = vector.extract_strided_slice %335 {offsets = [0, 0, 0], sizes = [1, 16, 8], strides = [1, 1, 1]} : vector<3x16x8xf32> to vector<1x16x8xf32>
    %340 = vector.shape_cast %339 : vector<1x16x8xf32> to vector<16x8xf32>
    %cst_141 = arith.constant dense<0.000000e+00> : vector<16x8xf32>
    %341 = tpu.matmul %340, %334, %cst_141 {dimension_numbers = #tpu.dot_dimension_numbers<[1], [0], [0], [1], [0, 0, 1, 1], [], []>} : vector<16x8xf32>, vector<8x8xf32>, vector<16x8xf32> -> vector<16x8xf32>
    %342 = vector.extract_strided_slice %335 {offsets = [1, 0, 0], sizes = [1, 16, 8], strides = [1, 1, 1]} : vector<3x16x8xf32> to vector<1x16x8xf32>
    %343 = vector.shape_cast %342 : vector<1x16x8xf32> to vector<16x8xf32>
    %cst_142 = arith.constant dense<0.000000e+00> : vector<16x8xf32>
    %344 = tpu.matmul %343, %334, %cst_142 {dimension_numbers = #tpu.dot_dimension_numbers<[1], [0], [0], [1], [0, 0, 1, 1], [], []>} : vector<16x8xf32>, vector<8x8xf32>, vector<16x8xf32> -> vector<16x8xf32>
    %345 = vector.extract_strided_slice %335 {offsets = [2, 0, 0], sizes = [1, 16, 8], strides = [1, 1, 1]} : vector<3x16x8xf32> to vector<1x16x8xf32>
    %346 = vector.shape_cast %345 : vector<1x16x8xf32> to vector<16x8xf32>
    %cst_143 = arith.constant dense<0.000000e+00> : vector<16x8xf32>
    %347 = tpu.matmul %346, %334, %cst_143 {dimension_numbers = #tpu.dot_dimension_numbers<[1], [0], [0], [1], [0, 0, 1, 1], [], []>} : vector<16x8xf32>, vector<8x8xf32>, vector<16x8xf32> -> vector<16x8xf32>
    %348 = tpu.iota {dimensions = array<i32: 0>} : vector<8x8xi32>
    %349 = tpu.iota {dimensions = array<i32: 1>} : vector<8x8xi32>
    %c-1_i32_144 = arith.constant -1 : i32
    %350 = vector.broadcast %c-1_i32_144 : i32 to vector<8x8xi32>
    %351 = arith.addi %349, %350 : vector<8x8xi32>
    %352 = arith.cmpi eq, %348, %351 : vector<8x8xi32>
    %c0_i32_145 = arith.constant 0 : i32
    %353 = vector.broadcast %c0_i32_145 : i32 to vector<8x8xi32>
    %354 = arith.cmpi sge, %348, %353 : vector<8x8xi32>
    %c4_i32 = arith.constant 4 : i32
    %355 = vector.broadcast %c4_i32 : i32 to vector<8x8xi32>
    %356 = arith.cmpi slt, %348, %355 : vector<8x8xi32>
    %357 = arith.andi %354, %356 : vector<8x8xi1>
    %c0_i32_146 = arith.constant 0 : i32
    %358 = vector.broadcast %c0_i32_146 : i32 to vector<8x8xi32>
    %359 = arith.cmpi sge, %349, %358 : vector<8x8xi32>
    %360 = arith.andi %357, %359 : vector<8x8xi1>
    %c4_i32_147 = arith.constant 4 : i32
    %361 = vector.broadcast %c4_i32_147 : i32 to vector<8x8xi32>
    %362 = arith.cmpi slt, %349, %361 : vector<8x8xi32>
    %363 = arith.andi %360, %362 : vector<8x8xi1>
    %c4_i32_148 = arith.constant 4 : i32
    %364 = vector.broadcast %c4_i32_148 : i32 to vector<8x8xi32>
    %365 = arith.cmpi sge, %348, %364 : vector<8x8xi32>
    %c8_i32_149 = arith.constant 8 : i32
    %366 = vector.broadcast %c8_i32_149 : i32 to vector<8x8xi32>
    %367 = arith.cmpi slt, %348, %366 : vector<8x8xi32>
    %368 = arith.andi %365, %367 : vector<8x8xi1>
    %c4_i32_150 = arith.constant 4 : i32
    %369 = vector.broadcast %c4_i32_150 : i32 to vector<8x8xi32>
    %370 = arith.cmpi sge, %349, %369 : vector<8x8xi32>
    %371 = arith.andi %368, %370 : vector<8x8xi1>
    %c8_i32_151 = arith.constant 8 : i32
    %372 = vector.broadcast %c8_i32_151 : i32 to vector<8x8xi32>
    %373 = arith.cmpi slt, %349, %372 : vector<8x8xi32>
    %374 = arith.andi %371, %373 : vector<8x8xi1>
    %375 = arith.ori %363, %374 : vector<8x8xi1>
    %376 = arith.andi %352, %375 : vector<8x8xi1>
    %cst_152 = arith.constant 1.000000e+00 : f32
    %cst_153 = arith.constant 0.000000e+00 : f32
    %377 = vector.broadcast %cst_152 : f32 to vector<8x8xf32>
    %378 = vector.broadcast %cst_153 : f32 to vector<8x8xf32>
    %379 = arith.select %376, %377, %378 : vector<8x8xi1>, vector<8x8xf32>
    %cst_154 = arith.constant dense<0.000000e+00> : vector<16x8xf32>
    %380 = tpu.matmul %341, %379, %cst_154 {dimension_numbers = #tpu.dot_dimension_numbers<[1], [0], [0], [1], [0, 0, 1, 1], [], []>} : vector<16x8xf32>, vector<8x8xf32>, vector<16x8xf32> -> vector<16x8xf32>
    %381 = arith.addf %344, %380 : vector<16x8xf32>
    %382 = tpu.iota {dimensions = array<i32: 0>} : vector<8x8xi32>
    %383 = tpu.iota {dimensions = array<i32: 1>} : vector<8x8xi32>
    %c1_i32_155 = arith.constant 1 : i32
    %384 = vector.broadcast %c1_i32_155 : i32 to vector<8x8xi32>
    %385 = arith.addi %383, %384 : vector<8x8xi32>
    %386 = arith.cmpi eq, %382, %385 : vector<8x8xi32>
    %c0_i32_156 = arith.constant 0 : i32
    %387 = vector.broadcast %c0_i32_156 : i32 to vector<8x8xi32>
    %388 = arith.cmpi sge, %382, %387 : vector<8x8xi32>
    %c4_i32_157 = arith.constant 4 : i32
    %389 = vector.broadcast %c4_i32_157 : i32 to vector<8x8xi32>
    %390 = arith.cmpi slt, %382, %389 : vector<8x8xi32>
    %391 = arith.andi %388, %390 : vector<8x8xi1>
    %c0_i32_158 = arith.constant 0 : i32
    %392 = vector.broadcast %c0_i32_158 : i32 to vector<8x8xi32>
    %393 = arith.cmpi sge, %383, %392 : vector<8x8xi32>
    %394 = arith.andi %391, %393 : vector<8x8xi1>
    %c4_i32_159 = arith.constant 4 : i32
    %395 = vector.broadcast %c4_i32_159 : i32 to vector<8x8xi32>
    %396 = arith.cmpi slt, %383, %395 : vector<8x8xi32>
    %397 = arith.andi %394, %396 : vector<8x8xi1>
    %c4_i32_160 = arith.constant 4 : i32
    %398 = vector.broadcast %c4_i32_160 : i32 to vector<8x8xi32>
    %399 = arith.cmpi sge, %382, %398 : vector<8x8xi32>
    %c8_i32_161 = arith.constant 8 : i32
    %400 = vector.broadcast %c8_i32_161 : i32 to vector<8x8xi32>
    %401 = arith.cmpi slt, %382, %400 : vector<8x8xi32>
    %402 = arith.andi %399, %401 : vector<8x8xi1>
    %c4_i32_162 = arith.constant 4 : i32
    %403 = vector.broadcast %c4_i32_162 : i32 to vector<8x8xi32>
    %404 = arith.cmpi sge, %383, %403 : vector<8x8xi32>
    %405 = arith.andi %402, %404 : vector<8x8xi1>
    %c8_i32_163 = arith.constant 8 : i32
    %406 = vector.broadcast %c8_i32_163 : i32 to vector<8x8xi32>
    %407 = arith.cmpi slt, %383, %406 : vector<8x8xi32>
    %408 = arith.andi %405, %407 : vector<8x8xi1>
    %409 = arith.ori %397, %408 : vector<8x8xi1>
    %410 = arith.andi %386, %409 : vector<8x8xi1>
    %cst_164 = arith.constant 1.000000e+00 : f32
    %cst_165 = arith.constant 0.000000e+00 : f32
    %411 = vector.broadcast %cst_164 : f32 to vector<8x8xf32>
    %412 = vector.broadcast %cst_165 : f32 to vector<8x8xf32>
    %413 = arith.select %410, %411, %412 : vector<8x8xi1>, vector<8x8xf32>
    %cst_166 = arith.constant dense<0.000000e+00> : vector<16x8xf32>
    %414 = tpu.matmul %347, %413, %cst_166 {dimension_numbers = #tpu.dot_dimension_numbers<[1], [0], [0], [1], [0, 0, 1, 1], [], []>} : vector<16x8xf32>, vector<8x8xf32>, vector<16x8xf32> -> vector<16x8xf32>
    %415 = arith.addf %381, %414 : vector<16x8xf32>
    %416 = vector.broadcast %336 : vector<16x1xf32> to vector<16x8xf32>
    %417 = arith.addf %415, %416 : vector<16x8xf32>
    %cst_167 = arith.constant 0.000000e+00 : f32
    %418 = vector.broadcast %cst_167 : f32 to vector<16x8xf32>
    %419 = arith.cmpf oge, %417, %418 : vector<16x8xf32>
    %cst_168 = arith.constant 0.00999999977 : f32
    %420 = vector.broadcast %cst_168 : f32 to vector<16x8xf32>
    %421 = arith.mulf %420, %417 : vector<16x8xf32>
    %422 = arith.select %419, %417, %421 : vector<16x8xi1>, vector<16x8xf32>
    %423 = vector.extract_strided_slice %337 {offsets = [0, 0, 0], sizes = [1, 16, 16], strides = [1, 1, 1]} : vector<3x16x16xf32> to vector<1x16x16xf32>
    %424 = vector.shape_cast %423 : vector<1x16x16xf32> to vector<16x16xf32>
    %cst_169 = arith.constant dense<0.000000e+00> : vector<16x8xf32>
    %425 = tpu.matmul %424, %422, %cst_169 {dimension_numbers = #tpu.dot_dimension_numbers<[1], [0], [0], [1], [0, 0, 1, 1], [], []>} : vector<16x16xf32>, vector<16x8xf32>, vector<16x8xf32> -> vector<16x8xf32>
    %426 = vector.extract_strided_slice %337 {offsets = [1, 0, 0], sizes = [1, 16, 16], strides = [1, 1, 1]} : vector<3x16x16xf32> to vector<1x16x16xf32>
    %427 = vector.shape_cast %426 : vector<1x16x16xf32> to vector<16x16xf32>
    %cst_170 = arith.constant dense<0.000000e+00> : vector<16x8xf32>
    %428 = tpu.matmul %427, %422, %cst_170 {dimension_numbers = #tpu.dot_dimension_numbers<[1], [0], [0], [1], [0, 0, 1, 1], [], []>} : vector<16x16xf32>, vector<16x8xf32>, vector<16x8xf32> -> vector<16x8xf32>
    %429 = vector.extract_strided_slice %337 {offsets = [2, 0, 0], sizes = [1, 16, 16], strides = [1, 1, 1]} : vector<3x16x16xf32> to vector<1x16x16xf32>
    %430 = vector.shape_cast %429 : vector<1x16x16xf32> to vector<16x16xf32>
    %cst_171 = arith.constant dense<0.000000e+00> : vector<16x8xf32>
    %431 = tpu.matmul %430, %422, %cst_171 {dimension_numbers = #tpu.dot_dimension_numbers<[1], [0], [0], [1], [0, 0, 1, 1], [], []>} : vector<16x16xf32>, vector<16x8xf32>, vector<16x8xf32> -> vector<16x8xf32>
    %cst_172 = arith.constant dense<0.000000e+00> : vector<16x8xf32>
    %432 = tpu.matmul %425, %379, %cst_172 {dimension_numbers = #tpu.dot_dimension_numbers<[1], [0], [0], [1], [0, 0, 1, 1], [], []>} : vector<16x8xf32>, vector<8x8xf32>, vector<16x8xf32> -> vector<16x8xf32>
    %433 = arith.addf %428, %432 : vector<16x8xf32>
    %cst_173 = arith.constant dense<0.000000e+00> : vector<16x8xf32>
    %434 = tpu.matmul %431, %413, %cst_173 {dimension_numbers = #tpu.dot_dimension_numbers<[1], [0], [0], [1], [0, 0, 1, 1], [], []>} : vector<16x8xf32>, vector<8x8xf32>, vector<16x8xf32> -> vector<16x8xf32>
    %435 = arith.addf %433, %434 : vector<16x8xf32>
    %436 = vector.broadcast %338 : vector<16x1xf32> to vector<16x8xf32>
    %437 = arith.addf %435, %436 : vector<16x8xf32>
    %cst_174 = arith.constant 0.000000e+00 : f32
    %438 = vector.broadcast %cst_174 : f32 to vector<16x8xf32>
    %439 = arith.cmpf oge, %437, %438 : vector<16x8xf32>
    %cst_175 = arith.constant 0.00999999977 : f32
    %440 = vector.broadcast %cst_175 : f32 to vector<16x8xf32>
    %441 = arith.mulf %440, %437 : vector<16x8xf32>
    %442 = arith.select %439, %437, %441 : vector<16x8xi1>, vector<16x8xf32>
    %443 = tpu.iota {dimensions = array<i32: 0>} : vector<8x8xi32>
    %444 = tpu.iota {dimensions = array<i32: 1>} : vector<8x8xi32>
    %c0_i32_176 = arith.constant 0 : i32
    %445 = vector.broadcast %c0_i32_176 : i32 to vector<8x8xi32>
    %446 = arith.cmpi sge, %443, %445 : vector<8x8xi32>
    %c4_i32_177 = arith.constant 4 : i32
    %447 = vector.broadcast %c4_i32_177 : i32 to vector<8x8xi32>
    %448 = arith.cmpi slt, %443, %447 : vector<8x8xi32>
    %449 = arith.andi %446, %448 : vector<8x8xi1>
    %c0_i32_178 = arith.constant 0 : i32
    %450 = vector.broadcast %c0_i32_178 : i32 to vector<8x8xi32>
    %451 = arith.cmpi sge, %444, %450 : vector<8x8xi32>
    %452 = arith.andi %449, %451 : vector<8x8xi1>
    %c4_i32_179 = arith.constant 4 : i32
    %453 = vector.broadcast %c4_i32_179 : i32 to vector<8x8xi32>
    %454 = arith.cmpi slt, %444, %453 : vector<8x8xi32>
    %455 = arith.andi %452, %454 : vector<8x8xi1>
    %c4_i32_180 = arith.constant 4 : i32
    %456 = vector.broadcast %c4_i32_180 : i32 to vector<8x8xi32>
    %457 = arith.cmpi sge, %443, %456 : vector<8x8xi32>
    %c8_i32_181 = arith.constant 8 : i32
    %458 = vector.broadcast %c8_i32_181 : i32 to vector<8x8xi32>
    %459 = arith.cmpi slt, %443, %458 : vector<8x8xi32>
    %460 = arith.andi %457, %459 : vector<8x8xi1>
    %c4_i32_182 = arith.constant 4 : i32
    %461 = vector.broadcast %c4_i32_182 : i32 to vector<8x8xi32>
    %462 = arith.cmpi sge, %444, %461 : vector<8x8xi32>
    %463 = arith.andi %460, %462 : vector<8x8xi1>
    %c8_i32_183 = arith.constant 8 : i32
    %464 = vector.broadcast %c8_i32_183 : i32 to vector<8x8xi32>
    %465 = arith.cmpi slt, %444, %464 : vector<8x8xi32>
    %466 = arith.andi %463, %465 : vector<8x8xi1>
    %467 = arith.ori %455, %466 : vector<8x8xi1>
    %cst_184 = arith.constant 2.500000e-01 : f32
    %cst_185 = arith.constant 0.000000e+00 : f32
    %468 = vector.broadcast %cst_184 : f32 to vector<8x8xf32>
    %469 = vector.broadcast %cst_185 : f32 to vector<8x8xf32>
    %470 = arith.select %467, %468, %469 : vector<8x8xi1>, vector<8x8xf32>
    %cst_186 = arith.constant dense<0.000000e+00> : vector<16x8xf32>
    %471 = tpu.matmul %442, %470, %cst_186 {dimension_numbers = #tpu.dot_dimension_numbers<[1], [0], [0], [1], [0, 0, 1, 1], [], []>} : vector<16x8xf32>, vector<8x8xf32>, vector<16x8xf32> -> vector<16x8xf32>
    %472 = arith.subf %442, %471 : vector<16x8xf32>
    %473 = arith.mulf %472, %472 : vector<16x8xf32>
    %cst_187 = arith.constant dense<0.000000e+00> : vector<16x8xf32>
    %474 = tpu.matmul %473, %470, %cst_187 {dimension_numbers = #tpu.dot_dimension_numbers<[1], [0], [0], [1], [0, 0, 1, 1], [], []>} : vector<16x8xf32>, vector<8x8xf32>, vector<16x8xf32> -> vector<16x8xf32>
    %cst_188 = arith.constant 9.99999974E-6 : f32
    %475 = vector.broadcast %cst_188 : f32 to vector<16x8xf32>
    %476 = arith.addf %474, %475 : vector<16x8xf32>
    %477 = math.rsqrt %476 : vector<16x8xf32>
    %478 = arith.mulf %472, %477 : vector<16x8xf32>
    %c0_189 = arith.constant 0 : index
    %c0_190 = arith.constant 0 : index
    %c0_191 = arith.constant 0 : index
    %479 = vector.load %arg13[%c0_189, %c0_190, %c0_191] : memref<2x8x16xf32, #tpu.memory_space<vmem>>, vector<2x8x16xf32>
    %c0_192 = arith.constant 0 : index
    %c0_193 = arith.constant 0 : index
    %480 = vector.load %arg14[%c0_192, %c0_193] : memref<8x1xf32, #tpu.memory_space<vmem>>, vector<8x1xf32>
    %c0_194 = arith.constant 0 : index
    %c0_195 = arith.constant 0 : index
    %c0_196 = arith.constant 0 : index
    %481 = vector.load %arg15[%c0_194, %c0_195, %c0_196] : memref<3x8x8xf32, #tpu.memory_space<vmem>>, vector<3x8x8xf32>
    %c0_197 = arith.constant 0 : index
    %c0_198 = arith.constant 0 : index
    %c0_199 = arith.constant 0 : index
    %482 = vector.load %arg16[%c0_197, %c0_198, %c0_199] : memref<3x8x8xf32, #tpu.memory_space<vmem>>, vector<3x8x8xf32>
    %c0_200 = arith.constant 0 : index
    %c0_201 = arith.constant 0 : index
    %483 = vector.load %arg17[%c0_200, %c0_201] : memref<8x1xf32, #tpu.memory_space<vmem>>, vector<8x1xf32>
    %c0_202 = arith.constant 0 : index
    %c0_203 = arith.constant 0 : index
    %c0_204 = arith.constant 0 : index
    %484 = vector.load %arg18[%c0_202, %c0_203, %c0_204] : memref<3x8x8xf32, #tpu.memory_space<vmem>>, vector<3x8x8xf32>
    %c0_205 = arith.constant 0 : index
    %c0_206 = arith.constant 0 : index
    %485 = vector.load %arg19[%c0_205, %c0_206] : memref<8x1xf32, #tpu.memory_space<vmem>>, vector<8x1xf32>
    %486 = vector.extract_strided_slice %479 {offsets = [0, 0, 0], sizes = [1, 8, 16], strides = [1, 1, 1]} : vector<2x8x16xf32> to vector<1x8x16xf32>
    %487 = vector.shape_cast %486 : vector<1x8x16xf32> to vector<8x16xf32>
    %cst_207 = arith.constant dense<0.000000e+00> : vector<8x8xf32>
    %488 = tpu.matmul %487, %478, %cst_207 {dimension_numbers = #tpu.dot_dimension_numbers<[1], [0], [0], [1], [0, 0, 1, 1], [], []>} : vector<8x16xf32>, vector<16x8xf32>, vector<8x8xf32> -> vector<8x8xf32>
    %489 = vector.broadcast %480 : vector<8x1xf32> to vector<8x8xf32>
    %490 = arith.addf %488, %489 : vector<8x8xf32>
    %491 = vector.extract_strided_slice %479 {offsets = [1, 0, 0], sizes = [1, 8, 16], strides = [1, 1, 1]} : vector<2x8x16xf32> to vector<1x8x16xf32>
    %492 = vector.shape_cast %491 : vector<1x8x16xf32> to vector<8x16xf32>
    %cst_208 = arith.constant dense<0.000000e+00> : vector<8x8xf32>
    %493 = tpu.matmul %492, %478, %cst_208 {dimension_numbers = #tpu.dot_dimension_numbers<[1], [0], [0], [1], [0, 0, 1, 1], [], []>} : vector<8x16xf32>, vector<16x8xf32>, vector<8x8xf32> -> vector<8x8xf32>
    %494 = vector.broadcast %480 : vector<8x1xf32> to vector<8x8xf32>
    %495 = arith.addf %493, %494 : vector<8x8xf32>
    %496 = tpu.iota {dimensions = array<i32: 0>} : vector<8x16xi32>
    %497 = tpu.iota {dimensions = array<i32: 1>} : vector<8x16xi32>
    %c2_i32_209 = arith.constant 2 : i32
    %498 = vector.broadcast %c2_i32_209 : i32 to vector<8x16xi32>
    %499 = arith.muli %498, %496 : vector<8x16xi32>
    %c0_i32_210 = arith.constant 0 : i32
    %500 = vector.broadcast %c0_i32_210 : i32 to vector<8x16xi32>
    %501 = arith.addi %499, %500 : vector<8x16xi32>
    %502 = arith.cmpi eq, %497, %501 : vector<8x16xi32>
    %cst_211 = arith.constant 1.000000e+00 : f32
    %cst_212 = arith.constant 0.000000e+00 : f32
    %503 = vector.broadcast %cst_211 : f32 to vector<8x16xf32>
    %504 = vector.broadcast %cst_212 : f32 to vector<8x16xf32>
    %505 = arith.select %502, %503, %504 : vector<8x16xi1>, vector<8x16xf32>
    %cst_213 = arith.constant dense<0.000000e+00> : vector<8x16xf32>
    %506 = tpu.matmul %490, %505, %cst_213 {dimension_numbers = #tpu.dot_dimension_numbers<[1], [0], [0], [1], [0, 0, 1, 1], [], []>} : vector<8x8xf32>, vector<8x16xf32>, vector<8x16xf32> -> vector<8x16xf32>
    %507 = tpu.iota {dimensions = array<i32: 0>} : vector<8x16xi32>
    %508 = tpu.iota {dimensions = array<i32: 1>} : vector<8x16xi32>
    %c2_i32_214 = arith.constant 2 : i32
    %509 = vector.broadcast %c2_i32_214 : i32 to vector<8x16xi32>
    %510 = arith.muli %509, %507 : vector<8x16xi32>
    %c1_i32_215 = arith.constant 1 : i32
    %511 = vector.broadcast %c1_i32_215 : i32 to vector<8x16xi32>
    %512 = arith.addi %510, %511 : vector<8x16xi32>
    %513 = arith.cmpi eq, %508, %512 : vector<8x16xi32>
    %cst_216 = arith.constant 1.000000e+00 : f32
    %cst_217 = arith.constant 0.000000e+00 : f32
    %514 = vector.broadcast %cst_216 : f32 to vector<8x16xf32>
    %515 = vector.broadcast %cst_217 : f32 to vector<8x16xf32>
    %516 = arith.select %513, %514, %515 : vector<8x16xi1>, vector<8x16xf32>
    %cst_218 = arith.constant dense<0.000000e+00> : vector<8x16xf32>
    %517 = tpu.matmul %495, %516, %cst_218 {dimension_numbers = #tpu.dot_dimension_numbers<[1], [0], [0], [1], [0, 0, 1, 1], [], []>} : vector<8x8xf32>, vector<8x16xf32>, vector<8x16xf32> -> vector<8x16xf32>
    %518 = arith.addf %506, %517 : vector<8x16xf32>
    %519 = vector.extract_strided_slice %481 {offsets = [0, 0, 0], sizes = [1, 8, 8], strides = [1, 1, 1]} : vector<3x8x8xf32> to vector<1x8x8xf32>
    %520 = vector.shape_cast %519 : vector<1x8x8xf32> to vector<8x8xf32>
    %cst_219 = arith.constant dense<0.000000e+00> : vector<8x16xf32>
    %521 = tpu.matmul %520, %311, %cst_219 {dimension_numbers = #tpu.dot_dimension_numbers<[1], [0], [0], [1], [0, 0, 1, 1], [], []>} : vector<8x8xf32>, vector<8x16xf32>, vector<8x16xf32> -> vector<8x16xf32>
    %522 = vector.extract_strided_slice %482 {offsets = [0, 0, 0], sizes = [1, 8, 8], strides = [1, 1, 1]} : vector<3x8x8xf32> to vector<1x8x8xf32>
    %523 = vector.shape_cast %522 : vector<1x8x8xf32> to vector<8x8xf32>
    %cst_220 = arith.constant dense<0.000000e+00> : vector<8x16xf32>
    %524 = tpu.matmul %523, %518, %cst_220 {dimension_numbers = #tpu.dot_dimension_numbers<[1], [0], [0], [1], [0, 0, 1, 1], [], []>} : vector<8x8xf32>, vector<8x16xf32>, vector<8x16xf32> -> vector<8x16xf32>
    %525 = arith.addf %521, %524 : vector<8x16xf32>
    %526 = vector.extract_strided_slice %481 {offsets = [1, 0, 0], sizes = [1, 8, 8], strides = [1, 1, 1]} : vector<3x8x8xf32> to vector<1x8x8xf32>
    %527 = vector.shape_cast %526 : vector<1x8x8xf32> to vector<8x8xf32>
    %cst_221 = arith.constant dense<0.000000e+00> : vector<8x16xf32>
    %528 = tpu.matmul %527, %311, %cst_221 {dimension_numbers = #tpu.dot_dimension_numbers<[1], [0], [0], [1], [0, 0, 1, 1], [], []>} : vector<8x8xf32>, vector<8x16xf32>, vector<8x16xf32> -> vector<8x16xf32>
    %529 = vector.extract_strided_slice %482 {offsets = [1, 0, 0], sizes = [1, 8, 8], strides = [1, 1, 1]} : vector<3x8x8xf32> to vector<1x8x8xf32>
    %530 = vector.shape_cast %529 : vector<1x8x8xf32> to vector<8x8xf32>
    %cst_222 = arith.constant dense<0.000000e+00> : vector<8x16xf32>
    %531 = tpu.matmul %530, %518, %cst_222 {dimension_numbers = #tpu.dot_dimension_numbers<[1], [0], [0], [1], [0, 0, 1, 1], [], []>} : vector<8x8xf32>, vector<8x16xf32>, vector<8x16xf32> -> vector<8x16xf32>
    %532 = arith.addf %528, %531 : vector<8x16xf32>
    %533 = vector.extract_strided_slice %481 {offsets = [2, 0, 0], sizes = [1, 8, 8], strides = [1, 1, 1]} : vector<3x8x8xf32> to vector<1x8x8xf32>
    %534 = vector.shape_cast %533 : vector<1x8x8xf32> to vector<8x8xf32>
    %cst_223 = arith.constant dense<0.000000e+00> : vector<8x16xf32>
    %535 = tpu.matmul %534, %311, %cst_223 {dimension_numbers = #tpu.dot_dimension_numbers<[1], [0], [0], [1], [0, 0, 1, 1], [], []>} : vector<8x8xf32>, vector<8x16xf32>, vector<8x16xf32> -> vector<8x16xf32>
    %536 = vector.extract_strided_slice %482 {offsets = [2, 0, 0], sizes = [1, 8, 8], strides = [1, 1, 1]} : vector<3x8x8xf32> to vector<1x8x8xf32>
    %537 = vector.shape_cast %536 : vector<1x8x8xf32> to vector<8x8xf32>
    %cst_224 = arith.constant dense<0.000000e+00> : vector<8x16xf32>
    %538 = tpu.matmul %537, %518, %cst_224 {dimension_numbers = #tpu.dot_dimension_numbers<[1], [0], [0], [1], [0, 0, 1, 1], [], []>} : vector<8x8xf32>, vector<8x16xf32>, vector<8x16xf32> -> vector<8x16xf32>
    %539 = arith.addf %535, %538 : vector<8x16xf32>
    %cst_225 = arith.constant dense<0.000000e+00> : vector<8x16xf32>
    %540 = tpu.matmul %525, %212, %cst_225 {dimension_numbers = #tpu.dot_dimension_numbers<[1], [0], [0], [1], [0, 0, 1, 1], [], []>} : vector<8x16xf32>, vector<16x16xf32>, vector<8x16xf32> -> vector<8x16xf32>
    %541 = arith.addf %532, %540 : vector<8x16xf32>
    %cst_226 = arith.constant dense<0.000000e+00> : vector<8x16xf32>
    %542 = tpu.matmul %539, %246, %cst_226 {dimension_numbers = #tpu.dot_dimension_numbers<[1], [0], [0], [1], [0, 0, 1, 1], [], []>} : vector<8x16xf32>, vector<16x16xf32>, vector<8x16xf32> -> vector<8x16xf32>
    %543 = arith.addf %541, %542 : vector<8x16xf32>
    %544 = vector.broadcast %483 : vector<8x1xf32> to vector<8x16xf32>
    %545 = arith.addf %543, %544 : vector<8x16xf32>
    %cst_227 = arith.constant 0.000000e+00 : f32
    %546 = vector.broadcast %cst_227 : f32 to vector<8x16xf32>
    %547 = arith.cmpf oge, %545, %546 : vector<8x16xf32>
    %cst_228 = arith.constant 0.00999999977 : f32
    %548 = vector.broadcast %cst_228 : f32 to vector<8x16xf32>
    %549 = arith.mulf %548, %545 : vector<8x16xf32>
    %550 = arith.select %547, %545, %549 : vector<8x16xi1>, vector<8x16xf32>
    %551 = vector.extract_strided_slice %484 {offsets = [0, 0, 0], sizes = [1, 8, 8], strides = [1, 1, 1]} : vector<3x8x8xf32> to vector<1x8x8xf32>
    %552 = vector.shape_cast %551 : vector<1x8x8xf32> to vector<8x8xf32>
    %cst_229 = arith.constant dense<0.000000e+00> : vector<8x16xf32>
    %553 = tpu.matmul %552, %550, %cst_229 {dimension_numbers = #tpu.dot_dimension_numbers<[1], [0], [0], [1], [0, 0, 1, 1], [], []>} : vector<8x8xf32>, vector<8x16xf32>, vector<8x16xf32> -> vector<8x16xf32>
    %554 = vector.extract_strided_slice %484 {offsets = [1, 0, 0], sizes = [1, 8, 8], strides = [1, 1, 1]} : vector<3x8x8xf32> to vector<1x8x8xf32>
    %555 = vector.shape_cast %554 : vector<1x8x8xf32> to vector<8x8xf32>
    %cst_230 = arith.constant dense<0.000000e+00> : vector<8x16xf32>
    %556 = tpu.matmul %555, %550, %cst_230 {dimension_numbers = #tpu.dot_dimension_numbers<[1], [0], [0], [1], [0, 0, 1, 1], [], []>} : vector<8x8xf32>, vector<8x16xf32>, vector<8x16xf32> -> vector<8x16xf32>
    %557 = vector.extract_strided_slice %484 {offsets = [2, 0, 0], sizes = [1, 8, 8], strides = [1, 1, 1]} : vector<3x8x8xf32> to vector<1x8x8xf32>
    %558 = vector.shape_cast %557 : vector<1x8x8xf32> to vector<8x8xf32>
    %cst_231 = arith.constant dense<0.000000e+00> : vector<8x16xf32>
    %559 = tpu.matmul %558, %550, %cst_231 {dimension_numbers = #tpu.dot_dimension_numbers<[1], [0], [0], [1], [0, 0, 1, 1], [], []>} : vector<8x8xf32>, vector<8x16xf32>, vector<8x16xf32> -> vector<8x16xf32>
    %cst_232 = arith.constant dense<0.000000e+00> : vector<8x16xf32>
    %560 = tpu.matmul %553, %212, %cst_232 {dimension_numbers = #tpu.dot_dimension_numbers<[1], [0], [0], [1], [0, 0, 1, 1], [], []>} : vector<8x16xf32>, vector<16x16xf32>, vector<8x16xf32> -> vector<8x16xf32>
    %561 = arith.addf %556, %560 : vector<8x16xf32>
    %cst_233 = arith.constant dense<0.000000e+00> : vector<8x16xf32>
    %562 = tpu.matmul %559, %246, %cst_233 {dimension_numbers = #tpu.dot_dimension_numbers<[1], [0], [0], [1], [0, 0, 1, 1], [], []>} : vector<8x16xf32>, vector<16x16xf32>, vector<8x16xf32> -> vector<8x16xf32>
    %563 = arith.addf %561, %562 : vector<8x16xf32>
    %564 = vector.broadcast %485 : vector<8x1xf32> to vector<8x16xf32>
    %565 = arith.addf %563, %564 : vector<8x16xf32>
    %cst_234 = arith.constant 0.000000e+00 : f32
    %566 = vector.broadcast %cst_234 : f32 to vector<8x16xf32>
    %567 = arith.cmpf oge, %565, %566 : vector<8x16xf32>
    %cst_235 = arith.constant 0.00999999977 : f32
    %568 = vector.broadcast %cst_235 : f32 to vector<8x16xf32>
    %569 = arith.mulf %568, %565 : vector<8x16xf32>
    %570 = arith.select %567, %565, %569 : vector<8x16xi1>, vector<8x16xf32>
    %cst_236 = arith.constant dense<0.000000e+00> : vector<8x16xf32>
    %571 = tpu.matmul %570, %303, %cst_236 {dimension_numbers = #tpu.dot_dimension_numbers<[1], [0], [0], [1], [0, 0, 1, 1], [], []>} : vector<8x16xf32>, vector<16x16xf32>, vector<8x16xf32> -> vector<8x16xf32>
    %572 = arith.subf %570, %571 : vector<8x16xf32>
    %573 = arith.mulf %572, %572 : vector<8x16xf32>
    %cst_237 = arith.constant dense<0.000000e+00> : vector<8x16xf32>
    %574 = tpu.matmul %573, %303, %cst_237 {dimension_numbers = #tpu.dot_dimension_numbers<[1], [0], [0], [1], [0, 0, 1, 1], [], []>} : vector<8x16xf32>, vector<16x16xf32>, vector<8x16xf32> -> vector<8x16xf32>
    %cst_238 = arith.constant 9.99999974E-6 : f32
    %575 = vector.broadcast %cst_238 : f32 to vector<8x16xf32>
    %576 = arith.addf %574, %575 : vector<8x16xf32>
    %577 = math.rsqrt %576 : vector<8x16xf32>
    %578 = arith.mulf %572, %577 : vector<8x16xf32>
    %c0_239 = arith.constant 0 : index
    %c0_240 = arith.constant 0 : index
    %c0_241 = arith.constant 0 : index
    %579 = vector.load %arg20[%c0_239, %c0_240, %c0_241] : memref<2x4x8xf32, #tpu.memory_space<vmem>>, vector<2x4x8xf32>
    %c0_242 = arith.constant 0 : index
    %c0_243 = arith.constant 0 : index
    %580 = vector.load %arg21[%c0_242, %c0_243] : memref<4x1xf32, #tpu.memory_space<vmem>>, vector<4x1xf32>
    %c0_244 = arith.constant 0 : index
    %c0_245 = arith.constant 0 : index
    %c0_246 = arith.constant 0 : index
    %581 = vector.load %arg22[%c0_244, %c0_245, %c0_246] : memref<3x4x4xf32, #tpu.memory_space<vmem>>, vector<3x4x4xf32>
    %c0_247 = arith.constant 0 : index
    %c0_248 = arith.constant 0 : index
    %c0_249 = arith.constant 0 : index
    %582 = vector.load %arg23[%c0_247, %c0_248, %c0_249] : memref<3x4x4xf32, #tpu.memory_space<vmem>>, vector<3x4x4xf32>
    %c0_250 = arith.constant 0 : index
    %c0_251 = arith.constant 0 : index
    %583 = vector.load %arg24[%c0_250, %c0_251] : memref<4x1xf32, #tpu.memory_space<vmem>>, vector<4x1xf32>
    %c0_252 = arith.constant 0 : index
    %c0_253 = arith.constant 0 : index
    %c0_254 = arith.constant 0 : index
    %584 = vector.load %arg25[%c0_252, %c0_253, %c0_254] : memref<3x4x4xf32, #tpu.memory_space<vmem>>, vector<3x4x4xf32>
    %c0_255 = arith.constant 0 : index
    %c0_256 = arith.constant 0 : index
    %585 = vector.load %arg26[%c0_255, %c0_256] : memref<4x1xf32, #tpu.memory_space<vmem>>, vector<4x1xf32>
    %586 = vector.extract_strided_slice %579 {offsets = [0, 0, 0], sizes = [1, 4, 8], strides = [1, 1, 1]} : vector<2x4x8xf32> to vector<1x4x8xf32>
    %587 = vector.shape_cast %586 : vector<1x4x8xf32> to vector<4x8xf32>
    %cst_257 = arith.constant dense<0.000000e+00> : vector<4x16xf32>
    %588 = tpu.matmul %587, %578, %cst_257 {dimension_numbers = #tpu.dot_dimension_numbers<[1], [0], [0], [1], [0, 0, 1, 1], [], []>} : vector<4x8xf32>, vector<8x16xf32>, vector<4x16xf32> -> vector<4x16xf32>
    %589 = vector.broadcast %580 : vector<4x1xf32> to vector<4x16xf32>
    %590 = arith.addf %588, %589 : vector<4x16xf32>
    %591 = vector.extract_strided_slice %579 {offsets = [1, 0, 0], sizes = [1, 4, 8], strides = [1, 1, 1]} : vector<2x4x8xf32> to vector<1x4x8xf32>
    %592 = vector.shape_cast %591 : vector<1x4x8xf32> to vector<4x8xf32>
    %cst_258 = arith.constant dense<0.000000e+00> : vector<4x16xf32>
    %593 = tpu.matmul %592, %578, %cst_258 {dimension_numbers = #tpu.dot_dimension_numbers<[1], [0], [0], [1], [0, 0, 1, 1], [], []>} : vector<4x8xf32>, vector<8x16xf32>, vector<4x16xf32> -> vector<4x16xf32>
    %594 = vector.broadcast %580 : vector<4x1xf32> to vector<4x16xf32>
    %595 = arith.addf %593, %594 : vector<4x16xf32>
    %596 = tpu.iota {dimensions = array<i32: 0>} : vector<16x32xi32>
    %597 = tpu.iota {dimensions = array<i32: 1>} : vector<16x32xi32>
    %c2_i32_259 = arith.constant 2 : i32
    %598 = vector.broadcast %c2_i32_259 : i32 to vector<16x32xi32>
    %599 = arith.muli %598, %596 : vector<16x32xi32>
    %c0_i32_260 = arith.constant 0 : i32
    %600 = vector.broadcast %c0_i32_260 : i32 to vector<16x32xi32>
    %601 = arith.addi %599, %600 : vector<16x32xi32>
    %602 = arith.cmpi eq, %597, %601 : vector<16x32xi32>
    %cst_261 = arith.constant 1.000000e+00 : f32
    %cst_262 = arith.constant 0.000000e+00 : f32
    %603 = vector.broadcast %cst_261 : f32 to vector<16x32xf32>
    %604 = vector.broadcast %cst_262 : f32 to vector<16x32xf32>
    %605 = arith.select %602, %603, %604 : vector<16x32xi1>, vector<16x32xf32>
    %cst_263 = arith.constant dense<0.000000e+00> : vector<4x32xf32>
    %606 = tpu.matmul %590, %605, %cst_263 {dimension_numbers = #tpu.dot_dimension_numbers<[1], [0], [0], [1], [0, 0, 1, 1], [], []>} : vector<4x16xf32>, vector<16x32xf32>, vector<4x32xf32> -> vector<4x32xf32>
    %607 = tpu.iota {dimensions = array<i32: 0>} : vector<16x32xi32>
    %608 = tpu.iota {dimensions = array<i32: 1>} : vector<16x32xi32>
    %c2_i32_264 = arith.constant 2 : i32
    %609 = vector.broadcast %c2_i32_264 : i32 to vector<16x32xi32>
    %610 = arith.muli %609, %607 : vector<16x32xi32>
    %c1_i32_265 = arith.constant 1 : i32
    %611 = vector.broadcast %c1_i32_265 : i32 to vector<16x32xi32>
    %612 = arith.addi %610, %611 : vector<16x32xi32>
    %613 = arith.cmpi eq, %608, %612 : vector<16x32xi32>
    %cst_266 = arith.constant 1.000000e+00 : f32
    %cst_267 = arith.constant 0.000000e+00 : f32
    %614 = vector.broadcast %cst_266 : f32 to vector<16x32xf32>
    %615 = vector.broadcast %cst_267 : f32 to vector<16x32xf32>
    %616 = arith.select %613, %614, %615 : vector<16x32xi1>, vector<16x32xf32>
    %cst_268 = arith.constant dense<0.000000e+00> : vector<4x32xf32>
    %617 = tpu.matmul %595, %616, %cst_268 {dimension_numbers = #tpu.dot_dimension_numbers<[1], [0], [0], [1], [0, 0, 1, 1], [], []>} : vector<4x16xf32>, vector<16x32xf32>, vector<4x32xf32> -> vector<4x32xf32>
    %618 = arith.addf %606, %617 : vector<4x32xf32>
    %619 = vector.extract_strided_slice %581 {offsets = [0, 0, 0], sizes = [1, 4, 4], strides = [1, 1, 1]} : vector<3x4x4xf32> to vector<1x4x4xf32>
    %620 = vector.shape_cast %619 : vector<1x4x4xf32> to vector<4x4xf32>
    %cst_269 = arith.constant dense<0.000000e+00> : vector<4x32xf32>
    %621 = tpu.matmul %620, %144, %cst_269 {dimension_numbers = #tpu.dot_dimension_numbers<[1], [0], [0], [1], [0, 0, 1, 1], [], []>} : vector<4x4xf32>, vector<4x32xf32>, vector<4x32xf32> -> vector<4x32xf32>
    %622 = vector.extract_strided_slice %582 {offsets = [0, 0, 0], sizes = [1, 4, 4], strides = [1, 1, 1]} : vector<3x4x4xf32> to vector<1x4x4xf32>
    %623 = vector.shape_cast %622 : vector<1x4x4xf32> to vector<4x4xf32>
    %cst_270 = arith.constant dense<0.000000e+00> : vector<4x32xf32>
    %624 = tpu.matmul %623, %618, %cst_270 {dimension_numbers = #tpu.dot_dimension_numbers<[1], [0], [0], [1], [0, 0, 1, 1], [], []>} : vector<4x4xf32>, vector<4x32xf32>, vector<4x32xf32> -> vector<4x32xf32>
    %625 = arith.addf %621, %624 : vector<4x32xf32>
    %626 = vector.extract_strided_slice %581 {offsets = [1, 0, 0], sizes = [1, 4, 4], strides = [1, 1, 1]} : vector<3x4x4xf32> to vector<1x4x4xf32>
    %627 = vector.shape_cast %626 : vector<1x4x4xf32> to vector<4x4xf32>
    %cst_271 = arith.constant dense<0.000000e+00> : vector<4x32xf32>
    %628 = tpu.matmul %627, %144, %cst_271 {dimension_numbers = #tpu.dot_dimension_numbers<[1], [0], [0], [1], [0, 0, 1, 1], [], []>} : vector<4x4xf32>, vector<4x32xf32>, vector<4x32xf32> -> vector<4x32xf32>
    %629 = vector.extract_strided_slice %582 {offsets = [1, 0, 0], sizes = [1, 4, 4], strides = [1, 1, 1]} : vector<3x4x4xf32> to vector<1x4x4xf32>
    %630 = vector.shape_cast %629 : vector<1x4x4xf32> to vector<4x4xf32>
    %cst_272 = arith.constant dense<0.000000e+00> : vector<4x32xf32>
    %631 = tpu.matmul %630, %618, %cst_272 {dimension_numbers = #tpu.dot_dimension_numbers<[1], [0], [0], [1], [0, 0, 1, 1], [], []>} : vector<4x4xf32>, vector<4x32xf32>, vector<4x32xf32> -> vector<4x32xf32>
    %632 = arith.addf %628, %631 : vector<4x32xf32>
    %633 = vector.extract_strided_slice %581 {offsets = [2, 0, 0], sizes = [1, 4, 4], strides = [1, 1, 1]} : vector<3x4x4xf32> to vector<1x4x4xf32>
    %634 = vector.shape_cast %633 : vector<1x4x4xf32> to vector<4x4xf32>
    %cst_273 = arith.constant dense<0.000000e+00> : vector<4x32xf32>
    %635 = tpu.matmul %634, %144, %cst_273 {dimension_numbers = #tpu.dot_dimension_numbers<[1], [0], [0], [1], [0, 0, 1, 1], [], []>} : vector<4x4xf32>, vector<4x32xf32>, vector<4x32xf32> -> vector<4x32xf32>
    %636 = vector.extract_strided_slice %582 {offsets = [2, 0, 0], sizes = [1, 4, 4], strides = [1, 1, 1]} : vector<3x4x4xf32> to vector<1x4x4xf32>
    %637 = vector.shape_cast %636 : vector<1x4x4xf32> to vector<4x4xf32>
    %cst_274 = arith.constant dense<0.000000e+00> : vector<4x32xf32>
    %638 = tpu.matmul %637, %618, %cst_274 {dimension_numbers = #tpu.dot_dimension_numbers<[1], [0], [0], [1], [0, 0, 1, 1], [], []>} : vector<4x4xf32>, vector<4x32xf32>, vector<4x32xf32> -> vector<4x32xf32>
    %639 = arith.addf %635, %638 : vector<4x32xf32>
    %cst_275 = arith.constant dense<0.000000e+00> : vector<4x32xf32>
    %640 = tpu.matmul %625, %45, %cst_275 {dimension_numbers = #tpu.dot_dimension_numbers<[1], [0], [0], [1], [0, 0, 1, 1], [], []>} : vector<4x32xf32>, vector<32x32xf32>, vector<4x32xf32> -> vector<4x32xf32>
    %641 = arith.addf %632, %640 : vector<4x32xf32>
    %cst_276 = arith.constant dense<0.000000e+00> : vector<4x32xf32>
    %642 = tpu.matmul %639, %79, %cst_276 {dimension_numbers = #tpu.dot_dimension_numbers<[1], [0], [0], [1], [0, 0, 1, 1], [], []>} : vector<4x32xf32>, vector<32x32xf32>, vector<4x32xf32> -> vector<4x32xf32>
    %643 = arith.addf %641, %642 : vector<4x32xf32>
    %644 = vector.broadcast %583 : vector<4x1xf32> to vector<4x32xf32>
    %645 = arith.addf %643, %644 : vector<4x32xf32>
    %cst_277 = arith.constant 0.000000e+00 : f32
    %646 = vector.broadcast %cst_277 : f32 to vector<4x32xf32>
    %647 = arith.cmpf oge, %645, %646 : vector<4x32xf32>
    %cst_278 = arith.constant 0.00999999977 : f32
    %648 = vector.broadcast %cst_278 : f32 to vector<4x32xf32>
    %649 = arith.mulf %648, %645 : vector<4x32xf32>
    %650 = arith.select %647, %645, %649 : vector<4x32xi1>, vector<4x32xf32>
    %651 = vector.extract_strided_slice %584 {offsets = [0, 0, 0], sizes = [1, 4, 4], strides = [1, 1, 1]} : vector<3x4x4xf32> to vector<1x4x4xf32>
    %652 = vector.shape_cast %651 : vector<1x4x4xf32> to vector<4x4xf32>
    %cst_279 = arith.constant dense<0.000000e+00> : vector<4x32xf32>
    %653 = tpu.matmul %652, %650, %cst_279 {dimension_numbers = #tpu.dot_dimension_numbers<[1], [0], [0], [1], [0, 0, 1, 1], [], []>} : vector<4x4xf32>, vector<4x32xf32>, vector<4x32xf32> -> vector<4x32xf32>
    %654 = vector.extract_strided_slice %584 {offsets = [1, 0, 0], sizes = [1, 4, 4], strides = [1, 1, 1]} : vector<3x4x4xf32> to vector<1x4x4xf32>
    %655 = vector.shape_cast %654 : vector<1x4x4xf32> to vector<4x4xf32>
    %cst_280 = arith.constant dense<0.000000e+00> : vector<4x32xf32>
    %656 = tpu.matmul %655, %650, %cst_280 {dimension_numbers = #tpu.dot_dimension_numbers<[1], [0], [0], [1], [0, 0, 1, 1], [], []>} : vector<4x4xf32>, vector<4x32xf32>, vector<4x32xf32> -> vector<4x32xf32>
    %657 = vector.extract_strided_slice %584 {offsets = [2, 0, 0], sizes = [1, 4, 4], strides = [1, 1, 1]} : vector<3x4x4xf32> to vector<1x4x4xf32>
    %658 = vector.shape_cast %657 : vector<1x4x4xf32> to vector<4x4xf32>
    %cst_281 = arith.constant dense<0.000000e+00> : vector<4x32xf32>
    %659 = tpu.matmul %658, %650, %cst_281 {dimension_numbers = #tpu.dot_dimension_numbers<[1], [0], [0], [1], [0, 0, 1, 1], [], []>} : vector<4x4xf32>, vector<4x32xf32>, vector<4x32xf32> -> vector<4x32xf32>
    %cst_282 = arith.constant dense<0.000000e+00> : vector<4x32xf32>
    %660 = tpu.matmul %653, %45, %cst_282 {dimension_numbers = #tpu.dot_dimension_numbers<[1], [0], [0], [1], [0, 0, 1, 1], [], []>} : vector<4x32xf32>, vector<32x32xf32>, vector<4x32xf32> -> vector<4x32xf32>
    %661 = arith.addf %656, %660 : vector<4x32xf32>
    %cst_283 = arith.constant dense<0.000000e+00> : vector<4x32xf32>
    %662 = tpu.matmul %659, %79, %cst_283 {dimension_numbers = #tpu.dot_dimension_numbers<[1], [0], [0], [1], [0, 0, 1, 1], [], []>} : vector<4x32xf32>, vector<32x32xf32>, vector<4x32xf32> -> vector<4x32xf32>
    %663 = arith.addf %661, %662 : vector<4x32xf32>
    %664 = vector.broadcast %585 : vector<4x1xf32> to vector<4x32xf32>
    %665 = arith.addf %663, %664 : vector<4x32xf32>
    %cst_284 = arith.constant 0.000000e+00 : f32
    %666 = vector.broadcast %cst_284 : f32 to vector<4x32xf32>
    %667 = arith.cmpf oge, %665, %666 : vector<4x32xf32>
    %cst_285 = arith.constant 0.00999999977 : f32
    %668 = vector.broadcast %cst_285 : f32 to vector<4x32xf32>
    %669 = arith.mulf %668, %665 : vector<4x32xf32>
    %670 = arith.select %667, %665, %669 : vector<4x32xi1>, vector<4x32xf32>
    %cst_286 = arith.constant dense<0.000000e+00> : vector<4x32xf32>
    %671 = tpu.matmul %670, %136, %cst_286 {dimension_numbers = #tpu.dot_dimension_numbers<[1], [0], [0], [1], [0, 0, 1, 1], [], []>} : vector<4x32xf32>, vector<32x32xf32>, vector<4x32xf32> -> vector<4x32xf32>
    %672 = arith.subf %670, %671 : vector<4x32xf32>
    %673 = arith.mulf %672, %672 : vector<4x32xf32>
    %cst_287 = arith.constant dense<0.000000e+00> : vector<4x32xf32>
    %674 = tpu.matmul %673, %136, %cst_287 {dimension_numbers = #tpu.dot_dimension_numbers<[1], [0], [0], [1], [0, 0, 1, 1], [], []>} : vector<4x32xf32>, vector<32x32xf32>, vector<4x32xf32> -> vector<4x32xf32>
    %cst_288 = arith.constant 9.99999974E-6 : f32
    %675 = vector.broadcast %cst_288 : f32 to vector<4x32xf32>
    %676 = arith.addf %674, %675 : vector<4x32xf32>
    %677 = math.rsqrt %676 : vector<4x32xf32>
    %678 = arith.mulf %672, %677 : vector<4x32xf32>
    %c0_289 = arith.constant 0 : index
    %c0_290 = arith.constant 0 : index
    %679 = vector.load %arg27[%c0_289, %c0_290] : memref<2x4xf32, #tpu.memory_space<vmem>>, vector<2x4xf32>
    %c0_291 = arith.constant 0 : index
    %c0_292 = arith.constant 0 : index
    %680 = vector.load %arg28[%c0_291, %c0_292] : memref<2x1xf32, #tpu.memory_space<vmem>>, vector<2x1xf32>
    %cst_293 = arith.constant dense<0.000000e+00> : vector<2x32xf32>
    %681 = tpu.matmul %679, %678, %cst_293 {dimension_numbers = #tpu.dot_dimension_numbers<[1], [0], [0], [1], [0, 0, 1, 1], [], []>} : vector<2x4xf32>, vector<4x32xf32>, vector<2x32xf32> -> vector<2x32xf32>
    %682 = vector.broadcast %680 : vector<2x1xf32> to vector<2x32xf32>
    %683 = arith.addf %681, %682 : vector<2x32xf32>
    %c0_294 = arith.constant 0 : index
    %c0_295 = arith.constant 0 : index
    %684 = vector.load %arg29[%c0_294, %c0_295] : memref<2x32xf32, #tpu.memory_space<vmem>>, vector<2x32xf32>
    tpu.vector_store %arg29[%c0_294, %c0_295], %683 {strides = array<i32>} : memref<2x32xf32, #tpu.memory_space<vmem>>, vector<2x32xf32>,
    return
  }
}

</mosaic_0001>

<llo_original>
// kernel: _unet_forward.1
$region0: #{_unet_forward.1}
  #allocation0 [shape = 'u32[]', space=smem, size = 0x4, offset = 0x4, fixed_abs, tag = 'smem constant byte address 0x4 - core index']
  #allocation1 [shape = 'u32[144,128]{1,0:T(1,128)}', space=vmem, size = 0x12000, scoped, tag = 'internal scratch']
  %s0 = inlined_call_operand.smem [shape: u32[30], index: -1, kind: input, shape index: {}]
  %s1 = sld [smem:[%s0]]
  %s2 = scalar_lea.smem %s0, 1
  %s3 = sld [smem:[%s2]]
  %s4 = scalar_lea.smem %s0, 2
  %s5 = sld [smem:[%s4]]
  %s6 = scalar_lea.smem %s0, 3
  %s7 = sld [smem:[%s6]]
  %s8 = scalar_lea.smem %s0, 4
  %s9 = sld [smem:[%s8]]
  %s10 = scalar_lea.smem %s0, 5
  %s11 = sld [smem:[%s10]]
  %s12 = scalar_lea.smem %s0, 6
  %s13 = sld [smem:[%s12]]
  %s14 = scalar_lea.smem %s0, 7
  %s15 = sld [smem:[%s14]]
  %s16 = scalar_lea.smem %s0, 8
  %s17 = sld [smem:[%s16]]
  %s18 = scalar_lea.smem %s0, 9
  %s19 = sld [smem:[%s18]]
  %s20 = scalar_lea.smem %s0, 10
  %s21 = sld [smem:[%s20]]
  %s22 = scalar_lea.smem %s0, 11
  %s23 = sld [smem:[%s22]]
  %s24 = scalar_lea.smem %s0, 12
  %s25 = sld [smem:[%s24]]
  %s26 = scalar_lea.smem %s0, 13
  %s27 = sld [smem:[%s26]]
  %s28 = scalar_lea.smem %s0, 14
  %s29 = sld [smem:[%s28]]
  %s30 = scalar_lea.smem %s0, 15
  %s31 = sld [smem:[%s30]]
  %s32 = scalar_lea.smem %s0, 16
  %s33 = sld [smem:[%s32]]
  %s34 = scalar_lea.smem %s0, 17
  %s35 = sld [smem:[%s34]]
  %s36 = scalar_lea.smem %s0, 18
  %s37 = sld [smem:[%s36]]
  %s38 = scalar_lea.smem %s0, 19
  %s39 = sld [smem:[%s38]]
  %s40 = scalar_lea.smem %s0, 20
  %s41 = sld [smem:[%s40]]
  %s42 = scalar_lea.smem %s0, 21
  %s43 = sld [smem:[%s42]]
  %s44 = scalar_lea.smem %s0, 22
  %s45 = sld [smem:[%s44]]
  %s46 = scalar_lea.smem %s0, 23
  %s47 = sld [smem:[%s46]]
  %s48 = scalar_lea.smem %s0, 24
  %s49 = sld [smem:[%s48]]
  %s50 = scalar_lea.smem %s0, 25
  %s51 = sld [smem:[%s50]]
  %s52 = scalar_lea.smem %s0, 26
  %s53 = sld [smem:[%s52]]
  %s54 = scalar_lea.smem %s0, 27
  %s55 = sld [smem:[%s54]]
  %s56 = scalar_lea.smem %s0, 28
  %s57 = sld [smem:[%s56]]
  %s58 = scalar_lea.smem %s0, 29
  %s59 = sld [smem:[%s58]]
  %s60 = sld [smem:[#allocation0]]
  $region126: #{_unet_forward.1} parent=0
    _
  %s62 = ssub.s32 1, %s60
  %s63 = scalar_select 0, %s62, %s60
  // Predicated region
  $region2: #{_unet_forward.1} parent=0 // pred_check
    _
  $region3: #{_unet_forward.1} parent=0 // pred_check_branch
    %65 = sbr.rel (0) target = $region5
  $region4: #{_unet_forward.1} parent=0 // pred_region
    _
  $region5: #{_unet_forward.1} parent=0 // pred_fallthru
    _
  // Predicated region
  $region6: #{_unet_forward.1} parent=0 // pred_check
    _
  $region7: #{_unet_forward.1} parent=0 // pred_check_branch
    %67 = sbr.rel (0) target = $region9
  $region8: #{_unet_forward.1} parent=0 // pred_region
    _
  $region9: #{_unet_forward.1} parent=0 // pred_fallthru
    _
  // Predicated region
  $region10: #{_unet_forward.1} parent=0 // pred_check
    _
  $region11: #{_unet_forward.1} parent=0 // pred_check_branch
    %69 = sbr.rel (0) target = $region13
  $region12: #{_unet_forward.1} parent=0 // pred_region
    _
  $region13: #{_unet_forward.1} parent=0 // pred_fallthru
    _
  // Predicated region
  $region14: #{_unet_forward.1} parent=0 // pred_check
    _
  $region15: #{_unet_forward.1} parent=0 // pred_check_branch
    %71 = sbr.rel (0) target = $region17
  $region16: #{_unet_forward.1} parent=0 // pred_region
    _
  $region17: #{_unet_forward.1} parent=0 // pred_fallthru
    _
  // Predicated region
  $region18: #{_unet_forward.1} parent=0 // pred_check
    _
  $region19: #{_unet_forward.1} parent=0 // pred_check_branch
    %73 = sbr.rel (0) target = $region21
  $region20: #{_unet_forward.1} parent=0 // pred_region
    _
  $region21: #{_unet_forward.1} parent=0 // pred_fallthru
    _
  // Predicated region
  $region22: #{_unet_forward.1} parent=0 // pred_check
    _
  $region23: #{_unet_forward.1} parent=0 // pred_check_branch
    %75 = sbr.rel (0) target = $region25
  $region24: #{_unet_forward.1} parent=0 // pred_region
    _
  $region25: #{_unet_forward.1} parent=0 // pred_fallthru
    _
  // Predicated region
  $region26: #{_unet_forward.1} parent=0 // pred_check
    _
  $region27: #{_unet_forward.1} parent=0 // pred_check_branch
    %77 = sbr.rel (0) target = $region29
  $region28: #{_unet_forward.1} parent=0 // pred_region
    _
  $region29: #{_unet_forward.1} parent=0 // pred_fallthru
    _
  // Predicated region
  $region30: #{_unet_forward.1} parent=0 // pred_check
    _
  $region31: #{_unet_forward.1} parent=0 // pred_check_branch
    %79 = sbr.rel (0) target = $region33
  $region32: #{_unet_forward.1} parent=0 // pred_region
    _
  $region33: #{_unet_forward.1} parent=0 // pred_fallthru
    _
  // Predicated region
  $region34: #{_unet_forward.1} parent=0 // pred_check
    _
  $region35: #{_unet_forward.1} parent=0 // pred_check_branch
    %81 = sbr.rel (0) target = $region37
  $region36: #{_unet_forward.1} parent=0 // pred_region
    _
  $region37: #{_unet_forward.1} parent=0 // pred_fallthru
    _
  // Predicated region
  $region38: #{_unet_forward.1} parent=0 // pred_check
    _
  $region39: #{_unet_forward.1} parent=0 // pred_check_branch
    %83 = sbr.rel (0) target = $region41
  $region40: #{_unet_forward.1} parent=0 // pred_region
    _
  $region41: #{_unet_forward.1} parent=0 // pred_fallthru
    _
  // Predicated region
  $region42: #{_unet_forward.1} parent=0 // pred_check
    _
  $region43: #{_unet_forward.1} parent=0 // pred_check_branch
    %85 = sbr.rel (0) target = $region45
  $region44: #{_unet_forward.1} parent=0 // pred_region
    _
  $region45: #{_unet_forward.1} parent=0 // pred_fallthru
    _
  // Predicated region
  $region46: #{_unet_forward.1} parent=0 // pred_check
    _
  $region47: #{_unet_forward.1} parent=0 // pred_check_branch
    %87 = sbr.rel (0) target = $region49
  $region48: #{_unet_forward.1} parent=0 // pred_region
    _
  $region49: #{_unet_forward.1} parent=0 // pred_fallthru
    _
  // Predicated region
  $region50: #{_unet_forward.1} parent=0 // pred_check
    _
  $region51: #{_unet_forward.1} parent=0 // pred_check_branch
    %89 = sbr.rel (0) target = $region53
  $region52: #{_unet_forward.1} parent=0 // pred_region
    _
  $region53: #{_unet_forward.1} parent=0 // pred_fallthru
    _
  // Predicated region
  $region54: #{_unet_forward.1} parent=0 // pred_check
    _
  $region55: #{_unet_forward.1} parent=0 // pred_check_branch
    %91 = sbr.rel (0) target = $region57
  $region56: #{_unet_forward.1} parent=0 // pred_region
    _
  $region57: #{_unet_forward.1} parent=0 // pred_fallthru
    _
  // Predicated region
  $region58: #{_unet_forward.1} parent=0 // pred_check
    _
  $region59: #{_unet_forward.1} parent=0 // pred_check_branch
    %93 = sbr.rel (0) target = $region61
  $region60: #{_unet_forward.1} parent=0 // pred_region
    _
  $region61: #{_unet_forward.1} parent=0 // pred_fallthru
    _
  // Predicated region
  $region62: #{_unet_forward.1} parent=0 // pred_check
    _
  $region63: #{_unet_forward.1} parent=0 // pred_check_branch
    %95 = sbr.rel (0) target = $region65
  $region64: #{_unet_forward.1} parent=0 // pred_region
    _
  $region65: #{_unet_forward.1} parent=0 // pred_fallthru
    _
  // Predicated region
  $region66: #{_unet_forward.1} parent=0 // pred_check
    _
  $region67: #{_unet_forward.1} parent=0 // pred_check_branch
    %97 = sbr.rel (0) target = $region69
  $region68: #{_unet_forward.1} parent=0 // pred_region
    _
  $region69: #{_unet_forward.1} parent=0 // pred_fallthru
    _
  // Predicated region
  $region70: #{_unet_forward.1} parent=0 // pred_check
    _
  $region71: #{_unet_forward.1} parent=0 // pred_check_branch
    %99 = sbr.rel (0) target = $region73
  $region72: #{_unet_forward.1} parent=0 // pred_region
    _
  $region73: #{_unet_forward.1} parent=0 // pred_fallthru
    _
  // Predicated region
  $region74: #{_unet_forward.1} parent=0 // pred_check
    _
  $region75: #{_unet_forward.1} parent=0 // pred_check_branch
    %101 = sbr.rel (0) target = $region77
  $region76: #{_unet_forward.1} parent=0 // pred_region
    _
  $region77: #{_unet_forward.1} parent=0 // pred_fallthru
    _
  // Predicated region
  $region78: #{_unet_forward.1} parent=0 // pred_check
    _
  $region79: #{_unet_forward.1} parent=0 // pred_check_branch
    %103 = sbr.rel (0) target = $region81
  $region80: #{_unet_forward.1} parent=0 // pred_region
    _
  $region81: #{_unet_forward.1} parent=0 // pred_fallthru
    _
  // Predicated region
  $region82: #{_unet_forward.1} parent=0 // pred_check
    _
  $region83: #{_unet_forward.1} parent=0 // pred_check_branch
    %105 = sbr.rel (0) target = $region85
  $region84: #{_unet_forward.1} parent=0 // pred_region
    _
  $region85: #{_unet_forward.1} parent=0 // pred_fallthru
    _
  // Predicated region
  $region86: #{_unet_forward.1} parent=0 // pred_check
    _
  $region87: #{_unet_forward.1} parent=0 // pred_check_branch
    %107 = sbr.rel (0) target = $region89
  $region88: #{_unet_forward.1} parent=0 // pred_region
    _
  $region89: #{_unet_forward.1} parent=0 // pred_fallthru
    _
  // Predicated region
  $region90: #{_unet_forward.1} parent=0 // pred_check
    _
  $region91: #{_unet_forward.1} parent=0 // pred_check_branch
    %109 = sbr.rel (0) target = $region93
  $region92: #{_unet_forward.1} parent=0 // pred_region
    _
  $region93: #{_unet_forward.1} parent=0 // pred_fallthru
    _
  // Predicated region
  $region94: #{_unet_forward.1} parent=0 // pred_check
    _
  $region95: #{_unet_forward.1} parent=0 // pred_check_branch
    %111 = sbr.rel (0) target = $region97
  $region96: #{_unet_forward.1} parent=0 // pred_region
    _
  $region97: #{_unet_forward.1} parent=0 // pred_fallthru
    _
  // Predicated region
  $region98: #{_unet_forward.1} parent=0 // pred_check
    _
  $region99: #{_unet_forward.1} parent=0 // pred_check_branch
    %113 = sbr.rel (0) target = $region101
  $region100: #{_unet_forward.1} parent=0 // pred_region
    _
  $region101: #{_unet_forward.1} parent=0 // pred_fallthru
    _
  // Predicated region
  $region102: #{_unet_forward.1} parent=0 // pred_check
    _
  $region103: #{_unet_forward.1} parent=0 // pred_check_branch
    %115 = sbr.rel (0) target = $region105
  $region104: #{_unet_forward.1} parent=0 // pred_region
    _
  $region105: #{_unet_forward.1} parent=0 // pred_fallthru
    _
  // Predicated region
  $region106: #{_unet_forward.1} parent=0 // pred_check
    _
  $region107: #{_unet_forward.1} parent=0 // pred_check_branch
    %117 = sbr.rel (0) target = $region109
  $region108: #{_unet_forward.1} parent=0 // pred_region
    _
  $region109: #{_unet_forward.1} parent=0 // pred_fallthru
    _
  // Predicated region
  $region110: #{_unet_forward.1} parent=0 // pred_check
    _
  $region111: #{_unet_forward.1} parent=0 // pred_check_branch
    %119 = sbr.rel (0) target = $region113
  $region112: #{_unet_forward.1} parent=0 // pred_region
    _
  $region113: #{_unet_forward.1} parent=0 // pred_fallthru
    _
  // Predicated region
  $region114: #{_unet_forward.1} parent=0 // pred_check
    _
  $region115: #{_unet_forward.1} parent=0 // pred_check_branch
    %121 = sbr.rel (0) target = $region117
  $region116: #{_unet_forward.1} parent=0 // pred_region
    _
  $region117: #{_unet_forward.1} parent=0 // pred_fallthru
    _
  %v122 = vld [vmem:[%s1] sm:$0x3]
  %v123 = vld [vmem:[%s3] sm:$0xf]
  %v124 = vld [vmem:[%s3 + $0x4] sm:$0xf]
  %v125 = vld [vmem:[%s3 + $0x8] sm:$0xf]
  %v126 = vld [vmem:[%s5] sm:$0xf]
  %v127 = vld [vmem:[%s7] sm:$0xf]
  %v128 = vld [vmem:[%s7 + $0x4] sm:$0xf]
  %v129 = vld [vmem:[%s7 + $0x8] sm:$0xf]
  %v130 = vld [vmem:[%s9] sm:$0xf]
  %vm131 = vcmask 15360
  %v133 = vsel %vm131, %v123, 0
  %vm135 = vcmask 1041408
  %v137 = vsel %vm135, %v122, 0
  %139 = vmatprep.subr.mxu0 0.0
  %140 = vmatpush1.msra.mxu0 %v137
  %141 = vmatprep.subr.mxu0 0.0
  %142 = vmatpush1.msra.mxu0 0.0
  %143 = vmatprep.subr.mxu0 0.0
  %144 = vmatpush1.msra.mxu0 0.0
  %145 = vmatprep.subr.mxu0 0.0
  %146 = vmatpush1.msra.mxu0 0.0
  %147 = vmatprep.subr.mxu0 0.0
  %148 = vmatpush1.msra.mxu0 0.0
  %149 = vmatprep.subr.mxu0 0.0
  %150 = vmatpush1.msra.mxu0 0.0
  %151 = vmatprep.subr.mxu0 0.0
  %152 = vmatpush1.msra.mxu0 0.0
  %153 = vmatprep.subr.mxu0 0.0
  %154 = vmatpush1.msra.mxu0 0.0
  %155 = vmatprep.subr.mxu0 0.0
  %156 = vmatpush1.msra.mxu0 0.0
  %157 = vmatprep.subr.mxu0 0.0
  %158 = vmatpush1.msra.mxu0 0.0
  %159 = vmatprep.subr.mxu0 0.0
  %160 = vmatpush1.msra.mxu0 0.0
  %161 = vmatprep.subr.mxu0 0.0
  %162 = vmatpush1.msra.mxu0 0.0
  %163 = vmatprep.subr.mxu0 0.0
  %164 = vmatpush1.msra.mxu0 0.0
  %165 = vmatprep.subr.mxu0 0.0
  %166 = vmatpush1.msra.mxu0 0.0
  %167 = vmatprep.subr.mxu0 0.0
  %168 = vmatpush1.msra.mxu0 0.0
  %169 = vmatprep.subr.mxu0 0.0
  %170 = vmatpush1.msra.mxu0 0.0
  %171 = vmatprep.subr.mxu0 0.0
  %172 = vmatpush1.msra.mxu0 0.0
  %173 = vmatprep.subr.mxu0 0.0
  %174 = vmatpush1.msra.mxu0 0.0
  %175 = vmatprep.subr.mxu0 0.0
  %176 = vmatpush1.msra.mxu0 0.0
  %177 = vmatprep.subr.mxu0 0.0
  %178 = vmatpush1.msra.mxu0 0.0
  %179 = vmatprep.subr.mxu0 0.0
  %180 = vmatpush1.msra.mxu0 0.0
  %181 = vmatprep.subr.mxu0 0.0
  %182 = vmatpush1.msra.mxu0 0.0
  %183 = vmatprep.subr.mxu0 0.0
  %184 = vmatpush1.msra.mxu0 0.0
  %185 = vmatprep.subr.mxu0 0.0
  %186 = vmatpush1.msra.mxu0 0.0
  %187 = vmatprep.subr.mxu0 0.0
  %188 = vmatpush1.msra.mxu0 0.0
  %189 = vmatprep.subr.mxu0 0.0
  %190 = vmatpush1.msra.mxu0 0.0
  %191 = vmatprep.subr.mxu0 0.0
  %192 = vmatpush1.msra.mxu0 0.0
  %193 = vmatprep.subr.mxu0 0.0
  %194 = vmatpush1.msra.mxu0 0.0
  %195 = vmatprep.subr.mxu0 0.0
  %196 = vmatpush1.msra.mxu0 0.0
  %197 = vmatprep.subr.mxu0 0.0
  %198 = vmatpush1.msra.mxu0 0.0
  %199 = vmatprep.subr.mxu0 0.0
  %200 = vmatpush1.msra.mxu0 0.0
  %201 = vmatprep.subr.mxu0 0.0
  %202 = vmatpush1.msra.mxu0 0.0
  %203 = vmatprep.mubr.f32.mxu0 0.0
  %204 = vmatmul.mubr.f32.gmra.mrb[0].mxu0 %v133
  %v205 = vpop.f32.mrb[0].mxu0
  %v206 = vadd.f32 0.0, %v205
  %v207 = vpop.f32.mrb[0].mxu0
  %208 = vdwg.mxu0
  %v210 = vsel %vm131, %v125, 0
  %212 = vmatprep.subr.mxu0 0.0
  %213 = vmatpush1.msra.mxu0 %v137
  %214 = vmatprep.subr.mxu0 0.0
  %215 = vmatpush1.msra.mxu0 0.0
  %216 = vmatprep.subr.mxu0 0.0
  %217 = vmatpush1.msra.mxu0 0.0
  %218 = vmatprep.subr.mxu0 0.0
  %219 = vmatpush1.msra.mxu0 0.0
  %220 = vmatprep.subr.mxu0 0.0
  %221 = vmatpush1.msra.mxu0 0.0
  %222 = vmatprep.subr.mxu0 0.0
  %223 = vmatpush1.msra.mxu0 0.0
  %224 = vmatprep.subr.mxu0 0.0
  %225 = vmatpush1.msra.mxu0 0.0
  %226 = vmatprep.subr.mxu0 0.0
  %227 = vmatpush1.msra.mxu0 0.0
  %228 = vmatprep.subr.mxu0 0.0
  %229 = vmatpush1.msra.mxu0 0.0
  %230 = vmatprep.subr.mxu0 0.0
  %231 = vmatpush1.msra.mxu0 0.0
  %232 = vmatprep.subr.mxu0 0.0
  %233 = vmatpush1.msra.mxu0 0.0
  %234 = vmatprep.subr.mxu0 0.0
  %235 = vmatpush1.msra.mxu0 0.0
  %236 = vmatprep.subr.mxu0 0.0
  %237 = vmatpush1.msra.mxu0 0.0
  %238 = vmatprep.subr.mxu0 0.0
  %239 = vmatpush1.msra.mxu0 0.0
  %240 = vmatprep.subr.mxu0 0.0
  %241 = vmatpush1.msra.mxu0 0.0
  %242 = vmatprep.subr.mxu0 0.0
  %243 = vmatpush1.msra.mxu0 0.0
  %244 = vmatprep.subr.mxu0 0.0
  %245 = vmatpush1.msra.mxu0 0.0
  %246 = vmatprep.subr.mxu0 0.0
  %247 = vmatpush1.msra.mxu0 0.0
  %248 = vmatprep.subr.mxu0 0.0
  %249 = vmatpush1.msra.mxu0 0.0
  %250 = vmatprep.subr.mxu0 0.0
  %251 = vmatpush1.msra.mxu0 0.0
  %252 = vmatprep.subr.mxu0 0.0
  %253 = vmatpush1.msra.mxu0 0.0
  %254 = vmatprep.subr.mxu0 0.0
  %255 = vmatpush1.msra.mxu0 0.0
  %256 = vmatprep.subr.mxu0 0.0
  %257 = vmatpush1.msra.mxu0 0.0
  %258 = vmatprep.subr.mxu0 0.0
  %259 = vmatpush1.msra.mxu0 0.0
  %260 = vmatprep.subr.mxu0 0.0
  %261 = vmatpush1.msra.mxu0 0.0
  %262 = vmatprep.subr.mxu0 0.0
  %263 = vmatpush1.msra.mxu0 0.0
  %264 = vmatprep.subr.mxu0 0.0
  %265 = vmatpush1.msra.mxu0 0.0
  %266 = vmatprep.subr.mxu0 0.0
  %267 = vmatpush1.msra.mxu0 0.0
  %268 = vmatprep.subr.mxu0 0.0
  %269 = vmatpush1.msra.mxu0 0.0
  %270 = vmatprep.subr.mxu0 0.0
  %271 = vmatpush1.msra.mxu0 0.0
  %272 = vmatprep.subr.mxu0 0.0
  %273 = vmatpush1.msra.mxu0 0.0
  %274 = vmatprep.subr.mxu0 0.0
  %275 = vmatpush1.msra.mxu0 0.0
  %276 = vmatprep.mubr.f32.mxu0 0.0
  %277 = vmatmul.mubr.f32.gmra.mrb[0].mxu0 %v210
  %v278 = vpop.f32.mrb[0].mxu0
  %v279 = vadd.f32 0.0, %v278
  %v280 = vpop.f32.mrb[0].mxu0
  %281 = vdwg.mxu0
  %v282 = vlaneseq
  %v283 = vshrl.u32 %v282, 7
  %v284 = vadd.s32 %v283, 8
  %v285 = vadd.s32 %v283, 16
  %v286 = vadd.s32 %v283, 24
  %v287 = vlaneseq
  %v288 = vand.u32 %v287, 127
  %v289 = vadd.s32 %v288, 4294967295
  %vm290 = vcmp.eq.s32.totalorder %v283, %v289
  %vm291 = vcmp.eq.s32.totalorder %v284, %v289
  %vm292 = vcmp.eq.s32.totalorder %v285, %v289
  %vm293 = vcmp.eq.s32.totalorder %v286, %v289
  %vm294 = vcmp.ge.s32.totalorder %v283, 0
  %vm295 = vcmp.ge.s32.totalorder %v284, 0
  %vm296 = vcmp.ge.s32.totalorder %v285, 0
  %vm297 = vcmp.ge.s32.totalorder %v286, 0
  %vm298 = vcmp.lt.s32.totalorder %v283, 16
  %vm299 = vcmp.lt.s32.totalorder %v284, 16
  %vm300 = vcmp.lt.s32.totalorder %v285, 16
  %vm301 = vcmp.lt.s32.totalorder %v286, 16
  %vm302 = vmand %vm294, %vm298
  %vm303 = vmand %vm295, %vm299
  %vm304 = vmand %vm296, %vm300
  %vm305 = vmand %vm297, %vm301
  %vm306 = vcmp.ge.s32.totalorder %v288, 0
  %vm307 = vmand %vm302, %vm306
  %vm308 = vmand %vm303, %vm306
  %vm309 = vmand %vm304, %vm306
  %vm310 = vmand %vm305, %vm306
  %vm311 = vcmp.lt.s32.totalorder %v288, 16
  %vm312 = vmand %vm307, %vm311
  %vm313 = vmand %vm308, %vm311
  %vm314 = vmand %vm309, %vm311
  %vm315 = vmand %vm310, %vm311
  %vm316 = vcmp.ge.s32.totalorder %v283, 16
  %vm317 = vcmp.ge.s32.totalorder %v284, 16
  %vm318 = vcmp.ge.s32.totalorder %v285, 16
  %vm319 = vcmp.ge.s32.totalorder %v286, 16
  %vm320 = vcmp.lt.s32.totalorder %v283, 32
  %vm321 = vcmp.lt.s32.totalorder %v284, 32
  %vm322 = vcmp.lt.s32.totalorder %v285, 32
  %vm323 = vcmp.lt.s32.totalorder %v286, 32
  %vm324 = vmand %vm316, %vm320
  %vm325 = vmand %vm317, %vm321
  %vm326 = vmand %vm318, %vm322
  %vm327 = vmand %vm319, %vm323
  %vm328 = vcmp.ge.s32.totalorder %v288, 16
  %vm329 = vmand %vm324, %vm328
  %vm330 = vmand %vm325, %vm328
  %vm331 = vmand %vm326, %vm328
  %vm332 = vmand %vm327, %vm328
  %vm333 = vcmp.lt.s32.totalorder %v288, 32
  %vm334 = vmand %vm329, %vm333
  %vm335 = vmand %vm330, %vm333
  %vm336 = vmand %vm331, %vm333
  %vm337 = vmand %vm332, %vm333
  %vm338 = vmor %vm312, %vm334
  %vm339 = vmor %vm313, %vm335
  %vm340 = vmor %vm314, %vm336
  %vm341 = vmor %vm315, %vm337
  %vm342 = vmand %vm290, %vm338
  %vm343 = vmand %vm291, %vm339
  %vm344 = vmand %vm292, %vm340
  %vm345 = vmand %vm293, %vm341
  %v346 = vsel %vm342, 1.0, 0.0
  %v347 = vsel %vm343, 1.0, 0.0
  %v348 = vsel %vm344, 1.0, 0.0
  %v349 = vsel %vm345, 1.0, 0.0
  %vm350 = vcmask 261120
  %v352 = vsel %vm350, %v206, 0
  %354 = vmatprep.subr.mxu0 0.0
  %355 = vmatpush1.msra.mxu0 %v346
  %356 = vmatprep.subr.mxu0 0.0
  %357 = vmatpush1.msra.mxu0 %v347
  %358 = vmatprep.subr.mxu0 0.0
  %359 = vmatpush1.msra.mxu0 %v348
  %360 = vmatprep.subr.mxu0 0.0
  %361 = vmatpush1.msra.mxu0 %v349
  %362 = vmatprep.subr.mxu0 0.0
  %363 = vmatpush1.msra.mxu0 0.0
  %364 = vmatprep.subr.mxu0 0.0
  %365 = vmatpush1.msra.mxu0 0.0
  %366 = vmatprep.subr.mxu0 0.0
  %367 = vmatpush1.msra.mxu0 0.0
  %368 = vmatprep.subr.mxu0 0.0
  %369 = vmatpush1.msra.mxu0 0.0
  %370 = vmatprep.subr.mxu0 0.0
  %371 = vmatpush1.msra.mxu0 0.0
  %372 = vmatprep.subr.mxu0 0.0
  %373 = vmatpush1.msra.mxu0 0.0
  %374 = vmatprep.subr.mxu0 0.0
  %375 = vmatpush1.msra.mxu0 0.0
  %376 = vmatprep.subr.mxu0 0.0
  %377 = vmatpush1.msra.mxu0 0.0
  %378 = vmatprep.subr.mxu0 0.0
  %379 = vmatpush1.msra.mxu0 0.0
  %380 = vmatprep.subr.mxu0 0.0
  %381 = vmatpush1.msra.mxu0 0.0
  %382 = vmatprep.subr.mxu0 0.0
  %383 = vmatpush1.msra.mxu0 0.0
  %384 = vmatprep.subr.mxu0 0.0
  %385 = vmatpush1.msra.mxu0 0.0
  %386 = vmatprep.subr.mxu0 0.0
  %387 = vmatpush1.msra.mxu0 0.0
  %388 = vmatprep.subr.mxu0 0.0
  %389 = vmatpush1.msra.mxu0 0.0
  %390 = vmatprep.subr.mxu0 0.0
  %391 = vmatpush1.msra.mxu0 0.0
  %392 = vmatprep.subr.mxu0 0.0
  %393 = vmatpush1.msra.mxu0 0.0
  %394 = vmatprep.subr.mxu0 0.0
  %395 = vmatpush1.msra.mxu0 0.0
  %396 = vmatprep.subr.mxu0 0.0
  %397 = vmatpush1.msra.mxu0 0.0
  %398 = vmatprep.subr.mxu0 0.0
  %399 = vmatpush1.msra.mxu0 0.0
  %400 = vmatprep.subr.mxu0 0.0
  %401 = vmatpush1.msra.mxu0 0.0
  %402 = vmatprep.subr.mxu0 0.0
  %403 = vmatpush1.msra.mxu0 0.0
  %404 = vmatprep.subr.mxu0 0.0
  %405 = vmatpush1.msra.mxu0 0.0
  %406 = vmatprep.subr.mxu0 0.0
  %407 = vmatpush1.msra.mxu0 0.0
  %408 = vmatprep.subr.mxu0 0.0
  %409 = vmatpush1.msra.mxu0 0.0
  %410 = vmatprep.subr.mxu0 0.0
  %411 = vmatpush1.msra.mxu0 0.0
  %412 = vmatprep.subr.mxu0 0.0
  %413 = vmatpush1.msra.mxu0 0.0
  %414 = vmatprep.subr.mxu0 0.0
  %415 = vmatpush1.msra.mxu0 0.0
  %416 = vmatprep.subr.mxu0 0.0
  %417 = vmatpush1.msra.mxu0 0.0
  %418 = vmatprep.mubr.f32.mxu0 0.0
  %419 = vmatmul.mubr.f32.gmra.mrb[0].mxu0 %v352
  %v420 = vpop.f32.mrb[0].mxu0
  %v421 = vadd.f32 0.0, %v420
  %v422 = vpop.f32.mrb[0].mxu0
  %423 = vdwg.mxu0
  %v425 = vsel %vm131, %v124, 0
  %427 = vmatprep.subr.mxu0 0.0
  %428 = vmatpush1.msra.mxu0 %v137
  %429 = vmatprep.subr.mxu0 0.0
  %430 = vmatpush1.msra.mxu0 0.0
  %431 = vmatprep.subr.mxu0 0.0
  %432 = vmatpush1.msra.mxu0 0.0
  %433 = vmatprep.subr.mxu0 0.0
  %434 = vmatpush1.msra.mxu0 0.0
  %435 = vmatprep.subr.mxu0 0.0
  %436 = vmatpush1.msra.mxu0 0.0
  %437 = vmatprep.subr.mxu0 0.0
  %438 = vmatpush1.msra.mxu0 0.0
  %439 = vmatprep.subr.mxu0 0.0
  %440 = vmatpush1.msra.mxu0 0.0
  %441 = vmatprep.subr.mxu0 0.0
  %442 = vmatpush1.msra.mxu0 0.0
  %443 = vmatprep.subr.mxu0 0.0
  %444 = vmatpush1.msra.mxu0 0.0
  %445 = vmatprep.subr.mxu0 0.0
  %446 = vmatpush1.msra.mxu0 0.0
  %447 = vmatprep.subr.mxu0 0.0
  %448 = vmatpush1.msra.mxu0 0.0
  %449 = vmatprep.subr.mxu0 0.0
  %450 = vmatpush1.msra.mxu0 0.0
  %451 = vmatprep.subr.mxu0 0.0
  %452 = vmatpush1.msra.mxu0 0.0
  %453 = vmatprep.subr.mxu0 0.0
  %454 = vmatpush1.msra.mxu0 0.0
  %455 = vmatprep.subr.mxu0 0.0
  %456 = vmatpush1.msra.mxu0 0.0
  %457 = vmatprep.subr.mxu0 0.0
  %458 = vmatpush1.msra.mxu0 0.0
  %459 = vmatprep.subr.mxu0 0.0
  %460 = vmatpush1.msra.mxu0 0.0
  %461 = vmatprep.subr.mxu0 0.0
  %462 = vmatpush1.msra.mxu0 0.0
  %463 = vmatprep.subr.mxu0 0.0
  %464 = vmatpush1.msra.mxu0 0.0
  %465 = vmatprep.subr.mxu0 0.0
  %466 = vmatpush1.msra.mxu0 0.0
  %467 = vmatprep.subr.mxu0 0.0
  %468 = vmatpush1.msra.mxu0 0.0
  %469 = vmatprep.subr.mxu0 0.0
  %470 = vmatpush1.msra.mxu0 0.0
  %471 = vmatprep.subr.mxu0 0.0
  %472 = vmatpush1.msra.mxu0 0.0
  %473 = vmatprep.subr.mxu0 0.0
  %474 = vmatpush1.msra.mxu0 0.0
  %475 = vmatprep.subr.mxu0 0.0
  %476 = vmatpush1.msra.mxu0 0.0
  %477 = vmatprep.subr.mxu0 0.0
  %478 = vmatpush1.msra.mxu0 0.0
  %479 = vmatprep.subr.mxu0 0.0
  %480 = vmatpush1.msra.mxu0 0.0
  %481 = vmatprep.subr.mxu0 0.0
  %482 = vmatpush1.msra.mxu0 0.0
  %483 = vmatprep.subr.mxu0 0.0
  %484 = vmatpush1.msra.mxu0 0.0
  %485 = vmatprep.subr.mxu0 0.0
  %486 = vmatpush1.msra.mxu0 0.0
  %487 = vmatprep.subr.mxu0 0.0
  %488 = vmatpush1.msra.mxu0 0.0
  %489 = vmatprep.subr.mxu0 0.0
  %490 = vmatpush1.msra.mxu0 0.0
  %491 = vmatprep.mubr.f32.mxu0 0.0
  %492 = vmatmul.mubr.f32.gmra.mrb[0].mxu0 %v425
  %v493 = vpop.f32.mrb[0].mxu0
  %v494 = vadd.f32 %v421, %v493
  %v495 = vpop.f32.mrb[0].mxu0
  %496 = vdwg.mxu0
  %v497 = vadd.s32 %v288, 1
  %vm498 = vcmp.eq.s32.totalorder %v283, %v497
  %vm499 = vcmp.eq.s32.totalorder %v284, %v497
  %vm500 = vcmp.eq.s32.totalorder %v285, %v497
  %vm501 = vcmp.eq.s32.totalorder %v286, %v497
  %vm502 = vmand %vm498, %vm338
  %vm503 = vmand %vm499, %vm339
  %vm504 = vmand %vm500, %vm340
  %vm505 = vmand %vm501, %vm341
  %v506 = vsel %vm502, 1.0, 0.0
  %v507 = vsel %vm503, 1.0, 0.0
  %v508 = vsel %vm504, 1.0, 0.0
  %v509 = vsel %vm505, 1.0, 0.0
  %v511 = vsel %vm350, %v279, 0
  %513 = vmatprep.subr.mxu0 0.0
  %514 = vmatpush1.msra.mxu0 %v506
  %515 = vmatprep.subr.mxu0 0.0
  %516 = vmatpush1.msra.mxu0 %v507
  %517 = vmatprep.subr.mxu0 0.0
  %518 = vmatpush1.msra.mxu0 %v508
  %519 = vmatprep.subr.mxu0 0.0
  %520 = vmatpush1.msra.mxu0 %v509
  %521 = vmatprep.subr.mxu0 0.0
  %522 = vmatpush1.msra.mxu0 0.0
  %523 = vmatprep.subr.mxu0 0.0
  %524 = vmatpush1.msra.mxu0 0.0
  %525 = vmatprep.subr.mxu0 0.0
  %526 = vmatpush1.msra.mxu0 0.0
  %527 = vmatprep.subr.mxu0 0.0
  %528 = vmatpush1.msra.mxu0 0.0
  %529 = vmatprep.subr.mxu0 0.0
  %530 = vmatpush1.msra.mxu0 0.0
  %531 = vmatprep.subr.mxu0 0.0
  %532 = vmatpush1.msra.mxu0 0.0
  %533 = vmatprep.subr.mxu0 0.0
  %534 = vmatpush1.msra.mxu0 0.0
  %535 = vmatprep.subr.mxu0 0.0
  %536 = vmatpush1.msra.mxu0 0.0
  %537 = vmatprep.subr.mxu0 0.0
  %538 = vmatpush1.msra.mxu0 0.0
  %539 = vmatprep.subr.mxu0 0.0
  %540 = vmatpush1.msra.mxu0 0.0
  %541 = vmatprep.subr.mxu0 0.0
  %542 = vmatpush1.msra.mxu0 0.0
  %543 = vmatprep.subr.mxu0 0.0
  %544 = vmatpush1.msra.mxu0 0.0
  %545 = vmatprep.subr.mxu0 0.0
  %546 = vmatpush1.msra.mxu0 0.0
  %547 = vmatprep.subr.mxu0 0.0
  %548 = vmatpush1.msra.mxu0 0.0
  %549 = vmatprep.subr.mxu0 0.0
  %550 = vmatpush1.msra.mxu0 0.0
  %551 = vmatprep.subr.mxu0 0.0
  %552 = vmatpush1.msra.mxu0 0.0
  %553 = vmatprep.subr.mxu0 0.0
  %554 = vmatpush1.msra.mxu0 0.0
  %555 = vmatprep.subr.mxu0 0.0
  %556 = vmatpush1.msra.mxu0 0.0
  %557 = vmatprep.subr.mxu0 0.0
  %558 = vmatpush1.msra.mxu0 0.0
  %559 = vmatprep.subr.mxu0 0.0
  %560 = vmatpush1.msra.mxu0 0.0
  %561 = vmatprep.subr.mxu0 0.0
  %562 = vmatpush1.msra.mxu0 0.0
  %563 = vmatprep.subr.mxu0 0.0
  %564 = vmatpush1.msra.mxu0 0.0
  %565 = vmatprep.subr.mxu0 0.0
  %566 = vmatpush1.msra.mxu0 0.0
  %567 = vmatprep.subr.mxu0 0.0
  %568 = vmatpush1.msra.mxu0 0.0
  %569 = vmatprep.subr.mxu0 0.0
  %570 = vmatpush1.msra.mxu0 0.0
  %571 = vmatprep.subr.mxu0 0.0
  %572 = vmatpush1.msra.mxu0 0.0
  %573 = vmatprep.subr.mxu0 0.0
  %574 = vmatpush1.msra.mxu0 0.0
  %575 = vmatprep.subr.mxu0 0.0
  %576 = vmatpush1.msra.mxu0 0.0
  %577 = vmatprep.mubr.f32.mxu0 0.0
  %578 = vmatmul.mubr.f32.gmra.mrb[0].mxu0 %v511
  %v579 = vpop.f32.mrb[0].mxu0
  %v580 = vadd.f32 0.0, %v579
  %v581 = vpop.f32.mrb[0].mxu0
  %582 = vdwg.mxu0
  %v583 = vadd.f32 %v494, %v580
  %585 = vset.pattern.permute.xlu0 0
  %586 = vperm.xlu0 %585, %v126
  %v587 = vpop.permute.xlu0 %586
  %v589 = vadd.f32 %v583, %v587
  %vm590 = vcmp.ge.f32.partialorder %v589, 0.0
  %v591 = vmul.f32 %v589, 0.01
  %v592 = vsel %vm590, %v589, %v591
  %vm593 = vcmask 31744
  %v595 = vsel %vm593, %v127, 0
  %vm597 = vcmask 1043456
  %v599 = vsel %vm597, %v592, 0
  %601 = vmatprep.subr.mxu0 0.0
  %602 = vmatpush1.msra.mxu0 %v599
  %603 = vmatprep.subr.mxu0 0.0
  %604 = vmatpush1.msra.mxu0 0.0
  %605 = vmatprep.subr.mxu0 0.0
  %606 = vmatpush1.msra.mxu0 0.0
  %607 = vmatprep.subr.mxu0 0.0
  %608 = vmatpush1.msra.mxu0 0.0
  %609 = vmatprep.subr.mxu0 0.0
  %610 = vmatpush1.msra.mxu0 0.0
  %611 = vmatprep.subr.mxu0 0.0
  %612 = vmatpush1.msra.mxu0 0.0
  %613 = vmatprep.subr.mxu0 0.0
  %614 = vmatpush1.msra.mxu0 0.0
  %615 = vmatprep.subr.mxu0 0.0
  %616 = vmatpush1.msra.mxu0 0.0
  %617 = vmatprep.subr.mxu0 0.0
  %618 = vmatpush1.msra.mxu0 0.0
  %619 = vmatprep.subr.mxu0 0.0
  %620 = vmatpush1.msra.mxu0 0.0
  %621 = vmatprep.subr.mxu0 0.0
  %622 = vmatpush1.msra.mxu0 0.0
  %623 = vmatprep.subr.mxu0 0.0
  %624 = vmatpush1.msra.mxu0 0.0
  %625 = vmatprep.subr.mxu0 0.0
  %626 = vmatpush1.msra.mxu0 0.0
  %627 = vmatprep.subr.mxu0 0.0
  %628 = vmatpush1.msra.mxu0 0.0
  %629 = vmatprep.subr.mxu0 0.0
  %630 = vmatpush1.msra.mxu0 0.0
  %631 = vmatprep.subr.mxu0 0.0
  %632 = vmatpush1.msra.mxu0 0.0
  %633 = vmatprep.subr.mxu0 0.0
  %634 = vmatpush1.msra.mxu0 0.0
  %635 = vmatprep.subr.mxu0 0.0
  %636 = vmatpush1.msra.mxu0 0.0
  %637 = vmatprep.subr.mxu0 0.0
  %638 = vmatpush1.msra.mxu0 0.0
  %639 = vmatprep.subr.mxu0 0.0
  %640 = vmatpush1.msra.mxu0 0.0
  %641 = vmatprep.subr.mxu0 0.0
  %642 = vmatpush1.msra.mxu0 0.0
  %643 = vmatprep.subr.mxu0 0.0
  %644 = vmatpush1.msra.mxu0 0.0
  %645 = vmatprep.subr.mxu0 0.0
  %646 = vmatpush1.msra.mxu0 0.0
  %647 = vmatprep.subr.mxu0 0.0
  %648 = vmatpush1.msra.mxu0 0.0
  %649 = vmatprep.subr.mxu0 0.0
  %650 = vmatpush1.msra.mxu0 0.0
  %651 = vmatprep.subr.mxu0 0.0
  %652 = vmatpush1.msra.mxu0 0.0
  %653 = vmatprep.subr.mxu0 0.0
  %654 = vmatpush1.msra.mxu0 0.0
  %655 = vmatprep.subr.mxu0 0.0
  %656 = vmatpush1.msra.mxu0 0.0
  %657 = vmatprep.subr.mxu0 0.0
  %658 = vmatpush1.msra.mxu0 0.0
  %659 = vmatprep.subr.mxu0 0.0
  %660 = vmatpush1.msra.mxu0 0.0
  %661 = vmatprep.subr.mxu0 0.0
  %662 = vmatpush1.msra.mxu0 0.0
  %663 = vmatprep.subr.mxu0 0.0
  %664 = vmatpush1.msra.mxu0 0.0
  %665 = vmatprep.mubr.f32.mxu0 0.0
  %666 = vmatmul.mubr.f32.gmra.mrb[0].mxu0 %v595
  %v667 = vpop.f32.mrb[0].mxu0
  %v668 = vadd.f32 0.0, %v667
  %v669 = vpop.f32.mrb[0].mxu0
  %670 = vdwg.mxu0
  %v672 = vsel %vm593, %v129, 0
  %674 = vmatprep.subr.mxu0 0.0
  %675 = vmatpush1.msra.mxu0 %v599
  %676 = vmatprep.subr.mxu0 0.0
  %677 = vmatpush1.msra.mxu0 0.0
  %678 = vmatprep.subr.mxu0 0.0
  %679 = vmatpush1.msra.mxu0 0.0
  %680 = vmatprep.subr.mxu0 0.0
  %681 = vmatpush1.msra.mxu0 0.0
  %682 = vmatprep.subr.mxu0 0.0
  %683 = vmatpush1.msra.mxu0 0.0
  %684 = vmatprep.subr.mxu0 0.0
  %685 = vmatpush1.msra.mxu0 0.0
  %686 = vmatprep.subr.mxu0 0.0
  %687 = vmatpush1.msra.mxu0 0.0
  %688 = vmatprep.subr.mxu0 0.0
  %689 = vmatpush1.msra.mxu0 0.0
  %690 = vmatprep.subr.mxu0 0.0
  %691 = vmatpush1.msra.mxu0 0.0
  %692 = vmatprep.subr.mxu0 0.0
  %693 = vmatpush1.msra.mxu0 0.0
  %694 = vmatprep.subr.mxu0 0.0
  %695 = vmatpush1.msra.mxu0 0.0
  %696 = vmatprep.subr.mxu0 0.0
  %697 = vmatpush1.msra.mxu0 0.0
  %698 = vmatprep.subr.mxu0 0.0
  %699 = vmatpush1.msra.mxu0 0.0
  %700 = vmatprep.subr.mxu0 0.0
  %701 = vmatpush1.msra.mxu0 0.0
  %702 = vmatprep.subr.mxu0 0.0
  %703 = vmatpush1.msra.mxu0 0.0
  %704 = vmatprep.subr.mxu0 0.0
  %705 = vmatpush1.msra.mxu0 0.0
  %706 = vmatprep.subr.mxu0 0.0
  %707 = vmatpush1.msra.mxu0 0.0
  %708 = vmatprep.subr.mxu0 0.0
  %709 = vmatpush1.msra.mxu0 0.0
  %710 = vmatprep.subr.mxu0 0.0
  %711 = vmatpush1.msra.mxu0 0.0
  %712 = vmatprep.subr.mxu0 0.0
  %713 = vmatpush1.msra.mxu0 0.0
  %714 = vmatprep.subr.mxu0 0.0
  %715 = vmatpush1.msra.mxu0 0.0
  %716 = vmatprep.subr.mxu0 0.0
  %717 = vmatpush1.msra.mxu0 0.0
  %718 = vmatprep.subr.mxu0 0.0
  %719 = vmatpush1.msra.mxu0 0.0
  %720 = vmatprep.subr.mxu0 0.0
  %721 = vmatpush1.msra.mxu0 0.0
  %722 = vmatprep.subr.mxu0 0.0
  %723 = vmatpush1.msra.mxu0 0.0
  %724 = vmatprep.subr.mxu0 0.0
  %725 = vmatpush1.msra.mxu0 0.0
  %726 = vmatprep.subr.mxu0 0.0
  %727 = vmatpush1.msra.mxu0 0.0
  %728 = vmatprep.subr.mxu0 0.0
  %729 = vmatpush1.msra.mxu0 0.0
  %730 = vmatprep.subr.mxu0 0.0
  %731 = vmatpush1.msra.mxu0 0.0
  %732 = vmatprep.subr.mxu0 0.0
  %733 = vmatpush1.msra.mxu0 0.0
  %734 = vmatprep.subr.mxu0 0.0
  %735 = vmatpush1.msra.mxu0 0.0
  %736 = vmatprep.subr.mxu0 0.0
  %737 = vmatpush1.msra.mxu0 0.0
  %738 = vmatprep.mubr.f32.mxu0 0.0
  %739 = vmatmul.mubr.f32.gmra.mrb[0].mxu0 %v672
  %v740 = vpop.f32.mrb[0].mxu0
  %v741 = vadd.f32 0.0, %v740
  %v742 = vpop.f32.mrb[0].mxu0
  %743 = vdwg.mxu0
  %v745 = vsel %vm350, %v668, 0
  %747 = vmatprep.subr.mxu0 0.0
  %748 = vmatpush1.msra.mxu0 %v346
  %749 = vmatprep.subr.mxu0 0.0
  %750 = vmatpush1.msra.mxu0 %v347
  %751 = vmatprep.subr.mxu0 0.0
  %752 = vmatpush1.msra.mxu0 %v348
  %753 = vmatprep.subr.mxu0 0.0
  %754 = vmatpush1.msra.mxu0 %v349
  %755 = vmatprep.subr.mxu0 0.0
  %756 = vmatpush1.msra.mxu0 0.0
  %757 = vmatprep.subr.mxu0 0.0
  %758 = vmatpush1.msra.mxu0 0.0
  %759 = vmatprep.subr.mxu0 0.0
  %760 = vmatpush1.msra.mxu0 0.0
  %761 = vmatprep.subr.mxu0 0.0
  %762 = vmatpush1.msra.mxu0 0.0
  %763 = vmatprep.subr.mxu0 0.0
  %764 = vmatpush1.msra.mxu0 0.0
  %765 = vmatprep.subr.mxu0 0.0
  %766 = vmatpush1.msra.mxu0 0.0
  %767 = vmatprep.subr.mxu0 0.0
  %768 = vmatpush1.msra.mxu0 0.0
  %769 = vmatprep.subr.mxu0 0.0
  %770 = vmatpush1.msra.mxu0 0.0
  %771 = vmatprep.subr.mxu0 0.0
  %772 = vmatpush1.msra.mxu0 0.0
  %773 = vmatprep.subr.mxu0 0.0
  %774 = vmatpush1.msra.mxu0 0.0
  %775 = vmatprep.subr.mxu0 0.0
  %776 = vmatpush1.msra.mxu0 0.0
  %777 = vmatprep.subr.mxu0 0.0
  %778 = vmatpush1.msra.mxu0 0.0
  %779 = vmatprep.subr.mxu0 0.0
  %780 = vmatpush1.msra.mxu0 0.0
  %781 = vmatprep.subr.mxu0 0.0
  %782 = vmatpush1.msra.mxu0 0.0
  %783 = vmatprep.subr.mxu0 0.0
  %784 = vmatpush1.msra.mxu0 0.0
  %785 = vmatprep.subr.mxu0 0.0
  %786 = vmatpush1.msra.mxu0 0.0
  %787 = vmatprep.subr.mxu0 0.0
  %788 = vmatpush1.msra.mxu0 0.0
  %789 = vmatprep.subr.mxu0 0.0
  %790 = vmatpush1.msra.mxu0 0.0
  %791 = vmatprep.subr.mxu0 0.0
  %792 = vmatpush1.msra.mxu0 0.0
  %793 = vmatprep.subr.mxu0 0.0
  %794 = vmatpush1.msra.mxu0 0.0
  %795 = vmatprep.subr.mxu0 0.0
  %796 = vmatpush1.msra.mxu0 0.0
  %797 = vmatprep.subr.mxu0 0.0
  %798 = vmatpush1.msra.mxu0 0.0
  %799 = vmatprep.subr.mxu0 0.0
  %800 = vmatpush1.msra.mxu0 0.0
  %801 = vmatprep.subr.mxu0 0.0
  %802 = vmatpush1.msra.mxu0 0.0
  %803 = vmatprep.subr.mxu0 0.0
  %804 = vmatpush1.msra.mxu0 0.0
  %805 = vmatprep.subr.mxu0 0.0
  %806 = vmatpush1.msra.mxu0 0.0
  %807 = vmatprep.subr.mxu0 0.0
  %808 = vmatpush1.msra.mxu0 0.0
  %809 = vmatprep.subr.mxu0 0.0
  %810 = vmatpush1.msra.mxu0 0.0
  %811 = vmatprep.mubr.f32.mxu0 0.0
  %812 = vmatmul.mubr.f32.gmra.mrb[0].mxu0 %v745
  %v813 = vpop.f32.mrb[0].mxu0
  %v814 = vadd.f32 0.0, %v813
  %v815 = vpop.f32.mrb[0].mxu0
  %816 = vdwg.mxu0
  %v818 = vsel %vm593, %v128, 0
  %820 = vmatprep.subr.mxu0 0.0
  %821 = vmatpush1.msra.mxu0 %v599
  %822 = vmatprep.subr.mxu0 0.0
  %823 = vmatpush1.msra.mxu0 0.0
  %824 = vmatprep.subr.mxu0 0.0
  %825 = vmatpush1.msra.mxu0 0.0
  %826 = vmatprep.subr.mxu0 0.0
  %827 = vmatpush1.msra.mxu0 0.0
  %828 = vmatprep.subr.mxu0 0.0
  %829 = vmatpush1.msra.mxu0 0.0
  %830 = vmatprep.subr.mxu0 0.0
  %831 = vmatpush1.msra.mxu0 0.0
  %832 = vmatprep.subr.mxu0 0.0
  %833 = vmatpush1.msra.mxu0 0.0
  %834 = vmatprep.subr.mxu0 0.0
  %835 = vmatpush1.msra.mxu0 0.0
  %836 = vmatprep.subr.mxu0 0.0
  %837 = vmatpush1.msra.mxu0 0.0
  %838 = vmatprep.subr.mxu0 0.0
  %839 = vmatpush1.msra.mxu0 0.0
  %840 = vmatprep.subr.mxu0 0.0
  %841 = vmatpush1.msra.mxu0 0.0
  %842 = vmatprep.subr.mxu0 0.0
  %843 = vmatpush1.msra.mxu0 0.0
  %844 = vmatprep.subr.mxu0 0.0
  %845 = vmatpush1.msra.mxu0 0.0
  %846 = vmatprep.subr.mxu0 0.0
  %847 = vmatpush1.msra.mxu0 0.0
  %848 = vmatprep.subr.mxu0 0.0
  %849 = vmatpush1.msra.mxu0 0.0
  %850 = vmatprep.subr.mxu0 0.0
  %851 = vmatpush1.msra.mxu0 0.0
  %852 = vmatprep.subr.mxu0 0.0
  %853 = vmatpush1.msra.mxu0 0.0
  %854 = vmatprep.subr.mxu0 0.0
  %855 = vmatpush1.msra.mxu0 0.0
  %856 = vmatprep.subr.mxu0 0.0
  %857 = vmatpush1.msra.mxu0 0.0
  %858 = vmatprep.subr.mxu0 0.0
  %859 = vmatpush1.msra.mxu0 0.0
  %860 = vmatprep.subr.mxu0 0.0
  %861 = vmatpush1.msra.mxu0 0.0
  %862 = vmatprep.subr.mxu0 0.0
  %863 = vmatpush1.msra.mxu0 0.0
  %864 = vmatprep.subr.mxu0 0.0
  %865 = vmatpush1.msra.mxu0 0.0
  %866 = vmatprep.subr.mxu0 0.0
  %867 = vmatpush1.msra.mxu0 0.0
  %868 = vmatprep.subr.mxu0 0.0
  %869 = vmatpush1.msra.mxu0 0.0
  %870 = vmatprep.subr.mxu0 0.0
  %871 = vmatpush1.msra.mxu0 0.0
  %872 = vmatprep.subr.mxu0 0.0
  %873 = vmatpush1.msra.mxu0 0.0
  %874 = vmatprep.subr.mxu0 0.0
  %875 = vmatpush1.msra.mxu0 0.0
  %876 = vmatprep.subr.mxu0 0.0
  %877 = vmatpush1.msra.mxu0 0.0
  %878 = vmatprep.subr.mxu0 0.0
  %879 = vmatpush1.msra.mxu0 0.0
  %880 = vmatprep.subr.mxu0 0.0
  %881 = vmatpush1.msra.mxu0 0.0
  %882 = vmatprep.subr.mxu0 0.0
  %883 = vmatpush1.msra.mxu0 0.0
  %884 = vmatprep.mubr.f32.mxu0 0.0
  %885 = vmatmul.mubr.f32.gmra.mrb[0].mxu0 %v818
  %v886 = vpop.f32.mrb[0].mxu0
  %v887 = vadd.f32 %v814, %v886
  %v888 = vpop.f32.mrb[0].mxu0
  %889 = vdwg.mxu0
  %v891 = vsel %vm350, %v741, 0
  %893 = vmatprep.subr.mxu0 0.0
  %894 = vmatpush1.msra.mxu0 %v506
  %895 = vmatprep.subr.mxu0 0.0
  %896 = vmatpush1.msra.mxu0 %v507
  %897 = vmatprep.subr.mxu0 0.0
  %898 = vmatpush1.msra.mxu0 %v508
  %899 = vmatprep.subr.mxu0 0.0
  %900 = vmatpush1.msra.mxu0 %v509
  %901 = vmatprep.subr.mxu0 0.0
  %902 = vmatpush1.msra.mxu0 0.0
  %903 = vmatprep.subr.mxu0 0.0
  %904 = vmatpush1.msra.mxu0 0.0
  %905 = vmatprep.subr.mxu0 0.0
  %906 = vmatpush1.msra.mxu0 0.0
  %907 = vmatprep.subr.mxu0 0.0
  %908 = vmatpush1.msra.mxu0 0.0
  %909 = vmatprep.subr.mxu0 0.0
  %910 = vmatpush1.msra.mxu0 0.0
  %911 = vmatprep.subr.mxu0 0.0
  %912 = vmatpush1.msra.mxu0 0.0
  %913 = vmatprep.subr.mxu0 0.0
  %914 = vmatpush1.msra.mxu0 0.0
  %915 = vmatprep.subr.mxu0 0.0
  %916 = vmatpush1.msra.mxu0 0.0
  %917 = vmatprep.subr.mxu0 0.0
  %918 = vmatpush1.msra.mxu0 0.0
  %919 = vmatprep.subr.mxu0 0.0
  %920 = vmatpush1.msra.mxu0 0.0
  %921 = vmatprep.subr.mxu0 0.0
  %922 = vmatpush1.msra.mxu0 0.0
  %923 = vmatprep.subr.mxu0 0.0
  %924 = vmatpush1.msra.mxu0 0.0
  %925 = vmatprep.subr.mxu0 0.0
  %926 = vmatpush1.msra.mxu0 0.0
  %927 = vmatprep.subr.mxu0 0.0
  %928 = vmatpush1.msra.mxu0 0.0
  %929 = vmatprep.subr.mxu0 0.0
  %930 = vmatpush1.msra.mxu0 0.0
  %931 = vmatprep.subr.mxu0 0.0
  %932 = vmatpush1.msra.mxu0 0.0
  %933 = vmatprep.subr.mxu0 0.0
  %934 = vmatpush1.msra.mxu0 0.0
  %935 = vmatprep.subr.mxu0 0.0
  %936 = vmatpush1.msra.mxu0 0.0
  %937 = vmatprep.subr.mxu0 0.0
  %938 = vmatpush1.msra.mxu0 0.0
  %939 = vmatprep.subr.mxu0 0.0
  %940 = vmatpush1.msra.mxu0 0.0
  %941 = vmatprep.subr.mxu0 0.0
  %942 = vmatpush1.msra.mxu0 0.0
  %943 = vmatprep.subr.mxu0 0.0
  %944 = vmatpush1.msra.mxu0 0.0
  %945 = vmatprep.subr.mxu0 0.0
  %946 = vmatpush1.msra.mxu0 0.0
  %947 = vmatprep.subr.mxu0 0.0
  %948 = vmatpush1.msra.mxu0 0.0
  %949 = vmatprep.subr.mxu0 0.0
  %950 = vmatpush1.msra.mxu0 0.0
  %951 = vmatprep.subr.mxu0 0.0
  %952 = vmatpush1.msra.mxu0 0.0
  %953 = vmatprep.subr.mxu0 0.0
  %954 = vmatpush1.msra.mxu0 0.0
  %955 = vmatprep.subr.mxu0 0.0
  %956 = vmatpush1.msra.mxu0 0.0
  %957 = vmatprep.mubr.f32.mxu0 0.0
  %958 = vmatmul.mubr.f32.gmra.mrb[0].mxu0 %v891
  %v959 = vpop.f32.mrb[0].mxu0
  %v960 = vadd.f32 0.0, %v959
  %v961 = vpop.f32.mrb[0].mxu0
  %962 = vdwg.mxu0
  %v963 = vadd.f32 %v887, %v960
  %965 = vset.pattern.permute.xlu0 0
  %966 = vperm.xlu0 %965, %v130
  %v967 = vpop.permute.xlu0 %966
  %v969 = vadd.f32 %v963, %v967
  %vm970 = vcmp.ge.f32.partialorder %v969, 0.0
  %v971 = vmul.f32 %v969, 0.01
  %v972 = vsel %vm970, %v969, %v971
  %v973 = vsel %vm338, 0.0625, 0.0
  %v974 = vsel %vm339, 0.0625, 0.0
  %v975 = vsel %vm340, 0.0625, 0.0
  %v976 = vsel %vm341, 0.0625, 0.0
  %v978 = vsel %vm350, %v972, 0
  %980 = vmatprep.subr.mxu0 0.0
  %981 = vmatpush1.msra.mxu0 %v973
  %982 = vmatprep.subr.mxu0 0.0
  %983 = vmatpush1.msra.mxu0 %v974
  %984 = vmatprep.subr.mxu0 0.0
  %985 = vmatpush1.msra.mxu0 %v975
  %986 = vmatprep.subr.mxu0 0.0
  %987 = vmatpush1.msra.mxu0 %v976
  %988 = vmatprep.subr.mxu0 0.0
  %989 = vmatpush1.msra.mxu0 0.0
  %990 = vmatprep.subr.mxu0 0.0
  %991 = vmatpush1.msra.mxu0 0.0
  %992 = vmatprep.subr.mxu0 0.0
  %993 = vmatpush1.msra.mxu0 0.0
  %994 = vmatprep.subr.mxu0 0.0
  %995 = vmatpush1.msra.mxu0 0.0
  %996 = vmatprep.subr.mxu0 0.0
  %997 = vmatpush1.msra.mxu0 0.0
  %998 = vmatprep.subr.mxu0 0.0
  %999 = vmatpush1.msra.mxu0 0.0
  %1000 = vmatprep.subr.mxu0 0.0
  %1001 = vmatpush1.msra.mxu0 0.0
  %1002 = vmatprep.subr.mxu0 0.0
  %1003 = vmatpush1.msra.mxu0 0.0
  %1004 = vmatprep.subr.mxu0 0.0
  %1005 = vmatpush1.msra.mxu0 0.0
  %1006 = vmatprep.subr.mxu0 0.0
  %1007 = vmatpush1.msra.mxu0 0.0
  %1008 = vmatprep.subr.mxu0 0.0
  %1009 = vmatpush1.msra.mxu0 0.0
  %1010 = vmatprep.subr.mxu0 0.0
  %1011 = vmatpush1.msra.mxu0 0.0
  %1012 = vmatprep.subr.mxu0 0.0
  %1013 = vmatpush1.msra.mxu0 0.0
  %1014 = vmatprep.subr.mxu0 0.0
  %1015 = vmatpush1.msra.mxu0 0.0
  %1016 = vmatprep.subr.mxu0 0.0
  %1017 = vmatpush1.msra.mxu0 0.0
  %1018 = vmatprep.subr.mxu0 0.0
  %1019 = vmatpush1.msra.mxu0 0.0
  %1020 = vmatprep.subr.mxu0 0.0
  %1021 = vmatpush1.msra.mxu0 0.0
  %1022 = vmatprep.subr.mxu0 0.0
  %1023 = vmatpush1.msra.mxu0 0.0
  %1024 = vmatprep.subr.mxu0 0.0
  %1025 = vmatpush1.msra.mxu0 0.0
  %1026 = vmatprep.subr.mxu0 0.0
  %1027 = vmatpush1.msra.mxu0 0.0
  %1028 = vmatprep.subr.mxu0 0.0
  %1029 = vmatpush1.msra.mxu0 0.0
  %1030 = vmatprep.subr.mxu0 0.0
  %1031 = vmatpush1.msra.mxu0 0.0
  %1032 = vmatprep.subr.mxu0 0.0
  %1033 = vmatpush1.msra.mxu0 0.0
  %1034 = vmatprep.subr.mxu0 0.0
  %1035 = vmatpush1.msra.mxu0 0.0
  %1036 = vmatprep.subr.mxu0 0.0
  %1037 = vmatpush1.msra.mxu0 0.0
  %1038 = vmatprep.subr.mxu0 0.0
  %1039 = vmatpush1.msra.mxu0 0.0
  %1040 = vmatprep.subr.mxu0 0.0
  %1041 = vmatpush1.msra.mxu0 0.0
  %1042 = vmatprep.subr.mxu0 0.0
  %1043 = vmatpush1.msra.mxu0 0.0
  %1044 = vmatprep.mubr.f32.mxu0 0.0
  %1045 = vmatmul.mubr.f32.gmra.mrb[0].mxu0 %v978
  %v1046 = vpop.f32.mrb[0].mxu0
  %v1047 = vadd.f32 0.0, %v1046
  %v1048 = vpop.f32.mrb[0].mxu0
  %1049 = vdwg.mxu0
  %v1050 = vsub.f32 %v972, %v1047
  %v1051 = vmul.f32 %v1050, %v1050
  %v1053 = vsel %vm350, %v1051, 0
  %1055 = vmatprep.subr.mxu0 0.0
  %1056 = vmatpush1.msra.mxu0 %v973
  %1057 = vmatprep.subr.mxu0 0.0
  %1058 = vmatpush1.msra.mxu0 %v974
  %1059 = vmatprep.subr.mxu0 0.0
  %1060 = vmatpush1.msra.mxu0 %v975
  %1061 = vmatprep.subr.mxu0 0.0
  %1062 = vmatpush1.msra.mxu0 %v976
  %1063 = vmatprep.subr.mxu0 0.0
  %1064 = vmatpush1.msra.mxu0 0.0
  %1065 = vmatprep.subr.mxu0 0.0
  %1066 = vmatpush1.msra.mxu0 0.0
  %1067 = vmatprep.subr.mxu0 0.0
  %1068 = vmatpush1.msra.mxu0 0.0
  %1069 = vmatprep.subr.mxu0 0.0
  %1070 = vmatpush1.msra.mxu0 0.0
  %1071 = vmatprep.subr.mxu0 0.0
  %1072 = vmatpush1.msra.mxu0 0.0
  %1073 = vmatprep.subr.mxu0 0.0
  %1074 = vmatpush1.msra.mxu0 0.0
  %1075 = vmatprep.subr.mxu0 0.0
  %1076 = vmatpush1.msra.mxu0 0.0
  %1077 = vmatprep.subr.mxu0 0.0
  %1078 = vmatpush1.msra.mxu0 0.0
  %1079 = vmatprep.subr.mxu0 0.0
  %1080 = vmatpush1.msra.mxu0 0.0
  %1081 = vmatprep.subr.mxu0 0.0
  %1082 = vmatpush1.msra.mxu0 0.0
  %1083 = vmatprep.subr.mxu0 0.0
  %1084 = vmatpush1.msra.mxu0 0.0
  %1085 = vmatprep.subr.mxu0 0.0
  %1086 = vmatpush1.msra.mxu0 0.0
  %1087 = vmatprep.subr.mxu0 0.0
  %1088 = vmatpush1.msra.mxu0 0.0
  %1089 = vmatprep.subr.mxu0 0.0
  %1090 = vmatpush1.msra.mxu0 0.0
  %1091 = vmatprep.subr.mxu0 0.0
  %1092 = vmatpush1.msra.mxu0 0.0
  %1093 = vmatprep.subr.mxu0 0.0
  %1094 = vmatpush1.msra.mxu0 0.0
  %1095 = vmatprep.subr.mxu0 0.0
  %1096 = vmatpush1.msra.mxu0 0.0
  %1097 = vmatprep.subr.mxu0 0.0
  %1098 = vmatpush1.msra.mxu0 0.0
  %1099 = vmatprep.subr.mxu0 0.0
  %1100 = vmatpush1.msra.mxu0 0.0
  %1101 = vmatprep.subr.mxu0 0.0
  %1102 = vmatpush1.msra.mxu0 0.0
  %1103 = vmatprep.subr.mxu0 0.0
  %1104 = vmatpush1.msra.mxu0 0.0
  %1105 = vmatprep.subr.mxu0 0.0
  %1106 = vmatpush1.msra.mxu0 0.0
  %1107 = vmatprep.subr.mxu0 0.0
  %1108 = vmatpush1.msra.mxu0 0.0
  %1109 = vmatprep.subr.mxu0 0.0
  %1110 = vmatpush1.msra.mxu0 0.0
  %1111 = vmatprep.subr.mxu0 0.0
  %1112 = vmatpush1.msra.mxu0 0.0
  %1113 = vmatprep.subr.mxu0 0.0
  %1114 = vmatpush1.msra.mxu0 0.0
  %1115 = vmatprep.subr.mxu0 0.0
  %1116 = vmatpush1.msra.mxu0 0.0
  %1117 = vmatprep.subr.mxu0 0.0
  %1118 = vmatpush1.msra.mxu0 0.0
  %1119 = vmatprep.mubr.f32.mxu0 0.0
  %1120 = vmatmul.mubr.f32.gmra.mrb[0].mxu0 %v1053
  %v1121 = vpop.f32.mrb[0].mxu0
  %v1122 = vadd.f32 1e-05, %v1121
  %v1123 = vpop.f32.mrb[0].mxu0
  %1124 = vdwg.mxu0
  %v1125 = vrsqrt.pop %v1122
  %v1126 = vmul.f32 %v1050, %v1125
  %v1127 = vmul.u32 %v288, 2
  %vm1128 = vcmp.eq.s32.totalorder %v283, %v1127
  %vm1129 = vcmp.eq.s32.totalorder %v284, %v1127
  %vm1130 = vcmp.eq.s32.totalorder %v285, %v1127
  %vm1131 = vcmp.eq.s32.totalorder %v286, %v1127
  %v1132 = vsel %vm1128, 1.0, 0.0
  %v1133 = vsel %vm1129, 1.0, 0.0
  %v1134 = vsel %vm1130, 1.0, 0.0
  %v1135 = vsel %vm1131, 1.0, 0.0
  %v1137 = vsel %vm350, %v1126, 0
  %1139 = vmatprep.subr.mxu0 0.0
  %1140 = vmatpush1.msra.mxu0 %v1132
  %1141 = vmatprep.subr.mxu0 0.0
  %1142 = vmatpush1.msra.mxu0 %v1133
  %1143 = vmatprep.subr.mxu0 0.0
  %1144 = vmatpush1.msra.mxu0 %v1134
  %1145 = vmatprep.subr.mxu0 0.0
  %1146 = vmatpush1.msra.mxu0 %v1135
  %1147 = vmatprep.subr.mxu0 0.0
  %1148 = vmatpush1.msra.mxu0 0.0
  %1149 = vmatprep.subr.mxu0 0.0
  %1150 = vmatpush1.msra.mxu0 0.0
  %1151 = vmatprep.subr.mxu0 0.0
  %1152 = vmatpush1.msra.mxu0 0.0
  %1153 = vmatprep.subr.mxu0 0.0
  %1154 = vmatpush1.msra.mxu0 0.0
  %1155 = vmatprep.subr.mxu0 0.0
  %1156 = vmatpush1.msra.mxu0 0.0
  %1157 = vmatprep.subr.mxu0 0.0
  %1158 = vmatpush1.msra.mxu0 0.0
  %1159 = vmatprep.subr.mxu0 0.0
  %1160 = vmatpush1.msra.mxu0 0.0
  %1161 = vmatprep.subr.mxu0 0.0
  %1162 = vmatpush1.msra.mxu0 0.0
  %1163 = vmatprep.subr.mxu0 0.0
  %1164 = vmatpush1.msra.mxu0 0.0
  %1165 = vmatprep.subr.mxu0 0.0
  %1166 = vmatpush1.msra.mxu0 0.0
  %1167 = vmatprep.subr.mxu0 0.0
  %1168 = vmatpush1.msra.mxu0 0.0
  %1169 = vmatprep.subr.mxu0 0.0
  %1170 = vmatpush1.msra.mxu0 0.0
  %1171 = vmatprep.subr.mxu0 0.0
  %1172 = vmatpush1.msra.mxu0 0.0
  %1173 = vmatprep.subr.mxu0 0.0
  %1174 = vmatpush1.msra.mxu0 0.0
  %1175 = vmatprep.subr.mxu0 0.0
  %1176 = vmatpush1.msra.mxu0 0.0
  %1177 = vmatprep.subr.mxu0 0.0
  %1178 = vmatpush1.msra.mxu0 0.0
  %1179 = vmatprep.subr.mxu0 0.0
  %1180 = vmatpush1.msra.mxu0 0.0
  %1181 = vmatprep.subr.mxu0 0.0
  %1182 = vmatpush1.msra.mxu0 0.0
  %1183 = vmatprep.subr.mxu0 0.0
  %1184 = vmatpush1.msra.mxu0 0.0
  %1185 = vmatprep.subr.mxu0 0.0
  %1186 = vmatpush1.msra.mxu0 0.0
  %1187 = vmatprep.subr.mxu0 0.0
  %1188 = vmatpush1.msra.mxu0 0.0
  %1189 = vmatprep.subr.mxu0 0.0
  %1190 = vmatpush1.msra.mxu0 0.0
  %1191 = vmatprep.subr.mxu0 0.0
  %1192 = vmatpush1.msra.mxu0 0.0
  %1193 = vmatprep.subr.mxu0 0.0
  %1194 = vmatpush1.msra.mxu0 0.0
  %1195 = vmatprep.subr.mxu0 0.0
  %1196 = vmatpush1.msra.mxu0 0.0
  %1197 = vmatprep.subr.mxu0 0.0
  %1198 = vmatpush1.msra.mxu0 0.0
  %1199 = vmatprep.subr.mxu0 0.0
  %1200 = vmatpush1.msra.mxu0 0.0
  %1201 = vmatprep.subr.mxu0 0.0
  %1202 = vmatpush1.msra.mxu0 0.0
  %1203 = vmatprep.mubr.f32.mxu0 0.0
  %1204 = vmatmul.mubr.f32.gmra.mrb[0].mxu0 %v1137
  %v1205 = vpop.f32.mrb[0].mxu0
  %v1206 = vadd.f32 0.0, %v1205
  %v1207 = vpop.f32.mrb[0].mxu0
  %1208 = vdwg.mxu0
  %v1209 = vadd.s32 %v1127, 1
  %vm1210 = vcmp.eq.s32.totalorder %v283, %v1209
  %vm1211 = vcmp.eq.s32.totalorder %v284, %v1209
  %vm1212 = vcmp.eq.s32.totalorder %v285, %v1209
  %vm1213 = vcmp.eq.s32.totalorder %v286, %v1209
  %v1214 = vsel %vm1210, 1.0, 0.0
  %v1215 = vsel %vm1211, 1.0, 0.0
  %v1216 = vsel %vm1212, 1.0, 0.0
  %v1217 = vsel %vm1213, 1.0, 0.0
  %1218 = vmatprep.subr.mxu0 0.0
  %1219 = vmatpush1.msra.mxu0 %v1214
  %1220 = vmatprep.subr.mxu0 0.0
  %1221 = vmatpush1.msra.mxu0 %v1215
  %1222 = vmatprep.subr.mxu0 0.0
  %1223 = vmatpush1.msra.mxu0 %v1216
  %1224 = vmatprep.subr.mxu0 0.0
  %1225 = vmatpush1.msra.mxu0 %v1217
  %1226 = vmatprep.subr.mxu0 0.0
  %1227 = vmatpush1.msra.mxu0 0.0
  %1228 = vmatprep.subr.mxu0 0.0
  %1229 = vmatpush1.msra.mxu0 0.0
  %1230 = vmatprep.subr.mxu0 0.0
  %1231 = vmatpush1.msra.mxu0 0.0
  %1232 = vmatprep.subr.mxu0 0.0
  %1233 = vmatpush1.msra.mxu0 0.0
  %1234 = vmatprep.subr.mxu0 0.0
  %1235 = vmatpush1.msra.mxu0 0.0
  %1236 = vmatprep.subr.mxu0 0.0
  %1237 = vmatpush1.msra.mxu0 0.0
  %1238 = vmatprep.subr.mxu0 0.0
  %1239 = vmatpush1.msra.mxu0 0.0
  %1240 = vmatprep.subr.mxu0 0.0
  %1241 = vmatpush1.msra.mxu0 0.0
  %1242 = vmatprep.subr.mxu0 0.0
  %1243 = vmatpush1.msra.mxu0 0.0
  %1244 = vmatprep.subr.mxu0 0.0
  %1245 = vmatpush1.msra.mxu0 0.0
  %1246 = vmatprep.subr.mxu0 0.0
  %1247 = vmatpush1.msra.mxu0 0.0
  %1248 = vmatprep.subr.mxu0 0.0
  %1249 = vmatpush1.msra.mxu0 0.0
  %1250 = vmatprep.subr.mxu0 0.0
  %1251 = vmatpush1.msra.mxu0 0.0
  %1252 = vmatprep.subr.mxu0 0.0
  %1253 = vmatpush1.msra.mxu0 0.0
  %1254 = vmatprep.subr.mxu0 0.0
  %1255 = vmatpush1.msra.mxu0 0.0
  %1256 = vmatprep.subr.mxu0 0.0
  %1257 = vmatpush1.msra.mxu0 0.0
  %1258 = vmatprep.subr.mxu0 0.0
  %1259 = vmatpush1.msra.mxu0 0.0
  %1260 = vmatprep.subr.mxu0 0.0
  %1261 = vmatpush1.msra.mxu0 0.0
  %1262 = vmatprep.subr.mxu0 0.0
  %1263 = vmatpush1.msra.mxu0 0.0
  %1264 = vmatprep.subr.mxu0 0.0
  %1265 = vmatpush1.msra.mxu0 0.0
  %1266 = vmatprep.subr.mxu0 0.0
  %1267 = vmatpush1.msra.mxu0 0.0
  %1268 = vmatprep.subr.mxu0 0.0
  %1269 = vmatpush1.msra.mxu0 0.0
  %1270 = vmatprep.subr.mxu0 0.0
  %1271 = vmatpush1.msra.mxu0 0.0
  %1272 = vmatprep.subr.mxu0 0.0
  %1273 = vmatpush1.msra.mxu0 0.0
  %1274 = vmatprep.subr.mxu0 0.0
  %1275 = vmatpush1.msra.mxu0 0.0
  %1276 = vmatprep.subr.mxu0 0.0
  %1277 = vmatpush1.msra.mxu0 0.0
  %1278 = vmatprep.subr.mxu0 0.0
  %1279 = vmatpush1.msra.mxu0 0.0
  %1280 = vmatprep.subr.mxu0 0.0
  %1281 = vmatpush1.msra.mxu0 0.0
  %1282 = vmatprep.mubr.f32.mxu0 0.0
  %1283 = vmatmul.mubr.f32.gmra.mrb[0].mxu0 %v1137
  %v1284 = vpop.f32.mrb[0].mxu0
  %v1285 = vadd.f32 0.0, %v1284
  %v1286 = vpop.f32.mrb[0].mxu0
  %1287 = vdwg.mxu0
  %v1288 = vmax.f32 %v1206, %v1285
  %v1289 = vld [vmem:[%s11] sm:$0xff]
  %v1290 = vld [vmem:[%s11 + $0x8] sm:$0xff]
  %v1291 = vld [vmem:[%s11 + $0x10] sm:$0xff]
  %v1292 = vld [vmem:[%s13] sm:$0xff]
  %v1293 = vld [vmem:[%s15] sm:$0xff]
  %v1294 = vld [vmem:[%s15 + $0x8] sm:$0xff]
  %v1295 = vld [vmem:[%s15 + $0x10] sm:$0xff]
  %v1296 = vld [vmem:[%s17] sm:$0xff]
  %v1298 = vsel %vm593, %v1289, 0
  %v1301 = vsel %vm597, %v1288, 0
  %1303 = vmatprep.subr.mxu0 0.0
  %1304 = vmatpush1.msra.mxu0 %v1301
  %1305 = vmatprep.subr.mxu0 0.0
  %1306 = vmatpush1.msra.mxu0 0.0
  %1307 = vmatprep.subr.mxu0 0.0
  %1308 = vmatpush1.msra.mxu0 0.0
  %1309 = vmatprep.subr.mxu0 0.0
  %1310 = vmatpush1.msra.mxu0 0.0
  %1311 = vmatprep.subr.mxu0 0.0
  %1312 = vmatpush1.msra.mxu0 0.0
  %1313 = vmatprep.subr.mxu0 0.0
  %1314 = vmatpush1.msra.mxu0 0.0
  %1315 = vmatprep.subr.mxu0 0.0
  %1316 = vmatpush1.msra.mxu0 0.0
  %1317 = vmatprep.subr.mxu0 0.0
  %1318 = vmatpush1.msra.mxu0 0.0
  %1319 = vmatprep.subr.mxu0 0.0
  %1320 = vmatpush1.msra.mxu0 0.0
  %1321 = vmatprep.subr.mxu0 0.0
  %1322 = vmatpush1.msra.mxu0 0.0
  %1323 = vmatprep.subr.mxu0 0.0
  %1324 = vmatpush1.msra.mxu0 0.0
  %1325 = vmatprep.subr.mxu0 0.0
  %1326 = vmatpush1.msra.mxu0 0.0
  %1327 = vmatprep.subr.mxu0 0.0
  %1328 = vmatpush1.msra.mxu0 0.0
  %1329 = vmatprep.subr.mxu0 0.0
  %1330 = vmatpush1.msra.mxu0 0.0
  %1331 = vmatprep.subr.mxu0 0.0
  %1332 = vmatpush1.msra.mxu0 0.0
  %1333 = vmatprep.subr.mxu0 0.0
  %1334 = vmatpush1.msra.mxu0 0.0
  %1335 = vmatprep.subr.mxu0 0.0
  %1336 = vmatpush1.msra.mxu0 0.0
  %1337 = vmatprep.subr.mxu0 0.0
  %1338 = vmatpush1.msra.mxu0 0.0
  %1339 = vmatprep.subr.mxu0 0.0
  %1340 = vmatpush1.msra.mxu0 0.0
  %1341 = vmatprep.subr.mxu0 0.0
  %1342 = vmatpush1.msra.mxu0 0.0
  %1343 = vmatprep.subr.mxu0 0.0
  %1344 = vmatpush1.msra.mxu0 0.0
  %1345 = vmatprep.subr.mxu0 0.0
  %1346 = vmatpush1.msra.mxu0 0.0
  %1347 = vmatprep.subr.mxu0 0.0
  %1348 = vmatpush1.msra.mxu0 0.0
  %1349 = vmatprep.subr.mxu0 0.0
  %1350 = vmatpush1.msra.mxu0 0.0
  %1351 = vmatprep.subr.mxu0 0.0
  %1352 = vmatpush1.msra.mxu0 0.0
  %1353 = vmatprep.subr.mxu0 0.0
  %1354 = vmatpush1.msra.mxu0 0.0
  %1355 = vmatprep.subr.mxu0 0.0
  %1356 = vmatpush1.msra.mxu0 0.0
  %1357 = vmatprep.subr.mxu0 0.0
  %1358 = vmatpush1.msra.mxu0 0.0
  %1359 = vmatprep.subr.mxu0 0.0
  %1360 = vmatpush1.msra.mxu0 0.0
  %1361 = vmatprep.subr.mxu0 0.0
  %1362 = vmatpush1.msra.mxu0 0.0
  %1363 = vmatprep.subr.mxu0 0.0
  %1364 = vmatpush1.msra.mxu0 0.0
  %1365 = vmatprep.subr.mxu0 0.0
  %1366 = vmatpush1.msra.mxu0 0.0
  %1367 = vmatprep.mubr.f32.mxu0 0.0
  %1368 = vmatmul.mubr.f32.gmra.mrb[0].mxu0 %v1298
  %v1369 = vpop.f32.mrb[0].mxu0
  %v1370 = vadd.f32 0.0, %v1369
  %v1371 = vpop.f32.mrb[0].mxu0
  %1372 = vdwg.mxu0
  %v1374 = vsel %vm593, %v1291, 0
  %1376 = vmatprep.subr.mxu0 0.0
  %1377 = vmatpush1.msra.mxu0 %v1301
  %1378 = vmatprep.subr.mxu0 0.0
  %1379 = vmatpush1.msra.mxu0 0.0
  %1380 = vmatprep.subr.mxu0 0.0
  %1381 = vmatpush1.msra.mxu0 0.0
  %1382 = vmatprep.subr.mxu0 0.0
  %1383 = vmatpush1.msra.mxu0 0.0
  %1384 = vmatprep.subr.mxu0 0.0
  %1385 = vmatpush1.msra.mxu0 0.0
  %1386 = vmatprep.subr.mxu0 0.0
  %1387 = vmatpush1.msra.mxu0 0.0
  %1388 = vmatprep.subr.mxu0 0.0
  %1389 = vmatpush1.msra.mxu0 0.0
  %1390 = vmatprep.subr.mxu0 0.0
  %1391 = vmatpush1.msra.mxu0 0.0
  %1392 = vmatprep.subr.mxu0 0.0
  %1393 = vmatpush1.msra.mxu0 0.0
  %1394 = vmatprep.subr.mxu0 0.0
  %1395 = vmatpush1.msra.mxu0 0.0
  %1396 = vmatprep.subr.mxu0 0.0
  %1397 = vmatpush1.msra.mxu0 0.0
  %1398 = vmatprep.subr.mxu0 0.0
  %1399 = vmatpush1.msra.mxu0 0.0
  %1400 = vmatprep.subr.mxu0 0.0
  %1401 = vmatpush1.msra.mxu0 0.0
  %1402 = vmatprep.subr.mxu0 0.0
  %1403 = vmatpush1.msra.mxu0 0.0
  %1404 = vmatprep.subr.mxu0 0.0
  %1405 = vmatpush1.msra.mxu0 0.0
  %1406 = vmatprep.subr.mxu0 0.0
  %1407 = vmatpush1.msra.mxu0 0.0
  %1408 = vmatprep.subr.mxu0 0.0
  %1409 = vmatpush1.msra.mxu0 0.0
  %1410 = vmatprep.subr.mxu0 0.0
  %1411 = vmatpush1.msra.mxu0 0.0
  %1412 = vmatprep.subr.mxu0 0.0
  %1413 = vmatpush1.msra.mxu0 0.0
  %1414 = vmatprep.subr.mxu0 0.0
  %1415 = vmatpush1.msra.mxu0 0.0
  %1416 = vmatprep.subr.mxu0 0.0
  %1417 = vmatpush1.msra.mxu0 0.0
  %1418 = vmatprep.subr.mxu0 0.0
  %1419 = vmatpush1.msra.mxu0 0.0
  %1420 = vmatprep.subr.mxu0 0.0
  %1421 = vmatpush1.msra.mxu0 0.0
  %1422 = vmatprep.subr.mxu0 0.0
  %1423 = vmatpush1.msra.mxu0 0.0
  %1424 = vmatprep.subr.mxu0 0.0
  %1425 = vmatpush1.msra.mxu0 0.0
  %1426 = vmatprep.subr.mxu0 0.0
  %1427 = vmatpush1.msra.mxu0 0.0
  %1428 = vmatprep.subr.mxu0 0.0
  %1429 = vmatpush1.msra.mxu0 0.0
  %1430 = vmatprep.subr.mxu0 0.0
  %1431 = vmatpush1.msra.mxu0 0.0
  %1432 = vmatprep.subr.mxu0 0.0
  %1433 = vmatpush1.msra.mxu0 0.0
  %1434 = vmatprep.subr.mxu0 0.0
  %1435 = vmatpush1.msra.mxu0 0.0
  %1436 = vmatprep.subr.mxu0 0.0
  %1437 = vmatpush1.msra.mxu0 0.0
  %1438 = vmatprep.subr.mxu0 0.0
  %1439 = vmatpush1.msra.mxu0 0.0
  %1440 = vmatprep.mubr.f32.mxu0 0.0
  %1441 = vmatmul.mubr.f32.gmra.mrb[0].mxu0 %v1374
  %v1442 = vpop.f32.mrb[0].mxu0
  %v1443 = vadd.f32 0.0, %v1442
  %v1444 = vpop.f32.mrb[0].mxu0
  %1445 = vdwg.mxu0
  %vm1446 = vcmp.lt.s32.totalorder %v283, 8
  %vm1447 = vcmp.lt.s32.totalorder %v284, 8
  %vm1448 = vmand %vm294, %vm1446
  %vm1449 = vmand %vm295, %vm1447
  %vm1450 = vmand %vm1448, %vm306
  %vm1451 = vmand %vm1449, %vm306
  %vm1452 = vcmp.lt.s32.totalorder %v288, 8
  %vm1453 = vmand %vm1450, %vm1452
  %vm1454 = vmand %vm1451, %vm1452
  %vm1455 = vcmp.ge.s32.totalorder %v283, 8
  %vm1456 = vcmp.ge.s32.totalorder %v284, 8
  %vm1457 = vmand %vm1455, %vm298
  %vm1458 = vmand %vm1456, %vm299
  %vm1459 = vcmp.ge.s32.totalorder %v288, 8
  %vm1460 = vmand %vm1457, %vm1459
  %vm1461 = vmand %vm1458, %vm1459
  %vm1462 = vmand %vm1460, %vm311
  %vm1463 = vmand %vm1461, %vm311
  %vm1464 = vmor %vm1453, %vm1462
  %vm1465 = vmor %vm1454, %vm1463
  %vm1466 = vmand %vm290, %vm1464
  %vm1467 = vmand %vm291, %vm1465
  %v1468 = vsel %vm1466, 1.0, 0.0
  %v1469 = vsel %vm1467, 1.0, 0.0
  %vm1470 = vcmask 130048
  %v1472 = vsel %vm1470, %v1370, 0
  %1474 = vmatprep.subr.mxu0 0.0
  %1475 = vmatpush1.msra.mxu0 %v1468
  %1476 = vmatprep.subr.mxu0 0.0
  %1477 = vmatpush1.msra.mxu0 %v1469
  %1478 = vmatprep.subr.mxu0 0.0
  %1479 = vmatpush1.msra.mxu0 0.0
  %1480 = vmatprep.subr.mxu0 0.0
  %1481 = vmatpush1.msra.mxu0 0.0
  %1482 = vmatprep.subr.mxu0 0.0
  %1483 = vmatpush1.msra.mxu0 0.0
  %1484 = vmatprep.subr.mxu0 0.0
  %1485 = vmatpush1.msra.mxu0 0.0
  %1486 = vmatprep.subr.mxu0 0.0
  %1487 = vmatpush1.msra.mxu0 0.0
  %1488 = vmatprep.subr.mxu0 0.0
  %1489 = vmatpush1.msra.mxu0 0.0
  %1490 = vmatprep.subr.mxu0 0.0
  %1491 = vmatpush1.msra.mxu0 0.0
  %1492 = vmatprep.subr.mxu0 0.0
  %1493 = vmatpush1.msra.mxu0 0.0
  %1494 = vmatprep.subr.mxu0 0.0
  %1495 = vmatpush1.msra.mxu0 0.0
  %1496 = vmatprep.subr.mxu0 0.0
  %1497 = vmatpush1.msra.mxu0 0.0
  %1498 = vmatprep.subr.mxu0 0.0
  %1499 = vmatpush1.msra.mxu0 0.0
  %1500 = vmatprep.subr.mxu0 0.0
  %1501 = vmatpush1.msra.mxu0 0.0
  %1502 = vmatprep.subr.mxu0 0.0
  %1503 = vmatpush1.msra.mxu0 0.0
  %1504 = vmatprep.subr.mxu0 0.0
  %1505 = vmatpush1.msra.mxu0 0.0
  %1506 = vmatprep.subr.mxu0 0.0
  %1507 = vmatpush1.msra.mxu0 0.0
  %1508 = vmatprep.subr.mxu0 0.0
  %1509 = vmatpush1.msra.mxu0 0.0
  %1510 = vmatprep.subr.mxu0 0.0
  %1511 = vmatpush1.msra.mxu0 0.0
  %1512 = vmatprep.subr.mxu0 0.0
  %1513 = vmatpush1.msra.mxu0 0.0
  %1514 = vmatprep.subr.mxu0 0.0
  %1515 = vmatpush1.msra.mxu0 0.0
  %1516 = vmatprep.subr.mxu0 0.0
  %1517 = vmatpush1.msra.mxu0 0.0
  %1518 = vmatprep.subr.mxu0 0.0
  %1519 = vmatpush1.msra.mxu0 0.0
  %1520 = vmatprep.subr.mxu0 0.0
  %1521 = vmatpush1.msra.mxu0 0.0
  %1522 = vmatprep.subr.mxu0 0.0
  %1523 = vmatpush1.msra.mxu0 0.0
  %1524 = vmatprep.subr.mxu0 0.0
  %1525 = vmatpush1.msra.mxu0 0.0
  %1526 = vmatprep.subr.mxu0 0.0
  %1527 = vmatpush1.msra.mxu0 0.0
  %1528 = vmatprep.subr.mxu0 0.0
  %1529 = vmatpush1.msra.mxu0 0.0
  %1530 = vmatprep.subr.mxu0 0.0
  %1531 = vmatpush1.msra.mxu0 0.0
  %1532 = vmatprep.subr.mxu0 0.0
  %1533 = vmatpush1.msra.mxu0 0.0
  %1534 = vmatprep.subr.mxu0 0.0
  %1535 = vmatpush1.msra.mxu0 0.0
  %1536 = vmatprep.subr.mxu0 0.0
  %1537 = vmatpush1.msra.mxu0 0.0
  %1538 = vmatprep.mubr.f32.mxu0 0.0
  %1539 = vmatmul.mubr.f32.gmra.mrb[0].mxu0 %v1472
  %v1540 = vpop.f32.mrb[0].mxu0
  %v1541 = vadd.f32 0.0, %v1540
  %v1542 = vpop.f32.mrb[0].mxu0
  %1543 = vdwg.mxu0
  %v1545 = vsel %vm593, %v1290, 0
  %1547 = vmatprep.subr.mxu0 0.0
  %1548 = vmatpush1.msra.mxu0 %v1301
  %1549 = vmatprep.subr.mxu0 0.0
  %1550 = vmatpush1.msra.mxu0 0.0
  %1551 = vmatprep.subr.mxu0 0.0
  %1552 = vmatpush1.msra.mxu0 0.0
  %1553 = vmatprep.subr.mxu0 0.0
  %1554 = vmatpush1.msra.mxu0 0.0
  %1555 = vmatprep.subr.mxu0 0.0
  %1556 = vmatpush1.msra.mxu0 0.0
  %1557 = vmatprep.subr.mxu0 0.0
  %1558 = vmatpush1.msra.mxu0 0.0
  %1559 = vmatprep.subr.mxu0 0.0
  %1560 = vmatpush1.msra.mxu0 0.0
  %1561 = vmatprep.subr.mxu0 0.0
  %1562 = vmatpush1.msra.mxu0 0.0
  %1563 = vmatprep.subr.mxu0 0.0
  %1564 = vmatpush1.msra.mxu0 0.0
  %1565 = vmatprep.subr.mxu0 0.0
  %1566 = vmatpush1.msra.mxu0 0.0
  %1567 = vmatprep.subr.mxu0 0.0
  %1568 = vmatpush1.msra.mxu0 0.0
  %1569 = vmatprep.subr.mxu0 0.0
  %1570 = vmatpush1.msra.mxu0 0.0
  %1571 = vmatprep.subr.mxu0 0.0
  %1572 = vmatpush1.msra.mxu0 0.0
  %1573 = vmatprep.subr.mxu0 0.0
  %1574 = vmatpush1.msra.mxu0 0.0
  %1575 = vmatprep.subr.mxu0 0.0
  %1576 = vmatpush1.msra.mxu0 0.0
  %1577 = vmatprep.subr.mxu0 0.0
  %1578 = vmatpush1.msra.mxu0 0.0
  %1579 = vmatprep.subr.mxu0 0.0
  %1580 = vmatpush1.msra.mxu0 0.0
  %1581 = vmatprep.subr.mxu0 0.0
  %1582 = vmatpush1.msra.mxu0 0.0
  %1583 = vmatprep.subr.mxu0 0.0
  %1584 = vmatpush1.msra.mxu0 0.0
  %1585 = vmatprep.subr.mxu0 0.0
  %1586 = vmatpush1.msra.mxu0 0.0
  %1587 = vmatprep.subr.mxu0 0.0
  %1588 = vmatpush1.msra.mxu0 0.0
  %1589 = vmatprep.subr.mxu0 0.0
  %1590 = vmatpush1.msra.mxu0 0.0
  %1591 = vmatprep.subr.mxu0 0.0
  %1592 = vmatpush1.msra.mxu0 0.0
  %1593 = vmatprep.subr.mxu0 0.0
  %1594 = vmatpush1.msra.mxu0 0.0
  %1595 = vmatprep.subr.mxu0 0.0
  %1596 = vmatpush1.msra.mxu0 0.0
  %1597 = vmatprep.subr.mxu0 0.0
  %1598 = vmatpush1.msra.mxu0 0.0
  %1599 = vmatprep.subr.mxu0 0.0
  %1600 = vmatpush1.msra.mxu0 0.0
  %1601 = vmatprep.subr.mxu0 0.0
  %1602 = vmatpush1.msra.mxu0 0.0
  %1603 = vmatprep.subr.mxu0 0.0
  %1604 = vmatpush1.msra.mxu0 0.0
  %1605 = vmatprep.subr.mxu0 0.0
  %1606 = vmatpush1.msra.mxu0 0.0
  %1607 = vmatprep.subr.mxu0 0.0
  %1608 = vmatpush1.msra.mxu0 0.0
  %1609 = vmatprep.subr.mxu0 0.0
  %1610 = vmatpush1.msra.mxu0 0.0
  %1611 = vmatprep.mubr.f32.mxu0 0.0
  %1612 = vmatmul.mubr.f32.gmra.mrb[0].mxu0 %v1545
  %v1613 = vpop.f32.mrb[0].mxu0
  %v1614 = vadd.f32 %v1541, %v1613
  %v1615 = vpop.f32.mrb[0].mxu0
  %1616 = vdwg.mxu0
  %vm1617 = vmand %vm498, %vm1464
  %vm1618 = vmand %vm499, %vm1465
  %v1619 = vsel %vm1617, 1.0, 0.0
  %v1620 = vsel %vm1618, 1.0, 0.0
  %v1622 = vsel %vm1470, %v1443, 0
  %1624 = vmatprep.subr.mxu0 0.0
  %1625 = vmatpush1.msra.mxu0 %v1619
  %1626 = vmatprep.subr.mxu0 0.0
  %1627 = vmatpush1.msra.mxu0 %v1620
  %1628 = vmatprep.subr.mxu0 0.0
  %1629 = vmatpush1.msra.mxu0 0.0
  %1630 = vmatprep.subr.mxu0 0.0
  %1631 = vmatpush1.msra.mxu0 0.0
  %1632 = vmatprep.subr.mxu0 0.0
  %1633 = vmatpush1.msra.mxu0 0.0
  %1634 = vmatprep.subr.mxu0 0.0
  %1635 = vmatpush1.msra.mxu0 0.0
  %1636 = vmatprep.subr.mxu0 0.0
  %1637 = vmatpush1.msra.mxu0 0.0
  %1638 = vmatprep.subr.mxu0 0.0
  %1639 = vmatpush1.msra.mxu0 0.0
  %1640 = vmatprep.subr.mxu0 0.0
  %1641 = vmatpush1.msra.mxu0 0.0
  %1642 = vmatprep.subr.mxu0 0.0
  %1643 = vmatpush1.msra.mxu0 0.0
  %1644 = vmatprep.subr.mxu0 0.0
  %1645 = vmatpush1.msra.mxu0 0.0
  %1646 = vmatprep.subr.mxu0 0.0
  %1647 = vmatpush1.msra.mxu0 0.0
  %1648 = vmatprep.subr.mxu0 0.0
  %1649 = vmatpush1.msra.mxu0 0.0
  %1650 = vmatprep.subr.mxu0 0.0
  %1651 = vmatpush1.msra.mxu0 0.0
  %1652 = vmatprep.subr.mxu0 0.0
  %1653 = vmatpush1.msra.mxu0 0.0
  %1654 = vmatprep.subr.mxu0 0.0
  %1655 = vmatpush1.msra.mxu0 0.0
  %1656 = vmatprep.subr.mxu0 0.0
  %1657 = vmatpush1.msra.mxu0 0.0
  %1658 = vmatprep.subr.mxu0 0.0
  %1659 = vmatpush1.msra.mxu0 0.0
  %1660 = vmatprep.subr.mxu0 0.0
  %1661 = vmatpush1.msra.mxu0 0.0
  %1662 = vmatprep.subr.mxu0 0.0
  %1663 = vmatpush1.msra.mxu0 0.0
  %1664 = vmatprep.subr.mxu0 0.0
  %1665 = vmatpush1.msra.mxu0 0.0
  %1666 = vmatprep.subr.mxu0 0.0
  %1667 = vmatpush1.msra.mxu0 0.0
  %1668 = vmatprep.subr.mxu0 0.0
  %1669 = vmatpush1.msra.mxu0 0.0
  %1670 = vmatprep.subr.mxu0 0.0
  %1671 = vmatpush1.msra.mxu0 0.0
  %1672 = vmatprep.subr.mxu0 0.0
  %1673 = vmatpush1.msra.mxu0 0.0
  %1674 = vmatprep.subr.mxu0 0.0
  %1675 = vmatpush1.msra.mxu0 0.0
  %1676 = vmatprep.subr.mxu0 0.0
  %1677 = vmatpush1.msra.mxu0 0.0
  %1678 = vmatprep.subr.mxu0 0.0
  %1679 = vmatpush1.msra.mxu0 0.0
  %1680 = vmatprep.subr.mxu0 0.0
  %1681 = vmatpush1.msra.mxu0 0.0
  %1682 = vmatprep.subr.mxu0 0.0
  %1683 = vmatpush1.msra.mxu0 0.0
  %1684 = vmatprep.subr.mxu0 0.0
  %1685 = vmatpush1.msra.mxu0 0.0
  %1686 = vmatprep.subr.mxu0 0.0
  %1687 = vmatpush1.msra.mxu0 0.0
  %1688 = vmatprep.mubr.f32.mxu0 0.0
  %1689 = vmatmul.mubr.f32.gmra.mrb[0].mxu0 %v1622
  %v1690 = vpop.f32.mrb[0].mxu0
  %v1691 = vadd.f32 0.0, %v1690
  %v1692 = vpop.f32.mrb[0].mxu0
  %1693 = vdwg.mxu0
  %v1694 = vadd.f32 %v1614, %v1691
  %1696 = vset.pattern.permute.xlu0 0
  %1697 = vperm.xlu0 %1696, %v1292
  %v1698 = vpop.permute.xlu0 %1697
  %v1700 = vadd.f32 %v1694, %v1698
  %vm1701 = vcmp.ge.f32.partialorder %v1700, 0.0
  %v1702 = vmul.f32 %v1700, 0.01
  %v1703 = vsel %vm1701, %v1700, %v1702
  %vm1704 = vcmask 64512
  %v1706 = vsel %vm1704, %v1293, 0
  %1708 = vmatprep.subr.mxu0 0.0
  %1709 = vmatpush1.msra.mxu0 %v1703
  %1710 = vmatprep.subr.mxu0 0.0
  %1711 = vmatpush1.msra.mxu0 0.0
  %1712 = vmatprep.subr.mxu0 0.0
  %1713 = vmatpush1.msra.mxu0 0.0
  %1714 = vmatprep.subr.mxu0 0.0
  %1715 = vmatpush1.msra.mxu0 0.0
  %1716 = vmatprep.subr.mxu0 0.0
  %1717 = vmatpush1.msra.mxu0 0.0
  %1718 = vmatprep.subr.mxu0 0.0
  %1719 = vmatpush1.msra.mxu0 0.0
  %1720 = vmatprep.subr.mxu0 0.0
  %1721 = vmatpush1.msra.mxu0 0.0
  %1722 = vmatprep.subr.mxu0 0.0
  %1723 = vmatpush1.msra.mxu0 0.0
  %1724 = vmatprep.subr.mxu0 0.0
  %1725 = vmatpush1.msra.mxu0 0.0
  %1726 = vmatprep.subr.mxu0 0.0
  %1727 = vmatpush1.msra.mxu0 0.0
  %1728 = vmatprep.subr.mxu0 0.0
  %1729 = vmatpush1.msra.mxu0 0.0
  %1730 = vmatprep.subr.mxu0 0.0
  %1731 = vmatpush1.msra.mxu0 0.0
  %1732 = vmatprep.subr.mxu0 0.0
  %1733 = vmatpush1.msra.mxu0 0.0
  %1734 = vmatprep.subr.mxu0 0.0
  %1735 = vmatpush1.msra.mxu0 0.0
  %1736 = vmatprep.subr.mxu0 0.0
  %1737 = vmatpush1.msra.mxu0 0.0
  %1738 = vmatprep.subr.mxu0 0.0
  %1739 = vmatpush1.msra.mxu0 0.0
  %1740 = vmatprep.subr.mxu0 0.0
  %1741 = vmatpush1.msra.mxu0 0.0
  %1742 = vmatprep.subr.mxu0 0.0
  %1743 = vmatpush1.msra.mxu0 0.0
  %1744 = vmatprep.subr.mxu0 0.0
  %1745 = vmatpush1.msra.mxu0 0.0
  %1746 = vmatprep.subr.mxu0 0.0
  %1747 = vmatpush1.msra.mxu0 0.0
  %1748 = vmatprep.subr.mxu0 0.0
  %1749 = vmatpush1.msra.mxu0 0.0
  %1750 = vmatprep.subr.mxu0 0.0
  %1751 = vmatpush1.msra.mxu0 0.0
  %1752 = vmatprep.subr.mxu0 0.0
  %1753 = vmatpush1.msra.mxu0 0.0
  %1754 = vmatprep.subr.mxu0 0.0
  %1755 = vmatpush1.msra.mxu0 0.0
  %1756 = vmatprep.subr.mxu0 0.0
  %1757 = vmatpush1.msra.mxu0 0.0
  %1758 = vmatprep.subr.mxu0 0.0
  %1759 = vmatpush1.msra.mxu0 0.0
  %1760 = vmatprep.subr.mxu0 0.0
  %1761 = vmatpush1.msra.mxu0 0.0
  %1762 = vmatprep.subr.mxu0 0.0
  %1763 = vmatpush1.msra.mxu0 0.0
  %1764 = vmatprep.subr.mxu0 0.0
  %1765 = vmatpush1.msra.mxu0 0.0
  %1766 = vmatprep.subr.mxu0 0.0
  %1767 = vmatpush1.msra.mxu0 0.0
  %1768 = vmatprep.subr.mxu0 0.0
  %1769 = vmatpush1.msra.mxu0 0.0
  %1770 = vmatprep.subr.mxu0 0.0
  %1771 = vmatpush1.msra.mxu0 0.0
  %1772 = vmatprep.mubr.f32.mxu0 0.0
  %1773 = vmatmul.mubr.f32.gmra.mrb[0].mxu0 %v1706
  %v1774 = vpop.f32.mrb[0].mxu0
  %v1775 = vadd.f32 0.0, %v1774
  %v1776 = vpop.f32.mrb[0].mxu0
  %1777 = vdwg.mxu0
  %v1779 = vsel %vm1704, %v1295, 0
  %1781 = vmatprep.subr.mxu0 0.0
  %1782 = vmatpush1.msra.mxu0 %v1703
  %1783 = vmatprep.subr.mxu0 0.0
  %1784 = vmatpush1.msra.mxu0 0.0
  %1785 = vmatprep.subr.mxu0 0.0
  %1786 = vmatpush1.msra.mxu0 0.0
  %1787 = vmatprep.subr.mxu0 0.0
  %1788 = vmatpush1.msra.mxu0 0.0
  %1789 = vmatprep.subr.mxu0 0.0
  %1790 = vmatpush1.msra.mxu0 0.0
  %1791 = vmatprep.subr.mxu0 0.0
  %1792 = vmatpush1.msra.mxu0 0.0
  %1793 = vmatprep.subr.mxu0 0.0
  %1794 = vmatpush1.msra.mxu0 0.0
  %1795 = vmatprep.subr.mxu0 0.0
  %1796 = vmatpush1.msra.mxu0 0.0
  %1797 = vmatprep.subr.mxu0 0.0
  %1798 = vmatpush1.msra.mxu0 0.0
  %1799 = vmatprep.subr.mxu0 0.0
  %1800 = vmatpush1.msra.mxu0 0.0
  %1801 = vmatprep.subr.mxu0 0.0
  %1802 = vmatpush1.msra.mxu0 0.0
  %1803 = vmatprep.subr.mxu0 0.0
  %1804 = vmatpush1.msra.mxu0 0.0
  %1805 = vmatprep.subr.mxu0 0.0
  %1806 = vmatpush1.msra.mxu0 0.0
  %1807 = vmatprep.subr.mxu0 0.0
  %1808 = vmatpush1.msra.mxu0 0.0
  %1809 = vmatprep.subr.mxu0 0.0
  %1810 = vmatpush1.msra.mxu0 0.0
  %1811 = vmatprep.subr.mxu0 0.0
  %1812 = vmatpush1.msra.mxu0 0.0
  %1813 = vmatprep.subr.mxu0 0.0
  %1814 = vmatpush1.msra.mxu0 0.0
  %1815 = vmatprep.subr.mxu0 0.0
  %1816 = vmatpush1.msra.mxu0 0.0
  %1817 = vmatprep.subr.mxu0 0.0
  %1818 = vmatpush1.msra.mxu0 0.0
  %1819 = vmatprep.subr.mxu0 0.0
  %1820 = vmatpush1.msra.mxu0 0.0
  %1821 = vmatprep.subr.mxu0 0.0
  %1822 = vmatpush1.msra.mxu0 0.0
  %1823 = vmatprep.subr.mxu0 0.0
  %1824 = vmatpush1.msra.mxu0 0.0
  %1825 = vmatprep.subr.mxu0 0.0
  %1826 = vmatpush1.msra.mxu0 0.0
  %1827 = vmatprep.subr.mxu0 0.0
  %1828 = vmatpush1.msra.mxu0 0.0
  %1829 = vmatprep.subr.mxu0 0.0
  %1830 = vmatpush1.msra.mxu0 0.0
  %1831 = vmatprep.subr.mxu0 0.0
  %1832 = vmatpush1.msra.mxu0 0.0
  %1833 = vmatprep.subr.mxu0 0.0
  %1834 = vmatpush1.msra.mxu0 0.0
  %1835 = vmatprep.subr.mxu0 0.0
  %1836 = vmatpush1.msra.mxu0 0.0
  %1837 = vmatprep.subr.mxu0 0.0
  %1838 = vmatpush1.msra.mxu0 0.0
  %1839 = vmatprep.subr.mxu0 0.0
  %1840 = vmatpush1.msra.mxu0 0.0
  %1841 = vmatprep.subr.mxu0 0.0
  %1842 = vmatpush1.msra.mxu0 0.0
  %1843 = vmatprep.subr.mxu0 0.0
  %1844 = vmatpush1.msra.mxu0 0.0
  %1845 = vmatprep.mubr.f32.mxu0 0.0
  %1846 = vmatmul.mubr.f32.gmra.mrb[0].mxu0 %v1779
  %v1847 = vpop.f32.mrb[0].mxu0
  %v1848 = vadd.f32 0.0, %v1847
  %v1849 = vpop.f32.mrb[0].mxu0
  %1850 = vdwg.mxu0
  %v1852 = vsel %vm1470, %v1775, 0
  %1854 = vmatprep.subr.mxu0 0.0
  %1855 = vmatpush1.msra.mxu0 %v1468
  %1856 = vmatprep.subr.mxu0 0.0
  %1857 = vmatpush1.msra.mxu0 %v1469
  %1858 = vmatprep.subr.mxu0 0.0
  %1859 = vmatpush1.msra.mxu0 0.0
  %1860 = vmatprep.subr.mxu0 0.0
  %1861 = vmatpush1.msra.mxu0 0.0
  %1862 = vmatprep.subr.mxu0 0.0
  %1863 = vmatpush1.msra.mxu0 0.0
  %1864 = vmatprep.subr.mxu0 0.0
  %1865 = vmatpush1.msra.mxu0 0.0
  %1866 = vmatprep.subr.mxu0 0.0
  %1867 = vmatpush1.msra.mxu0 0.0
  %1868 = vmatprep.subr.mxu0 0.0
  %1869 = vmatpush1.msra.mxu0 0.0
  %1870 = vmatprep.subr.mxu0 0.0
  %1871 = vmatpush1.msra.mxu0 0.0
  %1872 = vmatprep.subr.mxu0 0.0
  %1873 = vmatpush1.msra.mxu0 0.0
  %1874 = vmatprep.subr.mxu0 0.0
  %1875 = vmatpush1.msra.mxu0 0.0
  %1876 = vmatprep.subr.mxu0 0.0
  %1877 = vmatpush1.msra.mxu0 0.0
  %1878 = vmatprep.subr.mxu0 0.0
  %1879 = vmatpush1.msra.mxu0 0.0
  %1880 = vmatprep.subr.mxu0 0.0
  %1881 = vmatpush1.msra.mxu0 0.0
  %1882 = vmatprep.subr.mxu0 0.0
  %1883 = vmatpush1.msra.mxu0 0.0
  %1884 = vmatprep.subr.mxu0 0.0
  %1885 = vmatpush1.msra.mxu0 0.0
  %1886 = vmatprep.subr.mxu0 0.0
  %1887 = vmatpush1.msra.mxu0 0.0
  %1888 = vmatprep.subr.mxu0 0.0
  %1889 = vmatpush1.msra.mxu0 0.0
  %1890 = vmatprep.subr.mxu0 0.0
  %1891 = vmatpush1.msra.mxu0 0.0
  %1892 = vmatprep.subr.mxu0 0.0
  %1893 = vmatpush1.msra.mxu0 0.0
  %1894 = vmatprep.subr.mxu0 0.0
  %1895 = vmatpush1.msra.mxu0 0.0
  %1896 = vmatprep.subr.mxu0 0.0
  %1897 = vmatpush1.msra.mxu0 0.0
  %1898 = vmatprep.subr.mxu0 0.0
  %1899 = vmatpush1.msra.mxu0 0.0
  %1900 = vmatprep.subr.mxu0 0.0
  %1901 = vmatpush1.msra.mxu0 0.0
  %1902 = vmatprep.subr.mxu0 0.0
  %1903 = vmatpush1.msra.mxu0 0.0
  %1904 = vmatprep.subr.mxu0 0.0
  %1905 = vmatpush1.msra.mxu0 0.0
  %1906 = vmatprep.subr.mxu0 0.0
  %1907 = vmatpush1.msra.mxu0 0.0
  %1908 = vmatprep.subr.mxu0 0.0
  %1909 = vmatpush1.msra.mxu0 0.0
  %1910 = vmatprep.subr.mxu0 0.0
  %1911 = vmatpush1.msra.mxu0 0.0
  %1912 = vmatprep.subr.mxu0 0.0
  %1913 = vmatpush1.msra.mxu0 0.0
  %1914 = vmatprep.subr.mxu0 0.0
  %1915 = vmatpush1.msra.mxu0 0.0
  %1916 = vmatprep.subr.mxu0 0.0
  %1917 = vmatpush1.msra.mxu0 0.0
  %1918 = vmatprep.mubr.f32.mxu0 0.0
  %1919 = vmatmul.mubr.f32.gmra.mrb[0].mxu0 %v1852
  %v1920 = vpop.f32.mrb[0].mxu0
  %v1921 = vadd.f32 0.0, %v1920
  %v1922 = vpop.f32.mrb[0].mxu0
  %1923 = vdwg.mxu0
  %v1925 = vsel %vm1704, %v1294, 0
  %1927 = vmatprep.subr.mxu0 0.0
  %1928 = vmatpush1.msra.mxu0 %v1703
  %1929 = vmatprep.subr.mxu0 0.0
  %1930 = vmatpush1.msra.mxu0 0.0
  %1931 = vmatprep.subr.mxu0 0.0
  %1932 = vmatpush1.msra.mxu0 0.0
  %1933 = vmatprep.subr.mxu0 0.0
  %1934 = vmatpush1.msra.mxu0 0.0
  %1935 = vmatprep.subr.mxu0 0.0
  %1936 = vmatpush1.msra.mxu0 0.0
  %1937 = vmatprep.subr.mxu0 0.0
  %1938 = vmatpush1.msra.mxu0 0.0
  %1939 = vmatprep.subr.mxu0 0.0
  %1940 = vmatpush1.msra.mxu0 0.0
  %1941 = vmatprep.subr.mxu0 0.0
  %1942 = vmatpush1.msra.mxu0 0.0
  %1943 = vmatprep.subr.mxu0 0.0
  %1944 = vmatpush1.msra.mxu0 0.0
  %1945 = vmatprep.subr.mxu0 0.0
  %1946 = vmatpush1.msra.mxu0 0.0
  %1947 = vmatprep.subr.mxu0 0.0
  %1948 = vmatpush1.msra.mxu0 0.0
  %1949 = vmatprep.subr.mxu0 0.0
  %1950 = vmatpush1.msra.mxu0 0.0
  %1951 = vmatprep.subr.mxu0 0.0
  %1952 = vmatpush1.msra.mxu0 0.0
  %1953 = vmatprep.subr.mxu0 0.0
  %1954 = vmatpush1.msra.mxu0 0.0
  %1955 = vmatprep.subr.mxu0 0.0
  %1956 = vmatpush1.msra.mxu0 0.0
  %1957 = vmatprep.subr.mxu0 0.0
  %1958 = vmatpush1.msra.mxu0 0.0
  %1959 = vmatprep.subr.mxu0 0.0
  %1960 = vmatpush1.msra.mxu0 0.0
  %1961 = vmatprep.subr.mxu0 0.0
  %1962 = vmatpush1.msra.mxu0 0.0
  %1963 = vmatprep.subr.mxu0 0.0
  %1964 = vmatpush1.msra.mxu0 0.0
  %1965 = vmatprep.subr.mxu0 0.0
  %1966 = vmatpush1.msra.mxu0 0.0
  %1967 = vmatprep.subr.mxu0 0.0
  %1968 = vmatpush1.msra.mxu0 0.0
  %1969 = vmatprep.subr.mxu0 0.0
  %1970 = vmatpush1.msra.mxu0 0.0
  %1971 = vmatprep.subr.mxu0 0.0
  %1972 = vmatpush1.msra.mxu0 0.0
  %1973 = vmatprep.subr.mxu0 0.0
  %1974 = vmatpush1.msra.mxu0 0.0
  %1975 = vmatprep.subr.mxu0 0.0
  %1976 = vmatpush1.msra.mxu0 0.0
  %1977 = vmatprep.subr.mxu0 0.0
  %1978 = vmatpush1.msra.mxu0 0.0
  %1979 = vmatprep.subr.mxu0 0.0
  %1980 = vmatpush1.msra.mxu0 0.0
  %1981 = vmatprep.subr.mxu0 0.0
  %1982 = vmatpush1.msra.mxu0 0.0
  %1983 = vmatprep.subr.mxu0 0.0
  %1984 = vmatpush1.msra.mxu0 0.0
  %1985 = vmatprep.subr.mxu0 0.0
  %1986 = vmatpush1.msra.mxu0 0.0
  %1987 = vmatprep.subr.mxu0 0.0
  %1988 = vmatpush1.msra.mxu0 0.0
  %1989 = vmatprep.subr.mxu0 0.0
  %1990 = vmatpush1.msra.mxu0 0.0
  %1991 = vmatprep.mubr.f32.mxu0 0.0
  %1992 = vmatmul.mubr.f32.gmra.mrb[0].mxu0 %v1925
  %v1993 = vpop.f32.mrb[0].mxu0
  %v1994 = vadd.f32 %v1921, %v1993
  %v1995 = vpop.f32.mrb[0].mxu0
  %1996 = vdwg.mxu0
  %v1998 = vsel %vm1470, %v1848, 0
  %2000 = vmatprep.subr.mxu0 0.0
  %2001 = vmatpush1.msra.mxu0 %v1619
  %2002 = vmatprep.subr.mxu0 0.0
  %2003 = vmatpush1.msra.mxu0 %v1620
  %2004 = vmatprep.subr.mxu0 0.0
  %2005 = vmatpush1.msra.mxu0 0.0
  %2006 = vmatprep.subr.mxu0 0.0
  %2007 = vmatpush1.msra.mxu0 0.0
  %2008 = vmatprep.subr.mxu0 0.0
  %2009 = vmatpush1.msra.mxu0 0.0
  %2010 = vmatprep.subr.mxu0 0.0
  %2011 = vmatpush1.msra.mxu0 0.0
  %2012 = vmatprep.subr.mxu0 0.0
  %2013 = vmatpush1.msra.mxu0 0.0
  %2014 = vmatprep.subr.mxu0 0.0
  %2015 = vmatpush1.msra.mxu0 0.0
  %2016 = vmatprep.subr.mxu0 0.0
  %2017 = vmatpush1.msra.mxu0 0.0
  %2018 = vmatprep.subr.mxu0 0.0
  %2019 = vmatpush1.msra.mxu0 0.0
  %2020 = vmatprep.subr.mxu0 0.0
  %2021 = vmatpush1.msra.mxu0 0.0
  %2022 = vmatprep.subr.mxu0 0.0
  %2023 = vmatpush1.msra.mxu0 0.0
  %2024 = vmatprep.subr.mxu0 0.0
  %2025 = vmatpush1.msra.mxu0 0.0
  %2026 = vmatprep.subr.mxu0 0.0
  %2027 = vmatpush1.msra.mxu0 0.0
  %2028 = vmatprep.subr.mxu0 0.0
  %2029 = vmatpush1.msra.mxu0 0.0
  %2030 = vmatprep.subr.mxu0 0.0
  %2031 = vmatpush1.msra.mxu0 0.0
  %2032 = vmatprep.subr.mxu0 0.0
  %2033 = vmatpush1.msra.mxu0 0.0
  %2034 = vmatprep.subr.mxu0 0.0
  %2035 = vmatpush1.msra.mxu0 0.0
  %2036 = vmatprep.subr.mxu0 0.0
  %2037 = vmatpush1.msra.mxu0 0.0
  %2038 = vmatprep.subr.mxu0 0.0
  %2039 = vmatpush1.msra.mxu0 0.0
  %2040 = vmatprep.subr.mxu0 0.0
  %2041 = vmatpush1.msra.mxu0 0.0
  %2042 = vmatprep.subr.mxu0 0.0
  %2043 = vmatpush1.msra.mxu0 0.0
  %2044 = vmatprep.subr.mxu0 0.0
  %2045 = vmatpush1.msra.mxu0 0.0
  %2046 = vmatprep.subr.mxu0 0.0
  %2047 = vmatpush1.msra.mxu0 0.0
  %2048 = vmatprep.subr.mxu0 0.0
  %2049 = vmatpush1.msra.mxu0 0.0
  %2050 = vmatprep.subr.mxu0 0.0
  %2051 = vmatpush1.msra.mxu0 0.0
  %2052 = vmatprep.subr.mxu0 0.0
  %2053 = vmatpush1.msra.mxu0 0.0
  %2054 = vmatprep.subr.mxu0 0.0
  %2055 = vmatpush1.msra.mxu0 0.0
  %2056 = vmatprep.subr.mxu0 0.0
  %2057 = vmatpush1.msra.mxu0 0.0
  %2058 = vmatprep.subr.mxu0 0.0
  %2059 = vmatpush1.msra.mxu0 0.0
  %2060 = vmatprep.subr.mxu0 0.0
  %2061 = vmatpush1.msra.mxu0 0.0
  %2062 = vmatprep.subr.mxu0 0.0
  %2063 = vmatpush1.msra.mxu0 0.0
  %2064 = vmatprep.mubr.f32.mxu0 0.0
  %2065 = vmatmul.mubr.f32.gmra.mrb[0].mxu0 %v1998
  %v2066 = vpop.f32.mrb[0].mxu0
  %v2067 = vadd.f32 0.0, %v2066
  %v2068 = vpop.f32.mrb[0].mxu0
  %2069 = vdwg.mxu0
  %v2070 = vadd.f32 %v1994, %v2067
  %2072 = vset.pattern.permute.xlu0 0
  %2073 = vperm.xlu0 %2072, %v1296
  %v2074 = vpop.permute.xlu0 %2073
  %v2076 = vadd.f32 %v2070, %v2074
  %vm2077 = vcmp.ge.f32.partialorder %v2076, 0.0
  %v2078 = vmul.f32 %v2076, 0.01
  %v2079 = vsel %vm2077, %v2076, %v2078
  %v2080 = vsel %vm1464, 0.125, 0.0
  %v2081 = vsel %vm1465, 0.125, 0.0
  %v2083 = vsel %vm1470, %v2079, 0
  %2085 = vmatprep.subr.mxu0 0.0
  %2086 = vmatpush1.msra.mxu0 %v2080
  %2087 = vmatprep.subr.mxu0 0.0
  %2088 = vmatpush1.msra.mxu0 %v2081
  %2089 = vmatprep.subr.mxu0 0.0
  %2090 = vmatpush1.msra.mxu0 0.0
  %2091 = vmatprep.subr.mxu0 0.0
  %2092 = vmatpush1.msra.mxu0 0.0
  %2093 = vmatprep.subr.mxu0 0.0
  %2094 = vmatpush1.msra.mxu0 0.0
  %2095 = vmatprep.subr.mxu0 0.0
  %2096 = vmatpush1.msra.mxu0 0.0
  %2097 = vmatprep.subr.mxu0 0.0
  %2098 = vmatpush1.msra.mxu0 0.0
  %2099 = vmatprep.subr.mxu0 0.0
  %2100 = vmatpush1.msra.mxu0 0.0
  %2101 = vmatprep.subr.mxu0 0.0
  %2102 = vmatpush1.msra.mxu0 0.0
  %2103 = vmatprep.subr.mxu0 0.0
  %2104 = vmatpush1.msra.mxu0 0.0
  %2105 = vmatprep.subr.mxu0 0.0
  %2106 = vmatpush1.msra.mxu0 0.0
  %2107 = vmatprep.subr.mxu0 0.0
  %2108 = vmatpush1.msra.mxu0 0.0
  %2109 = vmatprep.subr.mxu0 0.0
  %2110 = vmatpush1.msra.mxu0 0.0
  %2111 = vmatprep.subr.mxu0 0.0
  %2112 = vmatpush1.msra.mxu0 0.0
  %2113 = vmatprep.subr.mxu0 0.0
  %2114 = vmatpush1.msra.mxu0 0.0
  %2115 = vmatprep.subr.mxu0 0.0
  %2116 = vmatpush1.msra.mxu0 0.0
  %2117 = vmatprep.subr.mxu0 0.0
  %2118 = vmatpush1.msra.mxu0 0.0
  %2119 = vmatprep.subr.mxu0 0.0
  %2120 = vmatpush1.msra.mxu0 0.0
  %2121 = vmatprep.subr.mxu0 0.0
  %2122 = vmatpush1.msra.mxu0 0.0
  %2123 = vmatprep.subr.mxu0 0.0
  %2124 = vmatpush1.msra.mxu0 0.0
  %2125 = vmatprep.subr.mxu0 0.0
  %2126 = vmatpush1.msra.mxu0 0.0
  %2127 = vmatprep.subr.mxu0 0.0
  %2128 = vmatpush1.msra.mxu0 0.0
  %2129 = vmatprep.subr.mxu0 0.0
  %2130 = vmatpush1.msra.mxu0 0.0
  %2131 = vmatprep.subr.mxu0 0.0
  %2132 = vmatpush1.msra.mxu0 0.0
  %2133 = vmatprep.subr.mxu0 0.0
  %2134 = vmatpush1.msra.mxu0 0.0
  %2135 = vmatprep.subr.mxu0 0.0
  %2136 = vmatpush1.msra.mxu0 0.0
  %2137 = vmatprep.subr.mxu0 0.0
  %2138 = vmatpush1.msra.mxu0 0.0
  %2139 = vmatprep.subr.mxu0 0.0
  %2140 = vmatpush1.msra.mxu0 0.0
  %2141 = vmatprep.subr.mxu0 0.0
  %2142 = vmatpush1.msra.mxu0 0.0
  %2143 = vmatprep.subr.mxu0 0.0
  %2144 = vmatpush1.msra.mxu0 0.0
  %2145 = vmatprep.subr.mxu0 0.0
  %2146 = vmatpush1.msra.mxu0 0.0
  %2147 = vmatprep.subr.mxu0 0.0
  %2148 = vmatpush1.msra.mxu0 0.0
  %2149 = vmatprep.mubr.f32.mxu0 0.0
  %2150 = vmatmul.mubr.f32.gmra.mrb[0].mxu0 %v2083
  %v2151 = vpop.f32.mrb[0].mxu0
  %v2152 = vadd.f32 0.0, %v2151
  %v2153 = vpop.f32.mrb[0].mxu0
  %2154 = vdwg.mxu0
  %v2155 = vsub.f32 %v2079, %v2152
  %v2156 = vmul.f32 %v2155, %v2155
  %v2158 = vsel %vm1470, %v2156, 0
  %2160 = vmatprep.subr.mxu0 0.0
  %2161 = vmatpush1.msra.mxu0 %v2080
  %2162 = vmatprep.subr.mxu0 0.0
  %2163 = vmatpush1.msra.mxu0 %v2081
  %2164 = vmatprep.subr.mxu0 0.0
  %2165 = vmatpush1.msra.mxu0 0.0
  %2166 = vmatprep.subr.mxu0 0.0
  %2167 = vmatpush1.msra.mxu0 0.0
  %2168 = vmatprep.subr.mxu0 0.0
  %2169 = vmatpush1.msra.mxu0 0.0
  %2170 = vmatprep.subr.mxu0 0.0
  %2171 = vmatpush1.msra.mxu0 0.0
  %2172 = vmatprep.subr.mxu0 0.0
  %2173 = vmatpush1.msra.mxu0 0.0
  %2174 = vmatprep.subr.mxu0 0.0
  %2175 = vmatpush1.msra.mxu0 0.0
  %2176 = vmatprep.subr.mxu0 0.0
  %2177 = vmatpush1.msra.mxu0 0.0
  %2178 = vmatprep.subr.mxu0 0.0
  %2179 = vmatpush1.msra.mxu0 0.0
  %2180 = vmatprep.subr.mxu0 0.0
  %2181 = vmatpush1.msra.mxu0 0.0
  %2182 = vmatprep.subr.mxu0 0.0
  %2183 = vmatpush1.msra.mxu0 0.0
  %2184 = vmatprep.subr.mxu0 0.0
  %2185 = vmatpush1.msra.mxu0 0.0
  %2186 = vmatprep.subr.mxu0 0.0
  %2187 = vmatpush1.msra.mxu0 0.0
  %2188 = vmatprep.subr.mxu0 0.0
  %2189 = vmatpush1.msra.mxu0 0.0
  %2190 = vmatprep.subr.mxu0 0.0
  %2191 = vmatpush1.msra.mxu0 0.0
  %2192 = vmatprep.subr.mxu0 0.0
  %2193 = vmatpush1.msra.mxu0 0.0
  %2194 = vmatprep.subr.mxu0 0.0
  %2195 = vmatpush1.msra.mxu0 0.0
  %2196 = vmatprep.subr.mxu0 0.0
  %2197 = vmatpush1.msra.mxu0 0.0
  %2198 = vmatprep.subr.mxu0 0.0
  %2199 = vmatpush1.msra.mxu0 0.0
  %2200 = vmatprep.subr.mxu0 0.0
  %2201 = vmatpush1.msra.mxu0 0.0
  %2202 = vmatprep.subr.mxu0 0.0
  %2203 = vmatpush1.msra.mxu0 0.0
  %2204 = vmatprep.subr.mxu0 0.0
  %2205 = vmatpush1.msra.mxu0 0.0
  %2206 = vmatprep.subr.mxu0 0.0
  %2207 = vmatpush1.msra.mxu0 0.0
  %2208 = vmatprep.subr.mxu0 0.0
  %2209 = vmatpush1.msra.mxu0 0.0
  %2210 = vmatprep.subr.mxu0 0.0
  %2211 = vmatpush1.msra.mxu0 0.0
  %2212 = vmatprep.subr.mxu0 0.0
  %2213 = vmatpush1.msra.mxu0 0.0
  %2214 = vmatprep.subr.mxu0 0.0
  %2215 = vmatpush1.msra.mxu0 0.0
  %2216 = vmatprep.subr.mxu0 0.0
  %2217 = vmatpush1.msra.mxu0 0.0
  %2218 = vmatprep.subr.mxu0 0.0
  %2219 = vmatpush1.msra.mxu0 0.0
  %2220 = vmatprep.subr.mxu0 0.0
  %2221 = vmatpush1.msra.mxu0 0.0
  %2222 = vmatprep.subr.mxu0 0.0
  %2223 = vmatpush1.msra.mxu0 0.0
  %2224 = vmatprep.mubr.f32.mxu0 0.0
  %2225 = vmatmul.mubr.f32.gmra.mrb[0].mxu0 %v2158
  %v2226 = vpop.f32.mrb[0].mxu0
  %v2227 = vadd.f32 1e-05, %v2226
  %v2228 = vpop.f32.mrb[0].mxu0
  %2229 = vdwg.mxu0
  %v2230 = vrsqrt.pop %v2227
  %v2231 = vmul.f32 %v2155, %v2230
  %v2233 = vsel %vm1470, %v2231, 0
  %2235 = vmatprep.subr.mxu0 0.0
  %2236 = vmatpush1.msra.mxu0 %v1132
  %2237 = vmatprep.subr.mxu0 0.0
  %2238 = vmatpush1.msra.mxu0 %v1133
  %2239 = vmatprep.subr.mxu0 0.0
  %2240 = vmatpush1.msra.mxu0 0.0
  %2241 = vmatprep.subr.mxu0 0.0
  %2242 = vmatpush1.msra.mxu0 0.0
  %2243 = vmatprep.subr.mxu0 0.0
  %2244 = vmatpush1.msra.mxu0 0.0
  %2245 = vmatprep.subr.mxu0 0.0
  %2246 = vmatpush1.msra.mxu0 0.0
  %2247 = vmatprep.subr.mxu0 0.0
  %2248 = vmatpush1.msra.mxu0 0.0
  %2249 = vmatprep.subr.mxu0 0.0
  %2250 = vmatpush1.msra.mxu0 0.0
  %2251 = vmatprep.subr.mxu0 0.0
  %2252 = vmatpush1.msra.mxu0 0.0
  %2253 = vmatprep.subr.mxu0 0.0
  %2254 = vmatpush1.msra.mxu0 0.0
  %2255 = vmatprep.subr.mxu0 0.0
  %2256 = vmatpush1.msra.mxu0 0.0
  %2257 = vmatprep.subr.mxu0 0.0
  %2258 = vmatpush1.msra.mxu0 0.0
  %2259 = vmatprep.subr.mxu0 0.0
  %2260 = vmatpush1.msra.mxu0 0.0
  %2261 = vmatprep.subr.mxu0 0.0
  %2262 = vmatpush1.msra.mxu0 0.0
  %2263 = vmatprep.subr.mxu0 0.0
  %2264 = vmatpush1.msra.mxu0 0.0
  %2265 = vmatprep.subr.mxu0 0.0
  %2266 = vmatpush1.msra.mxu0 0.0
  %2267 = vmatprep.subr.mxu0 0.0
  %2268 = vmatpush1.msra.mxu0 0.0
  %2269 = vmatprep.subr.mxu0 0.0
  %2270 = vmatpush1.msra.mxu0 0.0
  %2271 = vmatprep.subr.mxu0 0.0
  %2272 = vmatpush1.msra.mxu0 0.0
  %2273 = vmatprep.subr.mxu0 0.0
  %2274 = vmatpush1.msra.mxu0 0.0
  %2275 = vmatprep.subr.mxu0 0.0
  %2276 = vmatpush1.msra.mxu0 0.0
  %2277 = vmatprep.subr.mxu0 0.0
  %2278 = vmatpush1.msra.mxu0 0.0
  %2279 = vmatprep.subr.mxu0 0.0
  %2280 = vmatpush1.msra.mxu0 0.0
  %2281 = vmatprep.subr.mxu0 0.0
  %2282 = vmatpush1.msra.mxu0 0.0
  %2283 = vmatprep.subr.mxu0 0.0
  %2284 = vmatpush1.msra.mxu0 0.0
  %2285 = vmatprep.subr.mxu0 0.0
  %2286 = vmatpush1.msra.mxu0 0.0
  %2287 = vmatprep.subr.mxu0 0.0
  %2288 = vmatpush1.msra.mxu0 0.0
  %2289 = vmatprep.subr.mxu0 0.0
  %2290 = vmatpush1.msra.mxu0 0.0
  %2291 = vmatprep.subr.mxu0 0.0
  %2292 = vmatpush1.msra.mxu0 0.0
  %2293 = vmatprep.subr.mxu0 0.0
  %2294 = vmatpush1.msra.mxu0 0.0
  %2295 = vmatprep.subr.mxu0 0.0
  %2296 = vmatpush1.msra.mxu0 0.0
  %2297 = vmatprep.subr.mxu0 0.0
  %2298 = vmatpush1.msra.mxu0 0.0
  %2299 = vmatprep.mubr.f32.mxu0 0.0
  %2300 = vmatmul.mubr.f32.gmra.mrb[0].mxu0 %v2233
  %v2301 = vpop.f32.mrb[0].mxu0
  %v2302 = vadd.f32 0.0, %v2301
  %v2303 = vpop.f32.mrb[0].mxu0
  %2304 = vdwg.mxu0
  %2305 = vmatprep.subr.mxu0 0.0
  %2306 = vmatpush1.msra.mxu0 %v1214
  %2307 = vmatprep.subr.mxu0 0.0
  %2308 = vmatpush1.msra.mxu0 %v1215
  %2309 = vmatprep.subr.mxu0 0.0
  %2310 = vmatpush1.msra.mxu0 0.0
  %2311 = vmatprep.subr.mxu0 0.0
  %2312 = vmatpush1.msra.mxu0 0.0
  %2313 = vmatprep.subr.mxu0 0.0
  %2314 = vmatpush1.msra.mxu0 0.0
  %2315 = vmatprep.subr.mxu0 0.0
  %2316 = vmatpush1.msra.mxu0 0.0
  %2317 = vmatprep.subr.mxu0 0.0
  %2318 = vmatpush1.msra.mxu0 0.0
  %2319 = vmatprep.subr.mxu0 0.0
  %2320 = vmatpush1.msra.mxu0 0.0
  %2321 = vmatprep.subr.mxu0 0.0
  %2322 = vmatpush1.msra.mxu0 0.0
  %2323 = vmatprep.subr.mxu0 0.0
  %2324 = vmatpush1.msra.mxu0 0.0
  %2325 = vmatprep.subr.mxu0 0.0
  %2326 = vmatpush1.msra.mxu0 0.0
  %2327 = vmatprep.subr.mxu0 0.0
  %2328 = vmatpush1.msra.mxu0 0.0
  %2329 = vmatprep.subr.mxu0 0.0
  %2330 = vmatpush1.msra.mxu0 0.0
  %2331 = vmatprep.subr.mxu0 0.0
  %2332 = vmatpush1.msra.mxu0 0.0
  %2333 = vmatprep.subr.mxu0 0.0
  %2334 = vmatpush1.msra.mxu0 0.0
  %2335 = vmatprep.subr.mxu0 0.0
  %2336 = vmatpush1.msra.mxu0 0.0
  %2337 = vmatprep.subr.mxu0 0.0
  %2338 = vmatpush1.msra.mxu0 0.0
  %2339 = vmatprep.subr.mxu0 0.0
  %2340 = vmatpush1.msra.mxu0 0.0
  %2341 = vmatprep.subr.mxu0 0.0
  %2342 = vmatpush1.msra.mxu0 0.0
  %2343 = vmatprep.subr.mxu0 0.0
  %2344 = vmatpush1.msra.mxu0 0.0
  %2345 = vmatprep.subr.mxu0 0.0
  %2346 = vmatpush1.msra.mxu0 0.0
  %2347 = vmatprep.subr.mxu0 0.0
  %2348 = vmatpush1.msra.mxu0 0.0
  %2349 = vmatprep.subr.mxu0 0.0
  %2350 = vmatpush1.msra.mxu0 0.0
  %2351 = vmatprep.subr.mxu0 0.0
  %2352 = vmatpush1.msra.mxu0 0.0
  %2353 = vmatprep.subr.mxu0 0.0
  %2354 = vmatpush1.msra.mxu0 0.0
  %2355 = vmatprep.subr.mxu0 0.0
  %2356 = vmatpush1.msra.mxu0 0.0
  %2357 = vmatprep.subr.mxu0 0.0
  %2358 = vmatpush1.msra.mxu0 0.0
  %2359 = vmatprep.subr.mxu0 0.0
  %2360 = vmatpush1.msra.mxu0 0.0
  %2361 = vmatprep.subr.mxu0 0.0
  %2362 = vmatpush1.msra.mxu0 0.0
  %2363 = vmatprep.subr.mxu0 0.0
  %2364 = vmatpush1.msra.mxu0 0.0
  %2365 = vmatprep.subr.mxu0 0.0
  %2366 = vmatpush1.msra.mxu0 0.0
  %2367 = vmatprep.subr.mxu0 0.0
  %2368 = vmatpush1.msra.mxu0 0.0
  %2369 = vmatprep.mubr.f32.mxu0 0.0
  %2370 = vmatmul.mubr.f32.gmra.mrb[0].mxu0 %v2233
  %v2371 = vpop.f32.mrb[0].mxu0
  %v2372 = vadd.f32 0.0, %v2371
  %v2373 = vpop.f32.mrb[0].mxu0
  %2374 = vdwg.mxu0
  %v2375 = vmax.f32 %v2302, %v2372
  %v2376 = vld [vmem:[%s19] sm:$0xff]
  %v2377 = vld [vmem:[%s19 + $0x8] sm:$0xff]
  %v2378 = vld [vmem:[%s19 + $0x10] sm:$0xff]
  %v2379 = vld [vmem:[%s19 + $0x18] sm:$0xff]
  %v2380 = vld [vmem:[%s19 + $0x20] sm:$0xff]
  %v2381 = vld [vmem:[%s19 + $0x28] sm:$0xff]
  %v2382 = vld [vmem:[%s21] sm:$0xff]
  %v2383 = vld [vmem:[%s21 + $0x8] sm:$0xff]
  %v2384 = vld [vmem:[%s23] sm:$0xff]
  %v2385 = vld [vmem:[%s23 + $0x8] sm:$0xff]
  %v2386 = vld [vmem:[%s23 + $0x10] sm:$0xff]
  %v2387 = vld [vmem:[%s23 + $0x18] sm:$0xff]
  %v2388 = vld [vmem:[%s23 + $0x20] sm:$0xff]
  %v2389 = vld [vmem:[%s23 + $0x28] sm:$0xff]
  %v2390 = vld [vmem:[%s25] sm:$0xff]
  %v2391 = vld [vmem:[%s25 + $0x8] sm:$0xff]
  %v2393 = vsel %vm1704, %v2376, 0
  %v2396 = vsel %vm1704, %v2377, 0
  %2398 = vmatprep.subr.mxu0 0.0
  %2399 = vmatpush1.msra.mxu0 %v2375
  %2400 = vmatprep.subr.mxu0 0.0
  %2401 = vmatpush1.msra.mxu0 0.0
  %2402 = vmatprep.subr.mxu0 0.0
  %2403 = vmatpush1.msra.mxu0 0.0
  %2404 = vmatprep.subr.mxu0 0.0
  %2405 = vmatpush1.msra.mxu0 0.0
  %2406 = vmatprep.subr.mxu0 0.0
  %2407 = vmatpush1.msra.mxu0 0.0
  %2408 = vmatprep.subr.mxu0 0.0
  %2409 = vmatpush1.msra.mxu0 0.0
  %2410 = vmatprep.subr.mxu0 0.0
  %2411 = vmatpush1.msra.mxu0 0.0
  %2412 = vmatprep.subr.mxu0 0.0
  %2413 = vmatpush1.msra.mxu0 0.0
  %2414 = vmatprep.subr.mxu0 0.0
  %2415 = vmatpush1.msra.mxu0 0.0
  %2416 = vmatprep.subr.mxu0 0.0
  %2417 = vmatpush1.msra.mxu0 0.0
  %2418 = vmatprep.subr.mxu0 0.0
  %2419 = vmatpush1.msra.mxu0 0.0
  %2420 = vmatprep.subr.mxu0 0.0
  %2421 = vmatpush1.msra.mxu0 0.0
  %2422 = vmatprep.subr.mxu0 0.0
  %2423 = vmatpush1.msra.mxu0 0.0
  %2424 = vmatprep.subr.mxu0 0.0
  %2425 = vmatpush1.msra.mxu0 0.0
  %2426 = vmatprep.subr.mxu0 0.0
  %2427 = vmatpush1.msra.mxu0 0.0
  %2428 = vmatprep.subr.mxu0 0.0
  %2429 = vmatpush1.msra.mxu0 0.0
  %2430 = vmatprep.subr.mxu0 0.0
  %2431 = vmatpush1.msra.mxu0 0.0
  %2432 = vmatprep.subr.mxu0 0.0
  %2433 = vmatpush1.msra.mxu0 0.0
  %2434 = vmatprep.subr.mxu0 0.0
  %2435 = vmatpush1.msra.mxu0 0.0
  %2436 = vmatprep.subr.mxu0 0.0
  %2437 = vmatpush1.msra.mxu0 0.0
  %2438 = vmatprep.subr.mxu0 0.0
  %2439 = vmatpush1.msra.mxu0 0.0
  %2440 = vmatprep.subr.mxu0 0.0
  %2441 = vmatpush1.msra.mxu0 0.0
  %2442 = vmatprep.subr.mxu0 0.0
  %2443 = vmatpush1.msra.mxu0 0.0
  %2444 = vmatprep.subr.mxu0 0.0
  %2445 = vmatpush1.msra.mxu0 0.0
  %2446 = vmatprep.subr.mxu0 0.0
  %2447 = vmatpush1.msra.mxu0 0.0
  %2448 = vmatprep.subr.mxu0 0.0
  %2449 = vmatpush1.msra.mxu0 0.0
  %2450 = vmatprep.subr.mxu0 0.0
  %2451 = vmatpush1.msra.mxu0 0.0
  %2452 = vmatprep.subr.mxu0 0.0
  %2453 = vmatpush1.msra.mxu0 0.0
  %2454 = vmatprep.subr.mxu0 0.0
  %2455 = vmatpush1.msra.mxu0 0.0
  %2456 = vmatprep.subr.mxu0 0.0
  %2457 = vmatpush1.msra.mxu0 0.0
  %2458 = vmatprep.subr.mxu0 0.0
  %2459 = vmatpush1.msra.mxu0 0.0
  %2460 = vmatprep.subr.mxu0 0.0
  %2461 = vmatpush1.msra.mxu0 0.0
  %2462 = vmatprep.mubr.f32.mxu0 0.0
  %2463 = vmatmul.mubr.f32.gmra.mrb[0].mxu0 %v2393
  %v2464 = vpop.f32.mrb[0].mxu0
  %v2465 = vadd.f32 0.0, %v2464
  %v2466 = vpop.f32.mrb[0].mxu0
  %2467 = vmatprep.mubr.f32.mxu0 0.0
  %2468 = vmatmul.mubr.f32.gmra.mrb[0].mxu0 %v2396
  %v2469 = vpop.f32.mrb[0].mxu0
  %v2470 = vadd.f32 0.0, %v2469
  %v2471 = vpop.f32.mrb[0].mxu0
  %2472 = vdwg.mxu0
  %v2474 = vsel %vm1704, %v2380, 0
  %v2477 = vsel %vm1704, %v2381, 0
  %2479 = vmatprep.subr.mxu0 0.0
  %2480 = vmatpush1.msra.mxu0 %v2375
  %2481 = vmatprep.subr.mxu0 0.0
  %2482 = vmatpush1.msra.mxu0 0.0
  %2483 = vmatprep.subr.mxu0 0.0
  %2484 = vmatpush1.msra.mxu0 0.0
  %2485 = vmatprep.subr.mxu0 0.0
  %2486 = vmatpush1.msra.mxu0 0.0
  %2487 = vmatprep.subr.mxu0 0.0
  %2488 = vmatpush1.msra.mxu0 0.0
  %2489 = vmatprep.subr.mxu0 0.0
  %2490 = vmatpush1.msra.mxu0 0.0
  %2491 = vmatprep.subr.mxu0 0.0
  %2492 = vmatpush1.msra.mxu0 0.0
  %2493 = vmatprep.subr.mxu0 0.0
  %2494 = vmatpush1.msra.mxu0 0.0
  %2495 = vmatprep.subr.mxu0 0.0
  %2496 = vmatpush1.msra.mxu0 0.0
  %2497 = vmatprep.subr.mxu0 0.0
  %2498 = vmatpush1.msra.mxu0 0.0
  %2499 = vmatprep.subr.mxu0 0.0
  %2500 = vmatpush1.msra.mxu0 0.0
  %2501 = vmatprep.subr.mxu0 0.0
  %2502 = vmatpush1.msra.mxu0 0.0
  %2503 = vmatprep.subr.mxu0 0.0
  %2504 = vmatpush1.msra.mxu0 0.0
  %2505 = vmatprep.subr.mxu0 0.0
  %2506 = vmatpush1.msra.mxu0 0.0
  %2507 = vmatprep.subr.mxu0 0.0
  %2508 = vmatpush1.msra.mxu0 0.0
  %2509 = vmatprep.subr.mxu0 0.0
  %2510 = vmatpush1.msra.mxu0 0.0
  %2511 = vmatprep.subr.mxu0 0.0
  %2512 = vmatpush1.msra.mxu0 0.0
  %2513 = vmatprep.subr.mxu0 0.0
  %2514 = vmatpush1.msra.mxu0 0.0
  %2515 = vmatprep.subr.mxu0 0.0
  %2516 = vmatpush1.msra.mxu0 0.0
  %2517 = vmatprep.subr.mxu0 0.0
  %2518 = vmatpush1.msra.mxu0 0.0
  %2519 = vmatprep.subr.mxu0 0.0
  %2520 = vmatpush1.msra.mxu0 0.0
  %2521 = vmatprep.subr.mxu0 0.0
  %2522 = vmatpush1.msra.mxu0 0.0
  %2523 = vmatprep.subr.mxu0 0.0
  %2524 = vmatpush1.msra.mxu0 0.0
  %2525 = vmatprep.subr.mxu0 0.0
  %2526 = vmatpush1.msra.mxu0 0.0
  %2527 = vmatprep.subr.mxu0 0.0
  %2528 = vmatpush1.msra.mxu0 0.0
  %2529 = vmatprep.subr.mxu0 0.0
  %2530 = vmatpush1.msra.mxu0 0.0
  %2531 = vmatprep.subr.mxu0 0.0
  %2532 = vmatpush1.msra.mxu0 0.0
  %2533 = vmatprep.subr.mxu0 0.0
  %2534 = vmatpush1.msra.mxu0 0.0
  %2535 = vmatprep.subr.mxu0 0.0
  %2536 = vmatpush1.msra.mxu0 0.0
  %2537 = vmatprep.subr.mxu0 0.0
  %2538 = vmatpush1.msra.mxu0 0.0
  %2539 = vmatprep.subr.mxu0 0.0
  %2540 = vmatpush1.msra.mxu0 0.0
  %2541 = vmatprep.subr.mxu0 0.0
  %2542 = vmatpush1.msra.mxu0 0.0
  %2543 = vmatprep.mubr.f32.mxu0 0.0
  %2544 = vmatmul.mubr.f32.gmra.mrb[0].mxu0 %v2474
  %v2545 = vpop.f32.mrb[0].mxu0
  %v2546 = vadd.f32 0.0, %v2545
  %v2547 = vpop.f32.mrb[0].mxu0
  %2548 = vmatprep.mubr.f32.mxu0 0.0
  %2549 = vmatmul.mubr.f32.gmra.mrb[0].mxu0 %v2477
  %v2550 = vpop.f32.mrb[0].mxu0
  %v2551 = vadd.f32 0.0, %v2550
  %v2552 = vpop.f32.mrb[0].mxu0
  %2553 = vdwg.mxu0
  %vm2554 = vcmp.lt.s32.totalorder %v283, 4
  %vm2555 = vmand %vm294, %vm2554
  %vm2556 = vmand %vm2555, %vm306
  %vm2557 = vcmp.lt.s32.totalorder %v288, 4
  %vm2558 = vmand %vm2556, %vm2557
  %vm2559 = vcmp.ge.s32.totalorder %v283, 4
  %vm2560 = vmand %vm2559, %vm1446
  %vm2561 = vcmp.ge.s32.totalorder %v288, 4
  %vm2562 = vmand %vm2560, %vm2561
  %vm2563 = vmand %vm2562, %vm1452
  %vm2564 = vmor %vm2558, %vm2563
  %vm2565 = vmand %vm290, %vm2564
  %v2566 = vsel %vm2565, 1.0, 0.0
  %v2568 = vsel %vm1704, %v2465, 0
  %v2571 = vsel %vm1704, %v2470, 0
  %2573 = vmatprep.subr.mxu0 0.0
  %2574 = vmatpush1.msra.mxu0 %v2566
  %2575 = vmatprep.subr.mxu0 0.0
  %2576 = vmatpush1.msra.mxu0 0.0
  %2577 = vmatprep.subr.mxu0 0.0
  %2578 = vmatpush1.msra.mxu0 0.0
  %2579 = vmatprep.subr.mxu0 0.0
  %2580 = vmatpush1.msra.mxu0 0.0
  %2581 = vmatprep.subr.mxu0 0.0
  %2582 = vmatpush1.msra.mxu0 0.0
  %2583 = vmatprep.subr.mxu0 0.0
  %2584 = vmatpush1.msra.mxu0 0.0
  %2585 = vmatprep.subr.mxu0 0.0
  %2586 = vmatpush1.msra.mxu0 0.0
  %2587 = vmatprep.subr.mxu0 0.0
  %2588 = vmatpush1.msra.mxu0 0.0
  %2589 = vmatprep.subr.mxu0 0.0
  %2590 = vmatpush1.msra.mxu0 0.0
  %2591 = vmatprep.subr.mxu0 0.0
  %2592 = vmatpush1.msra.mxu0 0.0
  %2593 = vmatprep.subr.mxu0 0.0
  %2594 = vmatpush1.msra.mxu0 0.0
  %2595 = vmatprep.subr.mxu0 0.0
  %2596 = vmatpush1.msra.mxu0 0.0
  %2597 = vmatprep.subr.mxu0 0.0
  %2598 = vmatpush1.msra.mxu0 0.0
  %2599 = vmatprep.subr.mxu0 0.0
  %2600 = vmatpush1.msra.mxu0 0.0
  %2601 = vmatprep.subr.mxu0 0.0
  %2602 = vmatpush1.msra.mxu0 0.0
  %2603 = vmatprep.subr.mxu0 0.0
  %2604 = vmatpush1.msra.mxu0 0.0
  %2605 = vmatprep.subr.mxu0 0.0
  %2606 = vmatpush1.msra.mxu0 0.0
  %2607 = vmatprep.subr.mxu0 0.0
  %2608 = vmatpush1.msra.mxu0 0.0
  %2609 = vmatprep.subr.mxu0 0.0
  %2610 = vmatpush1.msra.mxu0 0.0
  %2611 = vmatprep.subr.mxu0 0.0
  %2612 = vmatpush1.msra.mxu0 0.0
  %2613 = vmatprep.subr.mxu0 0.0
  %2614 = vmatpush1.msra.mxu0 0.0
  %2615 = vmatprep.subr.mxu0 0.0
  %2616 = vmatpush1.msra.mxu0 0.0
  %2617 = vmatprep.subr.mxu0 0.0
  %2618 = vmatpush1.msra.mxu0 0.0
  %2619 = vmatprep.subr.mxu0 0.0
  %2620 = vmatpush1.msra.mxu0 0.0
  %2621 = vmatprep.subr.mxu0 0.0
  %2622 = vmatpush1.msra.mxu0 0.0
  %2623 = vmatprep.subr.mxu0 0.0
  %2624 = vmatpush1.msra.mxu0 0.0
  %2625 = vmatprep.subr.mxu0 0.0
  %2626 = vmatpush1.msra.mxu0 0.0
  %2627 = vmatprep.subr.mxu0 0.0
  %2628 = vmatpush1.msra.mxu0 0.0
  %2629 = vmatprep.subr.mxu0 0.0
  %2630 = vmatpush1.msra.mxu0 0.0
  %2631 = vmatprep.subr.mxu0 0.0
  %2632 = vmatpush1.msra.mxu0 0.0
  %2633 = vmatprep.subr.mxu0 0.0
  %2634 = vmatpush1.msra.mxu0 0.0
  %2635 = vmatprep.subr.mxu0 0.0
  %2636 = vmatpush1.msra.mxu0 0.0
  %2637 = vmatprep.mubr.f32.mxu0 0.0
  %2638 = vmatmul.mubr.f32.gmra.mrb[0].mxu0 %v2568
  %v2639 = vpop.f32.mrb[0].mxu0
  %v2640 = vadd.f32 0.0, %v2639
  %v2641 = vpop.f32.mrb[0].mxu0
  %2642 = vmatprep.mubr.f32.mxu0 0.0
  %2643 = vmatmul.mubr.f32.gmra.mrb[0].mxu0 %v2571
  %v2644 = vpop.f32.mrb[0].mxu0
  %v2645 = vadd.f32 0.0, %v2644
  %v2646 = vpop.f32.mrb[0].mxu0
  %2647 = vdwg.mxu0
  %v2649 = vsel %vm1704, %v2378, 0
  %v2652 = vsel %vm1704, %v2379, 0
  %2654 = vmatprep.subr.mxu0 0.0
  %2655 = vmatpush1.msra.mxu0 %v2375
  %2656 = vmatprep.subr.mxu0 0.0
  %2657 = vmatpush1.msra.mxu0 0.0
  %2658 = vmatprep.subr.mxu0 0.0
  %2659 = vmatpush1.msra.mxu0 0.0
  %2660 = vmatprep.subr.mxu0 0.0
  %2661 = vmatpush1.msra.mxu0 0.0
  %2662 = vmatprep.subr.mxu0 0.0
  %2663 = vmatpush1.msra.mxu0 0.0
  %2664 = vmatprep.subr.mxu0 0.0
  %2665 = vmatpush1.msra.mxu0 0.0
  %2666 = vmatprep.subr.mxu0 0.0
  %2667 = vmatpush1.msra.mxu0 0.0
  %2668 = vmatprep.subr.mxu0 0.0
  %2669 = vmatpush1.msra.mxu0 0.0
  %2670 = vmatprep.subr.mxu0 0.0
  %2671 = vmatpush1.msra.mxu0 0.0
  %2672 = vmatprep.subr.mxu0 0.0
  %2673 = vmatpush1.msra.mxu0 0.0
  %2674 = vmatprep.subr.mxu0 0.0
  %2675 = vmatpush1.msra.mxu0 0.0
  %2676 = vmatprep.subr.mxu0 0.0
  %2677 = vmatpush1.msra.mxu0 0.0
  %2678 = vmatprep.subr.mxu0 0.0
  %2679 = vmatpush1.msra.mxu0 0.0
  %2680 = vmatprep.subr.mxu0 0.0
  %2681 = vmatpush1.msra.mxu0 0.0
  %2682 = vmatprep.subr.mxu0 0.0
  %2683 = vmatpush1.msra.mxu0 0.0
  %2684 = vmatprep.subr.mxu0 0.0
  %2685 = vmatpush1.msra.mxu0 0.0
  %2686 = vmatprep.subr.mxu0 0.0
  %2687 = vmatpush1.msra.mxu0 0.0
  %2688 = vmatprep.subr.mxu0 0.0
  %2689 = vmatpush1.msra.mxu0 0.0
  %2690 = vmatprep.subr.mxu0 0.0
  %2691 = vmatpush1.msra.mxu0 0.0
  %2692 = vmatprep.subr.mxu0 0.0
  %2693 = vmatpush1.msra.mxu0 0.0
  %2694 = vmatprep.subr.mxu0 0.0
  %2695 = vmatpush1.msra.mxu0 0.0
  %2696 = vmatprep.subr.mxu0 0.0
  %2697 = vmatpush1.msra.mxu0 0.0
  %2698 = vmatprep.subr.mxu0 0.0
  %2699 = vmatpush1.msra.mxu0 0.0
  %2700 = vmatprep.subr.mxu0 0.0
  %2701 = vmatpush1.msra.mxu0 0.0
  %2702 = vmatprep.subr.mxu0 0.0
  %2703 = vmatpush1.msra.mxu0 0.0
  %2704 = vmatprep.subr.mxu0 0.0
  %2705 = vmatpush1.msra.mxu0 0.0
  %2706 = vmatprep.subr.mxu0 0.0
  %2707 = vmatpush1.msra.mxu0 0.0
  %2708 = vmatprep.subr.mxu0 0.0
  %2709 = vmatpush1.msra.mxu0 0.0
  %2710 = vmatprep.subr.mxu0 0.0
  %2711 = vmatpush1.msra.mxu0 0.0
  %2712 = vmatprep.subr.mxu0 0.0
  %2713 = vmatpush1.msra.mxu0 0.0
  %2714 = vmatprep.subr.mxu0 0.0
  %2715 = vmatpush1.msra.mxu0 0.0
  %2716 = vmatprep.subr.mxu0 0.0
  %2717 = vmatpush1.msra.mxu0 0.0
  %2718 = vmatprep.mubr.f32.mxu0 0.0
  %2719 = vmatmul.mubr.f32.gmra.mrb[0].mxu0 %v2649
  %v2720 = vpop.f32.mrb[0].mxu0
  %v2721 = vadd.f32 %v2640, %v2720
  %v2722 = vpop.f32.mrb[0].mxu0
  %2723 = vmatprep.mubr.f32.mxu0 0.0
  %2724 = vmatmul.mubr.f32.gmra.mrb[0].mxu0 %v2652
  %v2725 = vpop.f32.mrb[0].mxu0
  %v2726 = vadd.f32 %v2645, %v2725
  %v2727 = vpop.f32.mrb[0].mxu0
  %2728 = vdwg.mxu0
  %vm2729 = vmand %vm498, %vm2564
  %v2730 = vsel %vm2729, 1.0, 0.0
  %v2732 = vsel %vm1704, %v2546, 0
  %v2735 = vsel %vm1704, %v2551, 0
  %2737 = vmatprep.subr.mxu0 0.0
  %2738 = vmatpush1.msra.mxu0 %v2730
  %2739 = vmatprep.subr.mxu0 0.0
  %2740 = vmatpush1.msra.mxu0 0.0
  %2741 = vmatprep.subr.mxu0 0.0
  %2742 = vmatpush1.msra.mxu0 0.0
  %2743 = vmatprep.subr.mxu0 0.0
  %2744 = vmatpush1.msra.mxu0 0.0
  %2745 = vmatprep.subr.mxu0 0.0
  %2746 = vmatpush1.msra.mxu0 0.0
  %2747 = vmatprep.subr.mxu0 0.0
  %2748 = vmatpush1.msra.mxu0 0.0
  %2749 = vmatprep.subr.mxu0 0.0
  %2750 = vmatpush1.msra.mxu0 0.0
  %2751 = vmatprep.subr.mxu0 0.0
  %2752 = vmatpush1.msra.mxu0 0.0
  %2753 = vmatprep.subr.mxu0 0.0
  %2754 = vmatpush1.msra.mxu0 0.0
  %2755 = vmatprep.subr.mxu0 0.0
  %2756 = vmatpush1.msra.mxu0 0.0
  %2757 = vmatprep.subr.mxu0 0.0
  %2758 = vmatpush1.msra.mxu0 0.0
  %2759 = vmatprep.subr.mxu0 0.0
  %2760 = vmatpush1.msra.mxu0 0.0
  %2761 = vmatprep.subr.mxu0 0.0
  %2762 = vmatpush1.msra.mxu0 0.0
  %2763 = vmatprep.subr.mxu0 0.0
  %2764 = vmatpush1.msra.mxu0 0.0
  %2765 = vmatprep.subr.mxu0 0.0
  %2766 = vmatpush1.msra.mxu0 0.0
  %2767 = vmatprep.subr.mxu0 0.0
  %2768 = vmatpush1.msra.mxu0 0.0
  %2769 = vmatprep.subr.mxu0 0.0
  %2770 = vmatpush1.msra.mxu0 0.0
  %2771 = vmatprep.subr.mxu0 0.0
  %2772 = vmatpush1.msra.mxu0 0.0
  %2773 = vmatprep.subr.mxu0 0.0
  %2774 = vmatpush1.msra.mxu0 0.0
  %2775 = vmatprep.subr.mxu0 0.0
  %2776 = vmatpush1.msra.mxu0 0.0
  %2777 = vmatprep.subr.mxu0 0.0
  %2778 = vmatpush1.msra.mxu0 0.0
  %2779 = vmatprep.subr.mxu0 0.0
  %2780 = vmatpush1.msra.mxu0 0.0
  %2781 = vmatprep.subr.mxu0 0.0
  %2782 = vmatpush1.msra.mxu0 0.0
  %2783 = vmatprep.subr.mxu0 0.0
  %2784 = vmatpush1.msra.mxu0 0.0
  %2785 = vmatprep.subr.mxu0 0.0
  %2786 = vmatpush1.msra.mxu0 0.0
  %2787 = vmatprep.subr.mxu0 0.0
  %2788 = vmatpush1.msra.mxu0 0.0
  %2789 = vmatprep.subr.mxu0 0.0
  %2790 = vmatpush1.msra.mxu0 0.0
  %2791 = vmatprep.subr.mxu0 0.0
  %2792 = vmatpush1.msra.mxu0 0.0
  %2793 = vmatprep.subr.mxu0 0.0
  %2794 = vmatpush1.msra.mxu0 0.0
  %2795 = vmatprep.subr.mxu0 0.0
  %2796 = vmatpush1.msra.mxu0 0.0
  %2797 = vmatprep.subr.mxu0 0.0
  %2798 = vmatpush1.msra.mxu0 0.0
  %2799 = vmatprep.subr.mxu0 0.0
  %2800 = vmatpush1.msra.mxu0 0.0
  %2801 = vmatprep.mubr.f32.mxu0 0.0
  %2802 = vmatmul.mubr.f32.gmra.mrb[0].mxu0 %v2732
  %v2803 = vpop.f32.mrb[0].mxu0
  %v2804 = vadd.f32 0.0, %v2803
  %v2805 = vpop.f32.mrb[0].mxu0
  %2806 = vmatprep.mubr.f32.mxu0 0.0
  %2807 = vmatmul.mubr.f32.gmra.mrb[0].mxu0 %v2735
  %v2808 = vpop.f32.mrb[0].mxu0
  %v2809 = vadd.f32 0.0, %v2808
  %v2810 = vpop.f32.mrb[0].mxu0
  %2811 = vdwg.mxu0
  %v2812 = vadd.f32 %v2721, %v2804
  %v2813 = vadd.f32 %v2726, %v2809
  %2815 = vset.pattern.permute.xlu0 0
  %2816 = vperm.xlu0 %2815, %v2382
  %v2817 = vpop.permute.xlu0 %2816
  %2820 = vset.pattern.permute.xlu0 0
  %2821 = vperm.xlu0 %2820, %v2383
  %v2822 = vpop.permute.xlu0 %2821
  %v2824 = vadd.f32 %v2812, %v2817
  %v2825 = vadd.f32 %v2813, %v2822
  %vm2826 = vcmp.ge.f32.partialorder %v2824, 0.0
  %vm2827 = vcmp.ge.f32.partialorder %v2825, 0.0
  %v2828 = vmul.f32 %v2824, 0.01
  %v2829 = vmul.f32 %v2825, 0.01
  %v2830 = vsel %vm2826, %v2824, %v2828
  %v2831 = vsel %vm2827, %v2825, %v2829
  %v2833 = vsel %vm1470, %v2384, 0
  %v2836 = vsel %vm1470, %v2385, 0
  %2838 = vmatprep.subr.mxu0 0.0
  %2839 = vmatpush1.msra.mxu0 %v2830
  %2840 = vmatprep.subr.mxu0 0.0
  %2841 = vmatpush1.msra.mxu0 %v2831
  %2842 = vmatprep.subr.mxu0 0.0
  %2843 = vmatpush1.msra.mxu0 0.0
  %2844 = vmatprep.subr.mxu0 0.0
  %2845 = vmatpush1.msra.mxu0 0.0
  %2846 = vmatprep.subr.mxu0 0.0
  %2847 = vmatpush1.msra.mxu0 0.0
  %2848 = vmatprep.subr.mxu0 0.0
  %2849 = vmatpush1.msra.mxu0 0.0
  %2850 = vmatprep.subr.mxu0 0.0
  %2851 = vmatpush1.msra.mxu0 0.0
  %2852 = vmatprep.subr.mxu0 0.0
  %2853 = vmatpush1.msra.mxu0 0.0
  %2854 = vmatprep.subr.mxu0 0.0
  %2855 = vmatpush1.msra.mxu0 0.0
  %2856 = vmatprep.subr.mxu0 0.0
  %2857 = vmatpush1.msra.mxu0 0.0
  %2858 = vmatprep.subr.mxu0 0.0
  %2859 = vmatpush1.msra.mxu0 0.0
  %2860 = vmatprep.subr.mxu0 0.0
  %2861 = vmatpush1.msra.mxu0 0.0
  %2862 = vmatprep.subr.mxu0 0.0
  %2863 = vmatpush1.msra.mxu0 0.0
  %2864 = vmatprep.subr.mxu0 0.0
  %2865 = vmatpush1.msra.mxu0 0.0
  %2866 = vmatprep.subr.mxu0 0.0
  %2867 = vmatpush1.msra.mxu0 0.0
  %2868 = vmatprep.subr.mxu0 0.0
  %2869 = vmatpush1.msra.mxu0 0.0
  %2870 = vmatprep.subr.mxu0 0.0
  %2871 = vmatpush1.msra.mxu0 0.0
  %2872 = vmatprep.subr.mxu0 0.0
  %2873 = vmatpush1.msra.mxu0 0.0
  %2874 = vmatprep.subr.mxu0 0.0
  %2875 = vmatpush1.msra.mxu0 0.0
  %2876 = vmatprep.subr.mxu0 0.0
  %2877 = vmatpush1.msra.mxu0 0.0
  %2878 = vmatprep.subr.mxu0 0.0
  %2879 = vmatpush1.msra.mxu0 0.0
  %2880 = vmatprep.subr.mxu0 0.0
  %2881 = vmatpush1.msra.mxu0 0.0
  %2882 = vmatprep.subr.mxu0 0.0
  %2883 = vmatpush1.msra.mxu0 0.0
  %2884 = vmatprep.subr.mxu0 0.0
  %2885 = vmatpush1.msra.mxu0 0.0
  %2886 = vmatprep.subr.mxu0 0.0
  %2887 = vmatpush1.msra.mxu0 0.0
  %2888 = vmatprep.subr.mxu0 0.0
  %2889 = vmatpush1.msra.mxu0 0.0
  %2890 = vmatprep.subr.mxu0 0.0
  %2891 = vmatpush1.msra.mxu0 0.0
  %2892 = vmatprep.subr.mxu0 0.0
  %2893 = vmatpush1.msra.mxu0 0.0
  %2894 = vmatprep.subr.mxu0 0.0
  %2895 = vmatpush1.msra.mxu0 0.0
  %2896 = vmatprep.subr.mxu0 0.0
  %2897 = vmatpush1.msra.mxu0 0.0
  %2898 = vmatprep.subr.mxu0 0.0
  %2899 = vmatpush1.msra.mxu0 0.0
  %2900 = vmatprep.subr.mxu0 0.0
  %2901 = vmatpush1.msra.mxu0 0.0
  %2902 = vmatprep.mubr.f32.mxu0 0.0
  %2903 = vmatmul.mubr.f32.gmra.mrb[0].mxu0 %v2833
  %v2904 = vpop.f32.mrb[0].mxu0
  %v2905 = vadd.f32 0.0, %v2904
  %v2906 = vpop.f32.mrb[0].mxu0
  %2907 = vmatprep.mubr.f32.mxu0 0.0
  %2908 = vmatmul.mubr.f32.gmra.mrb[0].mxu0 %v2836
  %v2909 = vpop.f32.mrb[0].mxu0
  %v2910 = vadd.f32 0.0, %v2909
  %v2911 = vpop.f32.mrb[0].mxu0
  %2912 = vdwg.mxu0
  %v2914 = vsel %vm1470, %v2388, 0
  %v2917 = vsel %vm1470, %v2389, 0
  %2919 = vmatprep.subr.mxu0 0.0
  %2920 = vmatpush1.msra.mxu0 %v2830
  %2921 = vmatprep.subr.mxu0 0.0
  %2922 = vmatpush1.msra.mxu0 %v2831
  %2923 = vmatprep.subr.mxu0 0.0
  %2924 = vmatpush1.msra.mxu0 0.0
  %2925 = vmatprep.subr.mxu0 0.0
  %2926 = vmatpush1.msra.mxu0 0.0
  %2927 = vmatprep.subr.mxu0 0.0
  %2928 = vmatpush1.msra.mxu0 0.0
  %2929 = vmatprep.subr.mxu0 0.0
  %2930 = vmatpush1.msra.mxu0 0.0
  %2931 = vmatprep.subr.mxu0 0.0
  %2932 = vmatpush1.msra.mxu0 0.0
  %2933 = vmatprep.subr.mxu0 0.0
  %2934 = vmatpush1.msra.mxu0 0.0
  %2935 = vmatprep.subr.mxu0 0.0
  %2936 = vmatpush1.msra.mxu0 0.0
  %2937 = vmatprep.subr.mxu0 0.0
  %2938 = vmatpush1.msra.mxu0 0.0
  %2939 = vmatprep.subr.mxu0 0.0
  %2940 = vmatpush1.msra.mxu0 0.0
  %2941 = vmatprep.subr.mxu0 0.0
  %2942 = vmatpush1.msra.mxu0 0.0
  %2943 = vmatprep.subr.mxu0 0.0
  %2944 = vmatpush1.msra.mxu0 0.0
  %2945 = vmatprep.subr.mxu0 0.0
  %2946 = vmatpush1.msra.mxu0 0.0
  %2947 = vmatprep.subr.mxu0 0.0
  %2948 = vmatpush1.msra.mxu0 0.0
  %2949 = vmatprep.subr.mxu0 0.0
  %2950 = vmatpush1.msra.mxu0 0.0
  %2951 = vmatprep.subr.mxu0 0.0
  %2952 = vmatpush1.msra.mxu0 0.0
  %2953 = vmatprep.subr.mxu0 0.0
  %2954 = vmatpush1.msra.mxu0 0.0
  %2955 = vmatprep.subr.mxu0 0.0
  %2956 = vmatpush1.msra.mxu0 0.0
  %2957 = vmatprep.subr.mxu0 0.0
  %2958 = vmatpush1.msra.mxu0 0.0
  %2959 = vmatprep.subr.mxu0 0.0
  %2960 = vmatpush1.msra.mxu0 0.0
  %2961 = vmatprep.subr.mxu0 0.0
  %2962 = vmatpush1.msra.mxu0 0.0
  %2963 = vmatprep.subr.mxu0 0.0
  %2964 = vmatpush1.msra.mxu0 0.0
  %2965 = vmatprep.subr.mxu0 0.0
  %2966 = vmatpush1.msra.mxu0 0.0
  %2967 = vmatprep.subr.mxu0 0.0
  %2968 = vmatpush1.msra.mxu0 0.0
  %2969 = vmatprep.subr.mxu0 0.0
  %2970 = vmatpush1.msra.mxu0 0.0
  %2971 = vmatprep.subr.mxu0 0.0
  %2972 = vmatpush1.msra.mxu0 0.0
  %2973 = vmatprep.subr.mxu0 0.0
  %2974 = vmatpush1.msra.mxu0 0.0
  %2975 = vmatprep.subr.mxu0 0.0
  %2976 = vmatpush1.msra.mxu0 0.0
  %2977 = vmatprep.subr.mxu0 0.0
  %2978 = vmatpush1.msra.mxu0 0.0
  %2979 = vmatprep.subr.mxu0 0.0
  %2980 = vmatpush1.msra.mxu0 0.0
  %2981 = vmatprep.subr.mxu0 0.0
  %2982 = vmatpush1.msra.mxu0 0.0
  %2983 = vmatprep.mubr.f32.mxu0 0.0
  %2984 = vmatmul.mubr.f32.gmra.mrb[0].mxu0 %v2914
  %v2985 = vpop.f32.mrb[0].mxu0
  %v2986 = vadd.f32 0.0, %v2985
  %v2987 = vpop.f32.mrb[0].mxu0
  %2988 = vmatprep.mubr.f32.mxu0 0.0
  %2989 = vmatmul.mubr.f32.gmra.mrb[0].mxu0 %v2917
  %v2990 = vpop.f32.mrb[0].mxu0
  %v2991 = vadd.f32 0.0, %v2990
  %v2992 = vpop.f32.mrb[0].mxu0
  %2993 = vdwg.mxu0
  %v2995 = vsel %vm1704, %v2905, 0
  %v2998 = vsel %vm1704, %v2910, 0
  %3000 = vmatprep.subr.mxu0 0.0
  %3001 = vmatpush1.msra.mxu0 %v2566
  %3002 = vmatprep.subr.mxu0 0.0
  %3003 = vmatpush1.msra.mxu0 0.0
  %3004 = vmatprep.subr.mxu0 0.0
  %3005 = vmatpush1.msra.mxu0 0.0
  %3006 = vmatprep.subr.mxu0 0.0
  %3007 = vmatpush1.msra.mxu0 0.0
  %3008 = vmatprep.subr.mxu0 0.0
  %3009 = vmatpush1.msra.mxu0 0.0
  %3010 = vmatprep.subr.mxu0 0.0
  %3011 = vmatpush1.msra.mxu0 0.0
  %3012 = vmatprep.subr.mxu0 0.0
  %3013 = vmatpush1.msra.mxu0 0.0
  %3014 = vmatprep.subr.mxu0 0.0
  %3015 = vmatpush1.msra.mxu0 0.0
  %3016 = vmatprep.subr.mxu0 0.0
  %3017 = vmatpush1.msra.mxu0 0.0
  %3018 = vmatprep.subr.mxu0 0.0
  %3019 = vmatpush1.msra.mxu0 0.0
  %3020 = vmatprep.subr.mxu0 0.0
  %3021 = vmatpush1.msra.mxu0 0.0
  %3022 = vmatprep.subr.mxu0 0.0
  %3023 = vmatpush1.msra.mxu0 0.0
  %3024 = vmatprep.subr.mxu0 0.0
  %3025 = vmatpush1.msra.mxu0 0.0
  %3026 = vmatprep.subr.mxu0 0.0
  %3027 = vmatpush1.msra.mxu0 0.0
  %3028 = vmatprep.subr.mxu0 0.0
  %3029 = vmatpush1.msra.mxu0 0.0
  %3030 = vmatprep.subr.mxu0 0.0
  %3031 = vmatpush1.msra.mxu0 0.0
  %3032 = vmatprep.subr.mxu0 0.0
  %3033 = vmatpush1.msra.mxu0 0.0
  %3034 = vmatprep.subr.mxu0 0.0
  %3035 = vmatpush1.msra.mxu0 0.0
  %3036 = vmatprep.subr.mxu0 0.0
  %3037 = vmatpush1.msra.mxu0 0.0
  %3038 = vmatprep.subr.mxu0 0.0
  %3039 = vmatpush1.msra.mxu0 0.0
  %3040 = vmatprep.subr.mxu0 0.0
  %3041 = vmatpush1.msra.mxu0 0.0
  %3042 = vmatprep.subr.mxu0 0.0
  %3043 = vmatpush1.msra.mxu0 0.0
  %3044 = vmatprep.subr.mxu0 0.0
  %3045 = vmatpush1.msra.mxu0 0.0
  %3046 = vmatprep.subr.mxu0 0.0
  %3047 = vmatpush1.msra.mxu0 0.0
  %3048 = vmatprep.subr.mxu0 0.0
  %3049 = vmatpush1.msra.mxu0 0.0
  %3050 = vmatprep.subr.mxu0 0.0
  %3051 = vmatpush1.msra.mxu0 0.0
  %3052 = vmatprep.subr.mxu0 0.0
  %3053 = vmatpush1.msra.mxu0 0.0
  %3054 = vmatprep.subr.mxu0 0.0
  %3055 = vmatpush1.msra.mxu0 0.0
  %3056 = vmatprep.subr.mxu0 0.0
  %3057 = vmatpush1.msra.mxu0 0.0
  %3058 = vmatprep.subr.mxu0 0.0
  %3059 = vmatpush1.msra.mxu0 0.0
  %3060 = vmatprep.subr.mxu0 0.0
  %3061 = vmatpush1.msra.mxu0 0.0
  %3062 = vmatprep.subr.mxu0 0.0
  %3063 = vmatpush1.msra.mxu0 0.0
  %3064 = vmatprep.mubr.f32.mxu0 0.0
  %3065 = vmatmul.mubr.f32.gmra.mrb[0].mxu0 %v2995
  %v3066 = vpop.f32.mrb[0].mxu0
  %v3067 = vadd.f32 0.0, %v3066
  %v3068 = vpop.f32.mrb[0].mxu0
  %3069 = vmatprep.mubr.f32.mxu0 0.0
  %3070 = vmatmul.mubr.f32.gmra.mrb[0].mxu0 %v2998
  %v3071 = vpop.f32.mrb[0].mxu0
  %v3072 = vadd.f32 0.0, %v3071
  %v3073 = vpop.f32.mrb[0].mxu0
  %3074 = vdwg.mxu0
  %v3076 = vsel %vm1470, %v2386, 0
  %v3079 = vsel %vm1470, %v2387, 0
  %3081 = vmatprep.subr.mxu0 0.0
  %3082 = vmatpush1.msra.mxu0 %v2830
  %3083 = vmatprep.subr.mxu0 0.0
  %3084 = vmatpush1.msra.mxu0 %v2831
  %3085 = vmatprep.subr.mxu0 0.0
  %3086 = vmatpush1.msra.mxu0 0.0
  %3087 = vmatprep.subr.mxu0 0.0
  %3088 = vmatpush1.msra.mxu0 0.0
  %3089 = vmatprep.subr.mxu0 0.0
  %3090 = vmatpush1.msra.mxu0 0.0
  %3091 = vmatprep.subr.mxu0 0.0
  %3092 = vmatpush1.msra.mxu0 0.0
  %3093 = vmatprep.subr.mxu0 0.0
  %3094 = vmatpush1.msra.mxu0 0.0
  %3095 = vmatprep.subr.mxu0 0.0
  %3096 = vmatpush1.msra.mxu0 0.0
  %3097 = vmatprep.subr.mxu0 0.0
  %3098 = vmatpush1.msra.mxu0 0.0
  %3099 = vmatprep.subr.mxu0 0.0
  %3100 = vmatpush1.msra.mxu0 0.0
  %3101 = vmatprep.subr.mxu0 0.0
  %3102 = vmatpush1.msra.mxu0 0.0
  %3103 = vmatprep.subr.mxu0 0.0
  %3104 = vmatpush1.msra.mxu0 0.0
  %3105 = vmatprep.subr.mxu0 0.0
  %3106 = vmatpush1.msra.mxu0 0.0
  %3107 = vmatprep.subr.mxu0 0.0
  %3108 = vmatpush1.msra.mxu0 0.0
  %3109 = vmatprep.subr.mxu0 0.0
  %3110 = vmatpush1.msra.mxu0 0.0
  %3111 = vmatprep.subr.mxu0 0.0
  %3112 = vmatpush1.msra.mxu0 0.0
  %3113 = vmatprep.subr.mxu0 0.0
  %3114 = vmatpush1.msra.mxu0 0.0
  %3115 = vmatprep.subr.mxu0 0.0
  %3116 = vmatpush1.msra.mxu0 0.0
  %3117 = vmatprep.subr.mxu0 0.0
  %3118 = vmatpush1.msra.mxu0 0.0
  %3119 = vmatprep.subr.mxu0 0.0
  %3120 = vmatpush1.msra.mxu0 0.0
  %3121 = vmatprep.subr.mxu0 0.0
  %3122 = vmatpush1.msra.mxu0 0.0
  %3123 = vmatprep.subr.mxu0 0.0
  %3124 = vmatpush1.msra.mxu0 0.0
  %3125 = vmatprep.subr.mxu0 0.0
  %3126 = vmatpush1.msra.mxu0 0.0
  %3127 = vmatprep.subr.mxu0 0.0
  %3128 = vmatpush1.msra.mxu0 0.0
  %3129 = vmatprep.subr.mxu0 0.0
  %3130 = vmatpush1.msra.mxu0 0.0
  %3131 = vmatprep.subr.mxu0 0.0
  %3132 = vmatpush1.msra.mxu0 0.0
  %3133 = vmatprep.subr.mxu0 0.0
  %3134 = vmatpush1.msra.mxu0 0.0
  %3135 = vmatprep.subr.mxu0 0.0
  %3136 = vmatpush1.msra.mxu0 0.0
  %3137 = vmatprep.subr.mxu0 0.0
  %3138 = vmatpush1.msra.mxu0 0.0
  %3139 = vmatprep.subr.mxu0 0.0
  %3140 = vmatpush1.msra.mxu0 0.0
  %3141 = vmatprep.subr.mxu0 0.0
  %3142 = vmatpush1.msra.mxu0 0.0
  %3143 = vmatprep.subr.mxu0 0.0
  %3144 = vmatpush1.msra.mxu0 0.0
  %3145 = vmatprep.mubr.f32.mxu0 0.0
  %3146 = vmatmul.mubr.f32.gmra.mrb[0].mxu0 %v3076
  %v3147 = vpop.f32.mrb[0].mxu0
  %v3148 = vadd.f32 %v3067, %v3147
  %v3149 = vpop.f32.mrb[0].mxu0
  %3150 = vmatprep.mubr.f32.mxu0 0.0
  %3151 = vmatmul.mubr.f32.gmra.mrb[0].mxu0 %v3079
  %v3152 = vpop.f32.mrb[0].mxu0
  %v3153 = vadd.f32 %v3072, %v3152
  %v3154 = vpop.f32.mrb[0].mxu0
  %3155 = vdwg.mxu0
  %v3157 = vsel %vm1704, %v2986, 0
  %v3160 = vsel %vm1704, %v2991, 0
  %3162 = vmatprep.subr.mxu0 0.0
  %3163 = vmatpush1.msra.mxu0 %v2730
  %3164 = vmatprep.subr.mxu0 0.0
  %3165 = vmatpush1.msra.mxu0 0.0
  %3166 = vmatprep.subr.mxu0 0.0
  %3167 = vmatpush1.msra.mxu0 0.0
  %3168 = vmatprep.subr.mxu0 0.0
  %3169 = vmatpush1.msra.mxu0 0.0
  %3170 = vmatprep.subr.mxu0 0.0
  %3171 = vmatpush1.msra.mxu0 0.0
  %3172 = vmatprep.subr.mxu0 0.0
  %3173 = vmatpush1.msra.mxu0 0.0
  %3174 = vmatprep.subr.mxu0 0.0
  %3175 = vmatpush1.msra.mxu0 0.0
  %3176 = vmatprep.subr.mxu0 0.0
  %3177 = vmatpush1.msra.mxu0 0.0
  %3178 = vmatprep.subr.mxu0 0.0
  %3179 = vmatpush1.msra.mxu0 0.0
  %3180 = vmatprep.subr.mxu0 0.0
  %3181 = vmatpush1.msra.mxu0 0.0
  %3182 = vmatprep.subr.mxu0 0.0
  %3183 = vmatpush1.msra.mxu0 0.0
  %3184 = vmatprep.subr.mxu0 0.0
  %3185 = vmatpush1.msra.mxu0 0.0
  %3186 = vmatprep.subr.mxu0 0.0
  %3187 = vmatpush1.msra.mxu0 0.0
  %3188 = vmatprep.subr.mxu0 0.0
  %3189 = vmatpush1.msra.mxu0 0.0
  %3190 = vmatprep.subr.mxu0 0.0
  %3191 = vmatpush1.msra.mxu0 0.0
  %3192 = vmatprep.subr.mxu0 0.0
  %3193 = vmatpush1.msra.mxu0 0.0
  %3194 = vmatprep.subr.mxu0 0.0
  %3195 = vmatpush1.msra.mxu0 0.0
  %3196 = vmatprep.subr.mxu0 0.0
  %3197 = vmatpush1.msra.mxu0 0.0
  %3198 = vmatprep.subr.mxu0 0.0
  %3199 = vmatpush1.msra.mxu0 0.0
  %3200 = vmatprep.subr.mxu0 0.0
  %3201 = vmatpush1.msra.mxu0 0.0
  %3202 = vmatprep.subr.mxu0 0.0
  %3203 = vmatpush1.msra.mxu0 0.0
  %3204 = vmatprep.subr.mxu0 0.0
  %3205 = vmatpush1.msra.mxu0 0.0
  %3206 = vmatprep.subr.mxu0 0.0
  %3207 = vmatpush1.msra.mxu0 0.0
  %3208 = vmatprep.subr.mxu0 0.0
  %3209 = vmatpush1.msra.mxu0 0.0
  %3210 = vmatprep.subr.mxu0 0.0
  %3211 = vmatpush1.msra.mxu0 0.0
  %3212 = vmatprep.subr.mxu0 0.0
  %3213 = vmatpush1.msra.mxu0 0.0
  %3214 = vmatprep.subr.mxu0 0.0
  %3215 = vmatpush1.msra.mxu0 0.0
  %3216 = vmatprep.subr.mxu0 0.0
  %3217 = vmatpush1.msra.mxu0 0.0
  %3218 = vmatprep.subr.mxu0 0.0
  %3219 = vmatpush1.msra.mxu0 0.0
  %3220 = vmatprep.subr.mxu0 0.0
  %3221 = vmatpush1.msra.mxu0 0.0
  %3222 = vmatprep.subr.mxu0 0.0
  %3223 = vmatpush1.msra.mxu0 0.0
  %3224 = vmatprep.subr.mxu0 0.0
  %3225 = vmatpush1.msra.mxu0 0.0
  %3226 = vmatprep.mubr.f32.mxu0 0.0
  %3227 = vmatmul.mubr.f32.gmra.mrb[0].mxu0 %v3157
  %v3228 = vpop.f32.mrb[0].mxu0
  %v3229 = vadd.f32 0.0, %v3228
  %v3230 = vpop.f32.mrb[0].mxu0
  %3231 = vmatprep.mubr.f32.mxu0 0.0
  %3232 = vmatmul.mubr.f32.gmra.mrb[0].mxu0 %v3160
  %v3233 = vpop.f32.mrb[0].mxu0
  %v3234 = vadd.f32 0.0, %v3233
  %v3235 = vpop.f32.mrb[0].mxu0
  %3236 = vdwg.mxu0
  %v3237 = vadd.f32 %v3148, %v3229
  %v3238 = vadd.f32 %v3153, %v3234
  %3240 = vset.pattern.permute.xlu0 0
  %3241 = vperm.xlu0 %3240, %v2390
  %v3242 = vpop.permute.xlu0 %3241
  %3245 = vset.pattern.permute.xlu0 0
  %3246 = vperm.xlu0 %3245, %v2391
  %v3247 = vpop.permute.xlu0 %3246
  %v3249 = vadd.f32 %v3237, %v3242
  %v3250 = vadd.f32 %v3238, %v3247
  %vm3251 = vcmp.ge.f32.partialorder %v3249, 0.0
  %vm3252 = vcmp.ge.f32.partialorder %v3250, 0.0
  %v3253 = vmul.f32 %v3249, 0.01
  %v3254 = vmul.f32 %v3250, 0.01
  %v3255 = vsel %vm3251, %v3249, %v3253
  %v3256 = vsel %vm3252, %v3250, %v3254
  %v3257 = vsel %vm2564, 0.25, 0.0
  %v3259 = vsel %vm1704, %v3255, 0
  %v3262 = vsel %vm1704, %v3256, 0
  %3264 = vmatprep.subr.mxu0 0.0
  %3265 = vmatpush1.msra.mxu0 %v3257
  %3266 = vmatprep.subr.mxu0 0.0
  %3267 = vmatpush1.msra.mxu0 0.0
  %3268 = vmatprep.subr.mxu0 0.0
  %3269 = vmatpush1.msra.mxu0 0.0
  %3270 = vmatprep.subr.mxu0 0.0
  %3271 = vmatpush1.msra.mxu0 0.0
  %3272 = vmatprep.subr.mxu0 0.0
  %3273 = vmatpush1.msra.mxu0 0.0
  %3274 = vmatprep.subr.mxu0 0.0
  %3275 = vmatpush1.msra.mxu0 0.0
  %3276 = vmatprep.subr.mxu0 0.0
  %3277 = vmatpush1.msra.mxu0 0.0
  %3278 = vmatprep.subr.mxu0 0.0
  %3279 = vmatpush1.msra.mxu0 0.0
  %3280 = vmatprep.subr.mxu0 0.0
  %3281 = vmatpush1.msra.mxu0 0.0
  %3282 = vmatprep.subr.mxu0 0.0
  %3283 = vmatpush1.msra.mxu0 0.0
  %3284 = vmatprep.subr.mxu0 0.0
  %3285 = vmatpush1.msra.mxu0 0.0
  %3286 = vmatprep.subr.mxu0 0.0
  %3287 = vmatpush1.msra.mxu0 0.0
  %3288 = vmatprep.subr.mxu0 0.0
  %3289 = vmatpush1.msra.mxu0 0.0
  %3290 = vmatprep.subr.mxu0 0.0
  %3291 = vmatpush1.msra.mxu0 0.0
  %3292 = vmatprep.subr.mxu0 0.0
  %3293 = vmatpush1.msra.mxu0 0.0
  %3294 = vmatprep.subr.mxu0 0.0
  %3295 = vmatpush1.msra.mxu0 0.0
  %3296 = vmatprep.subr.mxu0 0.0
  %3297 = vmatpush1.msra.mxu0 0.0
  %3298 = vmatprep.subr.mxu0 0.0
  %3299 = vmatpush1.msra.mxu0 0.0
  %3300 = vmatprep.subr.mxu0 0.0
  %3301 = vmatpush1.msra.mxu0 0.0
  %3302 = vmatprep.subr.mxu0 0.0
  %3303 = vmatpush1.msra.mxu0 0.0
  %3304 = vmatprep.subr.mxu0 0.0
  %3305 = vmatpush1.msra.mxu0 0.0
  %3306 = vmatprep.subr.mxu0 0.0
  %3307 = vmatpush1.msra.mxu0 0.0
  %3308 = vmatprep.subr.mxu0 0.0
  %3309 = vmatpush1.msra.mxu0 0.0
  %3310 = vmatprep.subr.mxu0 0.0
  %3311 = vmatpush1.msra.mxu0 0.0
  %3312 = vmatprep.subr.mxu0 0.0
  %3313 = vmatpush1.msra.mxu0 0.0
  %3314 = vmatprep.subr.mxu0 0.0
  %3315 = vmatpush1.msra.mxu0 0.0
  %3316 = vmatprep.subr.mxu0 0.0
  %3317 = vmatpush1.msra.mxu0 0.0
  %3318 = vmatprep.subr.mxu0 0.0
  %3319 = vmatpush1.msra.mxu0 0.0
  %3320 = vmatprep.subr.mxu0 0.0
  %3321 = vmatpush1.msra.mxu0 0.0
  %3322 = vmatprep.subr.mxu0 0.0
  %3323 = vmatpush1.msra.mxu0 0.0
  %3324 = vmatprep.subr.mxu0 0.0
  %3325 = vmatpush1.msra.mxu0 0.0
  %3326 = vmatprep.subr.mxu0 0.0
  %3327 = vmatpush1.msra.mxu0 0.0
  %3328 = vmatprep.mubr.f32.mxu0 0.0
  %3329 = vmatmul.mubr.f32.gmra.mrb[0].mxu0 %v3259
  %v3330 = vpop.f32.mrb[0].mxu0
  %v3331 = vadd.f32 0.0, %v3330
  %v3332 = vpop.f32.mrb[0].mxu0
  %3333 = vmatprep.mubr.f32.mxu0 0.0
  %3334 = vmatmul.mubr.f32.gmra.mrb[0].mxu0 %v3262
  %v3335 = vpop.f32.mrb[0].mxu0
  %v3336 = vadd.f32 0.0, %v3335
  %v3337 = vpop.f32.mrb[0].mxu0
  %3338 = vdwg.mxu0
  %v3339 = vsub.f32 %v3255, %v3331
  %v3340 = vsub.f32 %v3256, %v3336
  %v3341 = vmul.f32 %v3339, %v3339
  %v3342 = vmul.f32 %v3340, %v3340
  %v3344 = vsel %vm1704, %v3341, 0
  %v3347 = vsel %vm1704, %v3342, 0
  %3349 = vmatprep.subr.mxu0 0.0
  %3350 = vmatpush1.msra.mxu0 %v3257
  %3351 = vmatprep.subr.mxu0 0.0
  %3352 = vmatpush1.msra.mxu0 0.0
  %3353 = vmatprep.subr.mxu0 0.0
  %3354 = vmatpush1.msra.mxu0 0.0
  %3355 = vmatprep.subr.mxu0 0.0
  %3356 = vmatpush1.msra.mxu0 0.0
  %3357 = vmatprep.subr.mxu0 0.0
  %3358 = vmatpush1.msra.mxu0 0.0
  %3359 = vmatprep.subr.mxu0 0.0
  %3360 = vmatpush1.msra.mxu0 0.0
  %3361 = vmatprep.subr.mxu0 0.0
  %3362 = vmatpush1.msra.mxu0 0.0
  %3363 = vmatprep.subr.mxu0 0.0
  %3364 = vmatpush1.msra.mxu0 0.0
  %3365 = vmatprep.subr.mxu0 0.0
  %3366 = vmatpush1.msra.mxu0 0.0
  %3367 = vmatprep.subr.mxu0 0.0
  %3368 = vmatpush1.msra.mxu0 0.0
  %3369 = vmatprep.subr.mxu0 0.0
  %3370 = vmatpush1.msra.mxu0 0.0
  %3371 = vmatprep.subr.mxu0 0.0
  %3372 = vmatpush1.msra.mxu0 0.0
  %3373 = vmatprep.subr.mxu0 0.0
  %3374 = vmatpush1.msra.mxu0 0.0
  %3375 = vmatprep.subr.mxu0 0.0
  %3376 = vmatpush1.msra.mxu0 0.0
  %3377 = vmatprep.subr.mxu0 0.0
  %3378 = vmatpush1.msra.mxu0 0.0
  %3379 = vmatprep.subr.mxu0 0.0
  %3380 = vmatpush1.msra.mxu0 0.0
  %3381 = vmatprep.subr.mxu0 0.0
  %3382 = vmatpush1.msra.mxu0 0.0
  %3383 = vmatprep.subr.mxu0 0.0
  %3384 = vmatpush1.msra.mxu0 0.0
  %3385 = vmatprep.subr.mxu0 0.0
  %3386 = vmatpush1.msra.mxu0 0.0
  %3387 = vmatprep.subr.mxu0 0.0
  %3388 = vmatpush1.msra.mxu0 0.0
  %3389 = vmatprep.subr.mxu0 0.0
  %3390 = vmatpush1.msra.mxu0 0.0
  %3391 = vmatprep.subr.mxu0 0.0
  %3392 = vmatpush1.msra.mxu0 0.0
  %3393 = vmatprep.subr.mxu0 0.0
  %3394 = vmatpush1.msra.mxu0 0.0
  %3395 = vmatprep.subr.mxu0 0.0
  %3396 = vmatpush1.msra.mxu0 0.0
  %3397 = vmatprep.subr.mxu0 0.0
  %3398 = vmatpush1.msra.mxu0 0.0
  %3399 = vmatprep.subr.mxu0 0.0
  %3400 = vmatpush1.msra.mxu0 0.0
  %3401 = vmatprep.subr.mxu0 0.0
  %3402 = vmatpush1.msra.mxu0 0.0
  %3403 = vmatprep.subr.mxu0 0.0
  %3404 = vmatpush1.msra.mxu0 0.0
  %3405 = vmatprep.subr.mxu0 0.0
  %3406 = vmatpush1.msra.mxu0 0.0
  %3407 = vmatprep.subr.mxu0 0.0
  %3408 = vmatpush1.msra.mxu0 0.0
  %3409 = vmatprep.subr.mxu0 0.0
  %3410 = vmatpush1.msra.mxu0 0.0
  %3411 = vmatprep.subr.mxu0 0.0
  %3412 = vmatpush1.msra.mxu0 0.0
  %3413 = vmatprep.mubr.f32.mxu0 0.0
  %3414 = vmatmul.mubr.f32.gmra.mrb[0].mxu0 %v3344
  %v3415 = vpop.f32.mrb[0].mxu0
  %v3416 = vadd.f32 1e-05, %v3415
  %v3417 = vpop.f32.mrb[0].mxu0
  %3418 = vmatprep.mubr.f32.mxu0 0.0
  %3419 = vmatmul.mubr.f32.gmra.mrb[0].mxu0 %v3347
  %v3420 = vpop.f32.mrb[0].mxu0
  %v3421 = vadd.f32 1e-05, %v3420
  %v3422 = vpop.f32.mrb[0].mxu0
  %3423 = vdwg.mxu0
  %v3424 = vrsqrt.pop %v3416
  %v3425 = vrsqrt.pop %v3421
  %v3426 = vmul.f32 %v3339, %v3424
  %v3427 = vmul.f32 %v3340, %v3425
  %v3428 = vld [vmem:[%s27] sm:$0xff]
  %v3429 = vld [vmem:[%s27 + $0x8] sm:$0xff]
  %v3430 = vld [vmem:[%s29] sm:$0xff]
  %v3431 = vld [vmem:[%s31] sm:$0xff]
  %v3432 = vld [vmem:[%s31 + $0x8] sm:$0xff]
  %v3433 = vld [vmem:[%s31 + $0x10] sm:$0xff]
  %v3434 = vld [vmem:[%s33] sm:$0xff]
  %v3435 = vld [vmem:[%s33 + $0x8] sm:$0xff]
  %v3436 = vld [vmem:[%s33 + $0x10] sm:$0xff]
  %v3437 = vld [vmem:[%s35] sm:$0xff]
  %v3438 = vld [vmem:[%s37] sm:$0xff]
  %v3439 = vld [vmem:[%s37 + $0x8] sm:$0xff]
  %v3440 = vld [vmem:[%s37 + $0x10] sm:$0xff]
  %v3441 = vld [vmem:[%s39] sm:$0xff]
  %3443 = vset.pattern.permute.xlu0 0
  %3444 = vperm.xlu0 %3443, %v3430
  %v3445 = vpop.permute.xlu0 %3444
  %v3448 = vsel %vm1470, %v3428, 0
  %3450 = vmatprep.subr.mxu0 0.0
  %3451 = vmatpush1.msra.mxu0 %v3426
  %3452 = vmatprep.subr.mxu0 0.0
  %3453 = vmatpush1.msra.mxu0 %v3427
  %3454 = vmatprep.subr.mxu0 0.0
  %3455 = vmatpush1.msra.mxu0 0.0
  %3456 = vmatprep.subr.mxu0 0.0
  %3457 = vmatpush1.msra.mxu0 0.0
  %3458 = vmatprep.subr.mxu0 0.0
  %3459 = vmatpush1.msra.mxu0 0.0
  %3460 = vmatprep.subr.mxu0 0.0
  %3461 = vmatpush1.msra.mxu0 0.0
  %3462 = vmatprep.subr.mxu0 0.0
  %3463 = vmatpush1.msra.mxu0 0.0
  %3464 = vmatprep.subr.mxu0 0.0
  %3465 = vmatpush1.msra.mxu0 0.0
  %3466 = vmatprep.subr.mxu0 0.0
  %3467 = vmatpush1.msra.mxu0 0.0
  %3468 = vmatprep.subr.mxu0 0.0
  %3469 = vmatpush1.msra.mxu0 0.0
  %3470 = vmatprep.subr.mxu0 0.0
  %3471 = vmatpush1.msra.mxu0 0.0
  %3472 = vmatprep.subr.mxu0 0.0
  %3473 = vmatpush1.msra.mxu0 0.0
  %3474 = vmatprep.subr.mxu0 0.0
  %3475 = vmatpush1.msra.mxu0 0.0
  %3476 = vmatprep.subr.mxu0 0.0
  %3477 = vmatpush1.msra.mxu0 0.0
  %3478 = vmatprep.subr.mxu0 0.0
  %3479 = vmatpush1.msra.mxu0 0.0
  %3480 = vmatprep.subr.mxu0 0.0
  %3481 = vmatpush1.msra.mxu0 0.0
  %3482 = vmatprep.subr.mxu0 0.0
  %3483 = vmatpush1.msra.mxu0 0.0
  %3484 = vmatprep.subr.mxu0 0.0
  %3485 = vmatpush1.msra.mxu0 0.0
  %3486 = vmatprep.subr.mxu0 0.0
  %3487 = vmatpush1.msra.mxu0 0.0
  %3488 = vmatprep.subr.mxu0 0.0
  %3489 = vmatpush1.msra.mxu0 0.0
  %3490 = vmatprep.subr.mxu0 0.0
  %3491 = vmatpush1.msra.mxu0 0.0
  %3492 = vmatprep.subr.mxu0 0.0
  %3493 = vmatpush1.msra.mxu0 0.0
  %3494 = vmatprep.subr.mxu0 0.0
  %3495 = vmatpush1.msra.mxu0 0.0
  %3496 = vmatprep.subr.mxu0 0.0
  %3497 = vmatpush1.msra.mxu0 0.0
  %3498 = vmatprep.subr.mxu0 0.0
  %3499 = vmatpush1.msra.mxu0 0.0
  %3500 = vmatprep.subr.mxu0 0.0
  %3501 = vmatpush1.msra.mxu0 0.0
  %3502 = vmatprep.subr.mxu0 0.0
  %3503 = vmatpush1.msra.mxu0 0.0
  %3504 = vmatprep.subr.mxu0 0.0
  %3505 = vmatpush1.msra.mxu0 0.0
  %3506 = vmatprep.subr.mxu0 0.0
  %3507 = vmatpush1.msra.mxu0 0.0
  %3508 = vmatprep.subr.mxu0 0.0
  %3509 = vmatpush1.msra.mxu0 0.0
  %3510 = vmatprep.subr.mxu0 0.0
  %3511 = vmatpush1.msra.mxu0 0.0
  %3512 = vmatprep.subr.mxu0 0.0
  %3513 = vmatpush1.msra.mxu0 0.0
  %3514 = vmatprep.mubr.f32.mxu0 0.0
  %3515 = vmatmul.mubr.f32.gmra.mrb[0].mxu0 %v3448
  %v3516 = vpop.f32.mrb[0].mxu0
  %v3517 = vadd.f32 %v3445, %v3516
  %v3518 = vpop.f32.mrb[0].mxu0
  %3519 = vdwg.mxu0
  %v3521 = vsel %vm1470, %v3429, 0
  %3523 = vmatprep.subr.mxu0 0.0
  %3524 = vmatpush1.msra.mxu0 %v3426
  %3525 = vmatprep.subr.mxu0 0.0
  %3526 = vmatpush1.msra.mxu0 %v3427
  %3527 = vmatprep.subr.mxu0 0.0
  %3528 = vmatpush1.msra.mxu0 0.0
  %3529 = vmatprep.subr.mxu0 0.0
  %3530 = vmatpush1.msra.mxu0 0.0
  %3531 = vmatprep.subr.mxu0 0.0
  %3532 = vmatpush1.msra.mxu0 0.0
  %3533 = vmatprep.subr.mxu0 0.0
  %3534 = vmatpush1.msra.mxu0 0.0
  %3535 = vmatprep.subr.mxu0 0.0
  %3536 = vmatpush1.msra.mxu0 0.0
  %3537 = vmatprep.subr.mxu0 0.0
  %3538 = vmatpush1.msra.mxu0 0.0
  %3539 = vmatprep.subr.mxu0 0.0
  %3540 = vmatpush1.msra.mxu0 0.0
  %3541 = vmatprep.subr.mxu0 0.0
  %3542 = vmatpush1.msra.mxu0 0.0
  %3543 = vmatprep.subr.mxu0 0.0
  %3544 = vmatpush1.msra.mxu0 0.0
  %3545 = vmatprep.subr.mxu0 0.0
  %3546 = vmatpush1.msra.mxu0 0.0
  %3547 = vmatprep.subr.mxu0 0.0
  %3548 = vmatpush1.msra.mxu0 0.0
  %3549 = vmatprep.subr.mxu0 0.0
  %3550 = vmatpush1.msra.mxu0 0.0
  %3551 = vmatprep.subr.mxu0 0.0
  %3552 = vmatpush1.msra.mxu0 0.0
  %3553 = vmatprep.subr.mxu0 0.0
  %3554 = vmatpush1.msra.mxu0 0.0
  %3555 = vmatprep.subr.mxu0 0.0
  %3556 = vmatpush1.msra.mxu0 0.0
  %3557 = vmatprep.subr.mxu0 0.0
  %3558 = vmatpush1.msra.mxu0 0.0
  %3559 = vmatprep.subr.mxu0 0.0
  %3560 = vmatpush1.msra.mxu0 0.0
  %3561 = vmatprep.subr.mxu0 0.0
  %3562 = vmatpush1.msra.mxu0 0.0
  %3563 = vmatprep.subr.mxu0 0.0
  %3564 = vmatpush1.msra.mxu0 0.0
  %3565 = vmatprep.subr.mxu0 0.0
  %3566 = vmatpush1.msra.mxu0 0.0
  %3567 = vmatprep.subr.mxu0 0.0
  %3568 = vmatpush1.msra.mxu0 0.0
  %3569 = vmatprep.subr.mxu0 0.0
  %3570 = vmatpush1.msra.mxu0 0.0
  %3571 = vmatprep.subr.mxu0 0.0
  %3572 = vmatpush1.msra.mxu0 0.0
  %3573 = vmatprep.subr.mxu0 0.0
  %3574 = vmatpush1.msra.mxu0 0.0
  %3575 = vmatprep.subr.mxu0 0.0
  %3576 = vmatpush1.msra.mxu0 0.0
  %3577 = vmatprep.subr.mxu0 0.0
  %3578 = vmatpush1.msra.mxu0 0.0
  %3579 = vmatprep.subr.mxu0 0.0
  %3580 = vmatpush1.msra.mxu0 0.0
  %3581 = vmatprep.subr.mxu0 0.0
  %3582 = vmatpush1.msra.mxu0 0.0
  %3583 = vmatprep.subr.mxu0 0.0
  %3584 = vmatpush1.msra.mxu0 0.0
  %3585 = vmatprep.subr.mxu0 0.0
  %3586 = vmatpush1.msra.mxu0 0.0
  %3587 = vmatprep.mubr.f32.mxu0 0.0
  %3588 = vmatmul.mubr.f32.gmra.mrb[0].mxu0 %v3521
  %v3589 = vpop.f32.mrb[0].mxu0
  %v3590 = vadd.f32 %v3445, %v3589
  %v3591 = vpop.f32.mrb[0].mxu0
  %3592 = vdwg.mxu0
  %v3593 = vmul.u32 %v283, 2
  %vm3594 = vcmp.eq.s32.totalorder %v288, %v3593
  %v3595 = vsel %vm3594, 1.0, 0.0
  %v3596 = vadd.s32 %v3593, 1
  %vm3597 = vcmp.eq.s32.totalorder %v288, %v3596
  %v3598 = vsel %vm3597, 1.0, 0.0
  %v3600 = vsel %vm1704, %v3590, 0
  %3602 = vmatprep.subr.mxu0 0.0
  %3603 = vmatpush1.msra.mxu0 %v3598
  %3604 = vmatprep.subr.mxu0 0.0
  %3605 = vmatpush1.msra.mxu0 0.0
  %3606 = vmatprep.subr.mxu0 0.0
  %3607 = vmatpush1.msra.mxu0 0.0
  %3608 = vmatprep.subr.mxu0 0.0
  %3609 = vmatpush1.msra.mxu0 0.0
  %3610 = vmatprep.subr.mxu0 0.0
  %3611 = vmatpush1.msra.mxu0 0.0
  %3612 = vmatprep.subr.mxu0 0.0
  %3613 = vmatpush1.msra.mxu0 0.0
  %3614 = vmatprep.subr.mxu0 0.0
  %3615 = vmatpush1.msra.mxu0 0.0
  %3616 = vmatprep.subr.mxu0 0.0
  %3617 = vmatpush1.msra.mxu0 0.0
  %3618 = vmatprep.subr.mxu0 0.0
  %3619 = vmatpush1.msra.mxu0 0.0
  %3620 = vmatprep.subr.mxu0 0.0
  %3621 = vmatpush1.msra.mxu0 0.0
  %3622 = vmatprep.subr.mxu0 0.0
  %3623 = vmatpush1.msra.mxu0 0.0
  %3624 = vmatprep.subr.mxu0 0.0
  %3625 = vmatpush1.msra.mxu0 0.0
  %3626 = vmatprep.subr.mxu0 0.0
  %3627 = vmatpush1.msra.mxu0 0.0
  %3628 = vmatprep.subr.mxu0 0.0
  %3629 = vmatpush1.msra.mxu0 0.0
  %3630 = vmatprep.subr.mxu0 0.0
  %3631 = vmatpush1.msra.mxu0 0.0
  %3632 = vmatprep.subr.mxu0 0.0
  %3633 = vmatpush1.msra.mxu0 0.0
  %3634 = vmatprep.subr.mxu0 0.0
  %3635 = vmatpush1.msra.mxu0 0.0
  %3636 = vmatprep.subr.mxu0 0.0
  %3637 = vmatpush1.msra.mxu0 0.0
  %3638 = vmatprep.subr.mxu0 0.0
  %3639 = vmatpush1.msra.mxu0 0.0
  %3640 = vmatprep.subr.mxu0 0.0
  %3641 = vmatpush1.msra.mxu0 0.0
  %3642 = vmatprep.subr.mxu0 0.0
  %3643 = vmatpush1.msra.mxu0 0.0
  %3644 = vmatprep.subr.mxu0 0.0
  %3645 = vmatpush1.msra.mxu0 0.0
  %3646 = vmatprep.subr.mxu0 0.0
  %3647 = vmatpush1.msra.mxu0 0.0
  %3648 = vmatprep.subr.mxu0 0.0
  %3649 = vmatpush1.msra.mxu0 0.0
  %3650 = vmatprep.subr.mxu0 0.0
  %3651 = vmatpush1.msra.mxu0 0.0
  %3652 = vmatprep.subr.mxu0 0.0
  %3653 = vmatpush1.msra.mxu0 0.0
  %3654 = vmatprep.subr.mxu0 0.0
  %3655 = vmatpush1.msra.mxu0 0.0
  %3656 = vmatprep.subr.mxu0 0.0
  %3657 = vmatpush1.msra.mxu0 0.0
  %3658 = vmatprep.subr.mxu0 0.0
  %3659 = vmatpush1.msra.mxu0 0.0
  %3660 = vmatprep.subr.mxu0 0.0
  %3661 = vmatpush1.msra.mxu0 0.0
  %3662 = vmatprep.subr.mxu0 0.0
  %3663 = vmatpush1.msra.mxu0 0.0
  %3664 = vmatprep.subr.mxu0 0.0
  %3665 = vmatpush1.msra.mxu0 0.0
  %3666 = vmatprep.mubr.f32.mxu0 0.0
  %3667 = vmatmul.mubr.f32.gmra.mrb[0].mxu0 %v3600
  %v3668 = vpop.f32.mrb[0].mxu0
  %v3669 = vadd.f32 0.0, %v3668
  %v3670 = vpop.f32.mrb[0].mxu0
  %3671 = vdwg.mxu0
  %v3673 = vsel %vm1704, %v3517, 0
  %3675 = vmatprep.subr.mxu0 0.0
  %3676 = vmatpush1.msra.mxu0 %v3595
  %3677 = vmatprep.subr.mxu0 0.0
  %3678 = vmatpush1.msra.mxu0 0.0
  %3679 = vmatprep.subr.mxu0 0.0
  %3680 = vmatpush1.msra.mxu0 0.0
  %3681 = vmatprep.subr.mxu0 0.0
  %3682 = vmatpush1.msra.mxu0 0.0
  %3683 = vmatprep.subr.mxu0 0.0
  %3684 = vmatpush1.msra.mxu0 0.0
  %3685 = vmatprep.subr.mxu0 0.0
  %3686 = vmatpush1.msra.mxu0 0.0
  %3687 = vmatprep.subr.mxu0 0.0
  %3688 = vmatpush1.msra.mxu0 0.0
  %3689 = vmatprep.subr.mxu0 0.0
  %3690 = vmatpush1.msra.mxu0 0.0
  %3691 = vmatprep.subr.mxu0 0.0
  %3692 = vmatpush1.msra.mxu0 0.0
  %3693 = vmatprep.subr.mxu0 0.0
  %3694 = vmatpush1.msra.mxu0 0.0
  %3695 = vmatprep.subr.mxu0 0.0
  %3696 = vmatpush1.msra.mxu0 0.0
  %3697 = vmatprep.subr.mxu0 0.0
  %3698 = vmatpush1.msra.mxu0 0.0
  %3699 = vmatprep.subr.mxu0 0.0
  %3700 = vmatpush1.msra.mxu0 0.0
  %3701 = vmatprep.subr.mxu0 0.0
  %3702 = vmatpush1.msra.mxu0 0.0
  %3703 = vmatprep.subr.mxu0 0.0
  %3704 = vmatpush1.msra.mxu0 0.0
  %3705 = vmatprep.subr.mxu0 0.0
  %3706 = vmatpush1.msra.mxu0 0.0
  %3707 = vmatprep.subr.mxu0 0.0
  %3708 = vmatpush1.msra.mxu0 0.0
  %3709 = vmatprep.subr.mxu0 0.0
  %3710 = vmatpush1.msra.mxu0 0.0
  %3711 = vmatprep.subr.mxu0 0.0
  %3712 = vmatpush1.msra.mxu0 0.0
  %3713 = vmatprep.subr.mxu0 0.0
  %3714 = vmatpush1.msra.mxu0 0.0
  %3715 = vmatprep.subr.mxu0 0.0
  %3716 = vmatpush1.msra.mxu0 0.0
  %3717 = vmatprep.subr.mxu0 0.0
  %3718 = vmatpush1.msra.mxu0 0.0
  %3719 = vmatprep.subr.mxu0 0.0
  %3720 = vmatpush1.msra.mxu0 0.0
  %3721 = vmatprep.subr.mxu0 0.0
  %3722 = vmatpush1.msra.mxu0 0.0
  %3723 = vmatprep.subr.mxu0 0.0
  %3724 = vmatpush1.msra.mxu0 0.0
  %3725 = vmatprep.subr.mxu0 0.0
  %3726 = vmatpush1.msra.mxu0 0.0
  %3727 = vmatprep.subr.mxu0 0.0
  %3728 = vmatpush1.msra.mxu0 0.0
  %3729 = vmatprep.subr.mxu0 0.0
  %3730 = vmatpush1.msra.mxu0 0.0
  %3731 = vmatprep.subr.mxu0 0.0
  %3732 = vmatpush1.msra.mxu0 0.0
  %3733 = vmatprep.subr.mxu0 0.0
  %3734 = vmatpush1.msra.mxu0 0.0
  %3735 = vmatprep.subr.mxu0 0.0
  %3736 = vmatpush1.msra.mxu0 0.0
  %3737 = vmatprep.subr.mxu0 0.0
  %3738 = vmatpush1.msra.mxu0 0.0
  %3739 = vmatprep.mubr.f32.mxu0 0.0
  %3740 = vmatmul.mubr.f32.gmra.mrb[0].mxu0 %v3673
  %v3741 = vpop.f32.mrb[0].mxu0
  %v3742 = vadd.f32 %v3669, %v3741
  %v3743 = vpop.f32.mrb[0].mxu0
  %3744 = vdwg.mxu0
  %v3746 = vsel %vm1704, %v3434, 0
  %3748 = vmatprep.subr.mxu0 0.0
  %3749 = vmatpush1.msra.mxu0 %v3742
  %3750 = vmatprep.subr.mxu0 0.0
  %3751 = vmatpush1.msra.mxu0 0.0
  %3752 = vmatprep.subr.mxu0 0.0
  %3753 = vmatpush1.msra.mxu0 0.0
  %3754 = vmatprep.subr.mxu0 0.0
  %3755 = vmatpush1.msra.mxu0 0.0
  %3756 = vmatprep.subr.mxu0 0.0
  %3757 = vmatpush1.msra.mxu0 0.0
  %3758 = vmatprep.subr.mxu0 0.0
  %3759 = vmatpush1.msra.mxu0 0.0
  %3760 = vmatprep.subr.mxu0 0.0
  %3761 = vmatpush1.msra.mxu0 0.0
  %3762 = vmatprep.subr.mxu0 0.0
  %3763 = vmatpush1.msra.mxu0 0.0
  %3764 = vmatprep.subr.mxu0 0.0
  %3765 = vmatpush1.msra.mxu0 0.0
  %3766 = vmatprep.subr.mxu0 0.0
  %3767 = vmatpush1.msra.mxu0 0.0
  %3768 = vmatprep.subr.mxu0 0.0
  %3769 = vmatpush1.msra.mxu0 0.0
  %3770 = vmatprep.subr.mxu0 0.0
  %3771 = vmatpush1.msra.mxu0 0.0
  %3772 = vmatprep.subr.mxu0 0.0
  %3773 = vmatpush1.msra.mxu0 0.0
  %3774 = vmatprep.subr.mxu0 0.0
  %3775 = vmatpush1.msra.mxu0 0.0
  %3776 = vmatprep.subr.mxu0 0.0
  %3777 = vmatpush1.msra.mxu0 0.0
  %3778 = vmatprep.subr.mxu0 0.0
  %3779 = vmatpush1.msra.mxu0 0.0
  %3780 = vmatprep.subr.mxu0 0.0
  %3781 = vmatpush1.msra.mxu0 0.0
  %3782 = vmatprep.subr.mxu0 0.0
  %3783 = vmatpush1.msra.mxu0 0.0
  %3784 = vmatprep.subr.mxu0 0.0
  %3785 = vmatpush1.msra.mxu0 0.0
  %3786 = vmatprep.subr.mxu0 0.0
  %3787 = vmatpush1.msra.mxu0 0.0
  %3788 = vmatprep.subr.mxu0 0.0
  %3789 = vmatpush1.msra.mxu0 0.0
  %3790 = vmatprep.subr.mxu0 0.0
  %3791 = vmatpush1.msra.mxu0 0.0
  %3792 = vmatprep.subr.mxu0 0.0
  %3793 = vmatpush1.msra.mxu0 0.0
  %3794 = vmatprep.subr.mxu0 0.0
  %3795 = vmatpush1.msra.mxu0 0.0
  %3796 = vmatprep.subr.mxu0 0.0
  %3797 = vmatpush1.msra.mxu0 0.0
  %3798 = vmatprep.subr.mxu0 0.0
  %3799 = vmatpush1.msra.mxu0 0.0
  %3800 = vmatprep.subr.mxu0 0.0
  %3801 = vmatpush1.msra.mxu0 0.0
  %3802 = vmatprep.subr.mxu0 0.0
  %3803 = vmatpush1.msra.mxu0 0.0
  %3804 = vmatprep.subr.mxu0 0.0
  %3805 = vmatpush1.msra.mxu0 0.0
  %3806 = vmatprep.subr.mxu0 0.0
  %3807 = vmatpush1.msra.mxu0 0.0
  %3808 = vmatprep.subr.mxu0 0.0
  %3809 = vmatpush1.msra.mxu0 0.0
  %3810 = vmatprep.subr.mxu0 0.0
  %3811 = vmatpush1.msra.mxu0 0.0
  %3812 = vmatprep.mubr.f32.mxu0 0.0
  %3813 = vmatmul.mubr.f32.gmra.mrb[0].mxu0 %v3746
  %v3814 = vpop.f32.mrb[0].mxu0
  %v3815 = vadd.f32 0.0, %v3814
  %v3816 = vpop.f32.mrb[0].mxu0
  %3817 = vdwg.mxu0
  %v3819 = vsel %vm1704, %v3431, 0
  %3821 = vmatprep.subr.mxu0 0.0
  %3822 = vmatpush1.msra.mxu0 %v2231
  %3823 = vmatprep.subr.mxu0 0.0
  %3824 = vmatpush1.msra.mxu0 0.0
  %3825 = vmatprep.subr.mxu0 0.0
  %3826 = vmatpush1.msra.mxu0 0.0
  %3827 = vmatprep.subr.mxu0 0.0
  %3828 = vmatpush1.msra.mxu0 0.0
  %3829 = vmatprep.subr.mxu0 0.0
  %3830 = vmatpush1.msra.mxu0 0.0
  %3831 = vmatprep.subr.mxu0 0.0
  %3832 = vmatpush1.msra.mxu0 0.0
  %3833 = vmatprep.subr.mxu0 0.0
  %3834 = vmatpush1.msra.mxu0 0.0
  %3835 = vmatprep.subr.mxu0 0.0
  %3836 = vmatpush1.msra.mxu0 0.0
  %3837 = vmatprep.subr.mxu0 0.0
  %3838 = vmatpush1.msra.mxu0 0.0
  %3839 = vmatprep.subr.mxu0 0.0
  %3840 = vmatpush1.msra.mxu0 0.0
  %3841 = vmatprep.subr.mxu0 0.0
  %3842 = vmatpush1.msra.mxu0 0.0
  %3843 = vmatprep.subr.mxu0 0.0
  %3844 = vmatpush1.msra.mxu0 0.0
  %3845 = vmatprep.subr.mxu0 0.0
  %3846 = vmatpush1.msra.mxu0 0.0
  %3847 = vmatprep.subr.mxu0 0.0
  %3848 = vmatpush1.msra.mxu0 0.0
  %3849 = vmatprep.subr.mxu0 0.0
  %3850 = vmatpush1.msra.mxu0 0.0
  %3851 = vmatprep.subr.mxu0 0.0
  %3852 = vmatpush1.msra.mxu0 0.0
  %3853 = vmatprep.subr.mxu0 0.0
  %3854 = vmatpush1.msra.mxu0 0.0
  %3855 = vmatprep.subr.mxu0 0.0
  %3856 = vmatpush1.msra.mxu0 0.0
  %3857 = vmatprep.subr.mxu0 0.0
  %3858 = vmatpush1.msra.mxu0 0.0
  %3859 = vmatprep.subr.mxu0 0.0
  %3860 = vmatpush1.msra.mxu0 0.0
  %3861 = vmatprep.subr.mxu0 0.0
  %3862 = vmatpush1.msra.mxu0 0.0
  %3863 = vmatprep.subr.mxu0 0.0
  %3864 = vmatpush1.msra.mxu0 0.0
  %3865 = vmatprep.subr.mxu0 0.0
  %3866 = vmatpush1.msra.mxu0 0.0
  %3867 = vmatprep.subr.mxu0 0.0
  %3868 = vmatpush1.msra.mxu0 0.0
  %3869 = vmatprep.subr.mxu0 0.0
  %3870 = vmatpush1.msra.mxu0 0.0
  %3871 = vmatprep.subr.mxu0 0.0
  %3872 = vmatpush1.msra.mxu0 0.0
  %3873 = vmatprep.subr.mxu0 0.0
  %3874 = vmatpush1.msra.mxu0 0.0
  %3875 = vmatprep.subr.mxu0 0.0
  %3876 = vmatpush1.msra.mxu0 0.0
  %3877 = vmatprep.subr.mxu0 0.0
  %3878 = vmatpush1.msra.mxu0 0.0
  %3879 = vmatprep.subr.mxu0 0.0
  %3880 = vmatpush1.msra.mxu0 0.0
  %3881 = vmatprep.subr.mxu0 0.0
  %3882 = vmatpush1.msra.mxu0 0.0
  %3883 = vmatprep.subr.mxu0 0.0
  %3884 = vmatpush1.msra.mxu0 0.0
  %3885 = vmatprep.mubr.f32.mxu0 0.0
  %3886 = vmatmul.mubr.f32.gmra.mrb[0].mxu0 %v3819
  %v3887 = vpop.f32.mrb[0].mxu0
  %v3888 = vadd.f32 %v3815, %v3887
  %v3889 = vpop.f32.mrb[0].mxu0
  %3890 = vdwg.mxu0
  %v3892 = vsel %vm1704, %v3435, 0
  %3894 = vmatprep.subr.mxu0 0.0
  %3895 = vmatpush1.msra.mxu0 %v3742
  %3896 = vmatprep.subr.mxu0 0.0
  %3897 = vmatpush1.msra.mxu0 0.0
  %3898 = vmatprep.subr.mxu0 0.0
  %3899 = vmatpush1.msra.mxu0 0.0
  %3900 = vmatprep.subr.mxu0 0.0
  %3901 = vmatpush1.msra.mxu0 0.0
  %3902 = vmatprep.subr.mxu0 0.0
  %3903 = vmatpush1.msra.mxu0 0.0
  %3904 = vmatprep.subr.mxu0 0.0
  %3905 = vmatpush1.msra.mxu0 0.0
  %3906 = vmatprep.subr.mxu0 0.0
  %3907 = vmatpush1.msra.mxu0 0.0
  %3908 = vmatprep.subr.mxu0 0.0
  %3909 = vmatpush1.msra.mxu0 0.0
  %3910 = vmatprep.subr.mxu0 0.0
  %3911 = vmatpush1.msra.mxu0 0.0
  %3912 = vmatprep.subr.mxu0 0.0
  %3913 = vmatpush1.msra.mxu0 0.0
  %3914 = vmatprep.subr.mxu0 0.0
  %3915 = vmatpush1.msra.mxu0 0.0
  %3916 = vmatprep.subr.mxu0 0.0
  %3917 = vmatpush1.msra.mxu0 0.0
  %3918 = vmatprep.subr.mxu0 0.0
  %3919 = vmatpush1.msra.mxu0 0.0
  %3920 = vmatprep.subr.mxu0 0.0
  %3921 = vmatpush1.msra.mxu0 0.0
  %3922 = vmatprep.subr.mxu0 0.0
  %3923 = vmatpush1.msra.mxu0 0.0
  %3924 = vmatprep.subr.mxu0 0.0
  %3925 = vmatpush1.msra.mxu0 0.0
  %3926 = vmatprep.subr.mxu0 0.0
  %3927 = vmatpush1.msra.mxu0 0.0
  %3928 = vmatprep.subr.mxu0 0.0
  %3929 = vmatpush1.msra.mxu0 0.0
  %3930 = vmatprep.subr.mxu0 0.0
  %3931 = vmatpush1.msra.mxu0 0.0
  %3932 = vmatprep.subr.mxu0 0.0
  %3933 = vmatpush1.msra.mxu0 0.0
  %3934 = vmatprep.subr.mxu0 0.0
  %3935 = vmatpush1.msra.mxu0 0.0
  %3936 = vmatprep.subr.mxu0 0.0
  %3937 = vmatpush1.msra.mxu0 0.0
  %3938 = vmatprep.subr.mxu0 0.0
  %3939 = vmatpush1.msra.mxu0 0.0
  %3940 = vmatprep.subr.mxu0 0.0
  %3941 = vmatpush1.msra.mxu0 0.0
  %3942 = vmatprep.subr.mxu0 0.0
  %3943 = vmatpush1.msra.mxu0 0.0
  %3944 = vmatprep.subr.mxu0 0.0
  %3945 = vmatpush1.msra.mxu0 0.0
  %3946 = vmatprep.subr.mxu0 0.0
  %3947 = vmatpush1.msra.mxu0 0.0
  %3948 = vmatprep.subr.mxu0 0.0
  %3949 = vmatpush1.msra.mxu0 0.0
  %3950 = vmatprep.subr.mxu0 0.0
  %3951 = vmatpush1.msra.mxu0 0.0
  %3952 = vmatprep.subr.mxu0 0.0
  %3953 = vmatpush1.msra.mxu0 0.0
  %3954 = vmatprep.subr.mxu0 0.0
  %3955 = vmatpush1.msra.mxu0 0.0
  %3956 = vmatprep.subr.mxu0 0.0
  %3957 = vmatpush1.msra.mxu0 0.0
  %3958 = vmatprep.mubr.f32.mxu0 0.0
  %3959 = vmatmul.mubr.f32.gmra.mrb[0].mxu0 %v3892
  %v3960 = vpop.f32.mrb[0].mxu0
  %v3961 = vadd.f32 0.0, %v3960
  %v3962 = vpop.f32.mrb[0].mxu0
  %3963 = vdwg.mxu0
  %v3965 = vsel %vm1704, %v3432, 0
  %3967 = vmatprep.subr.mxu0 0.0
  %3968 = vmatpush1.msra.mxu0 %v2231
  %3969 = vmatprep.subr.mxu0 0.0
  %3970 = vmatpush1.msra.mxu0 0.0
  %3971 = vmatprep.subr.mxu0 0.0
  %3972 = vmatpush1.msra.mxu0 0.0
  %3973 = vmatprep.subr.mxu0 0.0
  %3974 = vmatpush1.msra.mxu0 0.0
  %3975 = vmatprep.subr.mxu0 0.0
  %3976 = vmatpush1.msra.mxu0 0.0
  %3977 = vmatprep.subr.mxu0 0.0
  %3978 = vmatpush1.msra.mxu0 0.0
  %3979 = vmatprep.subr.mxu0 0.0
  %3980 = vmatpush1.msra.mxu0 0.0
  %3981 = vmatprep.subr.mxu0 0.0
  %3982 = vmatpush1.msra.mxu0 0.0
  %3983 = vmatprep.subr.mxu0 0.0
  %3984 = vmatpush1.msra.mxu0 0.0
  %3985 = vmatprep.subr.mxu0 0.0
  %3986 = vmatpush1.msra.mxu0 0.0
  %3987 = vmatprep.subr.mxu0 0.0
  %3988 = vmatpush1.msra.mxu0 0.0
  %3989 = vmatprep.subr.mxu0 0.0
  %3990 = vmatpush1.msra.mxu0 0.0
  %3991 = vmatprep.subr.mxu0 0.0
  %3992 = vmatpush1.msra.mxu0 0.0
  %3993 = vmatprep.subr.mxu0 0.0
  %3994 = vmatpush1.msra.mxu0 0.0
  %3995 = vmatprep.subr.mxu0 0.0
  %3996 = vmatpush1.msra.mxu0 0.0
  %3997 = vmatprep.subr.mxu0 0.0
  %3998 = vmatpush1.msra.mxu0 0.0
  %3999 = vmatprep.subr.mxu0 0.0
  %4000 = vmatpush1.msra.mxu0 0.0
  %4001 = vmatprep.subr.mxu0 0.0
  %4002 = vmatpush1.msra.mxu0 0.0
  %4003 = vmatprep.subr.mxu0 0.0
  %4004 = vmatpush1.msra.mxu0 0.0
  %4005 = vmatprep.subr.mxu0 0.0
  %4006 = vmatpush1.msra.mxu0 0.0
  %4007 = vmatprep.subr.mxu0 0.0
  %4008 = vmatpush1.msra.mxu0 0.0
  %4009 = vmatprep.subr.mxu0 0.0
  %4010 = vmatpush1.msra.mxu0 0.0
  %4011 = vmatprep.subr.mxu0 0.0
  %4012 = vmatpush1.msra.mxu0 0.0
  %4013 = vmatprep.subr.mxu0 0.0
  %4014 = vmatpush1.msra.mxu0 0.0
  %4015 = vmatprep.subr.mxu0 0.0
  %4016 = vmatpush1.msra.mxu0 0.0
  %4017 = vmatprep.subr.mxu0 0.0
  %4018 = vmatpush1.msra.mxu0 0.0
  %4019 = vmatprep.subr.mxu0 0.0
  %4020 = vmatpush1.msra.mxu0 0.0
  %4021 = vmatprep.subr.mxu0 0.0
  %4022 = vmatpush1.msra.mxu0 0.0
  %4023 = vmatprep.subr.mxu0 0.0
  %4024 = vmatpush1.msra.mxu0 0.0
  %4025 = vmatprep.subr.mxu0 0.0
  %4026 = vmatpush1.msra.mxu0 0.0
  %4027 = vmatprep.subr.mxu0 0.0
  %4028 = vmatpush1.msra.mxu0 0.0
  %4029 = vmatprep.subr.mxu0 0.0
  %4030 = vmatpush1.msra.mxu0 0.0
  %4031 = vmatprep.mubr.f32.mxu0 0.0
  %4032 = vmatmul.mubr.f32.gmra.mrb[0].mxu0 %v3965
  %v4033 = vpop.f32.mrb[0].mxu0
  %v4034 = vadd.f32 %v3961, %v4033
  %v4035 = vpop.f32.mrb[0].mxu0
  %4036 = vdwg.mxu0
  %v4038 = vsel %vm1704, %v3436, 0
  %4040 = vmatprep.subr.mxu0 0.0
  %4041 = vmatpush1.msra.mxu0 %v3742
  %4042 = vmatprep.subr.mxu0 0.0
  %4043 = vmatpush1.msra.mxu0 0.0
  %4044 = vmatprep.subr.mxu0 0.0
  %4045 = vmatpush1.msra.mxu0 0.0
  %4046 = vmatprep.subr.mxu0 0.0
  %4047 = vmatpush1.msra.mxu0 0.0
  %4048 = vmatprep.subr.mxu0 0.0
  %4049 = vmatpush1.msra.mxu0 0.0
  %4050 = vmatprep.subr.mxu0 0.0
  %4051 = vmatpush1.msra.mxu0 0.0
  %4052 = vmatprep.subr.mxu0 0.0
  %4053 = vmatpush1.msra.mxu0 0.0
  %4054 = vmatprep.subr.mxu0 0.0
  %4055 = vmatpush1.msra.mxu0 0.0
  %4056 = vmatprep.subr.mxu0 0.0
  %4057 = vmatpush1.msra.mxu0 0.0
  %4058 = vmatprep.subr.mxu0 0.0
  %4059 = vmatpush1.msra.mxu0 0.0
  %4060 = vmatprep.subr.mxu0 0.0
  %4061 = vmatpush1.msra.mxu0 0.0
  %4062 = vmatprep.subr.mxu0 0.0
  %4063 = vmatpush1.msra.mxu0 0.0
  %4064 = vmatprep.subr.mxu0 0.0
  %4065 = vmatpush1.msra.mxu0 0.0
  %4066 = vmatprep.subr.mxu0 0.0
  %4067 = vmatpush1.msra.mxu0 0.0
  %4068 = vmatprep.subr.mxu0 0.0
  %4069 = vmatpush1.msra.mxu0 0.0
  %4070 = vmatprep.subr.mxu0 0.0
  %4071 = vmatpush1.msra.mxu0 0.0
  %4072 = vmatprep.subr.mxu0 0.0
  %4073 = vmatpush1.msra.mxu0 0.0
  %4074 = vmatprep.subr.mxu0 0.0
  %4075 = vmatpush1.msra.mxu0 0.0
  %4076 = vmatprep.subr.mxu0 0.0
  %4077 = vmatpush1.msra.mxu0 0.0
  %4078 = vmatprep.subr.mxu0 0.0
  %4079 = vmatpush1.msra.mxu0 0.0
  %4080 = vmatprep.subr.mxu0 0.0
  %4081 = vmatpush1.msra.mxu0 0.0
  %4082 = vmatprep.subr.mxu0 0.0
  %4083 = vmatpush1.msra.mxu0 0.0
  %4084 = vmatprep.subr.mxu0 0.0
  %4085 = vmatpush1.msra.mxu0 0.0
  %4086 = vmatprep.subr.mxu0 0.0
  %4087 = vmatpush1.msra.mxu0 0.0
  %4088 = vmatprep.subr.mxu0 0.0
  %4089 = vmatpush1.msra.mxu0 0.0
  %4090 = vmatprep.subr.mxu0 0.0
  %4091 = vmatpush1.msra.mxu0 0.0
  %4092 = vmatprep.subr.mxu0 0.0
  %4093 = vmatpush1.msra.mxu0 0.0
  %4094 = vmatprep.subr.mxu0 0.0
  %4095 = vmatpush1.msra.mxu0 0.0
  %4096 = vmatprep.subr.mxu0 0.0
  %4097 = vmatpush1.msra.mxu0 0.0
  %4098 = vmatprep.subr.mxu0 0.0
  %4099 = vmatpush1.msra.mxu0 0.0
  %4100 = vmatprep.subr.mxu0 0.0
  %4101 = vmatpush1.msra.mxu0 0.0
  %4102 = vmatprep.subr.mxu0 0.0
  %4103 = vmatpush1.msra.mxu0 0.0
  %4104 = vmatprep.mubr.f32.mxu0 0.0
  %4105 = vmatmul.mubr.f32.gmra.mrb[0].mxu0 %v4038
  %v4106 = vpop.f32.mrb[0].mxu0
  %v4107 = vadd.f32 0.0, %v4106
  %v4108 = vpop.f32.mrb[0].mxu0
  %4109 = vdwg.mxu0
  %v4111 = vsel %vm1704, %v3433, 0
  %4113 = vmatprep.subr.mxu0 0.0
  %4114 = vmatpush1.msra.mxu0 %v2231
  %4115 = vmatprep.subr.mxu0 0.0
  %4116 = vmatpush1.msra.mxu0 0.0
  %4117 = vmatprep.subr.mxu0 0.0
  %4118 = vmatpush1.msra.mxu0 0.0
  %4119 = vmatprep.subr.mxu0 0.0
  %4120 = vmatpush1.msra.mxu0 0.0
  %4121 = vmatprep.subr.mxu0 0.0
  %4122 = vmatpush1.msra.mxu0 0.0
  %4123 = vmatprep.subr.mxu0 0.0
  %4124 = vmatpush1.msra.mxu0 0.0
  %4125 = vmatprep.subr.mxu0 0.0
  %4126 = vmatpush1.msra.mxu0 0.0
  %4127 = vmatprep.subr.mxu0 0.0
  %4128 = vmatpush1.msra.mxu0 0.0
  %4129 = vmatprep.subr.mxu0 0.0
  %4130 = vmatpush1.msra.mxu0 0.0
  %4131 = vmatprep.subr.mxu0 0.0
  %4132 = vmatpush1.msra.mxu0 0.0
  %4133 = vmatprep.subr.mxu0 0.0
  %4134 = vmatpush1.msra.mxu0 0.0
  %4135 = vmatprep.subr.mxu0 0.0
  %4136 = vmatpush1.msra.mxu0 0.0
  %4137 = vmatprep.subr.mxu0 0.0
  %4138 = vmatpush1.msra.mxu0 0.0
  %4139 = vmatprep.subr.mxu0 0.0
  %4140 = vmatpush1.msra.mxu0 0.0
  %4141 = vmatprep.subr.mxu0 0.0
  %4142 = vmatpush1.msra.mxu0 0.0
  %4143 = vmatprep.subr.mxu0 0.0
  %4144 = vmatpush1.msra.mxu0 0.0
  %4145 = vmatprep.subr.mxu0 0.0
  %4146 = vmatpush1.msra.mxu0 0.0
  %4147 = vmatprep.subr.mxu0 0.0
  %4148 = vmatpush1.msra.mxu0 0.0
  %4149 = vmatprep.subr.mxu0 0.0
  %4150 = vmatpush1.msra.mxu0 0.0
  %4151 = vmatprep.subr.mxu0 0.0
  %4152 = vmatpush1.msra.mxu0 0.0
  %4153 = vmatprep.subr.mxu0 0.0
  %4154 = vmatpush1.msra.mxu0 0.0
  %4155 = vmatprep.subr.mxu0 0.0
  %4156 = vmatpush1.msra.mxu0 0.0
  %4157 = vmatprep.subr.mxu0 0.0
  %4158 = vmatpush1.msra.mxu0 0.0
  %4159 = vmatprep.subr.mxu0 0.0
  %4160 = vmatpush1.msra.mxu0 0.0
  %4161 = vmatprep.subr.mxu0 0.0
  %4162 = vmatpush1.msra.mxu0 0.0
  %4163 = vmatprep.subr.mxu0 0.0
  %4164 = vmatpush1.msra.mxu0 0.0
  %4165 = vmatprep.subr.mxu0 0.0
  %4166 = vmatpush1.msra.mxu0 0.0
  %4167 = vmatprep.subr.mxu0 0.0
  %4168 = vmatpush1.msra.mxu0 0.0
  %4169 = vmatprep.subr.mxu0 0.0
  %4170 = vmatpush1.msra.mxu0 0.0
  %4171 = vmatprep.subr.mxu0 0.0
  %4172 = vmatpush1.msra.mxu0 0.0
  %4173 = vmatprep.subr.mxu0 0.0
  %4174 = vmatpush1.msra.mxu0 0.0
  %4175 = vmatprep.subr.mxu0 0.0
  %4176 = vmatpush1.msra.mxu0 0.0
  %4177 = vmatprep.mubr.f32.mxu0 0.0
  %4178 = vmatmul.mubr.f32.gmra.mrb[0].mxu0 %v4111
  %v4179 = vpop.f32.mrb[0].mxu0
  %v4180 = vadd.f32 %v4107, %v4179
  %v4181 = vpop.f32.mrb[0].mxu0
  %4182 = vdwg.mxu0
  %v4184 = vsel %vm1470, %v3888, 0
  %4186 = vmatprep.subr.mxu0 0.0
  %4187 = vmatpush1.msra.mxu0 %v1468
  %4188 = vmatprep.subr.mxu0 0.0
  %4189 = vmatpush1.msra.mxu0 %v1469
  %4190 = vmatprep.subr.mxu0 0.0
  %4191 = vmatpush1.msra.mxu0 0.0
  %4192 = vmatprep.subr.mxu0 0.0
  %4193 = vmatpush1.msra.mxu0 0.0
  %4194 = vmatprep.subr.mxu0 0.0
  %4195 = vmatpush1.msra.mxu0 0.0
  %4196 = vmatprep.subr.mxu0 0.0
  %4197 = vmatpush1.msra.mxu0 0.0
  %4198 = vmatprep.subr.mxu0 0.0
  %4199 = vmatpush1.msra.mxu0 0.0
  %4200 = vmatprep.subr.mxu0 0.0
  %4201 = vmatpush1.msra.mxu0 0.0
  %4202 = vmatprep.subr.mxu0 0.0
  %4203 = vmatpush1.msra.mxu0 0.0
  %4204 = vmatprep.subr.mxu0 0.0
  %4205 = vmatpush1.msra.mxu0 0.0
  %4206 = vmatprep.subr.mxu0 0.0
  %4207 = vmatpush1.msra.mxu0 0.0
  %4208 = vmatprep.subr.mxu0 0.0
  %4209 = vmatpush1.msra.mxu0 0.0
  %4210 = vmatprep.subr.mxu0 0.0
  %4211 = vmatpush1.msra.mxu0 0.0
  %4212 = vmatprep.subr.mxu0 0.0
  %4213 = vmatpush1.msra.mxu0 0.0
  %4214 = vmatprep.subr.mxu0 0.0
  %4215 = vmatpush1.msra.mxu0 0.0
  %4216 = vmatprep.subr.mxu0 0.0
  %4217 = vmatpush1.msra.mxu0 0.0
  %4218 = vmatprep.subr.mxu0 0.0
  %4219 = vmatpush1.msra.mxu0 0.0
  %4220 = vmatprep.subr.mxu0 0.0
  %4221 = vmatpush1.msra.mxu0 0.0
  %4222 = vmatprep.subr.mxu0 0.0
  %4223 = vmatpush1.msra.mxu0 0.0
  %4224 = vmatprep.subr.mxu0 0.0
  %4225 = vmatpush1.msra.mxu0 0.0
  %4226 = vmatprep.subr.mxu0 0.0
  %4227 = vmatpush1.msra.mxu0 0.0
  %4228 = vmatprep.subr.mxu0 0.0
  %4229 = vmatpush1.msra.mxu0 0.0
  %4230 = vmatprep.subr.mxu0 0.0
  %4231 = vmatpush1.msra.mxu0 0.0
  %4232 = vmatprep.subr.mxu0 0.0
  %4233 = vmatpush1.msra.mxu0 0.0
  %4234 = vmatprep.subr.mxu0 0.0
  %4235 = vmatpush1.msra.mxu0 0.0
  %4236 = vmatprep.subr.mxu0 0.0
  %4237 = vmatpush1.msra.mxu0 0.0
  %4238 = vmatprep.subr.mxu0 0.0
  %4239 = vmatpush1.msra.mxu0 0.0
  %4240 = vmatprep.subr.mxu0 0.0
  %4241 = vmatpush1.msra.mxu0 0.0
  %4242 = vmatprep.subr.mxu0 0.0
  %4243 = vmatpush1.msra.mxu0 0.0
  %4244 = vmatprep.subr.mxu0 0.0
  %4245 = vmatpush1.msra.mxu0 0.0
  %4246 = vmatprep.subr.mxu0 0.0
  %4247 = vmatpush1.msra.mxu0 0.0
  %4248 = vmatprep.subr.mxu0 0.0
  %4249 = vmatpush1.msra.mxu0 0.0
  %4250 = vmatprep.mubr.f32.mxu0 0.0
  %4251 = vmatmul.mubr.f32.gmra.mrb[0].mxu0 %v4184
  %v4252 = vpop.f32.mrb[0].mxu0
  %v4253 = vadd.f32 0.0, %v4252
  %v4254 = vpop.f32.mrb[0].mxu0
  %4255 = vdwg.mxu0
  %v4256 = vadd.f32 %v4034, %v4253
  %v4258 = vsel %vm1470, %v4180, 0
  %4260 = vmatprep.subr.mxu0 0.0
  %4261 = vmatpush1.msra.mxu0 %v1619
  %4262 = vmatprep.subr.mxu0 0.0
  %4263 = vmatpush1.msra.mxu0 %v1620
  %4264 = vmatprep.subr.mxu0 0.0
  %4265 = vmatpush1.msra.mxu0 0.0
  %4266 = vmatprep.subr.mxu0 0.0
  %4267 = vmatpush1.msra.mxu0 0.0
  %4268 = vmatprep.subr.mxu0 0.0
  %4269 = vmatpush1.msra.mxu0 0.0
  %4270 = vmatprep.subr.mxu0 0.0
  %4271 = vmatpush1.msra.mxu0 0.0
  %4272 = vmatprep.subr.mxu0 0.0
  %4273 = vmatpush1.msra.mxu0 0.0
  %4274 = vmatprep.subr.mxu0 0.0
  %4275 = vmatpush1.msra.mxu0 0.0
  %4276 = vmatprep.subr.mxu0 0.0
  %4277 = vmatpush1.msra.mxu0 0.0
  %4278 = vmatprep.subr.mxu0 0.0
  %4279 = vmatpush1.msra.mxu0 0.0
  %4280 = vmatprep.subr.mxu0 0.0
  %4281 = vmatpush1.msra.mxu0 0.0
  %4282 = vmatprep.subr.mxu0 0.0
  %4283 = vmatpush1.msra.mxu0 0.0
  %4284 = vmatprep.subr.mxu0 0.0
  %4285 = vmatpush1.msra.mxu0 0.0
  %4286 = vmatprep.subr.mxu0 0.0
  %4287 = vmatpush1.msra.mxu0 0.0
  %4288 = vmatprep.subr.mxu0 0.0
  %4289 = vmatpush1.msra.mxu0 0.0
  %4290 = vmatprep.subr.mxu0 0.0
  %4291 = vmatpush1.msra.mxu0 0.0
  %4292 = vmatprep.subr.mxu0 0.0
  %4293 = vmatpush1.msra.mxu0 0.0
  %4294 = vmatprep.subr.mxu0 0.0
  %4295 = vmatpush1.msra.mxu0 0.0
  %4296 = vmatprep.subr.mxu0 0.0
  %4297 = vmatpush1.msra.mxu0 0.0
  %4298 = vmatprep.subr.mxu0 0.0
  %4299 = vmatpush1.msra.mxu0 0.0
  %4300 = vmatprep.subr.mxu0 0.0
  %4301 = vmatpush1.msra.mxu0 0.0
  %4302 = vmatprep.subr.mxu0 0.0
  %4303 = vmatpush1.msra.mxu0 0.0
  %4304 = vmatprep.subr.mxu0 0.0
  %4305 = vmatpush1.msra.mxu0 0.0
  %4306 = vmatprep.subr.mxu0 0.0
  %4307 = vmatpush1.msra.mxu0 0.0
  %4308 = vmatprep.subr.mxu0 0.0
  %4309 = vmatpush1.msra.mxu0 0.0
  %4310 = vmatprep.subr.mxu0 0.0
  %4311 = vmatpush1.msra.mxu0 0.0
  %4312 = vmatprep.subr.mxu0 0.0
  %4313 = vmatpush1.msra.mxu0 0.0
  %4314 = vmatprep.subr.mxu0 0.0
  %4315 = vmatpush1.msra.mxu0 0.0
  %4316 = vmatprep.subr.mxu0 0.0
  %4317 = vmatpush1.msra.mxu0 0.0
  %4318 = vmatprep.subr.mxu0 0.0
  %4319 = vmatpush1.msra.mxu0 0.0
  %4320 = vmatprep.subr.mxu0 0.0
  %4321 = vmatpush1.msra.mxu0 0.0
  %4322 = vmatprep.subr.mxu0 0.0
  %4323 = vmatpush1.msra.mxu0 0.0
  %4324 = vmatprep.mubr.f32.mxu0 0.0
  %4325 = vmatmul.mubr.f32.gmra.mrb[0].mxu0 %v4258
  %v4326 = vpop.f32.mrb[0].mxu0
  %v4327 = vadd.f32 0.0, %v4326
  %v4328 = vpop.f32.mrb[0].mxu0
  %4329 = vdwg.mxu0
  %v4330 = vadd.f32 %v4256, %v4327
  %4332 = vset.pattern.permute.xlu0 0
  %4333 = vperm.xlu0 %4332, %v3437
  %v4334 = vpop.permute.xlu0 %4333
  %v4336 = vadd.f32 %v4330, %v4334
  %vm4337 = vcmp.ge.f32.partialorder %v4336, 0.0
  %v4338 = vmul.f32 %v4336, 0.01
  %v4339 = vsel %vm4337, %v4336, %v4338
  %v4341 = vsel %vm1704, %v3438, 0
  %4343 = vmatprep.subr.mxu0 0.0
  %4344 = vmatpush1.msra.mxu0 %v4339
  %4345 = vmatprep.subr.mxu0 0.0
  %4346 = vmatpush1.msra.mxu0 0.0
  %4347 = vmatprep.subr.mxu0 0.0
  %4348 = vmatpush1.msra.mxu0 0.0
  %4349 = vmatprep.subr.mxu0 0.0
  %4350 = vmatpush1.msra.mxu0 0.0
  %4351 = vmatprep.subr.mxu0 0.0
  %4352 = vmatpush1.msra.mxu0 0.0
  %4353 = vmatprep.subr.mxu0 0.0
  %4354 = vmatpush1.msra.mxu0 0.0
  %4355 = vmatprep.subr.mxu0 0.0
  %4356 = vmatpush1.msra.mxu0 0.0
  %4357 = vmatprep.subr.mxu0 0.0
  %4358 = vmatpush1.msra.mxu0 0.0
  %4359 = vmatprep.subr.mxu0 0.0
  %4360 = vmatpush1.msra.mxu0 0.0
  %4361 = vmatprep.subr.mxu0 0.0
  %4362 = vmatpush1.msra.mxu0 0.0
  %4363 = vmatprep.subr.mxu0 0.0
  %4364 = vmatpush1.msra.mxu0 0.0
  %4365 = vmatprep.subr.mxu0 0.0
  %4366 = vmatpush1.msra.mxu0 0.0
  %4367 = vmatprep.subr.mxu0 0.0
  %4368 = vmatpush1.msra.mxu0 0.0
  %4369 = vmatprep.subr.mxu0 0.0
  %4370 = vmatpush1.msra.mxu0 0.0
  %4371 = vmatprep.subr.mxu0 0.0
  %4372 = vmatpush1.msra.mxu0 0.0
  %4373 = vmatprep.subr.mxu0 0.0
  %4374 = vmatpush1.msra.mxu0 0.0
  %4375 = vmatprep.subr.mxu0 0.0
  %4376 = vmatpush1.msra.mxu0 0.0
  %4377 = vmatprep.subr.mxu0 0.0
  %4378 = vmatpush1.msra.mxu0 0.0
  %4379 = vmatprep.subr.mxu0 0.0
  %4380 = vmatpush1.msra.mxu0 0.0
  %4381 = vmatprep.subr.mxu0 0.0
  %4382 = vmatpush1.msra.mxu0 0.0
  %4383 = vmatprep.subr.mxu0 0.0
  %4384 = vmatpush1.msra.mxu0 0.0
  %4385 = vmatprep.subr.mxu0 0.0
  %4386 = vmatpush1.msra.mxu0 0.0
  %4387 = vmatprep.subr.mxu0 0.0
  %4388 = vmatpush1.msra.mxu0 0.0
  %4389 = vmatprep.subr.mxu0 0.0
  %4390 = vmatpush1.msra.mxu0 0.0
  %4391 = vmatprep.subr.mxu0 0.0
  %4392 = vmatpush1.msra.mxu0 0.0
  %4393 = vmatprep.subr.mxu0 0.0
  %4394 = vmatpush1.msra.mxu0 0.0
  %4395 = vmatprep.subr.mxu0 0.0
  %4396 = vmatpush1.msra.mxu0 0.0
  %4397 = vmatprep.subr.mxu0 0.0
  %4398 = vmatpush1.msra.mxu0 0.0
  %4399 = vmatprep.subr.mxu0 0.0
  %4400 = vmatpush1.msra.mxu0 0.0
  %4401 = vmatprep.subr.mxu0 0.0
  %4402 = vmatpush1.msra.mxu0 0.0
  %4403 = vmatprep.subr.mxu0 0.0
  %4404 = vmatpush1.msra.mxu0 0.0
  %4405 = vmatprep.subr.mxu0 0.0
  %4406 = vmatpush1.msra.mxu0 0.0
  %4407 = vmatprep.mubr.f32.mxu0 0.0
  %4408 = vmatmul.mubr.f32.gmra.mrb[0].mxu0 %v4341
  %v4409 = vpop.f32.mrb[0].mxu0
  %v4410 = vadd.f32 0.0, %v4409
  %v4411 = vpop.f32.mrb[0].mxu0
  %4412 = vdwg.mxu0
  %v4414 = vsel %vm1704, %v3440, 0
  %4416 = vmatprep.subr.mxu0 0.0
  %4417 = vmatpush1.msra.mxu0 %v4339
  %4418 = vmatprep.subr.mxu0 0.0
  %4419 = vmatpush1.msra.mxu0 0.0
  %4420 = vmatprep.subr.mxu0 0.0
  %4421 = vmatpush1.msra.mxu0 0.0
  %4422 = vmatprep.subr.mxu0 0.0
  %4423 = vmatpush1.msra.mxu0 0.0
  %4424 = vmatprep.subr.mxu0 0.0
  %4425 = vmatpush1.msra.mxu0 0.0
  %4426 = vmatprep.subr.mxu0 0.0
  %4427 = vmatpush1.msra.mxu0 0.0
  %4428 = vmatprep.subr.mxu0 0.0
  %4429 = vmatpush1.msra.mxu0 0.0
  %4430 = vmatprep.subr.mxu0 0.0
  %4431 = vmatpush1.msra.mxu0 0.0
  %4432 = vmatprep.subr.mxu0 0.0
  %4433 = vmatpush1.msra.mxu0 0.0
  %4434 = vmatprep.subr.mxu0 0.0
  %4435 = vmatpush1.msra.mxu0 0.0
  %4436 = vmatprep.subr.mxu0 0.0
  %4437 = vmatpush1.msra.mxu0 0.0
  %4438 = vmatprep.subr.mxu0 0.0
  %4439 = vmatpush1.msra.mxu0 0.0
  %4440 = vmatprep.subr.mxu0 0.0
  %4441 = vmatpush1.msra.mxu0 0.0
  %4442 = vmatprep.subr.mxu0 0.0
  %4443 = vmatpush1.msra.mxu0 0.0
  %4444 = vmatprep.subr.mxu0 0.0
  %4445 = vmatpush1.msra.mxu0 0.0
  %4446 = vmatprep.subr.mxu0 0.0
  %4447 = vmatpush1.msra.mxu0 0.0
  %4448 = vmatprep.subr.mxu0 0.0
  %4449 = vmatpush1.msra.mxu0 0.0
  %4450 = vmatprep.subr.mxu0 0.0
  %4451 = vmatpush1.msra.mxu0 0.0
  %4452 = vmatprep.subr.mxu0 0.0
  %4453 = vmatpush1.msra.mxu0 0.0
  %4454 = vmatprep.subr.mxu0 0.0
  %4455 = vmatpush1.msra.mxu0 0.0
  %4456 = vmatprep.subr.mxu0 0.0
  %4457 = vmatpush1.msra.mxu0 0.0
  %4458 = vmatprep.subr.mxu0 0.0
  %4459 = vmatpush1.msra.mxu0 0.0
  %4460 = vmatprep.subr.mxu0 0.0
  %4461 = vmatpush1.msra.mxu0 0.0
  %4462 = vmatprep.subr.mxu0 0.0
  %4463 = vmatpush1.msra.mxu0 0.0
  %4464 = vmatprep.subr.mxu0 0.0
  %4465 = vmatpush1.msra.mxu0 0.0
  %4466 = vmatprep.subr.mxu0 0.0
  %4467 = vmatpush1.msra.mxu0 0.0
  %4468 = vmatprep.subr.mxu0 0.0
  %4469 = vmatpush1.msra.mxu0 0.0
  %4470 = vmatprep.subr.mxu0 0.0
  %4471 = vmatpush1.msra.mxu0 0.0
  %4472 = vmatprep.subr.mxu0 0.0
  %4473 = vmatpush1.msra.mxu0 0.0
  %4474 = vmatprep.subr.mxu0 0.0
  %4475 = vmatpush1.msra.mxu0 0.0
  %4476 = vmatprep.subr.mxu0 0.0
  %4477 = vmatpush1.msra.mxu0 0.0
  %4478 = vmatprep.subr.mxu0 0.0
  %4479 = vmatpush1.msra.mxu0 0.0
  %4480 = vmatprep.mubr.f32.mxu0 0.0
  %4481 = vmatmul.mubr.f32.gmra.mrb[0].mxu0 %v4414
  %v4482 = vpop.f32.mrb[0].mxu0
  %v4483 = vadd.f32 0.0, %v4482
  %v4484 = vpop.f32.mrb[0].mxu0
  %4485 = vdwg.mxu0
  %v4487 = vsel %vm1470, %v4410, 0
  %4489 = vmatprep.subr.mxu0 0.0
  %4490 = vmatpush1.msra.mxu0 %v1468
  %4491 = vmatprep.subr.mxu0 0.0
  %4492 = vmatpush1.msra.mxu0 %v1469
  %4493 = vmatprep.subr.mxu0 0.0
  %4494 = vmatpush1.msra.mxu0 0.0
  %4495 = vmatprep.subr.mxu0 0.0
  %4496 = vmatpush1.msra.mxu0 0.0
  %4497 = vmatprep.subr.mxu0 0.0
  %4498 = vmatpush1.msra.mxu0 0.0
  %4499 = vmatprep.subr.mxu0 0.0
  %4500 = vmatpush1.msra.mxu0 0.0
  %4501 = vmatprep.subr.mxu0 0.0
  %4502 = vmatpush1.msra.mxu0 0.0
  %4503 = vmatprep.subr.mxu0 0.0
  %4504 = vmatpush1.msra.mxu0 0.0
  %4505 = vmatprep.subr.mxu0 0.0
  %4506 = vmatpush1.msra.mxu0 0.0
  %4507 = vmatprep.subr.mxu0 0.0
  %4508 = vmatpush1.msra.mxu0 0.0
  %4509 = vmatprep.subr.mxu0 0.0
  %4510 = vmatpush1.msra.mxu0 0.0
  %4511 = vmatprep.subr.mxu0 0.0
  %4512 = vmatpush1.msra.mxu0 0.0
  %4513 = vmatprep.subr.mxu0 0.0
  %4514 = vmatpush1.msra.mxu0 0.0
  %4515 = vmatprep.subr.mxu0 0.0
  %4516 = vmatpush1.msra.mxu0 0.0
  %4517 = vmatprep.subr.mxu0 0.0
  %4518 = vmatpush1.msra.mxu0 0.0
  %4519 = vmatprep.subr.mxu0 0.0
  %4520 = vmatpush1.msra.mxu0 0.0
  %4521 = vmatprep.subr.mxu0 0.0
  %4522 = vmatpush1.msra.mxu0 0.0
  %4523 = vmatprep.subr.mxu0 0.0
  %4524 = vmatpush1.msra.mxu0 0.0
  %4525 = vmatprep.subr.mxu0 0.0
  %4526 = vmatpush1.msra.mxu0 0.0
  %4527 = vmatprep.subr.mxu0 0.0
  %4528 = vmatpush1.msra.mxu0 0.0
  %4529 = vmatprep.subr.mxu0 0.0
  %4530 = vmatpush1.msra.mxu0 0.0
  %4531 = vmatprep.subr.mxu0 0.0
  %4532 = vmatpush1.msra.mxu0 0.0
  %4533 = vmatprep.subr.mxu0 0.0
  %4534 = vmatpush1.msra.mxu0 0.0
  %4535 = vmatprep.subr.mxu0 0.0
  %4536 = vmatpush1.msra.mxu0 0.0
  %4537 = vmatprep.subr.mxu0 0.0
  %4538 = vmatpush1.msra.mxu0 0.0
  %4539 = vmatprep.subr.mxu0 0.0
  %4540 = vmatpush1.msra.mxu0 0.0
  %4541 = vmatprep.subr.mxu0 0.0
  %4542 = vmatpush1.msra.mxu0 0.0
  %4543 = vmatprep.subr.mxu0 0.0
  %4544 = vmatpush1.msra.mxu0 0.0
  %4545 = vmatprep.subr.mxu0 0.0
  %4546 = vmatpush1.msra.mxu0 0.0
  %4547 = vmatprep.subr.mxu0 0.0
  %4548 = vmatpush1.msra.mxu0 0.0
  %4549 = vmatprep.subr.mxu0 0.0
  %4550 = vmatpush1.msra.mxu0 0.0
  %4551 = vmatprep.subr.mxu0 0.0
  %4552 = vmatpush1.msra.mxu0 0.0
  %4553 = vmatprep.mubr.f32.mxu0 0.0
  %4554 = vmatmul.mubr.f32.gmra.mrb[0].mxu0 %v4487
  %v4555 = vpop.f32.mrb[0].mxu0
  %v4556 = vadd.f32 0.0, %v4555
  %v4557 = vpop.f32.mrb[0].mxu0
  %4558 = vdwg.mxu0
  %v4560 = vsel %vm1704, %v3439, 0
  %4562 = vmatprep.subr.mxu0 0.0
  %4563 = vmatpush1.msra.mxu0 %v4339
  %4564 = vmatprep.subr.mxu0 0.0
  %4565 = vmatpush1.msra.mxu0 0.0
  %4566 = vmatprep.subr.mxu0 0.0
  %4567 = vmatpush1.msra.mxu0 0.0
  %4568 = vmatprep.subr.mxu0 0.0
  %4569 = vmatpush1.msra.mxu0 0.0
  %4570 = vmatprep.subr.mxu0 0.0
  %4571 = vmatpush1.msra.mxu0 0.0
  %4572 = vmatprep.subr.mxu0 0.0
  %4573 = vmatpush1.msra.mxu0 0.0
  %4574 = vmatprep.subr.mxu0 0.0
  %4575 = vmatpush1.msra.mxu0 0.0
  %4576 = vmatprep.subr.mxu0 0.0
  %4577 = vmatpush1.msra.mxu0 0.0
  %4578 = vmatprep.subr.mxu0 0.0
  %4579 = vmatpush1.msra.mxu0 0.0
  %4580 = vmatprep.subr.mxu0 0.0
  %4581 = vmatpush1.msra.mxu0 0.0
  %4582 = vmatprep.subr.mxu0 0.0
  %4583 = vmatpush1.msra.mxu0 0.0
  %4584 = vmatprep.subr.mxu0 0.0
  %4585 = vmatpush1.msra.mxu0 0.0
  %4586 = vmatprep.subr.mxu0 0.0
  %4587 = vmatpush1.msra.mxu0 0.0
  %4588 = vmatprep.subr.mxu0 0.0
  %4589 = vmatpush1.msra.mxu0 0.0
  %4590 = vmatprep.subr.mxu0 0.0
  %4591 = vmatpush1.msra.mxu0 0.0
  %4592 = vmatprep.subr.mxu0 0.0
  %4593 = vmatpush1.msra.mxu0 0.0
  %4594 = vmatprep.subr.mxu0 0.0
  %4595 = vmatpush1.msra.mxu0 0.0
  %4596 = vmatprep.subr.mxu0 0.0
  %4597 = vmatpush1.msra.mxu0 0.0
  %4598 = vmatprep.subr.mxu0 0.0
  %4599 = vmatpush1.msra.mxu0 0.0
  %4600 = vmatprep.subr.mxu0 0.0
  %4601 = vmatpush1.msra.mxu0 0.0
  %4602 = vmatprep.subr.mxu0 0.0
  %4603 = vmatpush1.msra.mxu0 0.0
  %4604 = vmatprep.subr.mxu0 0.0
  %4605 = vmatpush1.msra.mxu0 0.0
  %4606 = vmatprep.subr.mxu0 0.0
  %4607 = vmatpush1.msra.mxu0 0.0
  %4608 = vmatprep.subr.mxu0 0.0
  %4609 = vmatpush1.msra.mxu0 0.0
  %4610 = vmatprep.subr.mxu0 0.0
  %4611 = vmatpush1.msra.mxu0 0.0
  %4612 = vmatprep.subr.mxu0 0.0
  %4613 = vmatpush1.msra.mxu0 0.0
  %4614 = vmatprep.subr.mxu0 0.0
  %4615 = vmatpush1.msra.mxu0 0.0
  %4616 = vmatprep.subr.mxu0 0.0
  %4617 = vmatpush1.msra.mxu0 0.0
  %4618 = vmatprep.subr.mxu0 0.0
  %4619 = vmatpush1.msra.mxu0 0.0
  %4620 = vmatprep.subr.mxu0 0.0
  %4621 = vmatpush1.msra.mxu0 0.0
  %4622 = vmatprep.subr.mxu0 0.0
  %4623 = vmatpush1.msra.mxu0 0.0
  %4624 = vmatprep.subr.mxu0 0.0
  %4625 = vmatpush1.msra.mxu0 0.0
  %4626 = vmatprep.mubr.f32.mxu0 0.0
  %4627 = vmatmul.mubr.f32.gmra.mrb[0].mxu0 %v4560
  %v4628 = vpop.f32.mrb[0].mxu0
  %v4629 = vadd.f32 %v4556, %v4628
  %v4630 = vpop.f32.mrb[0].mxu0
  %4631 = vdwg.mxu0
  %v4633 = vsel %vm1470, %v4483, 0
  %4635 = vmatprep.subr.mxu0 0.0
  %4636 = vmatpush1.msra.mxu0 %v1619
  %4637 = vmatprep.subr.mxu0 0.0
  %4638 = vmatpush1.msra.mxu0 %v1620
  %4639 = vmatprep.subr.mxu0 0.0
  %4640 = vmatpush1.msra.mxu0 0.0
  %4641 = vmatprep.subr.mxu0 0.0
  %4642 = vmatpush1.msra.mxu0 0.0
  %4643 = vmatprep.subr.mxu0 0.0
  %4644 = vmatpush1.msra.mxu0 0.0
  %4645 = vmatprep.subr.mxu0 0.0
  %4646 = vmatpush1.msra.mxu0 0.0
  %4647 = vmatprep.subr.mxu0 0.0
  %4648 = vmatpush1.msra.mxu0 0.0
  %4649 = vmatprep.subr.mxu0 0.0
  %4650 = vmatpush1.msra.mxu0 0.0
  %4651 = vmatprep.subr.mxu0 0.0
  %4652 = vmatpush1.msra.mxu0 0.0
  %4653 = vmatprep.subr.mxu0 0.0
  %4654 = vmatpush1.msra.mxu0 0.0
  %4655 = vmatprep.subr.mxu0 0.0
  %4656 = vmatpush1.msra.mxu0 0.0
  %4657 = vmatprep.subr.mxu0 0.0
  %4658 = vmatpush1.msra.mxu0 0.0
  %4659 = vmatprep.subr.mxu0 0.0
  %4660 = vmatpush1.msra.mxu0 0.0
  %4661 = vmatprep.subr.mxu0 0.0
  %4662 = vmatpush1.msra.mxu0 0.0
  %4663 = vmatprep.subr.mxu0 0.0
  %4664 = vmatpush1.msra.mxu0 0.0
  %4665 = vmatprep.subr.mxu0 0.0
  %4666 = vmatpush1.msra.mxu0 0.0
  %4667 = vmatprep.subr.mxu0 0.0
  %4668 = vmatpush1.msra.mxu0 0.0
  %4669 = vmatprep.subr.mxu0 0.0
  %4670 = vmatpush1.msra.mxu0 0.0
  %4671 = vmatprep.subr.mxu0 0.0
  %4672 = vmatpush1.msra.mxu0 0.0
  %4673 = vmatprep.subr.mxu0 0.0
  %4674 = vmatpush1.msra.mxu0 0.0
  %4675 = vmatprep.subr.mxu0 0.0
  %4676 = vmatpush1.msra.mxu0 0.0
  %4677 = vmatprep.subr.mxu0 0.0
  %4678 = vmatpush1.msra.mxu0 0.0
  %4679 = vmatprep.subr.mxu0 0.0
  %4680 = vmatpush1.msra.mxu0 0.0
  %4681 = vmatprep.subr.mxu0 0.0
  %4682 = vmatpush1.msra.mxu0 0.0
  %4683 = vmatprep.subr.mxu0 0.0
  %4684 = vmatpush1.msra.mxu0 0.0
  %4685 = vmatprep.subr.mxu0 0.0
  %4686 = vmatpush1.msra.mxu0 0.0
  %4687 = vmatprep.subr.mxu0 0.0
  %4688 = vmatpush1.msra.mxu0 0.0
  %4689 = vmatprep.subr.mxu0 0.0
  %4690 = vmatpush1.msra.mxu0 0.0
  %4691 = vmatprep.subr.mxu0 0.0
  %4692 = vmatpush1.msra.mxu0 0.0
  %4693 = vmatprep.subr.mxu0 0.0
  %4694 = vmatpush1.msra.mxu0 0.0
  %4695 = vmatprep.subr.mxu0 0.0
  %4696 = vmatpush1.msra.mxu0 0.0
  %4697 = vmatprep.subr.mxu0 0.0
  %4698 = vmatpush1.msra.mxu0 0.0
  %4699 = vmatprep.mubr.f32.mxu0 0.0
  %4700 = vmatmul.mubr.f32.gmra.mrb[0].mxu0 %v4633
  %v4701 = vpop.f32.mrb[0].mxu0
  %v4702 = vadd.f32 0.0, %v4701
  %v4703 = vpop.f32.mrb[0].mxu0
  %4704 = vdwg.mxu0
  %v4705 = vadd.f32 %v4629, %v4702
  %4707 = vset.pattern.permute.xlu0 0
  %4708 = vperm.xlu0 %4707, %v3441
  %v4709 = vpop.permute.xlu0 %4708
  %v4711 = vadd.f32 %v4705, %v4709
  %vm4712 = vcmp.ge.f32.partialorder %v4711, 0.0
  %v4713 = vmul.f32 %v4711, 0.01
  %v4714 = vsel %vm4712, %v4711, %v4713
  %v4716 = vsel %vm1470, %v4714, 0
  %4718 = vmatprep.subr.mxu0 0.0
  %4719 = vmatpush1.msra.mxu0 %v2080
  %4720 = vmatprep.subr.mxu0 0.0
  %4721 = vmatpush1.msra.mxu0 %v2081
  %4722 = vmatprep.subr.mxu0 0.0
  %4723 = vmatpush1.msra.mxu0 0.0
  %4724 = vmatprep.subr.mxu0 0.0
  %4725 = vmatpush1.msra.mxu0 0.0
  %4726 = vmatprep.subr.mxu0 0.0
  %4727 = vmatpush1.msra.mxu0 0.0
  %4728 = vmatprep.subr.mxu0 0.0
  %4729 = vmatpush1.msra.mxu0 0.0
  %4730 = vmatprep.subr.mxu0 0.0
  %4731 = vmatpush1.msra.mxu0 0.0
  %4732 = vmatprep.subr.mxu0 0.0
  %4733 = vmatpush1.msra.mxu0 0.0
  %4734 = vmatprep.subr.mxu0 0.0
  %4735 = vmatpush1.msra.mxu0 0.0
  %4736 = vmatprep.subr.mxu0 0.0
  %4737 = vmatpush1.msra.mxu0 0.0
  %4738 = vmatprep.subr.mxu0 0.0
  %4739 = vmatpush1.msra.mxu0 0.0
  %4740 = vmatprep.subr.mxu0 0.0
  %4741 = vmatpush1.msra.mxu0 0.0
  %4742 = vmatprep.subr.mxu0 0.0
  %4743 = vmatpush1.msra.mxu0 0.0
  %4744 = vmatprep.subr.mxu0 0.0
  %4745 = vmatpush1.msra.mxu0 0.0
  %4746 = vmatprep.subr.mxu0 0.0
  %4747 = vmatpush1.msra.mxu0 0.0
  %4748 = vmatprep.subr.mxu0 0.0
  %4749 = vmatpush1.msra.mxu0 0.0
  %4750 = vmatprep.subr.mxu0 0.0
  %4751 = vmatpush1.msra.mxu0 0.0
  %4752 = vmatprep.subr.mxu0 0.0
  %4753 = vmatpush1.msra.mxu0 0.0
  %4754 = vmatprep.subr.mxu0 0.0
  %4755 = vmatpush1.msra.mxu0 0.0
  %4756 = vmatprep.subr.mxu0 0.0
  %4757 = vmatpush1.msra.mxu0 0.0
  %4758 = vmatprep.subr.mxu0 0.0
  %4759 = vmatpush1.msra.mxu0 0.0
  %4760 = vmatprep.subr.mxu0 0.0
  %4761 = vmatpush1.msra.mxu0 0.0
  %4762 = vmatprep.subr.mxu0 0.0
  %4763 = vmatpush1.msra.mxu0 0.0
  %4764 = vmatprep.subr.mxu0 0.0
  %4765 = vmatpush1.msra.mxu0 0.0
  %4766 = vmatprep.subr.mxu0 0.0
  %4767 = vmatpush1.msra.mxu0 0.0
  %4768 = vmatprep.subr.mxu0 0.0
  %4769 = vmatpush1.msra.mxu0 0.0
  %4770 = vmatprep.subr.mxu0 0.0
  %4771 = vmatpush1.msra.mxu0 0.0
  %4772 = vmatprep.subr.mxu0 0.0
  %4773 = vmatpush1.msra.mxu0 0.0
  %4774 = vmatprep.subr.mxu0 0.0
  %4775 = vmatpush1.msra.mxu0 0.0
  %4776 = vmatprep.subr.mxu0 0.0
  %4777 = vmatpush1.msra.mxu0 0.0
  %4778 = vmatprep.subr.mxu0 0.0
  %4779 = vmatpush1.msra.mxu0 0.0
  %4780 = vmatprep.subr.mxu0 0.0
  %4781 = vmatpush1.msra.mxu0 0.0
  %4782 = vmatprep.mubr.f32.mxu0 0.0
  %4783 = vmatmul.mubr.f32.gmra.mrb[0].mxu0 %v4716
  %v4784 = vpop.f32.mrb[0].mxu0
  %v4785 = vadd.f32 0.0, %v4784
  %v4786 = vpop.f32.mrb[0].mxu0
  %4787 = vdwg.mxu0
  %v4788 = vsub.f32 %v4714, %v4785
  %v4789 = vmul.f32 %v4788, %v4788
  %v4791 = vsel %vm1470, %v4789, 0
  %4793 = vmatprep.subr.mxu0 0.0
  %4794 = vmatpush1.msra.mxu0 %v2080
  %4795 = vmatprep.subr.mxu0 0.0
  %4796 = vmatpush1.msra.mxu0 %v2081
  %4797 = vmatprep.subr.mxu0 0.0
  %4798 = vmatpush1.msra.mxu0 0.0
  %4799 = vmatprep.subr.mxu0 0.0
  %4800 = vmatpush1.msra.mxu0 0.0
  %4801 = vmatprep.subr.mxu0 0.0
  %4802 = vmatpush1.msra.mxu0 0.0
  %4803 = vmatprep.subr.mxu0 0.0
  %4804 = vmatpush1.msra.mxu0 0.0
  %4805 = vmatprep.subr.mxu0 0.0
  %4806 = vmatpush1.msra.mxu0 0.0
  %4807 = vmatprep.subr.mxu0 0.0
  %4808 = vmatpush1.msra.mxu0 0.0
  %4809 = vmatprep.subr.mxu0 0.0
  %4810 = vmatpush1.msra.mxu0 0.0
  %4811 = vmatprep.subr.mxu0 0.0
  %4812 = vmatpush1.msra.mxu0 0.0
  %4813 = vmatprep.subr.mxu0 0.0
  %4814 = vmatpush1.msra.mxu0 0.0
  %4815 = vmatprep.subr.mxu0 0.0
  %4816 = vmatpush1.msra.mxu0 0.0
  %4817 = vmatprep.subr.mxu0 0.0
  %4818 = vmatpush1.msra.mxu0 0.0
  %4819 = vmatprep.subr.mxu0 0.0
  %4820 = vmatpush1.msra.mxu0 0.0
  %4821 = vmatprep.subr.mxu0 0.0
  %4822 = vmatpush1.msra.mxu0 0.0
  %4823 = vmatprep.subr.mxu0 0.0
  %4824 = vmatpush1.msra.mxu0 0.0
  %4825 = vmatprep.subr.mxu0 0.0
  %4826 = vmatpush1.msra.mxu0 0.0
  %4827 = vmatprep.subr.mxu0 0.0
  %4828 = vmatpush1.msra.mxu0 0.0
  %4829 = vmatprep.subr.mxu0 0.0
  %4830 = vmatpush1.msra.mxu0 0.0
  %4831 = vmatprep.subr.mxu0 0.0
  %4832 = vmatpush1.msra.mxu0 0.0
  %4833 = vmatprep.subr.mxu0 0.0
  %4834 = vmatpush1.msra.mxu0 0.0
  %4835 = vmatprep.subr.mxu0 0.0
  %4836 = vmatpush1.msra.mxu0 0.0
  %4837 = vmatprep.subr.mxu0 0.0
  %4838 = vmatpush1.msra.mxu0 0.0
  %4839 = vmatprep.subr.mxu0 0.0
  %4840 = vmatpush1.msra.mxu0 0.0
  %4841 = vmatprep.subr.mxu0 0.0
  %4842 = vmatpush1.msra.mxu0 0.0
  %4843 = vmatprep.subr.mxu0 0.0
  %4844 = vmatpush1.msra.mxu0 0.0
  %4845 = vmatprep.subr.mxu0 0.0
  %4846 = vmatpush1.msra.mxu0 0.0
  %4847 = vmatprep.subr.mxu0 0.0
  %4848 = vmatpush1.msra.mxu0 0.0
  %4849 = vmatprep.subr.mxu0 0.0
  %4850 = vmatpush1.msra.mxu0 0.0
  %4851 = vmatprep.subr.mxu0 0.0
  %4852 = vmatpush1.msra.mxu0 0.0
  %4853 = vmatprep.subr.mxu0 0.0
  %4854 = vmatpush1.msra.mxu0 0.0
  %4855 = vmatprep.subr.mxu0 0.0
  %4856 = vmatpush1.msra.mxu0 0.0
  %4857 = vmatprep.mubr.f32.mxu0 0.0
  %4858 = vmatmul.mubr.f32.gmra.mrb[0].mxu0 %v4791
  %v4859 = vpop.f32.mrb[0].mxu0
  %v4860 = vadd.f32 1e-05, %v4859
  %v4861 = vpop.f32.mrb[0].mxu0
  %4862 = vdwg.mxu0
  %v4863 = vrsqrt.pop %v4860
  %v4864 = vmul.f32 %v4788, %v4863
  %v4865 = vld [vmem:[%s41] sm:$0xf]
  %v4866 = vld [vmem:[%s41 + $0x4] sm:$0xf]
  %v4867 = vld [vmem:[%s43] sm:$0xf]
  %v4868 = vld [vmem:[%s45] sm:$0xf]
  %v4869 = vld [vmem:[%s45 + $0x4] sm:$0xf]
  %v4870 = vld [vmem:[%s45 + $0x8] sm:$0xf]
  %v4871 = vld [vmem:[%s47] sm:$0xf]
  %v4872 = vld [vmem:[%s47 + $0x4] sm:$0xf]
  %v4873 = vld [vmem:[%s47 + $0x8] sm:$0xf]
  %v4874 = vld [vmem:[%s49] sm:$0xf]
  %v4875 = vld [vmem:[%s51] sm:$0xf]
  %v4876 = vld [vmem:[%s51 + $0x4] sm:$0xf]
  %v4877 = vld [vmem:[%s51 + $0x8] sm:$0xf]
  %v4878 = vld [vmem:[%s53] sm:$0xf]
  %4880 = vset.pattern.permute.xlu0 0
  %4881 = vperm.xlu0 %4880, %v4867
  %v4882 = vpop.permute.xlu0 %4881
  %v4885 = vsel %vm1704, %v4865, 0
  %4887 = vmatprep.subr.mxu0 0.0
  %4888 = vmatpush1.msra.mxu0 %v4864
  %4889 = vmatprep.subr.mxu0 0.0
  %4890 = vmatpush1.msra.mxu0 0.0
  %4891 = vmatprep.subr.mxu0 0.0
  %4892 = vmatpush1.msra.mxu0 0.0
  %4893 = vmatprep.subr.mxu0 0.0
  %4894 = vmatpush1.msra.mxu0 0.0
  %4895 = vmatprep.subr.mxu0 0.0
  %4896 = vmatpush1.msra.mxu0 0.0
  %4897 = vmatprep.subr.mxu0 0.0
  %4898 = vmatpush1.msra.mxu0 0.0
  %4899 = vmatprep.subr.mxu0 0.0
  %4900 = vmatpush1.msra.mxu0 0.0
  %4901 = vmatprep.subr.mxu0 0.0
  %4902 = vmatpush1.msra.mxu0 0.0
  %4903 = vmatprep.subr.mxu0 0.0
  %4904 = vmatpush1.msra.mxu0 0.0
  %4905 = vmatprep.subr.mxu0 0.0
  %4906 = vmatpush1.msra.mxu0 0.0
  %4907 = vmatprep.subr.mxu0 0.0
  %4908 = vmatpush1.msra.mxu0 0.0
  %4909 = vmatprep.subr.mxu0 0.0
  %4910 = vmatpush1.msra.mxu0 0.0
  %4911 = vmatprep.subr.mxu0 0.0
  %4912 = vmatpush1.msra.mxu0 0.0
  %4913 = vmatprep.subr.mxu0 0.0
  %4914 = vmatpush1.msra.mxu0 0.0
  %4915 = vmatprep.subr.mxu0 0.0
  %4916 = vmatpush1.msra.mxu0 0.0
  %4917 = vmatprep.subr.mxu0 0.0
  %4918 = vmatpush1.msra.mxu0 0.0
  %4919 = vmatprep.subr.mxu0 0.0
  %4920 = vmatpush1.msra.mxu0 0.0
  %4921 = vmatprep.subr.mxu0 0.0
  %4922 = vmatpush1.msra.mxu0 0.0
  %4923 = vmatprep.subr.mxu0 0.0
  %4924 = vmatpush1.msra.mxu0 0.0
  %4925 = vmatprep.subr.mxu0 0.0
  %4926 = vmatpush1.msra.mxu0 0.0
  %4927 = vmatprep.subr.mxu0 0.0
  %4928 = vmatpush1.msra.mxu0 0.0
  %4929 = vmatprep.subr.mxu0 0.0
  %4930 = vmatpush1.msra.mxu0 0.0
  %4931 = vmatprep.subr.mxu0 0.0
  %4932 = vmatpush1.msra.mxu0 0.0
  %4933 = vmatprep.subr.mxu0 0.0
  %4934 = vmatpush1.msra.mxu0 0.0
  %4935 = vmatprep.subr.mxu0 0.0
  %4936 = vmatpush1.msra.mxu0 0.0
  %4937 = vmatprep.subr.mxu0 0.0
  %4938 = vmatpush1.msra.mxu0 0.0
  %4939 = vmatprep.subr.mxu0 0.0
  %4940 = vmatpush1.msra.mxu0 0.0
  %4941 = vmatprep.subr.mxu0 0.0
  %4942 = vmatpush1.msra.mxu0 0.0
  %4943 = vmatprep.subr.mxu0 0.0
  %4944 = vmatpush1.msra.mxu0 0.0
  %4945 = vmatprep.subr.mxu0 0.0
  %4946 = vmatpush1.msra.mxu0 0.0
  %4947 = vmatprep.subr.mxu0 0.0
  %4948 = vmatpush1.msra.mxu0 0.0
  %4949 = vmatprep.subr.mxu0 0.0
  %4950 = vmatpush1.msra.mxu0 0.0
  %4951 = vmatprep.mubr.f32.mxu0 0.0
  %4952 = vmatmul.mubr.f32.gmra.mrb[0].mxu0 %v4885
  %v4953 = vpop.f32.mrb[0].mxu0
  %v4954 = vadd.f32 %v4882, %v4953
  %v4955 = vpop.f32.mrb[0].mxu0
  %4956 = vdwg.mxu0
  %v4958 = vsel %vm1704, %v4866, 0
  %4960 = vmatprep.subr.mxu0 0.0
  %4961 = vmatpush1.msra.mxu0 %v4864
  %4962 = vmatprep.subr.mxu0 0.0
  %4963 = vmatpush1.msra.mxu0 0.0
  %4964 = vmatprep.subr.mxu0 0.0
  %4965 = vmatpush1.msra.mxu0 0.0
  %4966 = vmatprep.subr.mxu0 0.0
  %4967 = vmatpush1.msra.mxu0 0.0
  %4968 = vmatprep.subr.mxu0 0.0
  %4969 = vmatpush1.msra.mxu0 0.0
  %4970 = vmatprep.subr.mxu0 0.0
  %4971 = vmatpush1.msra.mxu0 0.0
  %4972 = vmatprep.subr.mxu0 0.0
  %4973 = vmatpush1.msra.mxu0 0.0
  %4974 = vmatprep.subr.mxu0 0.0
  %4975 = vmatpush1.msra.mxu0 0.0
  %4976 = vmatprep.subr.mxu0 0.0
  %4977 = vmatpush1.msra.mxu0 0.0
  %4978 = vmatprep.subr.mxu0 0.0
  %4979 = vmatpush1.msra.mxu0 0.0
  %4980 = vmatprep.subr.mxu0 0.0
  %4981 = vmatpush1.msra.mxu0 0.0
  %4982 = vmatprep.subr.mxu0 0.0
  %4983 = vmatpush1.msra.mxu0 0.0
  %4984 = vmatprep.subr.mxu0 0.0
  %4985 = vmatpush1.msra.mxu0 0.0
  %4986 = vmatprep.subr.mxu0 0.0
  %4987 = vmatpush1.msra.mxu0 0.0
  %4988 = vmatprep.subr.mxu0 0.0
  %4989 = vmatpush1.msra.mxu0 0.0
  %4990 = vmatprep.subr.mxu0 0.0
  %4991 = vmatpush1.msra.mxu0 0.0
  %4992 = vmatprep.subr.mxu0 0.0
  %4993 = vmatpush1.msra.mxu0 0.0
  %4994 = vmatprep.subr.mxu0 0.0
  %4995 = vmatpush1.msra.mxu0 0.0
  %4996 = vmatprep.subr.mxu0 0.0
  %4997 = vmatpush1.msra.mxu0 0.0
  %4998 = vmatprep.subr.mxu0 0.0
  %4999 = vmatpush1.msra.mxu0 0.0
  %5000 = vmatprep.subr.mxu0 0.0
  %5001 = vmatpush1.msra.mxu0 0.0
  %5002 = vmatprep.subr.mxu0 0.0
  %5003 = vmatpush1.msra.mxu0 0.0
  %5004 = vmatprep.subr.mxu0 0.0
  %5005 = vmatpush1.msra.mxu0 0.0
  %5006 = vmatprep.subr.mxu0 0.0
  %5007 = vmatpush1.msra.mxu0 0.0
  %5008 = vmatprep.subr.mxu0 0.0
  %5009 = vmatpush1.msra.mxu0 0.0
  %5010 = vmatprep.subr.mxu0 0.0
  %5011 = vmatpush1.msra.mxu0 0.0
  %5012 = vmatprep.subr.mxu0 0.0
  %5013 = vmatpush1.msra.mxu0 0.0
  %5014 = vmatprep.subr.mxu0 0.0
  %5015 = vmatpush1.msra.mxu0 0.0
  %5016 = vmatprep.subr.mxu0 0.0
  %5017 = vmatpush1.msra.mxu0 0.0
  %5018 = vmatprep.subr.mxu0 0.0
  %5019 = vmatpush1.msra.mxu0 0.0
  %5020 = vmatprep.subr.mxu0 0.0
  %5021 = vmatpush1.msra.mxu0 0.0
  %5022 = vmatprep.subr.mxu0 0.0
  %5023 = vmatpush1.msra.mxu0 0.0
  %5024 = vmatprep.mubr.f32.mxu0 0.0
  %5025 = vmatmul.mubr.f32.gmra.mrb[0].mxu0 %v4958
  %v5026 = vpop.f32.mrb[0].mxu0
  %v5027 = vadd.f32 %v4882, %v5026
  %v5028 = vpop.f32.mrb[0].mxu0
  %5029 = vdwg.mxu0
  %v5030 = vmul.u32 %v284, 2
  %vm5031 = vcmp.eq.s32.totalorder %v288, %v5030
  %v5032 = vsel %vm5031, 1.0, 0.0
  %v5033 = vadd.s32 %v5030, 1
  %vm5034 = vcmp.eq.s32.totalorder %v288, %v5033
  %v5035 = vsel %vm5034, 1.0, 0.0
  %v5037 = vsel %vm1470, %v5027, 0
  %5039 = vmatprep.subr.mxu0 0.0
  %5040 = vmatpush1.msra.mxu0 %v3598
  %5041 = vmatprep.subr.mxu0 0.0
  %5042 = vmatpush1.msra.mxu0 %v5035
  %5043 = vmatprep.subr.mxu0 0.0
  %5044 = vmatpush1.msra.mxu0 0.0
  %5045 = vmatprep.subr.mxu0 0.0
  %5046 = vmatpush1.msra.mxu0 0.0
  %5047 = vmatprep.subr.mxu0 0.0
  %5048 = vmatpush1.msra.mxu0 0.0
  %5049 = vmatprep.subr.mxu0 0.0
  %5050 = vmatpush1.msra.mxu0 0.0
  %5051 = vmatprep.subr.mxu0 0.0
  %5052 = vmatpush1.msra.mxu0 0.0
  %5053 = vmatprep.subr.mxu0 0.0
  %5054 = vmatpush1.msra.mxu0 0.0
  %5055 = vmatprep.subr.mxu0 0.0
  %5056 = vmatpush1.msra.mxu0 0.0
  %5057 = vmatprep.subr.mxu0 0.0
  %5058 = vmatpush1.msra.mxu0 0.0
  %5059 = vmatprep.subr.mxu0 0.0
  %5060 = vmatpush1.msra.mxu0 0.0
  %5061 = vmatprep.subr.mxu0 0.0
  %5062 = vmatpush1.msra.mxu0 0.0
  %5063 = vmatprep.subr.mxu0 0.0
  %5064 = vmatpush1.msra.mxu0 0.0
  %5065 = vmatprep.subr.mxu0 0.0
  %5066 = vmatpush1.msra.mxu0 0.0
  %5067 = vmatprep.subr.mxu0 0.0
  %5068 = vmatpush1.msra.mxu0 0.0
  %5069 = vmatprep.subr.mxu0 0.0
  %5070 = vmatpush1.msra.mxu0 0.0
  %5071 = vmatprep.subr.mxu0 0.0
  %5072 = vmatpush1.msra.mxu0 0.0
  %5073 = vmatprep.subr.mxu0 0.0
  %5074 = vmatpush1.msra.mxu0 0.0
  %5075 = vmatprep.subr.mxu0 0.0
  %5076 = vmatpush1.msra.mxu0 0.0
  %5077 = vmatprep.subr.mxu0 0.0
  %5078 = vmatpush1.msra.mxu0 0.0
  %5079 = vmatprep.subr.mxu0 0.0
  %5080 = vmatpush1.msra.mxu0 0.0
  %5081 = vmatprep.subr.mxu0 0.0
  %5082 = vmatpush1.msra.mxu0 0.0
  %5083 = vmatprep.subr.mxu0 0.0
  %5084 = vmatpush1.msra.mxu0 0.0
  %5085 = vmatprep.subr.mxu0 0.0
  %5086 = vmatpush1.msra.mxu0 0.0
  %5087 = vmatprep.subr.mxu0 0.0
  %5088 = vmatpush1.msra.mxu0 0.0
  %5089 = vmatprep.subr.mxu0 0.0
  %5090 = vmatpush1.msra.mxu0 0.0
  %5091 = vmatprep.subr.mxu0 0.0
  %5092 = vmatpush1.msra.mxu0 0.0
  %5093 = vmatprep.subr.mxu0 0.0
  %5094 = vmatpush1.msra.mxu0 0.0
  %5095 = vmatprep.subr.mxu0 0.0
  %5096 = vmatpush1.msra.mxu0 0.0
  %5097 = vmatprep.subr.mxu0 0.0
  %5098 = vmatpush1.msra.mxu0 0.0
  %5099 = vmatprep.subr.mxu0 0.0
  %5100 = vmatpush1.msra.mxu0 0.0
  %5101 = vmatprep.subr.mxu0 0.0
  %5102 = vmatpush1.msra.mxu0 0.0
  %5103 = vmatprep.mubr.f32.mxu0 0.0
  %5104 = vmatmul.mubr.f32.gmra.mrb[0].mxu0 %v5037
  %v5105 = vpop.f32.mrb[0].mxu0
  %v5106 = vadd.f32 0.0, %v5105
  %v5107 = vpop.f32.mrb[0].mxu0
  %5108 = vdwg.mxu0
  %v5110 = vsel %vm1470, %v4954, 0
  %5112 = vmatprep.subr.mxu0 0.0
  %5113 = vmatpush1.msra.mxu0 %v3595
  %5114 = vmatprep.subr.mxu0 0.0
  %5115 = vmatpush1.msra.mxu0 %v5032
  %5116 = vmatprep.subr.mxu0 0.0
  %5117 = vmatpush1.msra.mxu0 0.0
  %5118 = vmatprep.subr.mxu0 0.0
  %5119 = vmatpush1.msra.mxu0 0.0
  %5120 = vmatprep.subr.mxu0 0.0
  %5121 = vmatpush1.msra.mxu0 0.0
  %5122 = vmatprep.subr.mxu0 0.0
  %5123 = vmatpush1.msra.mxu0 0.0
  %5124 = vmatprep.subr.mxu0 0.0
  %5125 = vmatpush1.msra.mxu0 0.0
  %5126 = vmatprep.subr.mxu0 0.0
  %5127 = vmatpush1.msra.mxu0 0.0
  %5128 = vmatprep.subr.mxu0 0.0
  %5129 = vmatpush1.msra.mxu0 0.0
  %5130 = vmatprep.subr.mxu0 0.0
  %5131 = vmatpush1.msra.mxu0 0.0
  %5132 = vmatprep.subr.mxu0 0.0
  %5133 = vmatpush1.msra.mxu0 0.0
  %5134 = vmatprep.subr.mxu0 0.0
  %5135 = vmatpush1.msra.mxu0 0.0
  %5136 = vmatprep.subr.mxu0 0.0
  %5137 = vmatpush1.msra.mxu0 0.0
  %5138 = vmatprep.subr.mxu0 0.0
  %5139 = vmatpush1.msra.mxu0 0.0
  %5140 = vmatprep.subr.mxu0 0.0
  %5141 = vmatpush1.msra.mxu0 0.0
  %5142 = vmatprep.subr.mxu0 0.0
  %5143 = vmatpush1.msra.mxu0 0.0
  %5144 = vmatprep.subr.mxu0 0.0
  %5145 = vmatpush1.msra.mxu0 0.0
  %5146 = vmatprep.subr.mxu0 0.0
  %5147 = vmatpush1.msra.mxu0 0.0
  %5148 = vmatprep.subr.mxu0 0.0
  %5149 = vmatpush1.msra.mxu0 0.0
  %5150 = vmatprep.subr.mxu0 0.0
  %5151 = vmatpush1.msra.mxu0 0.0
  %5152 = vmatprep.subr.mxu0 0.0
  %5153 = vmatpush1.msra.mxu0 0.0
  %5154 = vmatprep.subr.mxu0 0.0
  %5155 = vmatpush1.msra.mxu0 0.0
  %5156 = vmatprep.subr.mxu0 0.0
  %5157 = vmatpush1.msra.mxu0 0.0
  %5158 = vmatprep.subr.mxu0 0.0
  %5159 = vmatpush1.msra.mxu0 0.0
  %5160 = vmatprep.subr.mxu0 0.0
  %5161 = vmatpush1.msra.mxu0 0.0
  %5162 = vmatprep.subr.mxu0 0.0
  %5163 = vmatpush1.msra.mxu0 0.0
  %5164 = vmatprep.subr.mxu0 0.0
  %5165 = vmatpush1.msra.mxu0 0.0
  %5166 = vmatprep.subr.mxu0 0.0
  %5167 = vmatpush1.msra.mxu0 0.0
  %5168 = vmatprep.subr.mxu0 0.0
  %5169 = vmatpush1.msra.mxu0 0.0
  %5170 = vmatprep.subr.mxu0 0.0
  %5171 = vmatpush1.msra.mxu0 0.0
  %5172 = vmatprep.subr.mxu0 0.0
  %5173 = vmatpush1.msra.mxu0 0.0
  %5174 = vmatprep.subr.mxu0 0.0
  %5175 = vmatpush1.msra.mxu0 0.0
  %5176 = vmatprep.mubr.f32.mxu0 0.0
  %5177 = vmatmul.mubr.f32.gmra.mrb[0].mxu0 %v5110
  %v5178 = vpop.f32.mrb[0].mxu0
  %v5179 = vadd.f32 %v5106, %v5178
  %v5180 = vpop.f32.mrb[0].mxu0
  %5181 = vdwg.mxu0
  %v5183 = vsel %vm593, %v4871, 0
  %v5186 = vsel %vm597, %v5179, 0
  %5188 = vmatprep.subr.mxu0 0.0
  %5189 = vmatpush1.msra.mxu0 %v5186
  %5190 = vmatprep.subr.mxu0 0.0
  %5191 = vmatpush1.msra.mxu0 0.0
  %5192 = vmatprep.subr.mxu0 0.0
  %5193 = vmatpush1.msra.mxu0 0.0
  %5194 = vmatprep.subr.mxu0 0.0
  %5195 = vmatpush1.msra.mxu0 0.0
  %5196 = vmatprep.subr.mxu0 0.0
  %5197 = vmatpush1.msra.mxu0 0.0
  %5198 = vmatprep.subr.mxu0 0.0
  %5199 = vmatpush1.msra.mxu0 0.0
  %5200 = vmatprep.subr.mxu0 0.0
  %5201 = vmatpush1.msra.mxu0 0.0
  %5202 = vmatprep.subr.mxu0 0.0
  %5203 = vmatpush1.msra.mxu0 0.0
  %5204 = vmatprep.subr.mxu0 0.0
  %5205 = vmatpush1.msra.mxu0 0.0
  %5206 = vmatprep.subr.mxu0 0.0
  %5207 = vmatpush1.msra.mxu0 0.0
  %5208 = vmatprep.subr.mxu0 0.0
  %5209 = vmatpush1.msra.mxu0 0.0
  %5210 = vmatprep.subr.mxu0 0.0
  %5211 = vmatpush1.msra.mxu0 0.0
  %5212 = vmatprep.subr.mxu0 0.0
  %5213 = vmatpush1.msra.mxu0 0.0
  %5214 = vmatprep.subr.mxu0 0.0
  %5215 = vmatpush1.msra.mxu0 0.0
  %5216 = vmatprep.subr.mxu0 0.0
  %5217 = vmatpush1.msra.mxu0 0.0
  %5218 = vmatprep.subr.mxu0 0.0
  %5219 = vmatpush1.msra.mxu0 0.0
  %5220 = vmatprep.subr.mxu0 0.0
  %5221 = vmatpush1.msra.mxu0 0.0
  %5222 = vmatprep.subr.mxu0 0.0
  %5223 = vmatpush1.msra.mxu0 0.0
  %5224 = vmatprep.subr.mxu0 0.0
  %5225 = vmatpush1.msra.mxu0 0.0
  %5226 = vmatprep.subr.mxu0 0.0
  %5227 = vmatpush1.msra.mxu0 0.0
  %5228 = vmatprep.subr.mxu0 0.0
  %5229 = vmatpush1.msra.mxu0 0.0
  %5230 = vmatprep.subr.mxu0 0.0
  %5231 = vmatpush1.msra.mxu0 0.0
  %5232 = vmatprep.subr.mxu0 0.0
  %5233 = vmatpush1.msra.mxu0 0.0
  %5234 = vmatprep.subr.mxu0 0.0
  %5235 = vmatpush1.msra.mxu0 0.0
  %5236 = vmatprep.subr.mxu0 0.0
  %5237 = vmatpush1.msra.mxu0 0.0
  %5238 = vmatprep.subr.mxu0 0.0
  %5239 = vmatpush1.msra.mxu0 0.0
  %5240 = vmatprep.subr.mxu0 0.0
  %5241 = vmatpush1.msra.mxu0 0.0
  %5242 = vmatprep.subr.mxu0 0.0
  %5243 = vmatpush1.msra.mxu0 0.0
  %5244 = vmatprep.subr.mxu0 0.0
  %5245 = vmatpush1.msra.mxu0 0.0
  %5246 = vmatprep.subr.mxu0 0.0
  %5247 = vmatpush1.msra.mxu0 0.0
  %5248 = vmatprep.subr.mxu0 0.0
  %5249 = vmatpush1.msra.mxu0 0.0
  %5250 = vmatprep.subr.mxu0 0.0
  %5251 = vmatpush1.msra.mxu0 0.0
  %5252 = vmatprep.mubr.f32.mxu0 0.0
  %5253 = vmatmul.mubr.f32.gmra.mrb[0].mxu0 %v5183
  %v5254 = vpop.f32.mrb[0].mxu0
  %v5255 = vadd.f32 0.0, %v5254
  %v5256 = vpop.f32.mrb[0].mxu0
  %5257 = vdwg.mxu0
  %v5259 = vsel %vm593, %v4868, 0
  %v5261 = vsel %vm597, %v1126, 0
  %5263 = vmatprep.subr.mxu0 0.0
  %5264 = vmatpush1.msra.mxu0 %v5261
  %5265 = vmatprep.subr.mxu0 0.0
  %5266 = vmatpush1.msra.mxu0 0.0
  %5267 = vmatprep.subr.mxu0 0.0
  %5268 = vmatpush1.msra.mxu0 0.0
  %5269 = vmatprep.subr.mxu0 0.0
  %5270 = vmatpush1.msra.mxu0 0.0
  %5271 = vmatprep.subr.mxu0 0.0
  %5272 = vmatpush1.msra.mxu0 0.0
  %5273 = vmatprep.subr.mxu0 0.0
  %5274 = vmatpush1.msra.mxu0 0.0
  %5275 = vmatprep.subr.mxu0 0.0
  %5276 = vmatpush1.msra.mxu0 0.0
  %5277 = vmatprep.subr.mxu0 0.0
  %5278 = vmatpush1.msra.mxu0 0.0
  %5279 = vmatprep.subr.mxu0 0.0
  %5280 = vmatpush1.msra.mxu0 0.0
  %5281 = vmatprep.subr.mxu0 0.0
  %5282 = vmatpush1.msra.mxu0 0.0
  %5283 = vmatprep.subr.mxu0 0.0
  %5284 = vmatpush1.msra.mxu0 0.0
  %5285 = vmatprep.subr.mxu0 0.0
  %5286 = vmatpush1.msra.mxu0 0.0
  %5287 = vmatprep.subr.mxu0 0.0
  %5288 = vmatpush1.msra.mxu0 0.0
  %5289 = vmatprep.subr.mxu0 0.0
  %5290 = vmatpush1.msra.mxu0 0.0
  %5291 = vmatprep.subr.mxu0 0.0
  %5292 = vmatpush1.msra.mxu0 0.0
  %5293 = vmatprep.subr.mxu0 0.0
  %5294 = vmatpush1.msra.mxu0 0.0
  %5295 = vmatprep.subr.mxu0 0.0
  %5296 = vmatpush1.msra.mxu0 0.0
  %5297 = vmatprep.subr.mxu0 0.0
  %5298 = vmatpush1.msra.mxu0 0.0
  %5299 = vmatprep.subr.mxu0 0.0
  %5300 = vmatpush1.msra.mxu0 0.0
  %5301 = vmatprep.subr.mxu0 0.0
  %5302 = vmatpush1.msra.mxu0 0.0
  %5303 = vmatprep.subr.mxu0 0.0
  %5304 = vmatpush1.msra.mxu0 0.0
  %5305 = vmatprep.subr.mxu0 0.0
  %5306 = vmatpush1.msra.mxu0 0.0
  %5307 = vmatprep.subr.mxu0 0.0
  %5308 = vmatpush1.msra.mxu0 0.0
  %5309 = vmatprep.subr.mxu0 0.0
  %5310 = vmatpush1.msra.mxu0 0.0
  %5311 = vmatprep.subr.mxu0 0.0
  %5312 = vmatpush1.msra.mxu0 0.0
  %5313 = vmatprep.subr.mxu0 0.0
  %5314 = vmatpush1.msra.mxu0 0.0
  %5315 = vmatprep.subr.mxu0 0.0
  %5316 = vmatpush1.msra.mxu0 0.0
  %5317 = vmatprep.subr.mxu0 0.0
  %5318 = vmatpush1.msra.mxu0 0.0
  %5319 = vmatprep.subr.mxu0 0.0
  %5320 = vmatpush1.msra.mxu0 0.0
  %5321 = vmatprep.subr.mxu0 0.0
  %5322 = vmatpush1.msra.mxu0 0.0
  %5323 = vmatprep.subr.mxu0 0.0
  %5324 = vmatpush1.msra.mxu0 0.0
  %5325 = vmatprep.subr.mxu0 0.0
  %5326 = vmatpush1.msra.mxu0 0.0
  %5327 = vmatprep.mubr.f32.mxu0 0.0
  %5328 = vmatmul.mubr.f32.gmra.mrb[0].mxu0 %v5259
  %v5329 = vpop.f32.mrb[0].mxu0
  %v5330 = vadd.f32 %v5255, %v5329
  %v5331 = vpop.f32.mrb[0].mxu0
  %5332 = vdwg.mxu0
  %v5334 = vsel %vm593, %v4872, 0
  %5336 = vmatprep.subr.mxu0 0.0
  %5337 = vmatpush1.msra.mxu0 %v5186
  %5338 = vmatprep.subr.mxu0 0.0
  %5339 = vmatpush1.msra.mxu0 0.0
  %5340 = vmatprep.subr.mxu0 0.0
  %5341 = vmatpush1.msra.mxu0 0.0
  %5342 = vmatprep.subr.mxu0 0.0
  %5343 = vmatpush1.msra.mxu0 0.0
  %5344 = vmatprep.subr.mxu0 0.0
  %5345 = vmatpush1.msra.mxu0 0.0
  %5346 = vmatprep.subr.mxu0 0.0
  %5347 = vmatpush1.msra.mxu0 0.0
  %5348 = vmatprep.subr.mxu0 0.0
  %5349 = vmatpush1.msra.mxu0 0.0
  %5350 = vmatprep.subr.mxu0 0.0
  %5351 = vmatpush1.msra.mxu0 0.0
  %5352 = vmatprep.subr.mxu0 0.0
  %5353 = vmatpush1.msra.mxu0 0.0
  %5354 = vmatprep.subr.mxu0 0.0
  %5355 = vmatpush1.msra.mxu0 0.0
  %5356 = vmatprep.subr.mxu0 0.0
  %5357 = vmatpush1.msra.mxu0 0.0
  %5358 = vmatprep.subr.mxu0 0.0
  %5359 = vmatpush1.msra.mxu0 0.0
  %5360 = vmatprep.subr.mxu0 0.0
  %5361 = vmatpush1.msra.mxu0 0.0
  %5362 = vmatprep.subr.mxu0 0.0
  %5363 = vmatpush1.msra.mxu0 0.0
  %5364 = vmatprep.subr.mxu0 0.0
  %5365 = vmatpush1.msra.mxu0 0.0
  %5366 = vmatprep.subr.mxu0 0.0
  %5367 = vmatpush1.msra.mxu0 0.0
  %5368 = vmatprep.subr.mxu0 0.0
  %5369 = vmatpush1.msra.mxu0 0.0
  %5370 = vmatprep.subr.mxu0 0.0
  %5371 = vmatpush1.msra.mxu0 0.0
  %5372 = vmatprep.subr.mxu0 0.0
  %5373 = vmatpush1.msra.mxu0 0.0
  %5374 = vmatprep.subr.mxu0 0.0
  %5375 = vmatpush1.msra.mxu0 0.0
  %5376 = vmatprep.subr.mxu0 0.0
  %5377 = vmatpush1.msra.mxu0 0.0
  %5378 = vmatprep.subr.mxu0 0.0
  %5379 = vmatpush1.msra.mxu0 0.0
  %5380 = vmatprep.subr.mxu0 0.0
  %5381 = vmatpush1.msra.mxu0 0.0
  %5382 = vmatprep.subr.mxu0 0.0
  %5383 = vmatpush1.msra.mxu0 0.0
  %5384 = vmatprep.subr.mxu0 0.0
  %5385 = vmatpush1.msra.mxu0 0.0
  %5386 = vmatprep.subr.mxu0 0.0
  %5387 = vmatpush1.msra.mxu0 0.0
  %5388 = vmatprep.subr.mxu0 0.0
  %5389 = vmatpush1.msra.mxu0 0.0
  %5390 = vmatprep.subr.mxu0 0.0
  %5391 = vmatpush1.msra.mxu0 0.0
  %5392 = vmatprep.subr.mxu0 0.0
  %5393 = vmatpush1.msra.mxu0 0.0
  %5394 = vmatprep.subr.mxu0 0.0
  %5395 = vmatpush1.msra.mxu0 0.0
  %5396 = vmatprep.subr.mxu0 0.0
  %5397 = vmatpush1.msra.mxu0 0.0
  %5398 = vmatprep.subr.mxu0 0.0
  %5399 = vmatpush1.msra.mxu0 0.0
  %5400 = vmatprep.mubr.f32.mxu0 0.0
  %5401 = vmatmul.mubr.f32.gmra.mrb[0].mxu0 %v5334
  %v5402 = vpop.f32.mrb[0].mxu0
  %v5403 = vadd.f32 0.0, %v5402
  %v5404 = vpop.f32.mrb[0].mxu0
  %5405 = vdwg.mxu0
  %v5407 = vsel %vm593, %v4869, 0
  %5409 = vmatprep.subr.mxu0 0.0
  %5410 = vmatpush1.msra.mxu0 %v5261
  %5411 = vmatprep.subr.mxu0 0.0
  %5412 = vmatpush1.msra.mxu0 0.0
  %5413 = vmatprep.subr.mxu0 0.0
  %5414 = vmatpush1.msra.mxu0 0.0
  %5415 = vmatprep.subr.mxu0 0.0
  %5416 = vmatpush1.msra.mxu0 0.0
  %5417 = vmatprep.subr.mxu0 0.0
  %5418 = vmatpush1.msra.mxu0 0.0
  %5419 = vmatprep.subr.mxu0 0.0
  %5420 = vmatpush1.msra.mxu0 0.0
  %5421 = vmatprep.subr.mxu0 0.0
  %5422 = vmatpush1.msra.mxu0 0.0
  %5423 = vmatprep.subr.mxu0 0.0
  %5424 = vmatpush1.msra.mxu0 0.0
  %5425 = vmatprep.subr.mxu0 0.0
  %5426 = vmatpush1.msra.mxu0 0.0
  %5427 = vmatprep.subr.mxu0 0.0
  %5428 = vmatpush1.msra.mxu0 0.0
  %5429 = vmatprep.subr.mxu0 0.0
  %5430 = vmatpush1.msra.mxu0 0.0
  %5431 = vmatprep.subr.mxu0 0.0
  %5432 = vmatpush1.msra.mxu0 0.0
  %5433 = vmatprep.subr.mxu0 0.0
  %5434 = vmatpush1.msra.mxu0 0.0
  %5435 = vmatprep.subr.mxu0 0.0
  %5436 = vmatpush1.msra.mxu0 0.0
  %5437 = vmatprep.subr.mxu0 0.0
  %5438 = vmatpush1.msra.mxu0 0.0
  %5439 = vmatprep.subr.mxu0 0.0
  %5440 = vmatpush1.msra.mxu0 0.0
  %5441 = vmatprep.subr.mxu0 0.0
  %5442 = vmatpush1.msra.mxu0 0.0
  %5443 = vmatprep.subr.mxu0 0.0
  %5444 = vmatpush1.msra.mxu0 0.0
  %5445 = vmatprep.subr.mxu0 0.0
  %5446 = vmatpush1.msra.mxu0 0.0
  %5447 = vmatprep.subr.mxu0 0.0
  %5448 = vmatpush1.msra.mxu0 0.0
  %5449 = vmatprep.subr.mxu0 0.0
  %5450 = vmatpush1.msra.mxu0 0.0
  %5451 = vmatprep.subr.mxu0 0.0
  %5452 = vmatpush1.msra.mxu0 0.0
  %5453 = vmatprep.subr.mxu0 0.0
  %5454 = vmatpush1.msra.mxu0 0.0
  %5455 = vmatprep.subr.mxu0 0.0
  %5456 = vmatpush1.msra.mxu0 0.0
  %5457 = vmatprep.subr.mxu0 0.0
  %5458 = vmatpush1.msra.mxu0 0.0
  %5459 = vmatprep.subr.mxu0 0.0
  %5460 = vmatpush1.msra.mxu0 0.0
  %5461 = vmatprep.subr.mxu0 0.0
  %5462 = vmatpush1.msra.mxu0 0.0
  %5463 = vmatprep.subr.mxu0 0.0
  %5464 = vmatpush1.msra.mxu0 0.0
  %5465 = vmatprep.subr.mxu0 0.0
  %5466 = vmatpush1.msra.mxu0 0.0
  %5467 = vmatprep.subr.mxu0 0.0
  %5468 = vmatpush1.msra.mxu0 0.0
  %5469 = vmatprep.subr.mxu0 0.0
  %5470 = vmatpush1.msra.mxu0 0.0
  %5471 = vmatprep.subr.mxu0 0.0
  %5472 = vmatpush1.msra.mxu0 0.0
  %5473 = vmatprep.mubr.f32.mxu0 0.0
  %5474 = vmatmul.mubr.f32.gmra.mrb[0].mxu0 %v5407
  %v5475 = vpop.f32.mrb[0].mxu0
  %v5476 = vadd.f32 %v5403, %v5475
  %v5477 = vpop.f32.mrb[0].mxu0
  %5478 = vdwg.mxu0
  %v5480 = vsel %vm593, %v4873, 0
  %5482 = vmatprep.subr.mxu0 0.0
  %5483 = vmatpush1.msra.mxu0 %v5186
  %5484 = vmatprep.subr.mxu0 0.0
  %5485 = vmatpush1.msra.mxu0 0.0
  %5486 = vmatprep.subr.mxu0 0.0
  %5487 = vmatpush1.msra.mxu0 0.0
  %5488 = vmatprep.subr.mxu0 0.0
  %5489 = vmatpush1.msra.mxu0 0.0
  %5490 = vmatprep.subr.mxu0 0.0
  %5491 = vmatpush1.msra.mxu0 0.0
  %5492 = vmatprep.subr.mxu0 0.0
  %5493 = vmatpush1.msra.mxu0 0.0
  %5494 = vmatprep.subr.mxu0 0.0
  %5495 = vmatpush1.msra.mxu0 0.0
  %5496 = vmatprep.subr.mxu0 0.0
  %5497 = vmatpush1.msra.mxu0 0.0
  %5498 = vmatprep.subr.mxu0 0.0
  %5499 = vmatpush1.msra.mxu0 0.0
  %5500 = vmatprep.subr.mxu0 0.0
  %5501 = vmatpush1.msra.mxu0 0.0
  %5502 = vmatprep.subr.mxu0 0.0
  %5503 = vmatpush1.msra.mxu0 0.0
  %5504 = vmatprep.subr.mxu0 0.0
  %5505 = vmatpush1.msra.mxu0 0.0
  %5506 = vmatprep.subr.mxu0 0.0
  %5507 = vmatpush1.msra.mxu0 0.0
  %5508 = vmatprep.subr.mxu0 0.0
  %5509 = vmatpush1.msra.mxu0 0.0
  %5510 = vmatprep.subr.mxu0 0.0
  %5511 = vmatpush1.msra.mxu0 0.0
  %5512 = vmatprep.subr.mxu0 0.0
  %5513 = vmatpush1.msra.mxu0 0.0
  %5514 = vmatprep.subr.mxu0 0.0
  %5515 = vmatpush1.msra.mxu0 0.0
  %5516 = vmatprep.subr.mxu0 0.0
  %5517 = vmatpush1.msra.mxu0 0.0
  %5518 = vmatprep.subr.mxu0 0.0
  %5519 = vmatpush1.msra.mxu0 0.0
  %5520 = vmatprep.subr.mxu0 0.0
  %5521 = vmatpush1.msra.mxu0 0.0
  %5522 = vmatprep.subr.mxu0 0.0
  %5523 = vmatpush1.msra.mxu0 0.0
  %5524 = vmatprep.subr.mxu0 0.0
  %5525 = vmatpush1.msra.mxu0 0.0
  %5526 = vmatprep.subr.mxu0 0.0
  %5527 = vmatpush1.msra.mxu0 0.0
  %5528 = vmatprep.subr.mxu0 0.0
  %5529 = vmatpush1.msra.mxu0 0.0
  %5530 = vmatprep.subr.mxu0 0.0
  %5531 = vmatpush1.msra.mxu0 0.0
  %5532 = vmatprep.subr.mxu0 0.0
  %5533 = vmatpush1.msra.mxu0 0.0
  %5534 = vmatprep.subr.mxu0 0.0
  %5535 = vmatpush1.msra.mxu0 0.0
  %5536 = vmatprep.subr.mxu0 0.0
  %5537 = vmatpush1.msra.mxu0 0.0
  %5538 = vmatprep.subr.mxu0 0.0
  %5539 = vmatpush1.msra.mxu0 0.0
  %5540 = vmatprep.subr.mxu0 0.0
  %5541 = vmatpush1.msra.mxu0 0.0
  %5542 = vmatprep.subr.mxu0 0.0
  %5543 = vmatpush1.msra.mxu0 0.0
  %5544 = vmatprep.subr.mxu0 0.0
  %5545 = vmatpush1.msra.mxu0 0.0
  %5546 = vmatprep.mubr.f32.mxu0 0.0
  %5547 = vmatmul.mubr.f32.gmra.mrb[0].mxu0 %v5480
  %v5548 = vpop.f32.mrb[0].mxu0
  %v5549 = vadd.f32 0.0, %v5548
  %v5550 = vpop.f32.mrb[0].mxu0
  %5551 = vdwg.mxu0
  %v5553 = vsel %vm593, %v4870, 0
  %5555 = vmatprep.subr.mxu0 0.0
  %5556 = vmatpush1.msra.mxu0 %v5261
  %5557 = vmatprep.subr.mxu0 0.0
  %5558 = vmatpush1.msra.mxu0 0.0
  %5559 = vmatprep.subr.mxu0 0.0
  %5560 = vmatpush1.msra.mxu0 0.0
  %5561 = vmatprep.subr.mxu0 0.0
  %5562 = vmatpush1.msra.mxu0 0.0
  %5563 = vmatprep.subr.mxu0 0.0
  %5564 = vmatpush1.msra.mxu0 0.0
  %5565 = vmatprep.subr.mxu0 0.0
  %5566 = vmatpush1.msra.mxu0 0.0
  %5567 = vmatprep.subr.mxu0 0.0
  %5568 = vmatpush1.msra.mxu0 0.0
  %5569 = vmatprep.subr.mxu0 0.0
  %5570 = vmatpush1.msra.mxu0 0.0
  %5571 = vmatprep.subr.mxu0 0.0
  %5572 = vmatpush1.msra.mxu0 0.0
  %5573 = vmatprep.subr.mxu0 0.0
  %5574 = vmatpush1.msra.mxu0 0.0
  %5575 = vmatprep.subr.mxu0 0.0
  %5576 = vmatpush1.msra.mxu0 0.0
  %5577 = vmatprep.subr.mxu0 0.0
  %5578 = vmatpush1.msra.mxu0 0.0
  %5579 = vmatprep.subr.mxu0 0.0
  %5580 = vmatpush1.msra.mxu0 0.0
  %5581 = vmatprep.subr.mxu0 0.0
  %5582 = vmatpush1.msra.mxu0 0.0
  %5583 = vmatprep.subr.mxu0 0.0
  %5584 = vmatpush1.msra.mxu0 0.0
  %5585 = vmatprep.subr.mxu0 0.0
  %5586 = vmatpush1.msra.mxu0 0.0
  %5587 = vmatprep.subr.mxu0 0.0
  %5588 = vmatpush1.msra.mxu0 0.0
  %5589 = vmatprep.subr.mxu0 0.0
  %5590 = vmatpush1.msra.mxu0 0.0
  %5591 = vmatprep.subr.mxu0 0.0
  %5592 = vmatpush1.msra.mxu0 0.0
  %5593 = vmatprep.subr.mxu0 0.0
  %5594 = vmatpush1.msra.mxu0 0.0
  %5595 = vmatprep.subr.mxu0 0.0
  %5596 = vmatpush1.msra.mxu0 0.0
  %5597 = vmatprep.subr.mxu0 0.0
  %5598 = vmatpush1.msra.mxu0 0.0
  %5599 = vmatprep.subr.mxu0 0.0
  %5600 = vmatpush1.msra.mxu0 0.0
  %5601 = vmatprep.subr.mxu0 0.0
  %5602 = vmatpush1.msra.mxu0 0.0
  %5603 = vmatprep.subr.mxu0 0.0
  %5604 = vmatpush1.msra.mxu0 0.0
  %5605 = vmatprep.subr.mxu0 0.0
  %5606 = vmatpush1.msra.mxu0 0.0
  %5607 = vmatprep.subr.mxu0 0.0
  %5608 = vmatpush1.msra.mxu0 0.0
  %5609 = vmatprep.subr.mxu0 0.0
  %5610 = vmatpush1.msra.mxu0 0.0
  %5611 = vmatprep.subr.mxu0 0.0
  %5612 = vmatpush1.msra.mxu0 0.0
  %5613 = vmatprep.subr.mxu0 0.0
  %5614 = vmatpush1.msra.mxu0 0.0
  %5615 = vmatprep.subr.mxu0 0.0
  %5616 = vmatpush1.msra.mxu0 0.0
  %5617 = vmatprep.subr.mxu0 0.0
  %5618 = vmatpush1.msra.mxu0 0.0
  %5619 = vmatprep.mubr.f32.mxu0 0.0
  %5620 = vmatmul.mubr.f32.gmra.mrb[0].mxu0 %v5553
  %v5621 = vpop.f32.mrb[0].mxu0
  %v5622 = vadd.f32 %v5549, %v5621
  %v5623 = vpop.f32.mrb[0].mxu0
  %5624 = vdwg.mxu0
  %v5626 = vsel %vm350, %v5330, 0
  %5628 = vmatprep.subr.mxu0 0.0
  %5629 = vmatpush1.msra.mxu0 %v346
  %5630 = vmatprep.subr.mxu0 0.0
  %5631 = vmatpush1.msra.mxu0 %v347
  %5632 = vmatprep.subr.mxu0 0.0
  %5633 = vmatpush1.msra.mxu0 %v348
  %5634 = vmatprep.subr.mxu0 0.0
  %5635 = vmatpush1.msra.mxu0 %v349
  %5636 = vmatprep.subr.mxu0 0.0
  %5637 = vmatpush1.msra.mxu0 0.0
  %5638 = vmatprep.subr.mxu0 0.0
  %5639 = vmatpush1.msra.mxu0 0.0
  %5640 = vmatprep.subr.mxu0 0.0
  %5641 = vmatpush1.msra.mxu0 0.0
  %5642 = vmatprep.subr.mxu0 0.0
  %5643 = vmatpush1.msra.mxu0 0.0
  %5644 = vmatprep.subr.mxu0 0.0
  %5645 = vmatpush1.msra.mxu0 0.0
  %5646 = vmatprep.subr.mxu0 0.0
  %5647 = vmatpush1.msra.mxu0 0.0
  %5648 = vmatprep.subr.mxu0 0.0
  %5649 = vmatpush1.msra.mxu0 0.0
  %5650 = vmatprep.subr.mxu0 0.0
  %5651 = vmatpush1.msra.mxu0 0.0
  %5652 = vmatprep.subr.mxu0 0.0
  %5653 = vmatpush1.msra.mxu0 0.0
  %5654 = vmatprep.subr.mxu0 0.0
  %5655 = vmatpush1.msra.mxu0 0.0
  %5656 = vmatprep.subr.mxu0 0.0
  %5657 = vmatpush1.msra.mxu0 0.0
  %5658 = vmatprep.subr.mxu0 0.0
  %5659 = vmatpush1.msra.mxu0 0.0
  %5660 = vmatprep.subr.mxu0 0.0
  %5661 = vmatpush1.msra.mxu0 0.0
  %5662 = vmatprep.subr.mxu0 0.0
  %5663 = vmatpush1.msra.mxu0 0.0
  %5664 = vmatprep.subr.mxu0 0.0
  %5665 = vmatpush1.msra.mxu0 0.0
  %5666 = vmatprep.subr.mxu0 0.0
  %5667 = vmatpush1.msra.mxu0 0.0
  %5668 = vmatprep.subr.mxu0 0.0
  %5669 = vmatpush1.msra.mxu0 0.0
  %5670 = vmatprep.subr.mxu0 0.0
  %5671 = vmatpush1.msra.mxu0 0.0
  %5672 = vmatprep.subr.mxu0 0.0
  %5673 = vmatpush1.msra.mxu0 0.0
  %5674 = vmatprep.subr.mxu0 0.0
  %5675 = vmatpush1.msra.mxu0 0.0
  %5676 = vmatprep.subr.mxu0 0.0
  %5677 = vmatpush1.msra.mxu0 0.0
  %5678 = vmatprep.subr.mxu0 0.0
  %5679 = vmatpush1.msra.mxu0 0.0
  %5680 = vmatprep.subr.mxu0 0.0
  %5681 = vmatpush1.msra.mxu0 0.0
  %5682 = vmatprep.subr.mxu0 0.0
  %5683 = vmatpush1.msra.mxu0 0.0
  %5684 = vmatprep.subr.mxu0 0.0
  %5685 = vmatpush1.msra.mxu0 0.0
  %5686 = vmatprep.subr.mxu0 0.0
  %5687 = vmatpush1.msra.mxu0 0.0
  %5688 = vmatprep.subr.mxu0 0.0
  %5689 = vmatpush1.msra.mxu0 0.0
  %5690 = vmatprep.subr.mxu0 0.0
  %5691 = vmatpush1.msra.mxu0 0.0
  %5692 = vmatprep.mubr.f32.mxu0 0.0
  %5693 = vmatmul.mubr.f32.gmra.mrb[0].mxu0 %v5626
  %v5694 = vpop.f32.mrb[0].mxu0
  %v5695 = vadd.f32 0.0, %v5694
  %v5696 = vpop.f32.mrb[0].mxu0
  %5697 = vdwg.mxu0
  %v5698 = vadd.f32 %v5476, %v5695
  %v5700 = vsel %vm350, %v5622, 0
  %5702 = vmatprep.subr.mxu0 0.0
  %5703 = vmatpush1.msra.mxu0 %v506
  %5704 = vmatprep.subr.mxu0 0.0
  %5705 = vmatpush1.msra.mxu0 %v507
  %5706 = vmatprep.subr.mxu0 0.0
  %5707 = vmatpush1.msra.mxu0 %v508
  %5708 = vmatprep.subr.mxu0 0.0
  %5709 = vmatpush1.msra.mxu0 %v509
  %5710 = vmatprep.subr.mxu0 0.0
  %5711 = vmatpush1.msra.mxu0 0.0
  %5712 = vmatprep.subr.mxu0 0.0
  %5713 = vmatpush1.msra.mxu0 0.0
  %5714 = vmatprep.subr.mxu0 0.0
  %5715 = vmatpush1.msra.mxu0 0.0
  %5716 = vmatprep.subr.mxu0 0.0
  %5717 = vmatpush1.msra.mxu0 0.0
  %5718 = vmatprep.subr.mxu0 0.0
  %5719 = vmatpush1.msra.mxu0 0.0
  %5720 = vmatprep.subr.mxu0 0.0
  %5721 = vmatpush1.msra.mxu0 0.0
  %5722 = vmatprep.subr.mxu0 0.0
  %5723 = vmatpush1.msra.mxu0 0.0
  %5724 = vmatprep.subr.mxu0 0.0
  %5725 = vmatpush1.msra.mxu0 0.0
  %5726 = vmatprep.subr.mxu0 0.0
  %5727 = vmatpush1.msra.mxu0 0.0
  %5728 = vmatprep.subr.mxu0 0.0
  %5729 = vmatpush1.msra.mxu0 0.0
  %5730 = vmatprep.subr.mxu0 0.0
  %5731 = vmatpush1.msra.mxu0 0.0
  %5732 = vmatprep.subr.mxu0 0.0
  %5733 = vmatpush1.msra.mxu0 0.0
  %5734 = vmatprep.subr.mxu0 0.0
  %5735 = vmatpush1.msra.mxu0 0.0
  %5736 = vmatprep.subr.mxu0 0.0
  %5737 = vmatpush1.msra.mxu0 0.0
  %5738 = vmatprep.subr.mxu0 0.0
  %5739 = vmatpush1.msra.mxu0 0.0
  %5740 = vmatprep.subr.mxu0 0.0
  %5741 = vmatpush1.msra.mxu0 0.0
  %5742 = vmatprep.subr.mxu0 0.0
  %5743 = vmatpush1.msra.mxu0 0.0
  %5744 = vmatprep.subr.mxu0 0.0
  %5745 = vmatpush1.msra.mxu0 0.0
  %5746 = vmatprep.subr.mxu0 0.0
  %5747 = vmatpush1.msra.mxu0 0.0
  %5748 = vmatprep.subr.mxu0 0.0
  %5749 = vmatpush1.msra.mxu0 0.0
  %5750 = vmatprep.subr.mxu0 0.0
  %5751 = vmatpush1.msra.mxu0 0.0
  %5752 = vmatprep.subr.mxu0 0.0
  %5753 = vmatpush1.msra.mxu0 0.0
  %5754 = vmatprep.subr.mxu0 0.0
  %5755 = vmatpush1.msra.mxu0 0.0
  %5756 = vmatprep.subr.mxu0 0.0
  %5757 = vmatpush1.msra.mxu0 0.0
  %5758 = vmatprep.subr.mxu0 0.0
  %5759 = vmatpush1.msra.mxu0 0.0
  %5760 = vmatprep.subr.mxu0 0.0
  %5761 = vmatpush1.msra.mxu0 0.0
  %5762 = vmatprep.subr.mxu0 0.0
  %5763 = vmatpush1.msra.mxu0 0.0
  %5764 = vmatprep.subr.mxu0 0.0
  %5765 = vmatpush1.msra.mxu0 0.0
  %5766 = vmatprep.mubr.f32.mxu0 0.0
  %5767 = vmatmul.mubr.f32.gmra.mrb[0].mxu0 %v5700
  %v5768 = vpop.f32.mrb[0].mxu0
  %v5769 = vadd.f32 0.0, %v5768
  %v5770 = vpop.f32.mrb[0].mxu0
  %5771 = vdwg.mxu0
  %v5772 = vadd.f32 %v5698, %v5769
  %5774 = vset.pattern.permute.xlu0 0
  %5775 = vperm.xlu0 %5774, %v4874
  %v5776 = vpop.permute.xlu0 %5775
  %v5778 = vadd.f32 %v5772, %v5776
  %vm5779 = vcmp.ge.f32.partialorder %v5778, 0.0
  %v5780 = vmul.f32 %v5778, 0.01
  %v5781 = vsel %vm5779, %v5778, %v5780
  %v5783 = vsel %vm593, %v4875, 0
  %v5786 = vsel %vm597, %v5781, 0
  %5788 = vmatprep.subr.mxu0 0.0
  %5789 = vmatpush1.msra.mxu0 %v5786
  %5790 = vmatprep.subr.mxu0 0.0
  %5791 = vmatpush1.msra.mxu0 0.0
  %5792 = vmatprep.subr.mxu0 0.0
  %5793 = vmatpush1.msra.mxu0 0.0
  %5794 = vmatprep.subr.mxu0 0.0
  %5795 = vmatpush1.msra.mxu0 0.0
  %5796 = vmatprep.subr.mxu0 0.0
  %5797 = vmatpush1.msra.mxu0 0.0
  %5798 = vmatprep.subr.mxu0 0.0
  %5799 = vmatpush1.msra.mxu0 0.0
  %5800 = vmatprep.subr.mxu0 0.0
  %5801 = vmatpush1.msra.mxu0 0.0
  %5802 = vmatprep.subr.mxu0 0.0
  %5803 = vmatpush1.msra.mxu0 0.0
  %5804 = vmatprep.subr.mxu0 0.0
  %5805 = vmatpush1.msra.mxu0 0.0
  %5806 = vmatprep.subr.mxu0 0.0
  %5807 = vmatpush1.msra.mxu0 0.0
  %5808 = vmatprep.subr.mxu0 0.0
  %5809 = vmatpush1.msra.mxu0 0.0
  %5810 = vmatprep.subr.mxu0 0.0
  %5811 = vmatpush1.msra.mxu0 0.0
  %5812 = vmatprep.subr.mxu0 0.0
  %5813 = vmatpush1.msra.mxu0 0.0
  %5814 = vmatprep.subr.mxu0 0.0
  %5815 = vmatpush1.msra.mxu0 0.0
  %5816 = vmatprep.subr.mxu0 0.0
  %5817 = vmatpush1.msra.mxu0 0.0
  %5818 = vmatprep.subr.mxu0 0.0
  %5819 = vmatpush1.msra.mxu0 0.0
  %5820 = vmatprep.subr.mxu0 0.0
  %5821 = vmatpush1.msra.mxu0 0.0
  %5822 = vmatprep.subr.mxu0 0.0
  %5823 = vmatpush1.msra.mxu0 0.0
  %5824 = vmatprep.subr.mxu0 0.0
  %5825 = vmatpush1.msra.mxu0 0.0
  %5826 = vmatprep.subr.mxu0 0.0
  %5827 = vmatpush1.msra.mxu0 0.0
  %5828 = vmatprep.subr.mxu0 0.0
  %5829 = vmatpush1.msra.mxu0 0.0
  %5830 = vmatprep.subr.mxu0 0.0
  %5831 = vmatpush1.msra.mxu0 0.0
  %5832 = vmatprep.subr.mxu0 0.0
  %5833 = vmatpush1.msra.mxu0 0.0
  %5834 = vmatprep.subr.mxu0 0.0
  %5835 = vmatpush1.msra.mxu0 0.0
  %5836 = vmatprep.subr.mxu0 0.0
  %5837 = vmatpush1.msra.mxu0 0.0
  %5838 = vmatprep.subr.mxu0 0.0
  %5839 = vmatpush1.msra.mxu0 0.0
  %5840 = vmatprep.subr.mxu0 0.0
  %5841 = vmatpush1.msra.mxu0 0.0
  %5842 = vmatprep.subr.mxu0 0.0
  %5843 = vmatpush1.msra.mxu0 0.0
  %5844 = vmatprep.subr.mxu0 0.0
  %5845 = vmatpush1.msra.mxu0 0.0
  %5846 = vmatprep.subr.mxu0 0.0
  %5847 = vmatpush1.msra.mxu0 0.0
  %5848 = vmatprep.subr.mxu0 0.0
  %5849 = vmatpush1.msra.mxu0 0.0
  %5850 = vmatprep.subr.mxu0 0.0
  %5851 = vmatpush1.msra.mxu0 0.0
  %5852 = vmatprep.mubr.f32.mxu0 0.0
  %5853 = vmatmul.mubr.f32.gmra.mrb[0].mxu0 %v5783
  %v5854 = vpop.f32.mrb[0].mxu0
  %v5855 = vadd.f32 0.0, %v5854
  %v5856 = vpop.f32.mrb[0].mxu0
  %5857 = vdwg.mxu0
  %v5859 = vsel %vm593, %v4877, 0
  %5861 = vmatprep.subr.mxu0 0.0
  %5862 = vmatpush1.msra.mxu0 %v5786
  %5863 = vmatprep.subr.mxu0 0.0
  %5864 = vmatpush1.msra.mxu0 0.0
  %5865 = vmatprep.subr.mxu0 0.0
  %5866 = vmatpush1.msra.mxu0 0.0
  %5867 = vmatprep.subr.mxu0 0.0
  %5868 = vmatpush1.msra.mxu0 0.0
  %5869 = vmatprep.subr.mxu0 0.0
  %5870 = vmatpush1.msra.mxu0 0.0
  %5871 = vmatprep.subr.mxu0 0.0
  %5872 = vmatpush1.msra.mxu0 0.0
  %5873 = vmatprep.subr.mxu0 0.0
  %5874 = vmatpush1.msra.mxu0 0.0
  %5875 = vmatprep.subr.mxu0 0.0
  %5876 = vmatpush1.msra.mxu0 0.0
  %5877 = vmatprep.subr.mxu0 0.0
  %5878 = vmatpush1.msra.mxu0 0.0
  %5879 = vmatprep.subr.mxu0 0.0
  %5880 = vmatpush1.msra.mxu0 0.0
  %5881 = vmatprep.subr.mxu0 0.0
  %5882 = vmatpush1.msra.mxu0 0.0
  %5883 = vmatprep.subr.mxu0 0.0
  %5884 = vmatpush1.msra.mxu0 0.0
  %5885 = vmatprep.subr.mxu0 0.0
  %5886 = vmatpush1.msra.mxu0 0.0
  %5887 = vmatprep.subr.mxu0 0.0
  %5888 = vmatpush1.msra.mxu0 0.0
  %5889 = vmatprep.subr.mxu0 0.0
  %5890 = vmatpush1.msra.mxu0 0.0
  %5891 = vmatprep.subr.mxu0 0.0
  %5892 = vmatpush1.msra.mxu0 0.0
  %5893 = vmatprep.subr.mxu0 0.0
  %5894 = vmatpush1.msra.mxu0 0.0
  %5895 = vmatprep.subr.mxu0 0.0
  %5896 = vmatpush1.msra.mxu0 0.0
  %5897 = vmatprep.subr.mxu0 0.0
  %5898 = vmatpush1.msra.mxu0 0.0
  %5899 = vmatprep.subr.mxu0 0.0
  %5900 = vmatpush1.msra.mxu0 0.0
  %5901 = vmatprep.subr.mxu0 0.0
  %5902 = vmatpush1.msra.mxu0 0.0
  %5903 = vmatprep.subr.mxu0 0.0
  %5904 = vmatpush1.msra.mxu0 0.0
  %5905 = vmatprep.subr.mxu0 0.0
  %5906 = vmatpush1.msra.mxu0 0.0
  %5907 = vmatprep.subr.mxu0 0.0
  %5908 = vmatpush1.msra.mxu0 0.0
  %5909 = vmatprep.subr.mxu0 0.0
  %5910 = vmatpush1.msra.mxu0 0.0
  %5911 = vmatprep.subr.mxu0 0.0
  %5912 = vmatpush1.msra.mxu0 0.0
  %5913 = vmatprep.subr.mxu0 0.0
  %5914 = vmatpush1.msra.mxu0 0.0
  %5915 = vmatprep.subr.mxu0 0.0
  %5916 = vmatpush1.msra.mxu0 0.0
  %5917 = vmatprep.subr.mxu0 0.0
  %5918 = vmatpush1.msra.mxu0 0.0
  %5919 = vmatprep.subr.mxu0 0.0
  %5920 = vmatpush1.msra.mxu0 0.0
  %5921 = vmatprep.subr.mxu0 0.0
  %5922 = vmatpush1.msra.mxu0 0.0
  %5923 = vmatprep.subr.mxu0 0.0
  %5924 = vmatpush1.msra.mxu0 0.0
  %5925 = vmatprep.mubr.f32.mxu0 0.0
  %5926 = vmatmul.mubr.f32.gmra.mrb[0].mxu0 %v5859
  %v5927 = vpop.f32.mrb[0].mxu0
  %v5928 = vadd.f32 0.0, %v5927
  %v5929 = vpop.f32.mrb[0].mxu0
  %5930 = vdwg.mxu0
  %v5932 = vsel %vm350, %v5855, 0
  %5934 = vmatprep.subr.mxu0 0.0
  %5935 = vmatpush1.msra.mxu0 %v346
  %5936 = vmatprep.subr.mxu0 0.0
  %5937 = vmatpush1.msra.mxu0 %v347
  %5938 = vmatprep.subr.mxu0 0.0
  %5939 = vmatpush1.msra.mxu0 %v348
  %5940 = vmatprep.subr.mxu0 0.0
  %5941 = vmatpush1.msra.mxu0 %v349
  %5942 = vmatprep.subr.mxu0 0.0
  %5943 = vmatpush1.msra.mxu0 0.0
  %5944 = vmatprep.subr.mxu0 0.0
  %5945 = vmatpush1.msra.mxu0 0.0
  %5946 = vmatprep.subr.mxu0 0.0
  %5947 = vmatpush1.msra.mxu0 0.0
  %5948 = vmatprep.subr.mxu0 0.0
  %5949 = vmatpush1.msra.mxu0 0.0
  %5950 = vmatprep.subr.mxu0 0.0
  %5951 = vmatpush1.msra.mxu0 0.0
  %5952 = vmatprep.subr.mxu0 0.0
  %5953 = vmatpush1.msra.mxu0 0.0
  %5954 = vmatprep.subr.mxu0 0.0
  %5955 = vmatpush1.msra.mxu0 0.0
  %5956 = vmatprep.subr.mxu0 0.0
  %5957 = vmatpush1.msra.mxu0 0.0
  %5958 = vmatprep.subr.mxu0 0.0
  %5959 = vmatpush1.msra.mxu0 0.0
  %5960 = vmatprep.subr.mxu0 0.0
  %5961 = vmatpush1.msra.mxu0 0.0
  %5962 = vmatprep.subr.mxu0 0.0
  %5963 = vmatpush1.msra.mxu0 0.0
  %5964 = vmatprep.subr.mxu0 0.0
  %5965 = vmatpush1.msra.mxu0 0.0
  %5966 = vmatprep.subr.mxu0 0.0
  %5967 = vmatpush1.msra.mxu0 0.0
  %5968 = vmatprep.subr.mxu0 0.0
  %5969 = vmatpush1.msra.mxu0 0.0
  %5970 = vmatprep.subr.mxu0 0.0
  %5971 = vmatpush1.msra.mxu0 0.0
  %5972 = vmatprep.subr.mxu0 0.0
  %5973 = vmatpush1.msra.mxu0 0.0
  %5974 = vmatprep.subr.mxu0 0.0
  %5975 = vmatpush1.msra.mxu0 0.0
  %5976 = vmatprep.subr.mxu0 0.0
  %5977 = vmatpush1.msra.mxu0 0.0
  %5978 = vmatprep.subr.mxu0 0.0
  %5979 = vmatpush1.msra.mxu0 0.0
  %5980 = vmatprep.subr.mxu0 0.0
  %5981 = vmatpush1.msra.mxu0 0.0
  %5982 = vmatprep.subr.mxu0 0.0
  %5983 = vmatpush1.msra.mxu0 0.0
  %5984 = vmatprep.subr.mxu0 0.0
  %5985 = vmatpush1.msra.mxu0 0.0
  %5986 = vmatprep.subr.mxu0 0.0
  %5987 = vmatpush1.msra.mxu0 0.0
  %5988 = vmatprep.subr.mxu0 0.0
  %5989 = vmatpush1.msra.mxu0 0.0
  %5990 = vmatprep.subr.mxu0 0.0
  %5991 = vmatpush1.msra.mxu0 0.0
  %5992 = vmatprep.subr.mxu0 0.0
  %5993 = vmatpush1.msra.mxu0 0.0
  %5994 = vmatprep.subr.mxu0 0.0
  %5995 = vmatpush1.msra.mxu0 0.0
  %5996 = vmatprep.subr.mxu0 0.0
  %5997 = vmatpush1.msra.mxu0 0.0
  %5998 = vmatprep.mubr.f32.mxu0 0.0
  %5999 = vmatmul.mubr.f32.gmra.mrb[0].mxu0 %v5932
  %v6000 = vpop.f32.mrb[0].mxu0
  %v6001 = vadd.f32 0.0, %v6000
  %v6002 = vpop.f32.mrb[0].mxu0
  %6003 = vdwg.mxu0
  %v6005 = vsel %vm593, %v4876, 0
  %6007 = vmatprep.subr.mxu0 0.0
  %6008 = vmatpush1.msra.mxu0 %v5786
  %6009 = vmatprep.subr.mxu0 0.0
  %6010 = vmatpush1.msra.mxu0 0.0
  %6011 = vmatprep.subr.mxu0 0.0
  %6012 = vmatpush1.msra.mxu0 0.0
  %6013 = vmatprep.subr.mxu0 0.0
  %6014 = vmatpush1.msra.mxu0 0.0
  %6015 = vmatprep.subr.mxu0 0.0
  %6016 = vmatpush1.msra.mxu0 0.0
  %6017 = vmatprep.subr.mxu0 0.0
  %6018 = vmatpush1.msra.mxu0 0.0
  %6019 = vmatprep.subr.mxu0 0.0
  %6020 = vmatpush1.msra.mxu0 0.0
  %6021 = vmatprep.subr.mxu0 0.0
  %6022 = vmatpush1.msra.mxu0 0.0
  %6023 = vmatprep.subr.mxu0 0.0
  %6024 = vmatpush1.msra.mxu0 0.0
  %6025 = vmatprep.subr.mxu0 0.0
  %6026 = vmatpush1.msra.mxu0 0.0
  %6027 = vmatprep.subr.mxu0 0.0
  %6028 = vmatpush1.msra.mxu0 0.0
  %6029 = vmatprep.subr.mxu0 0.0
  %6030 = vmatpush1.msra.mxu0 0.0
  %6031 = vmatprep.subr.mxu0 0.0
  %6032 = vmatpush1.msra.mxu0 0.0
  %6033 = vmatprep.subr.mxu0 0.0
  %6034 = vmatpush1.msra.mxu0 0.0
  %6035 = vmatprep.subr.mxu0 0.0
  %6036 = vmatpush1.msra.mxu0 0.0
  %6037 = vmatprep.subr.mxu0 0.0
  %6038 = vmatpush1.msra.mxu0 0.0
  %6039 = vmatprep.subr.mxu0 0.0
  %6040 = vmatpush1.msra.mxu0 0.0
  %6041 = vmatprep.subr.mxu0 0.0
  %6042 = vmatpush1.msra.mxu0 0.0
  %6043 = vmatprep.subr.mxu0 0.0
  %6044 = vmatpush1.msra.mxu0 0.0
  %6045 = vmatprep.subr.mxu0 0.0
  %6046 = vmatpush1.msra.mxu0 0.0
  %6047 = vmatprep.subr.mxu0 0.0
  %6048 = vmatpush1.msra.mxu0 0.0
  %6049 = vmatprep.subr.mxu0 0.0
  %6050 = vmatpush1.msra.mxu0 0.0
  %6051 = vmatprep.subr.mxu0 0.0
  %6052 = vmatpush1.msra.mxu0 0.0
  %6053 = vmatprep.subr.mxu0 0.0
  %6054 = vmatpush1.msra.mxu0 0.0
  %6055 = vmatprep.subr.mxu0 0.0
  %6056 = vmatpush1.msra.mxu0 0.0
  %6057 = vmatprep.subr.mxu0 0.0
  %6058 = vmatpush1.msra.mxu0 0.0
  %6059 = vmatprep.subr.mxu0 0.0
  %6060 = vmatpush1.msra.mxu0 0.0
  %6061 = vmatprep.subr.mxu0 0.0
  %6062 = vmatpush1.msra.mxu0 0.0
  %6063 = vmatprep.subr.mxu0 0.0
  %6064 = vmatpush1.msra.mxu0 0.0
  %6065 = vmatprep.subr.mxu0 0.0
  %6066 = vmatpush1.msra.mxu0 0.0
  %6067 = vmatprep.subr.mxu0 0.0
  %6068 = vmatpush1.msra.mxu0 0.0
  %6069 = vmatprep.subr.mxu0 0.0
  %6070 = vmatpush1.msra.mxu0 0.0
  %6071 = vmatprep.mubr.f32.mxu0 0.0
  %6072 = vmatmul.mubr.f32.gmra.mrb[0].mxu0 %v6005
  %v6073 = vpop.f32.mrb[0].mxu0
  %v6074 = vadd.f32 %v6001, %v6073
  %v6075 = vpop.f32.mrb[0].mxu0
  %6076 = vdwg.mxu0
  %v6078 = vsel %vm350, %v5928, 0
  %6080 = vmatprep.subr.mxu0 0.0
  %6081 = vmatpush1.msra.mxu0 %v506
  %6082 = vmatprep.subr.mxu0 0.0
  %6083 = vmatpush1.msra.mxu0 %v507
  %6084 = vmatprep.subr.mxu0 0.0
  %6085 = vmatpush1.msra.mxu0 %v508
  %6086 = vmatprep.subr.mxu0 0.0
  %6087 = vmatpush1.msra.mxu0 %v509
  %6088 = vmatprep.subr.mxu0 0.0
  %6089 = vmatpush1.msra.mxu0 0.0
  %6090 = vmatprep.subr.mxu0 0.0
  %6091 = vmatpush1.msra.mxu0 0.0
  %6092 = vmatprep.subr.mxu0 0.0
  %6093 = vmatpush1.msra.mxu0 0.0
  %6094 = vmatprep.subr.mxu0 0.0
  %6095 = vmatpush1.msra.mxu0 0.0
  %6096 = vmatprep.subr.mxu0 0.0
  %6097 = vmatpush1.msra.mxu0 0.0
  %6098 = vmatprep.subr.mxu0 0.0
  %6099 = vmatpush1.msra.mxu0 0.0
  %6100 = vmatprep.subr.mxu0 0.0
  %6101 = vmatpush1.msra.mxu0 0.0
  %6102 = vmatprep.subr.mxu0 0.0
  %6103 = vmatpush1.msra.mxu0 0.0
  %6104 = vmatprep.subr.mxu0 0.0
  %6105 = vmatpush1.msra.mxu0 0.0
  %6106 = vmatprep.subr.mxu0 0.0
  %6107 = vmatpush1.msra.mxu0 0.0
  %6108 = vmatprep.subr.mxu0 0.0
  %6109 = vmatpush1.msra.mxu0 0.0
  %6110 = vmatprep.subr.mxu0 0.0
  %6111 = vmatpush1.msra.mxu0 0.0
  %6112 = vmatprep.subr.mxu0 0.0
  %6113 = vmatpush1.msra.mxu0 0.0
  %6114 = vmatprep.subr.mxu0 0.0
  %6115 = vmatpush1.msra.mxu0 0.0
  %6116 = vmatprep.subr.mxu0 0.0
  %6117 = vmatpush1.msra.mxu0 0.0
  %6118 = vmatprep.subr.mxu0 0.0
  %6119 = vmatpush1.msra.mxu0 0.0
  %6120 = vmatprep.subr.mxu0 0.0
  %6121 = vmatpush1.msra.mxu0 0.0
  %6122 = vmatprep.subr.mxu0 0.0
  %6123 = vmatpush1.msra.mxu0 0.0
  %6124 = vmatprep.subr.mxu0 0.0
  %6125 = vmatpush1.msra.mxu0 0.0
  %6126 = vmatprep.subr.mxu0 0.0
  %6127 = vmatpush1.msra.mxu0 0.0
  %6128 = vmatprep.subr.mxu0 0.0
  %6129 = vmatpush1.msra.mxu0 0.0
  %6130 = vmatprep.subr.mxu0 0.0
  %6131 = vmatpush1.msra.mxu0 0.0
  %6132 = vmatprep.subr.mxu0 0.0
  %6133 = vmatpush1.msra.mxu0 0.0
  %6134 = vmatprep.subr.mxu0 0.0
  %6135 = vmatpush1.msra.mxu0 0.0
  %6136 = vmatprep.subr.mxu0 0.0
  %6137 = vmatpush1.msra.mxu0 0.0
  %6138 = vmatprep.subr.mxu0 0.0
  %6139 = vmatpush1.msra.mxu0 0.0
  %6140 = vmatprep.subr.mxu0 0.0
  %6141 = vmatpush1.msra.mxu0 0.0
  %6142 = vmatprep.subr.mxu0 0.0
  %6143 = vmatpush1.msra.mxu0 0.0
  %6144 = vmatprep.mubr.f32.mxu0 0.0
  %6145 = vmatmul.mubr.f32.gmra.mrb[0].mxu0 %v6078
  %v6146 = vpop.f32.mrb[0].mxu0
  %v6147 = vadd.f32 0.0, %v6146
  %v6148 = vpop.f32.mrb[0].mxu0
  %6149 = vdwg.mxu0
  %v6150 = vadd.f32 %v6074, %v6147
  %6152 = vset.pattern.permute.xlu0 0
  %6153 = vperm.xlu0 %6152, %v4878
  %v6154 = vpop.permute.xlu0 %6153
  %v6156 = vadd.f32 %v6150, %v6154
  %vm6157 = vcmp.ge.f32.partialorder %v6156, 0.0
  %v6158 = vmul.f32 %v6156, 0.01
  %v6159 = vsel %vm6157, %v6156, %v6158
  %v6161 = vsel %vm350, %v6159, 0
  %6163 = vmatprep.subr.mxu0 0.0
  %6164 = vmatpush1.msra.mxu0 %v973
  %6165 = vmatprep.subr.mxu0 0.0
  %6166 = vmatpush1.msra.mxu0 %v974
  %6167 = vmatprep.subr.mxu0 0.0
  %6168 = vmatpush1.msra.mxu0 %v975
  %6169 = vmatprep.subr.mxu0 0.0
  %6170 = vmatpush1.msra.mxu0 %v976
  %6171 = vmatprep.subr.mxu0 0.0
  %6172 = vmatpush1.msra.mxu0 0.0
  %6173 = vmatprep.subr.mxu0 0.0
  %6174 = vmatpush1.msra.mxu0 0.0
  %6175 = vmatprep.subr.mxu0 0.0
  %6176 = vmatpush1.msra.mxu0 0.0
  %6177 = vmatprep.subr.mxu0 0.0
  %6178 = vmatpush1.msra.mxu0 0.0
  %6179 = vmatprep.subr.mxu0 0.0
  %6180 = vmatpush1.msra.mxu0 0.0
  %6181 = vmatprep.subr.mxu0 0.0
  %6182 = vmatpush1.msra.mxu0 0.0
  %6183 = vmatprep.subr.mxu0 0.0
  %6184 = vmatpush1.msra.mxu0 0.0
  %6185 = vmatprep.subr.mxu0 0.0
  %6186 = vmatpush1.msra.mxu0 0.0
  %6187 = vmatprep.subr.mxu0 0.0
  %6188 = vmatpush1.msra.mxu0 0.0
  %6189 = vmatprep.subr.mxu0 0.0
  %6190 = vmatpush1.msra.mxu0 0.0
  %6191 = vmatprep.subr.mxu0 0.0
  %6192 = vmatpush1.msra.mxu0 0.0
  %6193 = vmatprep.subr.mxu0 0.0
  %6194 = vmatpush1.msra.mxu0 0.0
  %6195 = vmatprep.subr.mxu0 0.0
  %6196 = vmatpush1.msra.mxu0 0.0
  %6197 = vmatprep.subr.mxu0 0.0
  %6198 = vmatpush1.msra.mxu0 0.0
  %6199 = vmatprep.subr.mxu0 0.0
  %6200 = vmatpush1.msra.mxu0 0.0
  %6201 = vmatprep.subr.mxu0 0.0
  %6202 = vmatpush1.msra.mxu0 0.0
  %6203 = vmatprep.subr.mxu0 0.0
  %6204 = vmatpush1.msra.mxu0 0.0
  %6205 = vmatprep.subr.mxu0 0.0
  %6206 = vmatpush1.msra.mxu0 0.0
  %6207 = vmatprep.subr.mxu0 0.0
  %6208 = vmatpush1.msra.mxu0 0.0
  %6209 = vmatprep.subr.mxu0 0.0
  %6210 = vmatpush1.msra.mxu0 0.0
  %6211 = vmatprep.subr.mxu0 0.0
  %6212 = vmatpush1.msra.mxu0 0.0
  %6213 = vmatprep.subr.mxu0 0.0
  %6214 = vmatpush1.msra.mxu0 0.0
  %6215 = vmatprep.subr.mxu0 0.0
  %6216 = vmatpush1.msra.mxu0 0.0
  %6217 = vmatprep.subr.mxu0 0.0
  %6218 = vmatpush1.msra.mxu0 0.0
  %6219 = vmatprep.subr.mxu0 0.0
  %6220 = vmatpush1.msra.mxu0 0.0
  %6221 = vmatprep.subr.mxu0 0.0
  %6222 = vmatpush1.msra.mxu0 0.0
  %6223 = vmatprep.subr.mxu0 0.0
  %6224 = vmatpush1.msra.mxu0 0.0
  %6225 = vmatprep.subr.mxu0 0.0
  %6226 = vmatpush1.msra.mxu0 0.0
  %6227 = vmatprep.mubr.f32.mxu0 0.0
  %6228 = vmatmul.mubr.f32.gmra.mrb[0].mxu0 %v6161
  %v6229 = vpop.f32.mrb[0].mxu0
  %v6230 = vadd.f32 0.0, %v6229
  %v6231 = vpop.f32.mrb[0].mxu0
  %6232 = vdwg.mxu0
  %v6233 = vsub.f32 %v6159, %v6230
  %v6234 = vmul.f32 %v6233, %v6233
  %v6236 = vsel %vm350, %v6234, 0
  %6238 = vmatprep.subr.mxu0 0.0
  %6239 = vmatpush1.msra.mxu0 %v973
  %6240 = vmatprep.subr.mxu0 0.0
  %6241 = vmatpush1.msra.mxu0 %v974
  %6242 = vmatprep.subr.mxu0 0.0
  %6243 = vmatpush1.msra.mxu0 %v975
  %6244 = vmatprep.subr.mxu0 0.0
  %6245 = vmatpush1.msra.mxu0 %v976
  %6246 = vmatprep.subr.mxu0 0.0
  %6247 = vmatpush1.msra.mxu0 0.0
  %6248 = vmatprep.subr.mxu0 0.0
  %6249 = vmatpush1.msra.mxu0 0.0
  %6250 = vmatprep.subr.mxu0 0.0
  %6251 = vmatpush1.msra.mxu0 0.0
  %6252 = vmatprep.subr.mxu0 0.0
  %6253 = vmatpush1.msra.mxu0 0.0
  %6254 = vmatprep.subr.mxu0 0.0
  %6255 = vmatpush1.msra.mxu0 0.0
  %6256 = vmatprep.subr.mxu0 0.0
  %6257 = vmatpush1.msra.mxu0 0.0
  %6258 = vmatprep.subr.mxu0 0.0
  %6259 = vmatpush1.msra.mxu0 0.0
  %6260 = vmatprep.subr.mxu0 0.0
  %6261 = vmatpush1.msra.mxu0 0.0
  %6262 = vmatprep.subr.mxu0 0.0
  %6263 = vmatpush1.msra.mxu0 0.0
  %6264 = vmatprep.subr.mxu0 0.0
  %6265 = vmatpush1.msra.mxu0 0.0
  %6266 = vmatprep.subr.mxu0 0.0
  %6267 = vmatpush1.msra.mxu0 0.0
  %6268 = vmatprep.subr.mxu0 0.0
  %6269 = vmatpush1.msra.mxu0 0.0
  %6270 = vmatprep.subr.mxu0 0.0
  %6271 = vmatpush1.msra.mxu0 0.0
  %6272 = vmatprep.subr.mxu0 0.0
  %6273 = vmatpush1.msra.mxu0 0.0
  %6274 = vmatprep.subr.mxu0 0.0
  %6275 = vmatpush1.msra.mxu0 0.0
  %6276 = vmatprep.subr.mxu0 0.0
  %6277 = vmatpush1.msra.mxu0 0.0
  %6278 = vmatprep.subr.mxu0 0.0
  %6279 = vmatpush1.msra.mxu0 0.0
  %6280 = vmatprep.subr.mxu0 0.0
  %6281 = vmatpush1.msra.mxu0 0.0
  %6282 = vmatprep.subr.mxu0 0.0
  %6283 = vmatpush1.msra.mxu0 0.0
  %6284 = vmatprep.subr.mxu0 0.0
  %6285 = vmatpush1.msra.mxu0 0.0
  %6286 = vmatprep.subr.mxu0 0.0
  %6287 = vmatpush1.msra.mxu0 0.0
  %6288 = vmatprep.subr.mxu0 0.0
  %6289 = vmatpush1.msra.mxu0 0.0
  %6290 = vmatprep.subr.mxu0 0.0
  %6291 = vmatpush1.msra.mxu0 0.0
  %6292 = vmatprep.subr.mxu0 0.0
  %6293 = vmatpush1.msra.mxu0 0.0
  %6294 = vmatprep.subr.mxu0 0.0
  %6295 = vmatpush1.msra.mxu0 0.0
  %6296 = vmatprep.subr.mxu0 0.0
  %6297 = vmatpush1.msra.mxu0 0.0
  %6298 = vmatprep.subr.mxu0 0.0
  %6299 = vmatpush1.msra.mxu0 0.0
  %6300 = vmatprep.subr.mxu0 0.0
  %6301 = vmatpush1.msra.mxu0 0.0
  %6302 = vmatprep.mubr.f32.mxu0 0.0
  %6303 = vmatmul.mubr.f32.gmra.mrb[0].mxu0 %v6236
  %v6304 = vpop.f32.mrb[0].mxu0
  %v6305 = vadd.f32 1e-05, %v6304
  %v6306 = vpop.f32.mrb[0].mxu0
  %6307 = vdwg.mxu0
  %v6308 = vrsqrt.pop %v6305
  %v6309 = vmul.f32 %v6233, %v6308
  %v6310 = vld [vmem:[%s55] sm:$0x3]
  %v6311 = vld [vmem:[%s57] sm:$0x3]
  %6313 = vset.pattern.permute.xlu0 0
  %6314 = vperm.xlu0 %6313, %v6311
  %v6315 = vpop.permute.xlu0 %6314
  %v6318 = vsel %vm593, %v6310, 0
  %v6321 = vsel %vm597, %v6309, 0
  %6323 = vmatprep.subr.mxu0 0.0
  %6324 = vmatpush1.msra.mxu0 %v6321
  %6325 = vmatprep.subr.mxu0 0.0
  %6326 = vmatpush1.msra.mxu0 0.0
  %6327 = vmatprep.subr.mxu0 0.0
  %6328 = vmatpush1.msra.mxu0 0.0
  %6329 = vmatprep.subr.mxu0 0.0
  %6330 = vmatpush1.msra.mxu0 0.0
  %6331 = vmatprep.subr.mxu0 0.0
  %6332 = vmatpush1.msra.mxu0 0.0
  %6333 = vmatprep.subr.mxu0 0.0
  %6334 = vmatpush1.msra.mxu0 0.0
  %6335 = vmatprep.subr.mxu0 0.0
  %6336 = vmatpush1.msra.mxu0 0.0
  %6337 = vmatprep.subr.mxu0 0.0
  %6338 = vmatpush1.msra.mxu0 0.0
  %6339 = vmatprep.subr.mxu0 0.0
  %6340 = vmatpush1.msra.mxu0 0.0
  %6341 = vmatprep.subr.mxu0 0.0
  %6342 = vmatpush1.msra.mxu0 0.0
  %6343 = vmatprep.subr.mxu0 0.0
  %6344 = vmatpush1.msra.mxu0 0.0
  %6345 = vmatprep.subr.mxu0 0.0
  %6346 = vmatpush1.msra.mxu0 0.0
  %6347 = vmatprep.subr.mxu0 0.0
  %6348 = vmatpush1.msra.mxu0 0.0
  %6349 = vmatprep.subr.mxu0 0.0
  %6350 = vmatpush1.msra.mxu0 0.0
  %6351 = vmatprep.subr.mxu0 0.0
  %6352 = vmatpush1.msra.mxu0 0.0
  %6353 = vmatprep.subr.mxu0 0.0
  %6354 = vmatpush1.msra.mxu0 0.0
  %6355 = vmatprep.subr.mxu0 0.0
  %6356 = vmatpush1.msra.mxu0 0.0
  %6357 = vmatprep.subr.mxu0 0.0
  %6358 = vmatpush1.msra.mxu0 0.0
  %6359 = vmatprep.subr.mxu0 0.0
  %6360 = vmatpush1.msra.mxu0 0.0
  %6361 = vmatprep.subr.mxu0 0.0
  %6362 = vmatpush1.msra.mxu0 0.0
  %6363 = vmatprep.subr.mxu0 0.0
  %6364 = vmatpush1.msra.mxu0 0.0
  %6365 = vmatprep.subr.mxu0 0.0
  %6366 = vmatpush1.msra.mxu0 0.0
  %6367 = vmatprep.subr.mxu0 0.0
  %6368 = vmatpush1.msra.mxu0 0.0
  %6369 = vmatprep.subr.mxu0 0.0
  %6370 = vmatpush1.msra.mxu0 0.0
  %6371 = vmatprep.subr.mxu0 0.0
  %6372 = vmatpush1.msra.mxu0 0.0
  %6373 = vmatprep.subr.mxu0 0.0
  %6374 = vmatpush1.msra.mxu0 0.0
  %6375 = vmatprep.subr.mxu0 0.0
  %6376 = vmatpush1.msra.mxu0 0.0
  %6377 = vmatprep.subr.mxu0 0.0
  %6378 = vmatpush1.msra.mxu0 0.0
  %6379 = vmatprep.subr.mxu0 0.0
  %6380 = vmatpush1.msra.mxu0 0.0
  %6381 = vmatprep.subr.mxu0 0.0
  %6382 = vmatpush1.msra.mxu0 0.0
  %6383 = vmatprep.subr.mxu0 0.0
  %6384 = vmatpush1.msra.mxu0 0.0
  %6385 = vmatprep.subr.mxu0 0.0
  %6386 = vmatpush1.msra.mxu0 0.0
  %6387 = vmatprep.mubr.f32.mxu0 0.0
  %6388 = vmatmul.mubr.f32.gmra.mrb[0].mxu0 %v6318
  %v6389 = vpop.f32.mrb[0].mxu0
  %v6390 = vadd.f32 %v6315, %v6389
  %v6391 = vpop.f32.mrb[0].mxu0
  %6392 = vdwg.mxu0
  %vm6393 = vcmask 254976
  %6394 = vst.msk [vmem:[%s59] sm:$0x3] %vm6393, %v6390
  // Predicated region
  $region118: #{_unet_forward.1} parent=0 // pred_check
    _
  $region119: #{_unet_forward.1} parent=0 // pred_check_branch
    %6396 = sbr.rel (0) target = $region121
  $region120: #{_unet_forward.1} parent=0 // pred_region
    _
  $region121: #{_unet_forward.1} parent=0 // pred_fallthru
    _
  // Predicated region
  $region122: #{_unet_forward.1} parent=0 // pred_check
    _
  $region123: #{_unet_forward.1} parent=0 // pred_check_branch
    %6398 = sbr.rel (0) target = $region125
  $region124: #{_unet_forward.1} parent=0 // pred_region
    _
  $region125: #{_unet_forward.1} parent=0 // pred_fallthru
    _

</llo_original>
